<compile_context>
chip_gen: v5e
topology: v5e:2x2
jax: 0.10.0
libtpu: 0.0.40
codegen_flags: <defaults>
</compile_context>

<pallas_src>
import functools

import jax
import jax.numpy as jnp
from jax.experimental import pallas as pl
from jax.experimental.pallas import tpu as pltpu


def _round_up(n, m):
    return ((n + m - 1) // m) * m


# ----------------------------------------------------------------------------
# Fused kernel: 3x (bi-LSTM1 -> LayerNorm -> bi-LSTM2 finals) + head
# ----------------------------------------------------------------------------
def _make_fused_kernel(T, B, hidden, S):
    """T: timesteps, B: padded batch (multiple of 8), hidden: per-modality H,
    S: padded state lanes (multiple of 128, >= 2*sum(hidden))."""
    G = 4 * S                      # gate lanes: [i | f | g | o], each S wide
    f32 = jnp.float32

    # Per-modality lane chunks [start, end) inside the packed state layout.
    chunks = []
    off = 0
    for hm in hidden:
        chunks.append((off, off + 2 * hm))   # [fwd H | bwd H]
        off += 2 * hm

    def kernel(x_ref, kf_ref, kb_ref,
               wih1_ref, whh1_ref, b1_ref,
               lng_ref, lnb_ref,
               wih2_ref, whh2_ref, b2_ref,
               w1_ref, hb1_ref, w2_ref, hb2_ref,
               o_ref,
               gx_ref, seqf_ref, seqb_ref):
        # ---- hoisted constants ------------------------------------------------
        lane = jax.lax.broadcasted_iota(jnp.int32, (1, S), 1)
        fwd_s = jnp.zeros((1, S), f32)                 # 1.0 on forward-dir lanes
        for (s0, s1) in chunks:
            hm = (s1 - s0) // 2
            fwd_s = fwd_s + ((lane >= s0) & (lane < s0 + hm)).astype(f32)
        fwd_g = jnp.concatenate([fwd_s, fwd_s, fwd_s, fwd_s], axis=1)   # (1, G)

        def run_layer(whh_ref, emit):
            """Fused tri-modal bidirectional LSTM recurrence (T unrolled)."""
            h = jnp.zeros((B, S), f32)
            c = jnp.zeros((B, S), f32)
            for t in range(T):                         # static indices everywhere
                rt = T - 1 - t
                gx_t = gx_ref[pl.ds(t * B, B), :]      # input gates at time t
                gx_r = gx_ref[pl.ds(rt * B, B), :]     # input gates at time T-1-t
                gates = jnp.where(fwd_g > 0.5, gx_t, gx_r)
                gates = gates + jnp.dot(h, whh_ref[...],
                                        preferred_element_type=f32)
                ig = jax.nn.sigmoid(gates[:, 0 * S:1 * S])   # 128-aligned slices
                fg = jax.nn.sigmoid(gates[:, 1 * S:2 * S])
                gg = jnp.tanh(gates[:, 2 * S:3 * S])
                og = jax.nn.sigmoid(gates[:, 3 * S:4 * S])
                c_new = fg * c + ig * gg
                h_new = og * jnp.tanh(c_new)

                kf = kf_ref[pl.ds(t * B, B), :]        # fwd keep mask (0/1)
                kb = kb_ref[pl.ds(rt * B, B), :]       # bwd keep mask (0/1)
                keep = (kf + kb) > 0.5
                h = jnp.where(keep, h_new, h)          # freeze past length
                c = jnp.where(keep, c_new, c)

                if emit:                               # layer-1 sequence only
                    seqf_ref[pl.ds(t * B, B), :] = kf * h_new
                    seqb_ref[pl.ds(rt * B, B), :] = kb * h_new
            return h

        # ---- layer 1: hoisted input projection -> recurrence -------------------
        gx_ref[...] = (jnp.dot(x_ref[...], wih1_ref[...],
                               preferred_element_type=f32) + b1_ref[...])
        h1 = run_layer(whh1_ref, emit=True)

        # ---- per-modality LayerNorm on the packed lanes (eps = 1e-5) -----------
        seq = seqf_ref[...] + seqb_ref[...]            # (T*B, S), zeros past len
        mu = jnp.zeros_like(seq)
        for (s0, s1) in chunks:
            ind = ((lane >= s0) & (lane < s1)).astype(f32)
            mu = mu + ind * (jnp.sum(seq * ind, axis=-1, keepdims=True)
                             * (1.0 / (s1 - s0)))
        d = seq - mu
        var = jnp.zeros_like(seq)
        for (s0, s1) in chunks:
            ind = ((lane >= s0) & (lane < s1)).astype(f32)
            var = var + ind * (jnp.sum(d * d * ind, axis=-1, keepdims=True)
                               * (1.0 / (s1 - s0)))
        normed = d * jax.lax.rsqrt(var + 1e-5) * lng_ref[...] + lnb_ref[...]

        # ---- layer 2: finals only (reuse gx scratch) ---------------------------
        gx_ref[...] = (jnp.dot(normed, wih2_ref[...],
                               preferred_element_type=f32) + b2_ref[...])
        h2 = run_layer(whh2_ref, emit=False)

        # ---- head: folded-BN fc1 + ReLU + fc2 (eval mode) ----------------------
        feat = jnp.concatenate([h1, h2], axis=-1)      # (B, 2S), lane-aligned
        z = jnp.dot(feat, w1_ref[...], preferred_element_type=f32) + hb1_ref[...]
        z = jnp.maximum(z, 0.0)                        # dropout = identity (eval)
        o_ref[...] = (jnp.dot(z, w2_ref[...], preferred_element_type=f32)
                      + hb2_ref[...])                  # lane-dense (B, 128) store

    return kernel


# ----------------------------------------------------------------------------
# One-time host-side weight packing (block-diag / lane-padded layouts)
# ----------------------------------------------------------------------------
def pack_params(params, input_sizes, hidden_sizes):
    f32 = jnp.float32
    S = _round_up(2 * sum(hidden_sizes), 128)
    G = 4 * S
    DPAD = _round_up(sum(input_sizes), 128)
    fc1 = params["head"]["w1"].shape[1]
    out = params["head"]["w2"].shape[1]
    FC1_PAD = _round_up(fc1, 128)
    OUT_PAD = _round_up(out, 128)

    rnn1 = [params["trnn1"], params["vrnn1"], params["arnn1"]]
    rnn2 = [params["trnn2"], params["vrnn2"], params["arnn2"]]
    lns = [(params["tln_g"], params["tln_b"]),
           (params["vln_g"], params["vln_b"]),
           (params["aln_g"], params["aln_b"])]

    d_offs, o = [], 0
    for di in input_sizes:
        d_offs.append(o); o += di
    s_offs, o = [], 0
    for hm in hidden_sizes:
        s_offs.append(o); o += 2 * hm

    def pack_wih(plist, row_dim, row_offs, row_widths):
        W = jnp.zeros((row_dim, G), f32)
        b = jnp.zeros((1, G), f32)
        for p, H, ro, rw in zip(plist, hidden_sizes, row_offs, row_widths):
            col0 = s_offs[hidden_sizes.index(H)] if False else None  # unused
            pass
        l_off = 0
        for p, H, ro, rw in zip(plist, hidden_sizes, row_offs, row_widths):
            for dd, sfx in enumerate(("f", "b")):
                col = l_off + dd * H
                w = p["wih_" + sfx]          # (rw, 4H), gate order [i,f,g,o]
                bias = p["b_" + sfx]         # (1, 4H)
                for k in range(4):
                    W = W.at[ro:ro + rw, k * S + col:k * S + col + H].set(
                        w[:, k * H:(k + 1) * H])
                    b = b.at[0, k * S + col:k * S + col + H].set(
                        bias[0, k * H:(k + 1) * H])
            l_off += 2 * H
        return W, b

    def pack_whh(plist):
        W = jnp.zeros((S, G), f32)
        l_off = 0
        for p, H in zip(plist, hidden_sizes):
            for dd, sfx in enumerate(("f", "b")):
                ro = l_off + dd * H
                w = p["whh_" + sfx]          # (H, 4H)
                for k in range(4):
                    W = W.at[ro:ro + H, k * S + ro:k * S + ro + H].set(
                        w[:, k * H:(k + 1) * H])
            l_off += 2 * H
        return W

    wih1, b1 = pack_wih(rnn1, DPAD, d_offs, list(input_sizes))
    whh1 = pack_whh(rnn1)
    wih2, b2 = pack_wih(rnn2, S, s_offs, [2 * hm for hm in hidden_sizes])
    whh2 = pack_whh(rnn2)

    lng = jnp.zeros((1, S), f32)
    lnb = jnp.zeros((1, S), f32)
    for (g, bt), hm, so in zip(lns, hidden_sizes, s_offs):
        lng = lng.at[0, so:so + 2 * hm].set(g)
        lnb = lnb.at[0, so:so + 2 * hm].set(bt)

    # Head: fold eval BatchNorm1d into fc1, permute rows to the packed layout.
    hp = params["head"]
    F = 4 * sum(hidden_sizes)
    sum2 = 2 * sum(hidden_sizes)
    scale = hp["bn_w"] * jax.lax.rsqrt(hp["bn_var"] + 1e-5)   # (1, F)
    shift = hp["bn_b"] - hp["bn_mean"] * scale                # (1, F)
    w1f = hp["w1"] * scale.reshape(F, 1)                      # (F, fc1)
    b1f = hp["b1"] + jnp.dot(shift, hp["w1"])                 # (1, fc1)
    w1p = jnp.zeros((2 * S, FC1_PAD), f32)
    for hm, so in zip(hidden_sizes, s_offs):
        for dd in range(2):                 # 0 = fwd, 1 = bwd (PyTorch order)
            for li in range(2):             # 0 = layer-1 final, 1 = layer-2 final
                src = dd * sum2 + so + li * hm
                dst = li * S + so + dd * hm
                w1p = w1p.at[dst:dst + hm, :fc1].set(w1f[src:src + hm, :])
    b1p = jnp.zeros((1, FC1_PAD), f32).at[0, :fc1].set(b1f[0])
    w2p = jnp.zeros((FC1_PAD, OUT_PAD), f32).at[:fc1, :out].set(hp["w2"])
    b2p = jnp.zeros((1, OUT_PAD), f32).at[0, :out].set(hp["b2"][0])

    # Direction lane masks (used on the host to build per-step keep masks).
    dir_f = jnp.zeros((S,), f32)
    dir_b = jnp.zeros((S,), f32)
    for hm, so in zip(hidden_sizes, s_offs):
        dir_f = dir_f.at[so:so + hm].set(1.0)
        dir_b = dir_b.at[so + hm:so + 2 * hm].set(1.0)

    return {"embed": params["embed"],
            "wih1": wih1, "whh1": whh1, "b1": b1,
            "lng": lng, "lnb": lnb,
            "wih2": wih2, "whh2": whh2, "b2": b2,
            "w1p": w1p, "b1p": b1p, "w2p": w2p, "b2p": b2p,
            "dir_f": dir_f, "dir_b": dir_b}


# ----------------------------------------------------------------------------
# LFLSTM forward (single pallas_call)
# ----------------------------------------------------------------------------
def lflstm_forward(packed, sentences, visual, acoustic, lengths, *,
                   hidden_sizes, output_size):
    f32 = jnp.float32
    T, B = sentences.shape
    B_PAD = _round_up(max(B, 8), 8)
    S = packed["dir_f"].shape[0]
    G = packed["wih1"].shape[1]
    DPAD = packed["wih1"].shape[0]

    # ---- glue (plain XLA): embedding, batch pad, input concat, length masks ----
    sent_emb = jnp.take(packed["embed"], sentences, axis=0)        # (T, B, Dt)

    def pad_b(x):
        return jnp.pad(x, ((0, 0), (0, B_PAD - B), (0, 0)))

    x_cat = jnp.concatenate([pad_b(sent_emb), pad_b(visual), pad_b(acoustic)],
                            axis=-1)
    x_cat = jnp.pad(x_cat, ((0, 0), (0, 0), (0, DPAD - x_cat.shape[-1])))
    x_cat = x_cat.reshape(T * B_PAD, DPAD).astype(f32)

    lengths_p = jnp.pad(lengths, (0, B_PAD - B))
    tmask = (jnp.arange(T)[:, None] < lengths_p[None, :]).astype(f32)  # (T, Bp)
    kf = (tmask[:, :, None] * packed["dir_f"][None, None, :]).reshape(T * B_PAD, S)
    kb = (tmask[:, :, None] * packed["dir_b"][None, None, :]).reshape(T * B_PAD, S)

    kernel = _make_fused_kernel(T, B_PAD, tuple(hidden_sizes), S)
    vmem = pl.BlockSpec(memory_space=pltpu.MemorySpace.VMEM)
    out = pl.pallas_call(
        kernel,
        in_specs=[vmem] * 15,
        out_specs=vmem,
        out_shape=jax.ShapeDtypeStruct((B_PAD, packed["w2p"].shape[1]), f32),
        scratch_shapes=[pltpu.VMEM((T * B_PAD, G), f32),   # gate projections
                        pltpu.VMEM((T * B_PAD, S), f32),   # layer-1 fwd outputs
                        pltpu.VMEM((T * B_PAD, S), f32)],  # layer-1 bwd outputs
    )(x_cat, kf, kb,
      packed["wih1"], packed["whh1"], packed["b1"],
      packed["lng"], packed["lnb"],
      packed["wih2"], packed["whh2"], packed["b2"],
      packed["w1p"], packed["b1p"], packed["w2p"], packed["b2p"])

    return out[:B, :output_size]


# ----------------------------------------------------------------------------
# Deterministic parameter init (mirrors the module's shapes, small sizes)
# ----------------------------------------------------------------------------
def init_lstm_dir(key, din, h):
    k1, k2, k3 = jax.random.split(key, 3)
    s = 1.0 / (h ** 0.5)
    return (jax.random.uniform(k1, (din, 4 * h), jnp.float32, -s, s),
            jax.random.uniform(k2, (h, 4 * h), jnp.float32, -s, s),
            jax.random.uniform(k3, (1, 4 * h), jnp.float32, -s, s))


def init_bilstm(key, din, h):
    kf, kb = jax.random.split(key)
    wih_f, whh_f, b_f = init_lstm_dir(kf, din, h)
    wih_b, whh_b, b_b = init_lstm_dir(kb, din, h)
    return {"wih_f": wih_f, "whh_f": whh_f, "b_f": b_f,
            "wih_b": wih_b, "whh_b": whh_b, "b_b": b_b}


def init_params(key, vocab, input_sizes, hidden_sizes, fc1_size, output_size):
    ks = jax.random.split(key, 16)
    sum_h = sum(hidden_sizes)
    F = sum_h * 4
    return {
        "embed": jax.random.normal(ks[0], (vocab, input_sizes[0]), jnp.float32) * 0.1,
        "trnn1": init_bilstm(ks[1], input_sizes[0], hidden_sizes[0]),
        "trnn2": init_bilstm(ks[2], 2 * hidden_sizes[0], hidden_sizes[0]),
        "vrnn1": init_bilstm(ks[3], input_sizes[1], hidden_sizes[1]),
        "vrnn2": init_bilstm(ks[4], 2 * hidden_sizes[1], hidden_sizes[1]),
        "arnn1": init_bilstm(ks[5], input_sizes[2], hidden_sizes[2]),
        "arnn2": init_bilstm(ks[6], 2 * hidden_sizes[2], hidden_sizes[2]),
        "tln_g": jnp.ones((2 * hidden_sizes[0],), jnp.float32),
        "tln_b": jnp.zeros((2 * hidden_sizes[0],), jnp.float32),
        "vln_g": jnp.ones((2 * hidden_sizes[1],), jnp.float32),
        "vln_b": jnp.zeros((2 * hidden_sizes[1],), jnp.float32),
        "aln_g": jnp.ones((2 * hidden_sizes[2],), jnp.float32),
        "aln_b": jnp.zeros((2 * hidden_sizes[2],), jnp.float32),
        "head": {
            "bn_w": jnp.ones((1, F), jnp.float32),
            "bn_b": jnp.zeros((1, F), jnp.float32),
            "bn_mean": jnp.zeros((1, F), jnp.float32),
            "bn_var": jnp.ones((1, F), jnp.float32),
            "w1": jax.random.uniform(ks[7], (F, fc1_size), jnp.float32,
                                     -1.0 / F ** 0.5, 1.0 / F ** 0.5),
            "b1": jax.random.uniform(ks[8], (1, fc1_size), jnp.float32,
                                     -1.0 / F ** 0.5, 1.0 / F ** 0.5),
            "w2": jax.random.uniform(ks[9], (fc1_size, output_size), jnp.float32,
                                     -1.0 / fc1_size ** 0.5, 1.0 / fc1_size ** 0.5),
            "b2": jax.random.uniform(ks[10], (1, output_size), jnp.float32,
                                     -1.0 / fc1_size ** 0.5, 1.0 / fc1_size ** 0.5),
        },
    }


# ----------------------------------------------------------------------------
# Main
# ----------------------------------------------------------------------------
if __name__ == "__main__":
    # Small shapes consistent with the module structure.
    T, B = 8, 4
    vocab = 32
    text_size, visual_size, acoustic_size = 16, 8, 12
    input_sizes = [text_size, visual_size, acoustic_size]
    hidden_sizes = [int(text_size * 1.5), int(visual_size * 1.5),
                    int(acoustic_size * 1.5)]            # [24, 12, 18]
    fc1_size = sum(hidden_sizes) // 2
    output_size = 1

    key = jax.random.PRNGKey(0)
    kp, k1, k2, k3 = jax.random.split(key, 4)

    params = init_params(kp, vocab, input_sizes, hidden_sizes, fc1_size, output_size)
    packed = pack_params(params, input_sizes, hidden_sizes)   # one-time packing

    sentences = jax.random.randint(k1, (T, B), 0, vocab, dtype=jnp.int32)    # (T, B)
    visual = jax.random.normal(k2, (T, B, visual_size), jnp.float32)
    acoustic = jax.random.normal(k3, (T, B, acoustic_size), jnp.float32)
    lengths = jnp.array([8, 7, 5, 3], jnp.int32)   # sorted desc (enforce_sorted)

    fwd = jax.jit(functools.partial(lflstm_forward,
                                    hidden_sizes=tuple(hidden_sizes),
                                    output_size=output_size))
    out = fwd(packed, sentences, visual, acoustic, lengths)
    out = jax.block_until_ready(out)

    assert out.shape == (B, output_size), out.shape
    assert bool(jnp.all(jnp.isfinite(out)))
    print("KERNEL_OK")
</pallas_src>

<mosaic_0001>
module attributes {stable_mosaic.version = 11 : i64} {
  func.func @kernel(%arg0: memref<64x128xf32, #tpu.memory_space<vmem>>, %arg1: memref<64x128xf32, #tpu.memory_space<vmem>>, %arg2: memref<64x128xf32, #tpu.memory_space<vmem>>, %arg3: memref<128x512xf32, #tpu.memory_space<vmem>>, %arg4: memref<128x512xf32, #tpu.memory_space<vmem>>, %arg5: memref<1x512xf32, #tpu.memory_space<vmem>>, %arg6: memref<1x128xf32, #tpu.memory_space<vmem>>, %arg7: memref<1x128xf32, #tpu.memory_space<vmem>>, %arg8: memref<128x512xf32, #tpu.memory_space<vmem>>, %arg9: memref<128x512xf32, #tpu.memory_space<vmem>>, %arg10: memref<1x512xf32, #tpu.memory_space<vmem>>, %arg11: memref<256x128xf32, #tpu.memory_space<vmem>>, %arg12: memref<1x128xf32, #tpu.memory_space<vmem>>, %arg13: memref<128x128xf32, #tpu.memory_space<vmem>>, %arg14: memref<1x128xf32, #tpu.memory_space<vmem>>, %arg15: memref<8x128xf32, #tpu.memory_space<vmem>>, %arg16: memref<64x512xf32, #tpu.memory_space<vmem>>, %arg17: memref<64x128xf32, #tpu.memory_space<vmem>>, %arg18: memref<64x128xf32, #tpu.memory_space<vmem>>) attributes {dimension_semantics = [], scalar_prefetch = 0 : i64, scratch_operands = 3 : i64, tpu.core_type = #tpu.core_type<tc>} {
    %0 = tpu.iota {dimensions = array<i32: 1>} : vector<1x128xi32>
    %cst = arith.constant 0.000000e+00 : f32
    %1 = vector.broadcast %cst : f32 to vector<1x128xf32>
    %c0_i32 = arith.constant 0 : i32
    %2 = vector.broadcast %c0_i32 : i32 to vector<1x128xi32>
    %3 = arith.cmpi sge, %0, %2 : vector<1x128xi32>
    %c24_i32 = arith.constant 24 : i32
    %4 = vector.broadcast %c24_i32 : i32 to vector<1x128xi32>
    %5 = arith.cmpi slt, %0, %4 : vector<1x128xi32>
    %6 = arith.andi %3, %5 : vector<1x128xi1>
    %7 = arith.extui %6 : vector<1x128xi1> to vector<1x128xi32>
    %8 = arith.sitofp %7 : vector<1x128xi32> to vector<1x128xf32>
    %9 = arith.addf %1, %8 : vector<1x128xf32>
    %c48_i32 = arith.constant 48 : i32
    %10 = vector.broadcast %c48_i32 : i32 to vector<1x128xi32>
    %11 = arith.cmpi sge, %0, %10 : vector<1x128xi32>
    %c60_i32 = arith.constant 60 : i32
    %12 = vector.broadcast %c60_i32 : i32 to vector<1x128xi32>
    %13 = arith.cmpi slt, %0, %12 : vector<1x128xi32>
    %14 = arith.andi %11, %13 : vector<1x128xi1>
    %15 = arith.extui %14 : vector<1x128xi1> to vector<1x128xi32>
    %16 = arith.sitofp %15 : vector<1x128xi32> to vector<1x128xf32>
    %17 = arith.addf %9, %16 : vector<1x128xf32>
    %c72_i32 = arith.constant 72 : i32
    %18 = vector.broadcast %c72_i32 : i32 to vector<1x128xi32>
    %19 = arith.cmpi sge, %0, %18 : vector<1x128xi32>
    %c90_i32 = arith.constant 90 : i32
    %20 = vector.broadcast %c90_i32 : i32 to vector<1x128xi32>
    %21 = arith.cmpi slt, %0, %20 : vector<1x128xi32>
    %22 = arith.andi %19, %21 : vector<1x128xi1>
    %23 = arith.extui %22 : vector<1x128xi1> to vector<1x128xi32>
    %24 = arith.sitofp %23 : vector<1x128xi32> to vector<1x128xf32>
    %25 = arith.addf %17, %24 : vector<1x128xf32>
    %26 = tpu.concatenate %25, %25, %25, %25 in 1 : vector<1x128xf32>, vector<1x128xf32>, vector<1x128xf32>, vector<1x128xf32> -> vector<1x512xf32>
    %c0 = arith.constant 0 : index
    %c0_0 = arith.constant 0 : index
    %27 = vector.load %arg0[%c0, %c0_0] : memref<64x128xf32, #tpu.memory_space<vmem>>, vector<64x128xf32>
    %c0_1 = arith.constant 0 : index
    %c0_2 = arith.constant 0 : index
    %28 = vector.load %arg3[%c0_1, %c0_2] : memref<128x512xf32, #tpu.memory_space<vmem>>, vector<128x512xf32>
    %cst_3 = arith.constant dense<0.000000e+00> : vector<64x512xf32>
    %29 = tpu.matmul %27, %28, %cst_3 {dimension_numbers = #tpu.dot_dimension_numbers<[1], [0], [0], [1], [0, 0, 1, 1], [], []>} : vector<64x128xf32>, vector<128x512xf32>, vector<64x512xf32> -> vector<64x512xf32>
    %c0_4 = arith.constant 0 : index
    %c0_5 = arith.constant 0 : index
    %30 = vector.load %arg5[%c0_4, %c0_5] : memref<1x512xf32, #tpu.memory_space<vmem>>, vector<1x512xf32>
    %31 = vector.broadcast %30 : vector<1x512xf32> to vector<64x512xf32>
    %32 = arith.addf %29, %31 : vector<64x512xf32>
    %c0_6 = arith.constant 0 : index
    %c0_7 = arith.constant 0 : index
    %33 = vector.load %arg16[%c0_6, %c0_7] : memref<64x512xf32, #tpu.memory_space<vmem>>, vector<64x512xf32>
    tpu.vector_store %arg16[%c0_6, %c0_7], %32 {strides = array<i32>} : memref<64x512xf32, #tpu.memory_space<vmem>>, vector<64x512xf32>,
    %cst_8 = arith.constant 0.000000e+00 : f32
    %34 = vector.broadcast %cst_8 : f32 to vector<8x128xf32>
    %cst_9 = arith.constant 0.000000e+00 : f32
    %35 = vector.broadcast %cst_9 : f32 to vector<8x128xf32>
    %c0_10 = arith.constant 0 : index
    %c0_11 = arith.constant 0 : index
    %36 = vector.load %arg16[%c0_10, %c0_11] : memref<64x512xf32, #tpu.memory_space<vmem>>, vector<8x512xf32>
    %c56 = arith.constant 56 : index
    %c0_12 = arith.constant 0 : index
    %37 = vector.load %arg16[%c56, %c0_12] : memref<64x512xf32, #tpu.memory_space<vmem>>, vector<8x512xf32>
    %cst_13 = arith.constant 5.000000e-01 : f32
    %38 = vector.broadcast %cst_13 : f32 to vector<1x512xf32>
    %39 = arith.cmpf ogt, %26, %38 : vector<1x512xf32>
    %40 = vector.shape_cast %39 : vector<1x512xi1> to vector<1x512xi1>
    %41 = vector.broadcast %40 : vector<1x512xi1> to vector<8x512xi1>
    %42 = arith.select %41, %36, %37 : vector<8x512xi1>, vector<8x512xf32>
    %c0_14 = arith.constant 0 : index
    %c0_15 = arith.constant 0 : index
    %43 = vector.load %arg4[%c0_14, %c0_15] : memref<128x512xf32, #tpu.memory_space<vmem>>, vector<128x512xf32>
    %cst_16 = arith.constant dense<0.000000e+00> : vector<8x512xf32>
    %44 = tpu.matmul %34, %43, %cst_16 {dimension_numbers = #tpu.dot_dimension_numbers<[1], [0], [0], [1], [0, 0, 1, 1], [], []>} : vector<8x128xf32>, vector<128x512xf32>, vector<8x512xf32> -> vector<8x512xf32>
    %45 = arith.addf %42, %44 : vector<8x512xf32>
    %46 = vector.extract_strided_slice %45 {offsets = [0, 0], sizes = [8, 128], strides = [1, 1]} : vector<8x512xf32> to vector<8x128xf32>
    %47 = arith.negf %46 : vector<8x128xf32>
    %48 = math.exp %47 : vector<8x128xf32>
    %cst_17 = arith.constant 1.000000e+00 : f32
    %49 = vector.broadcast %cst_17 : f32 to vector<8x128xf32>
    %50 = arith.addf %49, %48 : vector<8x128xf32>
    %51 = arith.divf %49, %50 : vector<8x128xf32>
    %52 = vector.extract_strided_slice %45 {offsets = [0, 128], sizes = [8, 128], strides = [1, 1]} : vector<8x512xf32> to vector<8x128xf32>
    %53 = arith.negf %52 : vector<8x128xf32>
    %54 = math.exp %53 : vector<8x128xf32>
    %cst_18 = arith.constant 1.000000e+00 : f32
    %55 = vector.broadcast %cst_18 : f32 to vector<8x128xf32>
    %56 = arith.addf %55, %54 : vector<8x128xf32>
    %57 = arith.divf %55, %56 : vector<8x128xf32>
    %58 = vector.extract_strided_slice %45 {offsets = [0, 256], sizes = [8, 128], strides = [1, 1]} : vector<8x512xf32> to vector<8x128xf32>
    %59 = math.tanh %58 : vector<8x128xf32>
    %60 = vector.extract_strided_slice %45 {offsets = [0, 384], sizes = [8, 128], strides = [1, 1]} : vector<8x512xf32> to vector<8x128xf32>
    %61 = arith.negf %60 : vector<8x128xf32>
    %62 = math.exp %61 : vector<8x128xf32>
    %cst_19 = arith.constant 1.000000e+00 : f32
    %63 = vector.broadcast %cst_19 : f32 to vector<8x128xf32>
    %64 = arith.addf %63, %62 : vector<8x128xf32>
    %65 = arith.divf %63, %64 : vector<8x128xf32>
    %66 = arith.mulf %57, %35 : vector<8x128xf32>
    %67 = arith.mulf %51, %59 : vector<8x128xf32>
    %68 = arith.addf %66, %67 : vector<8x128xf32>
    %69 = math.tanh %68 : vector<8x128xf32>
    %70 = arith.mulf %65, %69 : vector<8x128xf32>
    %c0_20 = arith.constant 0 : index
    %c0_21 = arith.constant 0 : index
    %71 = vector.load %arg1[%c0_20, %c0_21] : memref<64x128xf32, #tpu.memory_space<vmem>>, vector<8x128xf32>
    %c56_22 = arith.constant 56 : index
    %c0_23 = arith.constant 0 : index
    %72 = vector.load %arg2[%c56_22, %c0_23] : memref<64x128xf32, #tpu.memory_space<vmem>>, vector<8x128xf32>
    %73 = arith.addf %71, %72 : vector<8x128xf32>
    %cst_24 = arith.constant 5.000000e-01 : f32
    %74 = vector.broadcast %cst_24 : f32 to vector<8x128xf32>
    %75 = arith.cmpf ogt, %73, %74 : vector<8x128xf32>
    %76 = arith.select %75, %70, %34 : vector<8x128xi1>, vector<8x128xf32>
    %77 = arith.select %75, %68, %35 : vector<8x128xi1>, vector<8x128xf32>
    %78 = arith.mulf %71, %70 : vector<8x128xf32>
    %c0_25 = arith.constant 0 : index
    %c0_26 = arith.constant 0 : index
    %79 = vector.load %arg17[%c0_25, %c0_26] : memref<64x128xf32, #tpu.memory_space<vmem>>, vector<8x128xf32>
    tpu.vector_store %arg17[%c0_25, %c0_26], %78 {strides = array<i32>} : memref<64x128xf32, #tpu.memory_space<vmem>>, vector<8x128xf32>,
    %80 = arith.mulf %72, %70 : vector<8x128xf32>
    %c56_27 = arith.constant 56 : index
    %c0_28 = arith.constant 0 : index
    %81 = vector.load %arg18[%c56_27, %c0_28] : memref<64x128xf32, #tpu.memory_space<vmem>>, vector<8x128xf32>
    tpu.vector_store %arg18[%c56_27, %c0_28], %80 {strides = array<i32>} : memref<64x128xf32, #tpu.memory_space<vmem>>, vector<8x128xf32>,
    %c8 = arith.constant 8 : index
    %c0_29 = arith.constant 0 : index
    %82 = vector.load %arg16[%c8, %c0_29] : memref<64x512xf32, #tpu.memory_space<vmem>>, vector<8x512xf32>
    %c48 = arith.constant 48 : index
    %c0_30 = arith.constant 0 : index
    %83 = vector.load %arg16[%c48, %c0_30] : memref<64x512xf32, #tpu.memory_space<vmem>>, vector<8x512xf32>
    %cst_31 = arith.constant 5.000000e-01 : f32
    %84 = vector.broadcast %cst_31 : f32 to vector<1x512xf32>
    %85 = arith.cmpf ogt, %26, %84 : vector<1x512xf32>
    %86 = vector.shape_cast %85 : vector<1x512xi1> to vector<1x512xi1>
    %87 = vector.broadcast %86 : vector<1x512xi1> to vector<8x512xi1>
    %88 = arith.select %87, %82, %83 : vector<8x512xi1>, vector<8x512xf32>
    %c0_32 = arith.constant 0 : index
    %c0_33 = arith.constant 0 : index
    %89 = vector.load %arg4[%c0_32, %c0_33] : memref<128x512xf32, #tpu.memory_space<vmem>>, vector<128x512xf32>
    %cst_34 = arith.constant dense<0.000000e+00> : vector<8x512xf32>
    %90 = tpu.matmul %76, %89, %cst_34 {dimension_numbers = #tpu.dot_dimension_numbers<[1], [0], [0], [1], [0, 0, 1, 1], [], []>} : vector<8x128xf32>, vector<128x512xf32>, vector<8x512xf32> -> vector<8x512xf32>
    %91 = arith.addf %88, %90 : vector<8x512xf32>
    %92 = vector.extract_strided_slice %91 {offsets = [0, 0], sizes = [8, 128], strides = [1, 1]} : vector<8x512xf32> to vector<8x128xf32>
    %93 = arith.negf %92 : vector<8x128xf32>
    %94 = math.exp %93 : vector<8x128xf32>
    %cst_35 = arith.constant 1.000000e+00 : f32
    %95 = vector.broadcast %cst_35 : f32 to vector<8x128xf32>
    %96 = arith.addf %95, %94 : vector<8x128xf32>
    %97 = arith.divf %95, %96 : vector<8x128xf32>
    %98 = vector.extract_strided_slice %91 {offsets = [0, 128], sizes = [8, 128], strides = [1, 1]} : vector<8x512xf32> to vector<8x128xf32>
    %99 = arith.negf %98 : vector<8x128xf32>
    %100 = math.exp %99 : vector<8x128xf32>
    %cst_36 = arith.constant 1.000000e+00 : f32
    %101 = vector.broadcast %cst_36 : f32 to vector<8x128xf32>
    %102 = arith.addf %101, %100 : vector<8x128xf32>
    %103 = arith.divf %101, %102 : vector<8x128xf32>
    %104 = vector.extract_strided_slice %91 {offsets = [0, 256], sizes = [8, 128], strides = [1, 1]} : vector<8x512xf32> to vector<8x128xf32>
    %105 = math.tanh %104 : vector<8x128xf32>
    %106 = vector.extract_strided_slice %91 {offsets = [0, 384], sizes = [8, 128], strides = [1, 1]} : vector<8x512xf32> to vector<8x128xf32>
    %107 = arith.negf %106 : vector<8x128xf32>
    %108 = math.exp %107 : vector<8x128xf32>
    %cst_37 = arith.constant 1.000000e+00 : f32
    %109 = vector.broadcast %cst_37 : f32 to vector<8x128xf32>
    %110 = arith.addf %109, %108 : vector<8x128xf32>
    %111 = arith.divf %109, %110 : vector<8x128xf32>
    %112 = arith.mulf %103, %77 : vector<8x128xf32>
    %113 = arith.mulf %97, %105 : vector<8x128xf32>
    %114 = arith.addf %112, %113 : vector<8x128xf32>
    %115 = math.tanh %114 : vector<8x128xf32>
    %116 = arith.mulf %111, %115 : vector<8x128xf32>
    %c8_38 = arith.constant 8 : index
    %c0_39 = arith.constant 0 : index
    %117 = vector.load %arg1[%c8_38, %c0_39] : memref<64x128xf32, #tpu.memory_space<vmem>>, vector<8x128xf32>
    %c48_40 = arith.constant 48 : index
    %c0_41 = arith.constant 0 : index
    %118 = vector.load %arg2[%c48_40, %c0_41] : memref<64x128xf32, #tpu.memory_space<vmem>>, vector<8x128xf32>
    %119 = arith.addf %117, %118 : vector<8x128xf32>
    %cst_42 = arith.constant 5.000000e-01 : f32
    %120 = vector.broadcast %cst_42 : f32 to vector<8x128xf32>
    %121 = arith.cmpf ogt, %119, %120 : vector<8x128xf32>
    %122 = arith.select %121, %116, %76 : vector<8x128xi1>, vector<8x128xf32>
    %123 = arith.select %121, %114, %77 : vector<8x128xi1>, vector<8x128xf32>
    %124 = arith.mulf %117, %116 : vector<8x128xf32>
    %c8_43 = arith.constant 8 : index
    %c0_44 = arith.constant 0 : index
    %125 = vector.load %arg17[%c8_43, %c0_44] : memref<64x128xf32, #tpu.memory_space<vmem>>, vector<8x128xf32>
    tpu.vector_store %arg17[%c8_43, %c0_44], %124 {strides = array<i32>} : memref<64x128xf32, #tpu.memory_space<vmem>>, vector<8x128xf32>,
    %126 = arith.mulf %118, %116 : vector<8x128xf32>
    %c48_45 = arith.constant 48 : index
    %c0_46 = arith.constant 0 : index
    %127 = vector.load %arg18[%c48_45, %c0_46] : memref<64x128xf32, #tpu.memory_space<vmem>>, vector<8x128xf32>
    tpu.vector_store %arg18[%c48_45, %c0_46], %126 {strides = array<i32>} : memref<64x128xf32, #tpu.memory_space<vmem>>, vector<8x128xf32>,
    %c16 = arith.constant 16 : index
    %c0_47 = arith.constant 0 : index
    %128 = vector.load %arg16[%c16, %c0_47] : memref<64x512xf32, #tpu.memory_space<vmem>>, vector<8x512xf32>
    %c40 = arith.constant 40 : index
    %c0_48 = arith.constant 0 : index
    %129 = vector.load %arg16[%c40, %c0_48] : memref<64x512xf32, #tpu.memory_space<vmem>>, vector<8x512xf32>
    %cst_49 = arith.constant 5.000000e-01 : f32
    %130 = vector.broadcast %cst_49 : f32 to vector<1x512xf32>
    %131 = arith.cmpf ogt, %26, %130 : vector<1x512xf32>
    %132 = vector.shape_cast %131 : vector<1x512xi1> to vector<1x512xi1>
    %133 = vector.broadcast %132 : vector<1x512xi1> to vector<8x512xi1>
    %134 = arith.select %133, %128, %129 : vector<8x512xi1>, vector<8x512xf32>
    %c0_50 = arith.constant 0 : index
    %c0_51 = arith.constant 0 : index
    %135 = vector.load %arg4[%c0_50, %c0_51] : memref<128x512xf32, #tpu.memory_space<vmem>>, vector<128x512xf32>
    %cst_52 = arith.constant dense<0.000000e+00> : vector<8x512xf32>
    %136 = tpu.matmul %122, %135, %cst_52 {dimension_numbers = #tpu.dot_dimension_numbers<[1], [0], [0], [1], [0, 0, 1, 1], [], []>} : vector<8x128xf32>, vector<128x512xf32>, vector<8x512xf32> -> vector<8x512xf32>
    %137 = arith.addf %134, %136 : vector<8x512xf32>
    %138 = vector.extract_strided_slice %137 {offsets = [0, 0], sizes = [8, 128], strides = [1, 1]} : vector<8x512xf32> to vector<8x128xf32>
    %139 = arith.negf %138 : vector<8x128xf32>
    %140 = math.exp %139 : vector<8x128xf32>
    %cst_53 = arith.constant 1.000000e+00 : f32
    %141 = vector.broadcast %cst_53 : f32 to vector<8x128xf32>
    %142 = arith.addf %141, %140 : vector<8x128xf32>
    %143 = arith.divf %141, %142 : vector<8x128xf32>
    %144 = vector.extract_strided_slice %137 {offsets = [0, 128], sizes = [8, 128], strides = [1, 1]} : vector<8x512xf32> to vector<8x128xf32>
    %145 = arith.negf %144 : vector<8x128xf32>
    %146 = math.exp %145 : vector<8x128xf32>
    %cst_54 = arith.constant 1.000000e+00 : f32
    %147 = vector.broadcast %cst_54 : f32 to vector<8x128xf32>
    %148 = arith.addf %147, %146 : vector<8x128xf32>
    %149 = arith.divf %147, %148 : vector<8x128xf32>
    %150 = vector.extract_strided_slice %137 {offsets = [0, 256], sizes = [8, 128], strides = [1, 1]} : vector<8x512xf32> to vector<8x128xf32>
    %151 = math.tanh %150 : vector<8x128xf32>
    %152 = vector.extract_strided_slice %137 {offsets = [0, 384], sizes = [8, 128], strides = [1, 1]} : vector<8x512xf32> to vector<8x128xf32>
    %153 = arith.negf %152 : vector<8x128xf32>
    %154 = math.exp %153 : vector<8x128xf32>
    %cst_55 = arith.constant 1.000000e+00 : f32
    %155 = vector.broadcast %cst_55 : f32 to vector<8x128xf32>
    %156 = arith.addf %155, %154 : vector<8x128xf32>
    %157 = arith.divf %155, %156 : vector<8x128xf32>
    %158 = arith.mulf %149, %123 : vector<8x128xf32>
    %159 = arith.mulf %143, %151 : vector<8x128xf32>
    %160 = arith.addf %158, %159 : vector<8x128xf32>
    %161 = math.tanh %160 : vector<8x128xf32>
    %162 = arith.mulf %157, %161 : vector<8x128xf32>
    %c16_56 = arith.constant 16 : index
    %c0_57 = arith.constant 0 : index
    %163 = vector.load %arg1[%c16_56, %c0_57] : memref<64x128xf32, #tpu.memory_space<vmem>>, vector<8x128xf32>
    %c40_58 = arith.constant 40 : index
    %c0_59 = arith.constant 0 : index
    %164 = vector.load %arg2[%c40_58, %c0_59] : memref<64x128xf32, #tpu.memory_space<vmem>>, vector<8x128xf32>
    %165 = arith.addf %163, %164 : vector<8x128xf32>
    %cst_60 = arith.constant 5.000000e-01 : f32
    %166 = vector.broadcast %cst_60 : f32 to vector<8x128xf32>
    %167 = arith.cmpf ogt, %165, %166 : vector<8x128xf32>
    %168 = arith.select %167, %162, %122 : vector<8x128xi1>, vector<8x128xf32>
    %169 = arith.select %167, %160, %123 : vector<8x128xi1>, vector<8x128xf32>
    %170 = arith.mulf %163, %162 : vector<8x128xf32>
    %c16_61 = arith.constant 16 : index
    %c0_62 = arith.constant 0 : index
    %171 = vector.load %arg17[%c16_61, %c0_62] : memref<64x128xf32, #tpu.memory_space<vmem>>, vector<8x128xf32>
    tpu.vector_store %arg17[%c16_61, %c0_62], %170 {strides = array<i32>} : memref<64x128xf32, #tpu.memory_space<vmem>>, vector<8x128xf32>,
    %172 = arith.mulf %164, %162 : vector<8x128xf32>
    %c40_63 = arith.constant 40 : index
    %c0_64 = arith.constant 0 : index
    %173 = vector.load %arg18[%c40_63, %c0_64] : memref<64x128xf32, #tpu.memory_space<vmem>>, vector<8x128xf32>
    tpu.vector_store %arg18[%c40_63, %c0_64], %172 {strides = array<i32>} : memref<64x128xf32, #tpu.memory_space<vmem>>, vector<8x128xf32>,
    %c24 = arith.constant 24 : index
    %c0_65 = arith.constant 0 : index
    %174 = vector.load %arg16[%c24, %c0_65] : memref<64x512xf32, #tpu.memory_space<vmem>>, vector<8x512xf32>
    %c32 = arith.constant 32 : index
    %c0_66 = arith.constant 0 : index
    %175 = vector.load %arg16[%c32, %c0_66] : memref<64x512xf32, #tpu.memory_space<vmem>>, vector<8x512xf32>
    %cst_67 = arith.constant 5.000000e-01 : f32
    %176 = vector.broadcast %cst_67 : f32 to vector<1x512xf32>
    %177 = arith.cmpf ogt, %26, %176 : vector<1x512xf32>
    %178 = vector.shape_cast %177 : vector<1x512xi1> to vector<1x512xi1>
    %179 = vector.broadcast %178 : vector<1x512xi1> to vector<8x512xi1>
    %180 = arith.select %179, %174, %175 : vector<8x512xi1>, vector<8x512xf32>
    %c0_68 = arith.constant 0 : index
    %c0_69 = arith.constant 0 : index
    %181 = vector.load %arg4[%c0_68, %c0_69] : memref<128x512xf32, #tpu.memory_space<vmem>>, vector<128x512xf32>
    %cst_70 = arith.constant dense<0.000000e+00> : vector<8x512xf32>
    %182 = tpu.matmul %168, %181, %cst_70 {dimension_numbers = #tpu.dot_dimension_numbers<[1], [0], [0], [1], [0, 0, 1, 1], [], []>} : vector<8x128xf32>, vector<128x512xf32>, vector<8x512xf32> -> vector<8x512xf32>
    %183 = arith.addf %180, %182 : vector<8x512xf32>
    %184 = vector.extract_strided_slice %183 {offsets = [0, 0], sizes = [8, 128], strides = [1, 1]} : vector<8x512xf32> to vector<8x128xf32>
    %185 = arith.negf %184 : vector<8x128xf32>
    %186 = math.exp %185 : vector<8x128xf32>
    %cst_71 = arith.constant 1.000000e+00 : f32
    %187 = vector.broadcast %cst_71 : f32 to vector<8x128xf32>
    %188 = arith.addf %187, %186 : vector<8x128xf32>
    %189 = arith.divf %187, %188 : vector<8x128xf32>
    %190 = vector.extract_strided_slice %183 {offsets = [0, 128], sizes = [8, 128], strides = [1, 1]} : vector<8x512xf32> to vector<8x128xf32>
    %191 = arith.negf %190 : vector<8x128xf32>
    %192 = math.exp %191 : vector<8x128xf32>
    %cst_72 = arith.constant 1.000000e+00 : f32
    %193 = vector.broadcast %cst_72 : f32 to vector<8x128xf32>
    %194 = arith.addf %193, %192 : vector<8x128xf32>
    %195 = arith.divf %193, %194 : vector<8x128xf32>
    %196 = vector.extract_strided_slice %183 {offsets = [0, 256], sizes = [8, 128], strides = [1, 1]} : vector<8x512xf32> to vector<8x128xf32>
    %197 = math.tanh %196 : vector<8x128xf32>
    %198 = vector.extract_strided_slice %183 {offsets = [0, 384], sizes = [8, 128], strides = [1, 1]} : vector<8x512xf32> to vector<8x128xf32>
    %199 = arith.negf %198 : vector<8x128xf32>
    %200 = math.exp %199 : vector<8x128xf32>
    %cst_73 = arith.constant 1.000000e+00 : f32
    %201 = vector.broadcast %cst_73 : f32 to vector<8x128xf32>
    %202 = arith.addf %201, %200 : vector<8x128xf32>
    %203 = arith.divf %201, %202 : vector<8x128xf32>
    %204 = arith.mulf %195, %169 : vector<8x128xf32>
    %205 = arith.mulf %189, %197 : vector<8x128xf32>
    %206 = arith.addf %204, %205 : vector<8x128xf32>
    %207 = math.tanh %206 : vector<8x128xf32>
    %208 = arith.mulf %203, %207 : vector<8x128xf32>
    %c24_74 = arith.constant 24 : index
    %c0_75 = arith.constant 0 : index
    %209 = vector.load %arg1[%c24_74, %c0_75] : memref<64x128xf32, #tpu.memory_space<vmem>>, vector<8x128xf32>
    %c32_76 = arith.constant 32 : index
    %c0_77 = arith.constant 0 : index
    %210 = vector.load %arg2[%c32_76, %c0_77] : memref<64x128xf32, #tpu.memory_space<vmem>>, vector<8x128xf32>
    %211 = arith.addf %209, %210 : vector<8x128xf32>
    %cst_78 = arith.constant 5.000000e-01 : f32
    %212 = vector.broadcast %cst_78 : f32 to vector<8x128xf32>
    %213 = arith.cmpf ogt, %211, %212 : vector<8x128xf32>
    %214 = arith.select %213, %208, %168 : vector<8x128xi1>, vector<8x128xf32>
    %215 = arith.select %213, %206, %169 : vector<8x128xi1>, vector<8x128xf32>
    %216 = arith.mulf %209, %208 : vector<8x128xf32>
    %c24_79 = arith.constant 24 : index
    %c0_80 = arith.constant 0 : index
    %217 = vector.load %arg17[%c24_79, %c0_80] : memref<64x128xf32, #tpu.memory_space<vmem>>, vector<8x128xf32>
    tpu.vector_store %arg17[%c24_79, %c0_80], %216 {strides = array<i32>} : memref<64x128xf32, #tpu.memory_space<vmem>>, vector<8x128xf32>,
    %218 = arith.mulf %210, %208 : vector<8x128xf32>
    %c32_81 = arith.constant 32 : index
    %c0_82 = arith.constant 0 : index
    %219 = vector.load %arg18[%c32_81, %c0_82] : memref<64x128xf32, #tpu.memory_space<vmem>>, vector<8x128xf32>
    tpu.vector_store %arg18[%c32_81, %c0_82], %218 {strides = array<i32>} : memref<64x128xf32, #tpu.memory_space<vmem>>, vector<8x128xf32>,
    %c32_83 = arith.constant 32 : index
    %c0_84 = arith.constant 0 : index
    %220 = vector.load %arg16[%c32_83, %c0_84] : memref<64x512xf32, #tpu.memory_space<vmem>>, vector<8x512xf32>
    %c24_85 = arith.constant 24 : index
    %c0_86 = arith.constant 0 : index
    %221 = vector.load %arg16[%c24_85, %c0_86] : memref<64x512xf32, #tpu.memory_space<vmem>>, vector<8x512xf32>
    %cst_87 = arith.constant 5.000000e-01 : f32
    %222 = vector.broadcast %cst_87 : f32 to vector<1x512xf32>
    %223 = arith.cmpf ogt, %26, %222 : vector<1x512xf32>
    %224 = vector.shape_cast %223 : vector<1x512xi1> to vector<1x512xi1>
    %225 = vector.broadcast %224 : vector<1x512xi1> to vector<8x512xi1>
    %226 = arith.select %225, %220, %221 : vector<8x512xi1>, vector<8x512xf32>
    %c0_88 = arith.constant 0 : index
    %c0_89 = arith.constant 0 : index
    %227 = vector.load %arg4[%c0_88, %c0_89] : memref<128x512xf32, #tpu.memory_space<vmem>>, vector<128x512xf32>
    %cst_90 = arith.constant dense<0.000000e+00> : vector<8x512xf32>
    %228 = tpu.matmul %214, %227, %cst_90 {dimension_numbers = #tpu.dot_dimension_numbers<[1], [0], [0], [1], [0, 0, 1, 1], [], []>} : vector<8x128xf32>, vector<128x512xf32>, vector<8x512xf32> -> vector<8x512xf32>
    %229 = arith.addf %226, %228 : vector<8x512xf32>
    %230 = vector.extract_strided_slice %229 {offsets = [0, 0], sizes = [8, 128], strides = [1, 1]} : vector<8x512xf32> to vector<8x128xf32>
    %231 = arith.negf %230 : vector<8x128xf32>
    %232 = math.exp %231 : vector<8x128xf32>
    %cst_91 = arith.constant 1.000000e+00 : f32
    %233 = vector.broadcast %cst_91 : f32 to vector<8x128xf32>
    %234 = arith.addf %233, %232 : vector<8x128xf32>
    %235 = arith.divf %233, %234 : vector<8x128xf32>
    %236 = vector.extract_strided_slice %229 {offsets = [0, 128], sizes = [8, 128], strides = [1, 1]} : vector<8x512xf32> to vector<8x128xf32>
    %237 = arith.negf %236 : vector<8x128xf32>
    %238 = math.exp %237 : vector<8x128xf32>
    %cst_92 = arith.constant 1.000000e+00 : f32
    %239 = vector.broadcast %cst_92 : f32 to vector<8x128xf32>
    %240 = arith.addf %239, %238 : vector<8x128xf32>
    %241 = arith.divf %239, %240 : vector<8x128xf32>
    %242 = vector.extract_strided_slice %229 {offsets = [0, 256], sizes = [8, 128], strides = [1, 1]} : vector<8x512xf32> to vector<8x128xf32>
    %243 = math.tanh %242 : vector<8x128xf32>
    %244 = vector.extract_strided_slice %229 {offsets = [0, 384], sizes = [8, 128], strides = [1, 1]} : vector<8x512xf32> to vector<8x128xf32>
    %245 = arith.negf %244 : vector<8x128xf32>
    %246 = math.exp %245 : vector<8x128xf32>
    %cst_93 = arith.constant 1.000000e+00 : f32
    %247 = vector.broadcast %cst_93 : f32 to vector<8x128xf32>
    %248 = arith.addf %247, %246 : vector<8x128xf32>
    %249 = arith.divf %247, %248 : vector<8x128xf32>
    %250 = arith.mulf %241, %215 : vector<8x128xf32>
    %251 = arith.mulf %235, %243 : vector<8x128xf32>
    %252 = arith.addf %250, %251 : vector<8x128xf32>
    %253 = math.tanh %252 : vector<8x128xf32>
    %254 = arith.mulf %249, %253 : vector<8x128xf32>
    %c32_94 = arith.constant 32 : index
    %c0_95 = arith.constant 0 : index
    %255 = vector.load %arg1[%c32_94, %c0_95] : memref<64x128xf32, #tpu.memory_space<vmem>>, vector<8x128xf32>
    %c24_96 = arith.constant 24 : index
    %c0_97 = arith.constant 0 : index
    %256 = vector.load %arg2[%c24_96, %c0_97] : memref<64x128xf32, #tpu.memory_space<vmem>>, vector<8x128xf32>
    %257 = arith.addf %255, %256 : vector<8x128xf32>
    %cst_98 = arith.constant 5.000000e-01 : f32
    %258 = vector.broadcast %cst_98 : f32 to vector<8x128xf32>
    %259 = arith.cmpf ogt, %257, %258 : vector<8x128xf32>
    %260 = arith.select %259, %254, %214 : vector<8x128xi1>, vector<8x128xf32>
    %261 = arith.select %259, %252, %215 : vector<8x128xi1>, vector<8x128xf32>
    %262 = arith.mulf %255, %254 : vector<8x128xf32>
    %c32_99 = arith.constant 32 : index
    %c0_100 = arith.constant 0 : index
    %263 = vector.load %arg17[%c32_99, %c0_100] : memref<64x128xf32, #tpu.memory_space<vmem>>, vector<8x128xf32>
    tpu.vector_store %arg17[%c32_99, %c0_100], %262 {strides = array<i32>} : memref<64x128xf32, #tpu.memory_space<vmem>>, vector<8x128xf32>,
    %264 = arith.mulf %256, %254 : vector<8x128xf32>
    %c24_101 = arith.constant 24 : index
    %c0_102 = arith.constant 0 : index
    %265 = vector.load %arg18[%c24_101, %c0_102] : memref<64x128xf32, #tpu.memory_space<vmem>>, vector<8x128xf32>
    tpu.vector_store %arg18[%c24_101, %c0_102], %264 {strides = array<i32>} : memref<64x128xf32, #tpu.memory_space<vmem>>, vector<8x128xf32>,
    %c40_103 = arith.constant 40 : index
    %c0_104 = arith.constant 0 : index
    %266 = vector.load %arg16[%c40_103, %c0_104] : memref<64x512xf32, #tpu.memory_space<vmem>>, vector<8x512xf32>
    %c16_105 = arith.constant 16 : index
    %c0_106 = arith.constant 0 : index
    %267 = vector.load %arg16[%c16_105, %c0_106] : memref<64x512xf32, #tpu.memory_space<vmem>>, vector<8x512xf32>
    %cst_107 = arith.constant 5.000000e-01 : f32
    %268 = vector.broadcast %cst_107 : f32 to vector<1x512xf32>
    %269 = arith.cmpf ogt, %26, %268 : vector<1x512xf32>
    %270 = vector.shape_cast %269 : vector<1x512xi1> to vector<1x512xi1>
    %271 = vector.broadcast %270 : vector<1x512xi1> to vector<8x512xi1>
    %272 = arith.select %271, %266, %267 : vector<8x512xi1>, vector<8x512xf32>
    %c0_108 = arith.constant 0 : index
    %c0_109 = arith.constant 0 : index
    %273 = vector.load %arg4[%c0_108, %c0_109] : memref<128x512xf32, #tpu.memory_space<vmem>>, vector<128x512xf32>
    %cst_110 = arith.constant dense<0.000000e+00> : vector<8x512xf32>
    %274 = tpu.matmul %260, %273, %cst_110 {dimension_numbers = #tpu.dot_dimension_numbers<[1], [0], [0], [1], [0, 0, 1, 1], [], []>} : vector<8x128xf32>, vector<128x512xf32>, vector<8x512xf32> -> vector<8x512xf32>
    %275 = arith.addf %272, %274 : vector<8x512xf32>
    %276 = vector.extract_strided_slice %275 {offsets = [0, 0], sizes = [8, 128], strides = [1, 1]} : vector<8x512xf32> to vector<8x128xf32>
    %277 = arith.negf %276 : vector<8x128xf32>
    %278 = math.exp %277 : vector<8x128xf32>
    %cst_111 = arith.constant 1.000000e+00 : f32
    %279 = vector.broadcast %cst_111 : f32 to vector<8x128xf32>
    %280 = arith.addf %279, %278 : vector<8x128xf32>
    %281 = arith.divf %279, %280 : vector<8x128xf32>
    %282 = vector.extract_strided_slice %275 {offsets = [0, 128], sizes = [8, 128], strides = [1, 1]} : vector<8x512xf32> to vector<8x128xf32>
    %283 = arith.negf %282 : vector<8x128xf32>
    %284 = math.exp %283 : vector<8x128xf32>
    %cst_112 = arith.constant 1.000000e+00 : f32
    %285 = vector.broadcast %cst_112 : f32 to vector<8x128xf32>
    %286 = arith.addf %285, %284 : vector<8x128xf32>
    %287 = arith.divf %285, %286 : vector<8x128xf32>
    %288 = vector.extract_strided_slice %275 {offsets = [0, 256], sizes = [8, 128], strides = [1, 1]} : vector<8x512xf32> to vector<8x128xf32>
    %289 = math.tanh %288 : vector<8x128xf32>
    %290 = vector.extract_strided_slice %275 {offsets = [0, 384], sizes = [8, 128], strides = [1, 1]} : vector<8x512xf32> to vector<8x128xf32>
    %291 = arith.negf %290 : vector<8x128xf32>
    %292 = math.exp %291 : vector<8x128xf32>
    %cst_113 = arith.constant 1.000000e+00 : f32
    %293 = vector.broadcast %cst_113 : f32 to vector<8x128xf32>
    %294 = arith.addf %293, %292 : vector<8x128xf32>
    %295 = arith.divf %293, %294 : vector<8x128xf32>
    %296 = arith.mulf %287, %261 : vector<8x128xf32>
    %297 = arith.mulf %281, %289 : vector<8x128xf32>
    %298 = arith.addf %296, %297 : vector<8x128xf32>
    %299 = math.tanh %298 : vector<8x128xf32>
    %300 = arith.mulf %295, %299 : vector<8x128xf32>
    %c40_114 = arith.constant 40 : index
    %c0_115 = arith.constant 0 : index
    %301 = vector.load %arg1[%c40_114, %c0_115] : memref<64x128xf32, #tpu.memory_space<vmem>>, vector<8x128xf32>
    %c16_116 = arith.constant 16 : index
    %c0_117 = arith.constant 0 : index
    %302 = vector.load %arg2[%c16_116, %c0_117] : memref<64x128xf32, #tpu.memory_space<vmem>>, vector<8x128xf32>
    %303 = arith.addf %301, %302 : vector<8x128xf32>
    %cst_118 = arith.constant 5.000000e-01 : f32
    %304 = vector.broadcast %cst_118 : f32 to vector<8x128xf32>
    %305 = arith.cmpf ogt, %303, %304 : vector<8x128xf32>
    %306 = arith.select %305, %300, %260 : vector<8x128xi1>, vector<8x128xf32>
    %307 = arith.select %305, %298, %261 : vector<8x128xi1>, vector<8x128xf32>
    %308 = arith.mulf %301, %300 : vector<8x128xf32>
    %c40_119 = arith.constant 40 : index
    %c0_120 = arith.constant 0 : index
    %309 = vector.load %arg17[%c40_119, %c0_120] : memref<64x128xf32, #tpu.memory_space<vmem>>, vector<8x128xf32>
    tpu.vector_store %arg17[%c40_119, %c0_120], %308 {strides = array<i32>} : memref<64x128xf32, #tpu.memory_space<vmem>>, vector<8x128xf32>,
    %310 = arith.mulf %302, %300 : vector<8x128xf32>
    %c16_121 = arith.constant 16 : index
    %c0_122 = arith.constant 0 : index
    %311 = vector.load %arg18[%c16_121, %c0_122] : memref<64x128xf32, #tpu.memory_space<vmem>>, vector<8x128xf32>
    tpu.vector_store %arg18[%c16_121, %c0_122], %310 {strides = array<i32>} : memref<64x128xf32, #tpu.memory_space<vmem>>, vector<8x128xf32>,
    %c48_123 = arith.constant 48 : index
    %c0_124 = arith.constant 0 : index
    %312 = vector.load %arg16[%c48_123, %c0_124] : memref<64x512xf32, #tpu.memory_space<vmem>>, vector<8x512xf32>
    %c8_125 = arith.constant 8 : index
    %c0_126 = arith.constant 0 : index
    %313 = vector.load %arg16[%c8_125, %c0_126] : memref<64x512xf32, #tpu.memory_space<vmem>>, vector<8x512xf32>
    %cst_127 = arith.constant 5.000000e-01 : f32
    %314 = vector.broadcast %cst_127 : f32 to vector<1x512xf32>
    %315 = arith.cmpf ogt, %26, %314 : vector<1x512xf32>
    %316 = vector.shape_cast %315 : vector<1x512xi1> to vector<1x512xi1>
    %317 = vector.broadcast %316 : vector<1x512xi1> to vector<8x512xi1>
    %318 = arith.select %317, %312, %313 : vector<8x512xi1>, vector<8x512xf32>
    %c0_128 = arith.constant 0 : index
    %c0_129 = arith.constant 0 : index
    %319 = vector.load %arg4[%c0_128, %c0_129] : memref<128x512xf32, #tpu.memory_space<vmem>>, vector<128x512xf32>
    %cst_130 = arith.constant dense<0.000000e+00> : vector<8x512xf32>
    %320 = tpu.matmul %306, %319, %cst_130 {dimension_numbers = #tpu.dot_dimension_numbers<[1], [0], [0], [1], [0, 0, 1, 1], [], []>} : vector<8x128xf32>, vector<128x512xf32>, vector<8x512xf32> -> vector<8x512xf32>
    %321 = arith.addf %318, %320 : vector<8x512xf32>
    %322 = vector.extract_strided_slice %321 {offsets = [0, 0], sizes = [8, 128], strides = [1, 1]} : vector<8x512xf32> to vector<8x128xf32>
    %323 = arith.negf %322 : vector<8x128xf32>
    %324 = math.exp %323 : vector<8x128xf32>
    %cst_131 = arith.constant 1.000000e+00 : f32
    %325 = vector.broadcast %cst_131 : f32 to vector<8x128xf32>
    %326 = arith.addf %325, %324 : vector<8x128xf32>
    %327 = arith.divf %325, %326 : vector<8x128xf32>
    %328 = vector.extract_strided_slice %321 {offsets = [0, 128], sizes = [8, 128], strides = [1, 1]} : vector<8x512xf32> to vector<8x128xf32>
    %329 = arith.negf %328 : vector<8x128xf32>
    %330 = math.exp %329 : vector<8x128xf32>
    %cst_132 = arith.constant 1.000000e+00 : f32
    %331 = vector.broadcast %cst_132 : f32 to vector<8x128xf32>
    %332 = arith.addf %331, %330 : vector<8x128xf32>
    %333 = arith.divf %331, %332 : vector<8x128xf32>
    %334 = vector.extract_strided_slice %321 {offsets = [0, 256], sizes = [8, 128], strides = [1, 1]} : vector<8x512xf32> to vector<8x128xf32>
    %335 = math.tanh %334 : vector<8x128xf32>
    %336 = vector.extract_strided_slice %321 {offsets = [0, 384], sizes = [8, 128], strides = [1, 1]} : vector<8x512xf32> to vector<8x128xf32>
    %337 = arith.negf %336 : vector<8x128xf32>
    %338 = math.exp %337 : vector<8x128xf32>
    %cst_133 = arith.constant 1.000000e+00 : f32
    %339 = vector.broadcast %cst_133 : f32 to vector<8x128xf32>
    %340 = arith.addf %339, %338 : vector<8x128xf32>
    %341 = arith.divf %339, %340 : vector<8x128xf32>
    %342 = arith.mulf %333, %307 : vector<8x128xf32>
    %343 = arith.mulf %327, %335 : vector<8x128xf32>
    %344 = arith.addf %342, %343 : vector<8x128xf32>
    %345 = math.tanh %344 : vector<8x128xf32>
    %346 = arith.mulf %341, %345 : vector<8x128xf32>
    %c48_134 = arith.constant 48 : index
    %c0_135 = arith.constant 0 : index
    %347 = vector.load %arg1[%c48_134, %c0_135] : memref<64x128xf32, #tpu.memory_space<vmem>>, vector<8x128xf32>
    %c8_136 = arith.constant 8 : index
    %c0_137 = arith.constant 0 : index
    %348 = vector.load %arg2[%c8_136, %c0_137] : memref<64x128xf32, #tpu.memory_space<vmem>>, vector<8x128xf32>
    %349 = arith.addf %347, %348 : vector<8x128xf32>
    %cst_138 = arith.constant 5.000000e-01 : f32
    %350 = vector.broadcast %cst_138 : f32 to vector<8x128xf32>
    %351 = arith.cmpf ogt, %349, %350 : vector<8x128xf32>
    %352 = arith.select %351, %346, %306 : vector<8x128xi1>, vector<8x128xf32>
    %353 = arith.select %351, %344, %307 : vector<8x128xi1>, vector<8x128xf32>
    %354 = arith.mulf %347, %346 : vector<8x128xf32>
    %c48_139 = arith.constant 48 : index
    %c0_140 = arith.constant 0 : index
    %355 = vector.load %arg17[%c48_139, %c0_140] : memref<64x128xf32, #tpu.memory_space<vmem>>, vector<8x128xf32>
    tpu.vector_store %arg17[%c48_139, %c0_140], %354 {strides = array<i32>} : memref<64x128xf32, #tpu.memory_space<vmem>>, vector<8x128xf32>,
    %356 = arith.mulf %348, %346 : vector<8x128xf32>
    %c8_141 = arith.constant 8 : index
    %c0_142 = arith.constant 0 : index
    %357 = vector.load %arg18[%c8_141, %c0_142] : memref<64x128xf32, #tpu.memory_space<vmem>>, vector<8x128xf32>
    tpu.vector_store %arg18[%c8_141, %c0_142], %356 {strides = array<i32>} : memref<64x128xf32, #tpu.memory_space<vmem>>, vector<8x128xf32>,
    %c56_143 = arith.constant 56 : index
    %c0_144 = arith.constant 0 : index
    %358 = vector.load %arg16[%c56_143, %c0_144] : memref<64x512xf32, #tpu.memory_space<vmem>>, vector<8x512xf32>
    %c0_145 = arith.constant 0 : index
    %c0_146 = arith.constant 0 : index
    %359 = vector.load %arg16[%c0_145, %c0_146] : memref<64x512xf32, #tpu.memory_space<vmem>>, vector<8x512xf32>
    %cst_147 = arith.constant 5.000000e-01 : f32
    %360 = vector.broadcast %cst_147 : f32 to vector<1x512xf32>
    %361 = arith.cmpf ogt, %26, %360 : vector<1x512xf32>
    %362 = vector.shape_cast %361 : vector<1x512xi1> to vector<1x512xi1>
    %363 = vector.broadcast %362 : vector<1x512xi1> to vector<8x512xi1>
    %364 = arith.select %363, %358, %359 : vector<8x512xi1>, vector<8x512xf32>
    %c0_148 = arith.constant 0 : index
    %c0_149 = arith.constant 0 : index
    %365 = vector.load %arg4[%c0_148, %c0_149] : memref<128x512xf32, #tpu.memory_space<vmem>>, vector<128x512xf32>
    %cst_150 = arith.constant dense<0.000000e+00> : vector<8x512xf32>
    %366 = tpu.matmul %352, %365, %cst_150 {dimension_numbers = #tpu.dot_dimension_numbers<[1], [0], [0], [1], [0, 0, 1, 1], [], []>} : vector<8x128xf32>, vector<128x512xf32>, vector<8x512xf32> -> vector<8x512xf32>
    %367 = arith.addf %364, %366 : vector<8x512xf32>
    %368 = vector.extract_strided_slice %367 {offsets = [0, 0], sizes = [8, 128], strides = [1, 1]} : vector<8x512xf32> to vector<8x128xf32>
    %369 = arith.negf %368 : vector<8x128xf32>
    %370 = math.exp %369 : vector<8x128xf32>
    %cst_151 = arith.constant 1.000000e+00 : f32
    %371 = vector.broadcast %cst_151 : f32 to vector<8x128xf32>
    %372 = arith.addf %371, %370 : vector<8x128xf32>
    %373 = arith.divf %371, %372 : vector<8x128xf32>
    %374 = vector.extract_strided_slice %367 {offsets = [0, 128], sizes = [8, 128], strides = [1, 1]} : vector<8x512xf32> to vector<8x128xf32>
    %375 = arith.negf %374 : vector<8x128xf32>
    %376 = math.exp %375 : vector<8x128xf32>
    %cst_152 = arith.constant 1.000000e+00 : f32
    %377 = vector.broadcast %cst_152 : f32 to vector<8x128xf32>
    %378 = arith.addf %377, %376 : vector<8x128xf32>
    %379 = arith.divf %377, %378 : vector<8x128xf32>
    %380 = vector.extract_strided_slice %367 {offsets = [0, 256], sizes = [8, 128], strides = [1, 1]} : vector<8x512xf32> to vector<8x128xf32>
    %381 = math.tanh %380 : vector<8x128xf32>
    %382 = vector.extract_strided_slice %367 {offsets = [0, 384], sizes = [8, 128], strides = [1, 1]} : vector<8x512xf32> to vector<8x128xf32>
    %383 = arith.negf %382 : vector<8x128xf32>
    %384 = math.exp %383 : vector<8x128xf32>
    %cst_153 = arith.constant 1.000000e+00 : f32
    %385 = vector.broadcast %cst_153 : f32 to vector<8x128xf32>
    %386 = arith.addf %385, %384 : vector<8x128xf32>
    %387 = arith.divf %385, %386 : vector<8x128xf32>
    %388 = arith.mulf %379, %353 : vector<8x128xf32>
    %389 = arith.mulf %373, %381 : vector<8x128xf32>
    %390 = arith.addf %388, %389 : vector<8x128xf32>
    %391 = math.tanh %390 : vector<8x128xf32>
    %392 = arith.mulf %387, %391 : vector<8x128xf32>
    %c56_154 = arith.constant 56 : index
    %c0_155 = arith.constant 0 : index
    %393 = vector.load %arg1[%c56_154, %c0_155] : memref<64x128xf32, #tpu.memory_space<vmem>>, vector<8x128xf32>
    %c0_156 = arith.constant 0 : index
    %c0_157 = arith.constant 0 : index
    %394 = vector.load %arg2[%c0_156, %c0_157] : memref<64x128xf32, #tpu.memory_space<vmem>>, vector<8x128xf32>
    %395 = arith.addf %393, %394 : vector<8x128xf32>
    %cst_158 = arith.constant 5.000000e-01 : f32
    %396 = vector.broadcast %cst_158 : f32 to vector<8x128xf32>
    %397 = arith.cmpf ogt, %395, %396 : vector<8x128xf32>
    %398 = arith.select %397, %392, %352 : vector<8x128xi1>, vector<8x128xf32>
    %399 = arith.mulf %393, %392 : vector<8x128xf32>
    %c56_159 = arith.constant 56 : index
    %c0_160 = arith.constant 0 : index
    %400 = vector.load %arg17[%c56_159, %c0_160] : memref<64x128xf32, #tpu.memory_space<vmem>>, vector<8x128xf32>
    tpu.vector_store %arg17[%c56_159, %c0_160], %399 {strides = array<i32>} : memref<64x128xf32, #tpu.memory_space<vmem>>, vector<8x128xf32>,
    %401 = arith.mulf %394, %392 : vector<8x128xf32>
    %c0_161 = arith.constant 0 : index
    %c0_162 = arith.constant 0 : index
    %402 = vector.load %arg18[%c0_161, %c0_162] : memref<64x128xf32, #tpu.memory_space<vmem>>, vector<8x128xf32>
    tpu.vector_store %arg18[%c0_161, %c0_162], %401 {strides = array<i32>} : memref<64x128xf32, #tpu.memory_space<vmem>>, vector<8x128xf32>,
    %c0_163 = arith.constant 0 : index
    %c0_164 = arith.constant 0 : index
    %403 = vector.load %arg17[%c0_163, %c0_164] : memref<64x128xf32, #tpu.memory_space<vmem>>, vector<64x128xf32>
    %c0_165 = arith.constant 0 : index
    %c0_166 = arith.constant 0 : index
    %404 = vector.load %arg18[%c0_165, %c0_166] : memref<64x128xf32, #tpu.memory_space<vmem>>, vector<64x128xf32>
    %405 = arith.addf %403, %404 : vector<64x128xf32>
    %cst_167 = arith.constant 0.000000e+00 : f32
    %406 = vector.broadcast %cst_167 : f32 to vector<64x128xf32>
    %c0_i32_168 = arith.constant 0 : i32
    %407 = vector.broadcast %c0_i32_168 : i32 to vector<1x128xi32>
    %408 = arith.cmpi sge, %0, %407 : vector<1x128xi32>
    %c48_i32_169 = arith.constant 48 : i32
    %409 = vector.broadcast %c48_i32_169 : i32 to vector<1x128xi32>
    %410 = arith.cmpi slt, %0, %409 : vector<1x128xi32>
    %411 = arith.andi %408, %410 : vector<1x128xi1>
    %412 = arith.extui %411 : vector<1x128xi1> to vector<1x128xi32>
    %413 = arith.sitofp %412 : vector<1x128xi32> to vector<1x128xf32>
    %414 = vector.broadcast %413 : vector<1x128xf32> to vector<64x128xf32>
    %415 = arith.mulf %405, %414 : vector<64x128xf32>
    %cst_170 = arith.constant dense<0.000000e+00> : vector<64xf32>
    %416 = vector.multi_reduction <add>, %415, %cst_170 [1] : vector<64x128xf32> to vector<64xf32>
    %417 = vector.shape_cast %416 : vector<64xf32> to vector<64x1xf32>
    %cst_171 = arith.constant 0.020833334 : f32
    %418 = vector.broadcast %cst_171 : f32 to vector<64x1xf32>
    %419 = arith.mulf %417, %418 : vector<64x1xf32>
    %420 = vector.broadcast %413 : vector<1x128xf32> to vector<64x128xf32>
    %421 = vector.broadcast %419 : vector<64x1xf32> to vector<64x128xf32>
    %422 = arith.mulf %420, %421 : vector<64x128xf32>
    %423 = arith.addf %406, %422 : vector<64x128xf32>
    %c48_i32_172 = arith.constant 48 : i32
    %424 = vector.broadcast %c48_i32_172 : i32 to vector<1x128xi32>
    %425 = arith.cmpi sge, %0, %424 : vector<1x128xi32>
    %c72_i32_173 = arith.constant 72 : i32
    %426 = vector.broadcast %c72_i32_173 : i32 to vector<1x128xi32>
    %427 = arith.cmpi slt, %0, %426 : vector<1x128xi32>
    %428 = arith.andi %425, %427 : vector<1x128xi1>
    %429 = arith.extui %428 : vector<1x128xi1> to vector<1x128xi32>
    %430 = arith.sitofp %429 : vector<1x128xi32> to vector<1x128xf32>
    %431 = vector.broadcast %430 : vector<1x128xf32> to vector<64x128xf32>
    %432 = arith.mulf %405, %431 : vector<64x128xf32>
    %cst_174 = arith.constant dense<0.000000e+00> : vector<64xf32>
    %433 = vector.multi_reduction <add>, %432, %cst_174 [1] : vector<64x128xf32> to vector<64xf32>
    %434 = vector.shape_cast %433 : vector<64xf32> to vector<64x1xf32>
    %cst_175 = arith.constant 0.0416666679 : f32
    %435 = vector.broadcast %cst_175 : f32 to vector<64x1xf32>
    %436 = arith.mulf %434, %435 : vector<64x1xf32>
    %437 = vector.broadcast %430 : vector<1x128xf32> to vector<64x128xf32>
    %438 = vector.broadcast %436 : vector<64x1xf32> to vector<64x128xf32>
    %439 = arith.mulf %437, %438 : vector<64x128xf32>
    %440 = arith.addf %423, %439 : vector<64x128xf32>
    %c72_i32_176 = arith.constant 72 : i32
    %441 = vector.broadcast %c72_i32_176 : i32 to vector<1x128xi32>
    %442 = arith.cmpi sge, %0, %441 : vector<1x128xi32>
    %c108_i32 = arith.constant 108 : i32
    %443 = vector.broadcast %c108_i32 : i32 to vector<1x128xi32>
    %444 = arith.cmpi slt, %0, %443 : vector<1x128xi32>
    %445 = arith.andi %442, %444 : vector<1x128xi1>
    %446 = arith.extui %445 : vector<1x128xi1> to vector<1x128xi32>
    %447 = arith.sitofp %446 : vector<1x128xi32> to vector<1x128xf32>
    %448 = vector.broadcast %447 : vector<1x128xf32> to vector<64x128xf32>
    %449 = arith.mulf %405, %448 : vector<64x128xf32>
    %cst_177 = arith.constant dense<0.000000e+00> : vector<64xf32>
    %450 = vector.multi_reduction <add>, %449, %cst_177 [1] : vector<64x128xf32> to vector<64xf32>
    %451 = vector.shape_cast %450 : vector<64xf32> to vector<64x1xf32>
    %cst_178 = arith.constant 0.027777778 : f32
    %452 = vector.broadcast %cst_178 : f32 to vector<64x1xf32>
    %453 = arith.mulf %451, %452 : vector<64x1xf32>
    %454 = vector.broadcast %447 : vector<1x128xf32> to vector<64x128xf32>
    %455 = vector.broadcast %453 : vector<64x1xf32> to vector<64x128xf32>
    %456 = arith.mulf %454, %455 : vector<64x128xf32>
    %457 = arith.addf %440, %456 : vector<64x128xf32>
    %458 = arith.subf %405, %457 : vector<64x128xf32>
    %cst_179 = arith.constant 0.000000e+00 : f32
    %459 = vector.broadcast %cst_179 : f32 to vector<64x128xf32>
    %c0_i32_180 = arith.constant 0 : i32
    %460 = vector.broadcast %c0_i32_180 : i32 to vector<1x128xi32>
    %461 = arith.cmpi sge, %0, %460 : vector<1x128xi32>
    %c48_i32_181 = arith.constant 48 : i32
    %462 = vector.broadcast %c48_i32_181 : i32 to vector<1x128xi32>
    %463 = arith.cmpi slt, %0, %462 : vector<1x128xi32>
    %464 = arith.andi %461, %463 : vector<1x128xi1>
    %465 = arith.extui %464 : vector<1x128xi1> to vector<1x128xi32>
    %466 = arith.sitofp %465 : vector<1x128xi32> to vector<1x128xf32>
    %467 = arith.mulf %458, %458 : vector<64x128xf32>
    %468 = vector.broadcast %466 : vector<1x128xf32> to vector<64x128xf32>
    %469 = arith.mulf %467, %468 : vector<64x128xf32>
    %cst_182 = arith.constant dense<0.000000e+00> : vector<64xf32>
    %470 = vector.multi_reduction <add>, %469, %cst_182 [1] : vector<64x128xf32> to vector<64xf32>
    %471 = vector.shape_cast %470 : vector<64xf32> to vector<64x1xf32>
    %cst_183 = arith.constant 0.020833334 : f32
    %472 = vector.broadcast %cst_183 : f32 to vector<64x1xf32>
    %473 = arith.mulf %471, %472 : vector<64x1xf32>
    %474 = vector.broadcast %466 : vector<1x128xf32> to vector<64x128xf32>
    %475 = vector.broadcast %473 : vector<64x1xf32> to vector<64x128xf32>
    %476 = arith.mulf %474, %475 : vector<64x128xf32>
    %477 = arith.addf %459, %476 : vector<64x128xf32>
    %c48_i32_184 = arith.constant 48 : i32
    %478 = vector.broadcast %c48_i32_184 : i32 to vector<1x128xi32>
    %479 = arith.cmpi sge, %0, %478 : vector<1x128xi32>
    %c72_i32_185 = arith.constant 72 : i32
    %480 = vector.broadcast %c72_i32_185 : i32 to vector<1x128xi32>
    %481 = arith.cmpi slt, %0, %480 : vector<1x128xi32>
    %482 = arith.andi %479, %481 : vector<1x128xi1>
    %483 = arith.extui %482 : vector<1x128xi1> to vector<1x128xi32>
    %484 = arith.sitofp %483 : vector<1x128xi32> to vector<1x128xf32>
    %485 = arith.mulf %458, %458 : vector<64x128xf32>
    %486 = vector.broadcast %484 : vector<1x128xf32> to vector<64x128xf32>
    %487 = arith.mulf %485, %486 : vector<64x128xf32>
    %cst_186 = arith.constant dense<0.000000e+00> : vector<64xf32>
    %488 = vector.multi_reduction <add>, %487, %cst_186 [1] : vector<64x128xf32> to vector<64xf32>
    %489 = vector.shape_cast %488 : vector<64xf32> to vector<64x1xf32>
    %cst_187 = arith.constant 0.0416666679 : f32
    %490 = vector.broadcast %cst_187 : f32 to vector<64x1xf32>
    %491 = arith.mulf %489, %490 : vector<64x1xf32>
    %492 = vector.broadcast %484 : vector<1x128xf32> to vector<64x128xf32>
    %493 = vector.broadcast %491 : vector<64x1xf32> to vector<64x128xf32>
    %494 = arith.mulf %492, %493 : vector<64x128xf32>
    %495 = arith.addf %477, %494 : vector<64x128xf32>
    %c72_i32_188 = arith.constant 72 : i32
    %496 = vector.broadcast %c72_i32_188 : i32 to vector<1x128xi32>
    %497 = arith.cmpi sge, %0, %496 : vector<1x128xi32>
    %c108_i32_189 = arith.constant 108 : i32
    %498 = vector.broadcast %c108_i32_189 : i32 to vector<1x128xi32>
    %499 = arith.cmpi slt, %0, %498 : vector<1x128xi32>
    %500 = arith.andi %497, %499 : vector<1x128xi1>
    %501 = arith.extui %500 : vector<1x128xi1> to vector<1x128xi32>
    %502 = arith.sitofp %501 : vector<1x128xi32> to vector<1x128xf32>
    %503 = arith.mulf %458, %458 : vector<64x128xf32>
    %504 = vector.broadcast %502 : vector<1x128xf32> to vector<64x128xf32>
    %505 = arith.mulf %503, %504 : vector<64x128xf32>
    %cst_190 = arith.constant dense<0.000000e+00> : vector<64xf32>
    %506 = vector.multi_reduction <add>, %505, %cst_190 [1] : vector<64x128xf32> to vector<64xf32>
    %507 = vector.shape_cast %506 : vector<64xf32> to vector<64x1xf32>
    %cst_191 = arith.constant 0.027777778 : f32
    %508 = vector.broadcast %cst_191 : f32 to vector<64x1xf32>
    %509 = arith.mulf %507, %508 : vector<64x1xf32>
    %510 = vector.broadcast %502 : vector<1x128xf32> to vector<64x128xf32>
    %511 = vector.broadcast %509 : vector<64x1xf32> to vector<64x128xf32>
    %512 = arith.mulf %510, %511 : vector<64x128xf32>
    %513 = arith.addf %495, %512 : vector<64x128xf32>
    %cst_192 = arith.constant 9.99999974E-6 : f32
    %514 = vector.broadcast %cst_192 : f32 to vector<64x128xf32>
    %515 = arith.addf %513, %514 : vector<64x128xf32>
    %516 = math.rsqrt %515 : vector<64x128xf32>
    %517 = arith.mulf %458, %516 : vector<64x128xf32>
    %c0_193 = arith.constant 0 : index
    %c0_194 = arith.constant 0 : index
    %518 = vector.load %arg6[%c0_193, %c0_194] : memref<1x128xf32, #tpu.memory_space<vmem>>, vector<1x128xf32>
    %519 = vector.broadcast %518 : vector<1x128xf32> to vector<64x128xf32>
    %520 = arith.mulf %517, %519 : vector<64x128xf32>
    %c0_195 = arith.constant 0 : index
    %c0_196 = arith.constant 0 : index
    %521 = vector.load %arg7[%c0_195, %c0_196] : memref<1x128xf32, #tpu.memory_space<vmem>>, vector<1x128xf32>
    %522 = vector.broadcast %521 : vector<1x128xf32> to vector<64x128xf32>
    %523 = arith.addf %520, %522 : vector<64x128xf32>
    %c0_197 = arith.constant 0 : index
    %c0_198 = arith.constant 0 : index
    %524 = vector.load %arg8[%c0_197, %c0_198] : memref<128x512xf32, #tpu.memory_space<vmem>>, vector<128x512xf32>
    %cst_199 = arith.constant dense<0.000000e+00> : vector<64x512xf32>
    %525 = tpu.matmul %523, %524, %cst_199 {dimension_numbers = #tpu.dot_dimension_numbers<[1], [0], [0], [1], [0, 0, 1, 1], [], []>} : vector<64x128xf32>, vector<128x512xf32>, vector<64x512xf32> -> vector<64x512xf32>
    %c0_200 = arith.constant 0 : index
    %c0_201 = arith.constant 0 : index
    %526 = vector.load %arg10[%c0_200, %c0_201] : memref<1x512xf32, #tpu.memory_space<vmem>>, vector<1x512xf32>
    %527 = vector.broadcast %526 : vector<1x512xf32> to vector<64x512xf32>
    %528 = arith.addf %525, %527 : vector<64x512xf32>
    %c0_202 = arith.constant 0 : index
    %c0_203 = arith.constant 0 : index
    %529 = vector.load %arg16[%c0_202, %c0_203] : memref<64x512xf32, #tpu.memory_space<vmem>>, vector<64x512xf32>
    tpu.vector_store %arg16[%c0_202, %c0_203], %528 {strides = array<i32>} : memref<64x512xf32, #tpu.memory_space<vmem>>, vector<64x512xf32>,
    %cst_204 = arith.constant 0.000000e+00 : f32
    %530 = vector.broadcast %cst_204 : f32 to vector<8x128xf32>
    %cst_205 = arith.constant 0.000000e+00 : f32
    %531 = vector.broadcast %cst_205 : f32 to vector<8x128xf32>
    %c0_206 = arith.constant 0 : index
    %c0_207 = arith.constant 0 : index
    %532 = vector.load %arg16[%c0_206, %c0_207] : memref<64x512xf32, #tpu.memory_space<vmem>>, vector<8x512xf32>
    %c56_208 = arith.constant 56 : index
    %c0_209 = arith.constant 0 : index
    %533 = vector.load %arg16[%c56_208, %c0_209] : memref<64x512xf32, #tpu.memory_space<vmem>>, vector<8x512xf32>
    %cst_210 = arith.constant 5.000000e-01 : f32
    %534 = vector.broadcast %cst_210 : f32 to vector<1x512xf32>
    %535 = arith.cmpf ogt, %26, %534 : vector<1x512xf32>
    %536 = vector.shape_cast %535 : vector<1x512xi1> to vector<1x512xi1>
    %537 = vector.broadcast %536 : vector<1x512xi1> to vector<8x512xi1>
    %538 = arith.select %537, %532, %533 : vector<8x512xi1>, vector<8x512xf32>
    %c0_211 = arith.constant 0 : index
    %c0_212 = arith.constant 0 : index
    %539 = vector.load %arg9[%c0_211, %c0_212] : memref<128x512xf32, #tpu.memory_space<vmem>>, vector<128x512xf32>
    %cst_213 = arith.constant dense<0.000000e+00> : vector<8x512xf32>
    %540 = tpu.matmul %530, %539, %cst_213 {dimension_numbers = #tpu.dot_dimension_numbers<[1], [0], [0], [1], [0, 0, 1, 1], [], []>} : vector<8x128xf32>, vector<128x512xf32>, vector<8x512xf32> -> vector<8x512xf32>
    %541 = arith.addf %538, %540 : vector<8x512xf32>
    %542 = vector.extract_strided_slice %541 {offsets = [0, 0], sizes = [8, 128], strides = [1, 1]} : vector<8x512xf32> to vector<8x128xf32>
    %543 = arith.negf %542 : vector<8x128xf32>
    %544 = math.exp %543 : vector<8x128xf32>
    %cst_214 = arith.constant 1.000000e+00 : f32
    %545 = vector.broadcast %cst_214 : f32 to vector<8x128xf32>
    %546 = arith.addf %545, %544 : vector<8x128xf32>
    %547 = arith.divf %545, %546 : vector<8x128xf32>
    %548 = vector.extract_strided_slice %541 {offsets = [0, 128], sizes = [8, 128], strides = [1, 1]} : vector<8x512xf32> to vector<8x128xf32>
    %549 = arith.negf %548 : vector<8x128xf32>
    %550 = math.exp %549 : vector<8x128xf32>
    %cst_215 = arith.constant 1.000000e+00 : f32
    %551 = vector.broadcast %cst_215 : f32 to vector<8x128xf32>
    %552 = arith.addf %551, %550 : vector<8x128xf32>
    %553 = arith.divf %551, %552 : vector<8x128xf32>
    %554 = vector.extract_strided_slice %541 {offsets = [0, 256], sizes = [8, 128], strides = [1, 1]} : vector<8x512xf32> to vector<8x128xf32>
    %555 = math.tanh %554 : vector<8x128xf32>
    %556 = vector.extract_strided_slice %541 {offsets = [0, 384], sizes = [8, 128], strides = [1, 1]} : vector<8x512xf32> to vector<8x128xf32>
    %557 = arith.negf %556 : vector<8x128xf32>
    %558 = math.exp %557 : vector<8x128xf32>
    %cst_216 = arith.constant 1.000000e+00 : f32
    %559 = vector.broadcast %cst_216 : f32 to vector<8x128xf32>
    %560 = arith.addf %559, %558 : vector<8x128xf32>
    %561 = arith.divf %559, %560 : vector<8x128xf32>
    %562 = arith.mulf %553, %531 : vector<8x128xf32>
    %563 = arith.mulf %547, %555 : vector<8x128xf32>
    %564 = arith.addf %562, %563 : vector<8x128xf32>
    %565 = math.tanh %564 : vector<8x128xf32>
    %566 = arith.mulf %561, %565 : vector<8x128xf32>
    %c0_217 = arith.constant 0 : index
    %c0_218 = arith.constant 0 : index
    %567 = vector.load %arg1[%c0_217, %c0_218] : memref<64x128xf32, #tpu.memory_space<vmem>>, vector<8x128xf32>
    %c56_219 = arith.constant 56 : index
    %c0_220 = arith.constant 0 : index
    %568 = vector.load %arg2[%c56_219, %c0_220] : memref<64x128xf32, #tpu.memory_space<vmem>>, vector<8x128xf32>
    %569 = arith.addf %567, %568 : vector<8x128xf32>
    %cst_221 = arith.constant 5.000000e-01 : f32
    %570 = vector.broadcast %cst_221 : f32 to vector<8x128xf32>
    %571 = arith.cmpf ogt, %569, %570 : vector<8x128xf32>
    %572 = arith.select %571, %566, %530 : vector<8x128xi1>, vector<8x128xf32>
    %573 = arith.select %571, %564, %531 : vector<8x128xi1>, vector<8x128xf32>
    %c8_222 = arith.constant 8 : index
    %c0_223 = arith.constant 0 : index
    %574 = vector.load %arg16[%c8_222, %c0_223] : memref<64x512xf32, #tpu.memory_space<vmem>>, vector<8x512xf32>
    %c48_224 = arith.constant 48 : index
    %c0_225 = arith.constant 0 : index
    %575 = vector.load %arg16[%c48_224, %c0_225] : memref<64x512xf32, #tpu.memory_space<vmem>>, vector<8x512xf32>
    %cst_226 = arith.constant 5.000000e-01 : f32
    %576 = vector.broadcast %cst_226 : f32 to vector<1x512xf32>
    %577 = arith.cmpf ogt, %26, %576 : vector<1x512xf32>
    %578 = vector.shape_cast %577 : vector<1x512xi1> to vector<1x512xi1>
    %579 = vector.broadcast %578 : vector<1x512xi1> to vector<8x512xi1>
    %580 = arith.select %579, %574, %575 : vector<8x512xi1>, vector<8x512xf32>
    %c0_227 = arith.constant 0 : index
    %c0_228 = arith.constant 0 : index
    %581 = vector.load %arg9[%c0_227, %c0_228] : memref<128x512xf32, #tpu.memory_space<vmem>>, vector<128x512xf32>
    %cst_229 = arith.constant dense<0.000000e+00> : vector<8x512xf32>
    %582 = tpu.matmul %572, %581, %cst_229 {dimension_numbers = #tpu.dot_dimension_numbers<[1], [0], [0], [1], [0, 0, 1, 1], [], []>} : vector<8x128xf32>, vector<128x512xf32>, vector<8x512xf32> -> vector<8x512xf32>
    %583 = arith.addf %580, %582 : vector<8x512xf32>
    %584 = vector.extract_strided_slice %583 {offsets = [0, 0], sizes = [8, 128], strides = [1, 1]} : vector<8x512xf32> to vector<8x128xf32>
    %585 = arith.negf %584 : vector<8x128xf32>
    %586 = math.exp %585 : vector<8x128xf32>
    %cst_230 = arith.constant 1.000000e+00 : f32
    %587 = vector.broadcast %cst_230 : f32 to vector<8x128xf32>
    %588 = arith.addf %587, %586 : vector<8x128xf32>
    %589 = arith.divf %587, %588 : vector<8x128xf32>
    %590 = vector.extract_strided_slice %583 {offsets = [0, 128], sizes = [8, 128], strides = [1, 1]} : vector<8x512xf32> to vector<8x128xf32>
    %591 = arith.negf %590 : vector<8x128xf32>
    %592 = math.exp %591 : vector<8x128xf32>
    %cst_231 = arith.constant 1.000000e+00 : f32
    %593 = vector.broadcast %cst_231 : f32 to vector<8x128xf32>
    %594 = arith.addf %593, %592 : vector<8x128xf32>
    %595 = arith.divf %593, %594 : vector<8x128xf32>
    %596 = vector.extract_strided_slice %583 {offsets = [0, 256], sizes = [8, 128], strides = [1, 1]} : vector<8x512xf32> to vector<8x128xf32>
    %597 = math.tanh %596 : vector<8x128xf32>
    %598 = vector.extract_strided_slice %583 {offsets = [0, 384], sizes = [8, 128], strides = [1, 1]} : vector<8x512xf32> to vector<8x128xf32>
    %599 = arith.negf %598 : vector<8x128xf32>
    %600 = math.exp %599 : vector<8x128xf32>
    %cst_232 = arith.constant 1.000000e+00 : f32
    %601 = vector.broadcast %cst_232 : f32 to vector<8x128xf32>
    %602 = arith.addf %601, %600 : vector<8x128xf32>
    %603 = arith.divf %601, %602 : vector<8x128xf32>
    %604 = arith.mulf %595, %573 : vector<8x128xf32>
    %605 = arith.mulf %589, %597 : vector<8x128xf32>
    %606 = arith.addf %604, %605 : vector<8x128xf32>
    %607 = math.tanh %606 : vector<8x128xf32>
    %608 = arith.mulf %603, %607 : vector<8x128xf32>
    %c8_233 = arith.constant 8 : index
    %c0_234 = arith.constant 0 : index
    %609 = vector.load %arg1[%c8_233, %c0_234] : memref<64x128xf32, #tpu.memory_space<vmem>>, vector<8x128xf32>
    %c48_235 = arith.constant 48 : index
    %c0_236 = arith.constant 0 : index
    %610 = vector.load %arg2[%c48_235, %c0_236] : memref<64x128xf32, #tpu.memory_space<vmem>>, vector<8x128xf32>
    %611 = arith.addf %609, %610 : vector<8x128xf32>
    %cst_237 = arith.constant 5.000000e-01 : f32
    %612 = vector.broadcast %cst_237 : f32 to vector<8x128xf32>
    %613 = arith.cmpf ogt, %611, %612 : vector<8x128xf32>
    %614 = arith.select %613, %608, %572 : vector<8x128xi1>, vector<8x128xf32>
    %615 = arith.select %613, %606, %573 : vector<8x128xi1>, vector<8x128xf32>
    %c16_238 = arith.constant 16 : index
    %c0_239 = arith.constant 0 : index
    %616 = vector.load %arg16[%c16_238, %c0_239] : memref<64x512xf32, #tpu.memory_space<vmem>>, vector<8x512xf32>
    %c40_240 = arith.constant 40 : index
    %c0_241 = arith.constant 0 : index
    %617 = vector.load %arg16[%c40_240, %c0_241] : memref<64x512xf32, #tpu.memory_space<vmem>>, vector<8x512xf32>
    %cst_242 = arith.constant 5.000000e-01 : f32
    %618 = vector.broadcast %cst_242 : f32 to vector<1x512xf32>
    %619 = arith.cmpf ogt, %26, %618 : vector<1x512xf32>
    %620 = vector.shape_cast %619 : vector<1x512xi1> to vector<1x512xi1>
    %621 = vector.broadcast %620 : vector<1x512xi1> to vector<8x512xi1>
    %622 = arith.select %621, %616, %617 : vector<8x512xi1>, vector<8x512xf32>
    %c0_243 = arith.constant 0 : index
    %c0_244 = arith.constant 0 : index
    %623 = vector.load %arg9[%c0_243, %c0_244] : memref<128x512xf32, #tpu.memory_space<vmem>>, vector<128x512xf32>
    %cst_245 = arith.constant dense<0.000000e+00> : vector<8x512xf32>
    %624 = tpu.matmul %614, %623, %cst_245 {dimension_numbers = #tpu.dot_dimension_numbers<[1], [0], [0], [1], [0, 0, 1, 1], [], []>} : vector<8x128xf32>, vector<128x512xf32>, vector<8x512xf32> -> vector<8x512xf32>
    %625 = arith.addf %622, %624 : vector<8x512xf32>
    %626 = vector.extract_strided_slice %625 {offsets = [0, 0], sizes = [8, 128], strides = [1, 1]} : vector<8x512xf32> to vector<8x128xf32>
    %627 = arith.negf %626 : vector<8x128xf32>
    %628 = math.exp %627 : vector<8x128xf32>
    %cst_246 = arith.constant 1.000000e+00 : f32
    %629 = vector.broadcast %cst_246 : f32 to vector<8x128xf32>
    %630 = arith.addf %629, %628 : vector<8x128xf32>
    %631 = arith.divf %629, %630 : vector<8x128xf32>
    %632 = vector.extract_strided_slice %625 {offsets = [0, 128], sizes = [8, 128], strides = [1, 1]} : vector<8x512xf32> to vector<8x128xf32>
    %633 = arith.negf %632 : vector<8x128xf32>
    %634 = math.exp %633 : vector<8x128xf32>
    %cst_247 = arith.constant 1.000000e+00 : f32
    %635 = vector.broadcast %cst_247 : f32 to vector<8x128xf32>
    %636 = arith.addf %635, %634 : vector<8x128xf32>
    %637 = arith.divf %635, %636 : vector<8x128xf32>
    %638 = vector.extract_strided_slice %625 {offsets = [0, 256], sizes = [8, 128], strides = [1, 1]} : vector<8x512xf32> to vector<8x128xf32>
    %639 = math.tanh %638 : vector<8x128xf32>
    %640 = vector.extract_strided_slice %625 {offsets = [0, 384], sizes = [8, 128], strides = [1, 1]} : vector<8x512xf32> to vector<8x128xf32>
    %641 = arith.negf %640 : vector<8x128xf32>
    %642 = math.exp %641 : vector<8x128xf32>
    %cst_248 = arith.constant 1.000000e+00 : f32
    %643 = vector.broadcast %cst_248 : f32 to vector<8x128xf32>
    %644 = arith.addf %643, %642 : vector<8x128xf32>
    %645 = arith.divf %643, %644 : vector<8x128xf32>
    %646 = arith.mulf %637, %615 : vector<8x128xf32>
    %647 = arith.mulf %631, %639 : vector<8x128xf32>
    %648 = arith.addf %646, %647 : vector<8x128xf32>
    %649 = math.tanh %648 : vector<8x128xf32>
    %650 = arith.mulf %645, %649 : vector<8x128xf32>
    %c16_249 = arith.constant 16 : index
    %c0_250 = arith.constant 0 : index
    %651 = vector.load %arg1[%c16_249, %c0_250] : memref<64x128xf32, #tpu.memory_space<vmem>>, vector<8x128xf32>
    %c40_251 = arith.constant 40 : index
    %c0_252 = arith.constant 0 : index
    %652 = vector.load %arg2[%c40_251, %c0_252] : memref<64x128xf32, #tpu.memory_space<vmem>>, vector<8x128xf32>
    %653 = arith.addf %651, %652 : vector<8x128xf32>
    %cst_253 = arith.constant 5.000000e-01 : f32
    %654 = vector.broadcast %cst_253 : f32 to vector<8x128xf32>
    %655 = arith.cmpf ogt, %653, %654 : vector<8x128xf32>
    %656 = arith.select %655, %650, %614 : vector<8x128xi1>, vector<8x128xf32>
    %657 = arith.select %655, %648, %615 : vector<8x128xi1>, vector<8x128xf32>
    %c24_254 = arith.constant 24 : index
    %c0_255 = arith.constant 0 : index
    %658 = vector.load %arg16[%c24_254, %c0_255] : memref<64x512xf32, #tpu.memory_space<vmem>>, vector<8x512xf32>
    %c32_256 = arith.constant 32 : index
    %c0_257 = arith.constant 0 : index
    %659 = vector.load %arg16[%c32_256, %c0_257] : memref<64x512xf32, #tpu.memory_space<vmem>>, vector<8x512xf32>
    %cst_258 = arith.constant 5.000000e-01 : f32
    %660 = vector.broadcast %cst_258 : f32 to vector<1x512xf32>
    %661 = arith.cmpf ogt, %26, %660 : vector<1x512xf32>
    %662 = vector.shape_cast %661 : vector<1x512xi1> to vector<1x512xi1>
    %663 = vector.broadcast %662 : vector<1x512xi1> to vector<8x512xi1>
    %664 = arith.select %663, %658, %659 : vector<8x512xi1>, vector<8x512xf32>
    %c0_259 = arith.constant 0 : index
    %c0_260 = arith.constant 0 : index
    %665 = vector.load %arg9[%c0_259, %c0_260] : memref<128x512xf32, #tpu.memory_space<vmem>>, vector<128x512xf32>
    %cst_261 = arith.constant dense<0.000000e+00> : vector<8x512xf32>
    %666 = tpu.matmul %656, %665, %cst_261 {dimension_numbers = #tpu.dot_dimension_numbers<[1], [0], [0], [1], [0, 0, 1, 1], [], []>} : vector<8x128xf32>, vector<128x512xf32>, vector<8x512xf32> -> vector<8x512xf32>
    %667 = arith.addf %664, %666 : vector<8x512xf32>
    %668 = vector.extract_strided_slice %667 {offsets = [0, 0], sizes = [8, 128], strides = [1, 1]} : vector<8x512xf32> to vector<8x128xf32>
    %669 = arith.negf %668 : vector<8x128xf32>
    %670 = math.exp %669 : vector<8x128xf32>
    %cst_262 = arith.constant 1.000000e+00 : f32
    %671 = vector.broadcast %cst_262 : f32 to vector<8x128xf32>
    %672 = arith.addf %671, %670 : vector<8x128xf32>
    %673 = arith.divf %671, %672 : vector<8x128xf32>
    %674 = vector.extract_strided_slice %667 {offsets = [0, 128], sizes = [8, 128], strides = [1, 1]} : vector<8x512xf32> to vector<8x128xf32>
    %675 = arith.negf %674 : vector<8x128xf32>
    %676 = math.exp %675 : vector<8x128xf32>
    %cst_263 = arith.constant 1.000000e+00 : f32
    %677 = vector.broadcast %cst_263 : f32 to vector<8x128xf32>
    %678 = arith.addf %677, %676 : vector<8x128xf32>
    %679 = arith.divf %677, %678 : vector<8x128xf32>
    %680 = vector.extract_strided_slice %667 {offsets = [0, 256], sizes = [8, 128], strides = [1, 1]} : vector<8x512xf32> to vector<8x128xf32>
    %681 = math.tanh %680 : vector<8x128xf32>
    %682 = vector.extract_strided_slice %667 {offsets = [0, 384], sizes = [8, 128], strides = [1, 1]} : vector<8x512xf32> to vector<8x128xf32>
    %683 = arith.negf %682 : vector<8x128xf32>
    %684 = math.exp %683 : vector<8x128xf32>
    %cst_264 = arith.constant 1.000000e+00 : f32
    %685 = vector.broadcast %cst_264 : f32 to vector<8x128xf32>
    %686 = arith.addf %685, %684 : vector<8x128xf32>
    %687 = arith.divf %685, %686 : vector<8x128xf32>
    %688 = arith.mulf %679, %657 : vector<8x128xf32>
    %689 = arith.mulf %673, %681 : vector<8x128xf32>
    %690 = arith.addf %688, %689 : vector<8x128xf32>
    %691 = math.tanh %690 : vector<8x128xf32>
    %692 = arith.mulf %687, %691 : vector<8x128xf32>
    %c24_265 = arith.constant 24 : index
    %c0_266 = arith.constant 0 : index
    %693 = vector.load %arg1[%c24_265, %c0_266] : memref<64x128xf32, #tpu.memory_space<vmem>>, vector<8x128xf32>
    %c32_267 = arith.constant 32 : index
    %c0_268 = arith.constant 0 : index
    %694 = vector.load %arg2[%c32_267, %c0_268] : memref<64x128xf32, #tpu.memory_space<vmem>>, vector<8x128xf32>
    %695 = arith.addf %693, %694 : vector<8x128xf32>
    %cst_269 = arith.constant 5.000000e-01 : f32
    %696 = vector.broadcast %cst_269 : f32 to vector<8x128xf32>
    %697 = arith.cmpf ogt, %695, %696 : vector<8x128xf32>
    %698 = arith.select %697, %692, %656 : vector<8x128xi1>, vector<8x128xf32>
    %699 = arith.select %697, %690, %657 : vector<8x128xi1>, vector<8x128xf32>
    %c32_270 = arith.constant 32 : index
    %c0_271 = arith.constant 0 : index
    %700 = vector.load %arg16[%c32_270, %c0_271] : memref<64x512xf32, #tpu.memory_space<vmem>>, vector<8x512xf32>
    %c24_272 = arith.constant 24 : index
    %c0_273 = arith.constant 0 : index
    %701 = vector.load %arg16[%c24_272, %c0_273] : memref<64x512xf32, #tpu.memory_space<vmem>>, vector<8x512xf32>
    %cst_274 = arith.constant 5.000000e-01 : f32
    %702 = vector.broadcast %cst_274 : f32 to vector<1x512xf32>
    %703 = arith.cmpf ogt, %26, %702 : vector<1x512xf32>
    %704 = vector.shape_cast %703 : vector<1x512xi1> to vector<1x512xi1>
    %705 = vector.broadcast %704 : vector<1x512xi1> to vector<8x512xi1>
    %706 = arith.select %705, %700, %701 : vector<8x512xi1>, vector<8x512xf32>
    %c0_275 = arith.constant 0 : index
    %c0_276 = arith.constant 0 : index
    %707 = vector.load %arg9[%c0_275, %c0_276] : memref<128x512xf32, #tpu.memory_space<vmem>>, vector<128x512xf32>
    %cst_277 = arith.constant dense<0.000000e+00> : vector<8x512xf32>
    %708 = tpu.matmul %698, %707, %cst_277 {dimension_numbers = #tpu.dot_dimension_numbers<[1], [0], [0], [1], [0, 0, 1, 1], [], []>} : vector<8x128xf32>, vector<128x512xf32>, vector<8x512xf32> -> vector<8x512xf32>
    %709 = arith.addf %706, %708 : vector<8x512xf32>
    %710 = vector.extract_strided_slice %709 {offsets = [0, 0], sizes = [8, 128], strides = [1, 1]} : vector<8x512xf32> to vector<8x128xf32>
    %711 = arith.negf %710 : vector<8x128xf32>
    %712 = math.exp %711 : vector<8x128xf32>
    %cst_278 = arith.constant 1.000000e+00 : f32
    %713 = vector.broadcast %cst_278 : f32 to vector<8x128xf32>
    %714 = arith.addf %713, %712 : vector<8x128xf32>
    %715 = arith.divf %713, %714 : vector<8x128xf32>
    %716 = vector.extract_strided_slice %709 {offsets = [0, 128], sizes = [8, 128], strides = [1, 1]} : vector<8x512xf32> to vector<8x128xf32>
    %717 = arith.negf %716 : vector<8x128xf32>
    %718 = math.exp %717 : vector<8x128xf32>
    %cst_279 = arith.constant 1.000000e+00 : f32
    %719 = vector.broadcast %cst_279 : f32 to vector<8x128xf32>
    %720 = arith.addf %719, %718 : vector<8x128xf32>
    %721 = arith.divf %719, %720 : vector<8x128xf32>
    %722 = vector.extract_strided_slice %709 {offsets = [0, 256], sizes = [8, 128], strides = [1, 1]} : vector<8x512xf32> to vector<8x128xf32>
    %723 = math.tanh %722 : vector<8x128xf32>
    %724 = vector.extract_strided_slice %709 {offsets = [0, 384], sizes = [8, 128], strides = [1, 1]} : vector<8x512xf32> to vector<8x128xf32>
    %725 = arith.negf %724 : vector<8x128xf32>
    %726 = math.exp %725 : vector<8x128xf32>
    %cst_280 = arith.constant 1.000000e+00 : f32
    %727 = vector.broadcast %cst_280 : f32 to vector<8x128xf32>
    %728 = arith.addf %727, %726 : vector<8x128xf32>
    %729 = arith.divf %727, %728 : vector<8x128xf32>
    %730 = arith.mulf %721, %699 : vector<8x128xf32>
    %731 = arith.mulf %715, %723 : vector<8x128xf32>
    %732 = arith.addf %730, %731 : vector<8x128xf32>
    %733 = math.tanh %732 : vector<8x128xf32>
    %734 = arith.mulf %729, %733 : vector<8x128xf32>
    %c32_281 = arith.constant 32 : index
    %c0_282 = arith.constant 0 : index
    %735 = vector.load %arg1[%c32_281, %c0_282] : memref<64x128xf32, #tpu.memory_space<vmem>>, vector<8x128xf32>
    %c24_283 = arith.constant 24 : index
    %c0_284 = arith.constant 0 : index
    %736 = vector.load %arg2[%c24_283, %c0_284] : memref<64x128xf32, #tpu.memory_space<vmem>>, vector<8x128xf32>
    %737 = arith.addf %735, %736 : vector<8x128xf32>
    %cst_285 = arith.constant 5.000000e-01 : f32
    %738 = vector.broadcast %cst_285 : f32 to vector<8x128xf32>
    %739 = arith.cmpf ogt, %737, %738 : vector<8x128xf32>
    %740 = arith.select %739, %734, %698 : vector<8x128xi1>, vector<8x128xf32>
    %741 = arith.select %739, %732, %699 : vector<8x128xi1>, vector<8x128xf32>
    %c40_286 = arith.constant 40 : index
    %c0_287 = arith.constant 0 : index
    %742 = vector.load %arg16[%c40_286, %c0_287] : memref<64x512xf32, #tpu.memory_space<vmem>>, vector<8x512xf32>
    %c16_288 = arith.constant 16 : index
    %c0_289 = arith.constant 0 : index
    %743 = vector.load %arg16[%c16_288, %c0_289] : memref<64x512xf32, #tpu.memory_space<vmem>>, vector<8x512xf32>
    %cst_290 = arith.constant 5.000000e-01 : f32
    %744 = vector.broadcast %cst_290 : f32 to vector<1x512xf32>
    %745 = arith.cmpf ogt, %26, %744 : vector<1x512xf32>
    %746 = vector.shape_cast %745 : vector<1x512xi1> to vector<1x512xi1>
    %747 = vector.broadcast %746 : vector<1x512xi1> to vector<8x512xi1>
    %748 = arith.select %747, %742, %743 : vector<8x512xi1>, vector<8x512xf32>
    %c0_291 = arith.constant 0 : index
    %c0_292 = arith.constant 0 : index
    %749 = vector.load %arg9[%c0_291, %c0_292] : memref<128x512xf32, #tpu.memory_space<vmem>>, vector<128x512xf32>
    %cst_293 = arith.constant dense<0.000000e+00> : vector<8x512xf32>
    %750 = tpu.matmul %740, %749, %cst_293 {dimension_numbers = #tpu.dot_dimension_numbers<[1], [0], [0], [1], [0, 0, 1, 1], [], []>} : vector<8x128xf32>, vector<128x512xf32>, vector<8x512xf32> -> vector<8x512xf32>
    %751 = arith.addf %748, %750 : vector<8x512xf32>
    %752 = vector.extract_strided_slice %751 {offsets = [0, 0], sizes = [8, 128], strides = [1, 1]} : vector<8x512xf32> to vector<8x128xf32>
    %753 = arith.negf %752 : vector<8x128xf32>
    %754 = math.exp %753 : vector<8x128xf32>
    %cst_294 = arith.constant 1.000000e+00 : f32
    %755 = vector.broadcast %cst_294 : f32 to vector<8x128xf32>
    %756 = arith.addf %755, %754 : vector<8x128xf32>
    %757 = arith.divf %755, %756 : vector<8x128xf32>
    %758 = vector.extract_strided_slice %751 {offsets = [0, 128], sizes = [8, 128], strides = [1, 1]} : vector<8x512xf32> to vector<8x128xf32>
    %759 = arith.negf %758 : vector<8x128xf32>
    %760 = math.exp %759 : vector<8x128xf32>
    %cst_295 = arith.constant 1.000000e+00 : f32
    %761 = vector.broadcast %cst_295 : f32 to vector<8x128xf32>
    %762 = arith.addf %761, %760 : vector<8x128xf32>
    %763 = arith.divf %761, %762 : vector<8x128xf32>
    %764 = vector.extract_strided_slice %751 {offsets = [0, 256], sizes = [8, 128], strides = [1, 1]} : vector<8x512xf32> to vector<8x128xf32>
    %765 = math.tanh %764 : vector<8x128xf32>
    %766 = vector.extract_strided_slice %751 {offsets = [0, 384], sizes = [8, 128], strides = [1, 1]} : vector<8x512xf32> to vector<8x128xf32>
    %767 = arith.negf %766 : vector<8x128xf32>
    %768 = math.exp %767 : vector<8x128xf32>
    %cst_296 = arith.constant 1.000000e+00 : f32
    %769 = vector.broadcast %cst_296 : f32 to vector<8x128xf32>
    %770 = arith.addf %769, %768 : vector<8x128xf32>
    %771 = arith.divf %769, %770 : vector<8x128xf32>
    %772 = arith.mulf %763, %741 : vector<8x128xf32>
    %773 = arith.mulf %757, %765 : vector<8x128xf32>
    %774 = arith.addf %772, %773 : vector<8x128xf32>
    %775 = math.tanh %774 : vector<8x128xf32>
    %776 = arith.mulf %771, %775 : vector<8x128xf32>
    %c40_297 = arith.constant 40 : index
    %c0_298 = arith.constant 0 : index
    %777 = vector.load %arg1[%c40_297, %c0_298] : memref<64x128xf32, #tpu.memory_space<vmem>>, vector<8x128xf32>
    %c16_299 = arith.constant 16 : index
    %c0_300 = arith.constant 0 : index
    %778 = vector.load %arg2[%c16_299, %c0_300] : memref<64x128xf32, #tpu.memory_space<vmem>>, vector<8x128xf32>
    %779 = arith.addf %777, %778 : vector<8x128xf32>
    %cst_301 = arith.constant 5.000000e-01 : f32
    %780 = vector.broadcast %cst_301 : f32 to vector<8x128xf32>
    %781 = arith.cmpf ogt, %779, %780 : vector<8x128xf32>
    %782 = arith.select %781, %776, %740 : vector<8x128xi1>, vector<8x128xf32>
    %783 = arith.select %781, %774, %741 : vector<8x128xi1>, vector<8x128xf32>
    %c48_302 = arith.constant 48 : index
    %c0_303 = arith.constant 0 : index
    %784 = vector.load %arg16[%c48_302, %c0_303] : memref<64x512xf32, #tpu.memory_space<vmem>>, vector<8x512xf32>
    %c8_304 = arith.constant 8 : index
    %c0_305 = arith.constant 0 : index
    %785 = vector.load %arg16[%c8_304, %c0_305] : memref<64x512xf32, #tpu.memory_space<vmem>>, vector<8x512xf32>
    %cst_306 = arith.constant 5.000000e-01 : f32
    %786 = vector.broadcast %cst_306 : f32 to vector<1x512xf32>
    %787 = arith.cmpf ogt, %26, %786 : vector<1x512xf32>
    %788 = vector.shape_cast %787 : vector<1x512xi1> to vector<1x512xi1>
    %789 = vector.broadcast %788 : vector<1x512xi1> to vector<8x512xi1>
    %790 = arith.select %789, %784, %785 : vector<8x512xi1>, vector<8x512xf32>
    %c0_307 = arith.constant 0 : index
    %c0_308 = arith.constant 0 : index
    %791 = vector.load %arg9[%c0_307, %c0_308] : memref<128x512xf32, #tpu.memory_space<vmem>>, vector<128x512xf32>
    %cst_309 = arith.constant dense<0.000000e+00> : vector<8x512xf32>
    %792 = tpu.matmul %782, %791, %cst_309 {dimension_numbers = #tpu.dot_dimension_numbers<[1], [0], [0], [1], [0, 0, 1, 1], [], []>} : vector<8x128xf32>, vector<128x512xf32>, vector<8x512xf32> -> vector<8x512xf32>
    %793 = arith.addf %790, %792 : vector<8x512xf32>
    %794 = vector.extract_strided_slice %793 {offsets = [0, 0], sizes = [8, 128], strides = [1, 1]} : vector<8x512xf32> to vector<8x128xf32>
    %795 = arith.negf %794 : vector<8x128xf32>
    %796 = math.exp %795 : vector<8x128xf32>
    %cst_310 = arith.constant 1.000000e+00 : f32
    %797 = vector.broadcast %cst_310 : f32 to vector<8x128xf32>
    %798 = arith.addf %797, %796 : vector<8x128xf32>
    %799 = arith.divf %797, %798 : vector<8x128xf32>
    %800 = vector.extract_strided_slice %793 {offsets = [0, 128], sizes = [8, 128], strides = [1, 1]} : vector<8x512xf32> to vector<8x128xf32>
    %801 = arith.negf %800 : vector<8x128xf32>
    %802 = math.exp %801 : vector<8x128xf32>
    %cst_311 = arith.constant 1.000000e+00 : f32
    %803 = vector.broadcast %cst_311 : f32 to vector<8x128xf32>
    %804 = arith.addf %803, %802 : vector<8x128xf32>
    %805 = arith.divf %803, %804 : vector<8x128xf32>
    %806 = vector.extract_strided_slice %793 {offsets = [0, 256], sizes = [8, 128], strides = [1, 1]} : vector<8x512xf32> to vector<8x128xf32>
    %807 = math.tanh %806 : vector<8x128xf32>
    %808 = vector.extract_strided_slice %793 {offsets = [0, 384], sizes = [8, 128], strides = [1, 1]} : vector<8x512xf32> to vector<8x128xf32>
    %809 = arith.negf %808 : vector<8x128xf32>
    %810 = math.exp %809 : vector<8x128xf32>
    %cst_312 = arith.constant 1.000000e+00 : f32
    %811 = vector.broadcast %cst_312 : f32 to vector<8x128xf32>
    %812 = arith.addf %811, %810 : vector<8x128xf32>
    %813 = arith.divf %811, %812 : vector<8x128xf32>
    %814 = arith.mulf %805, %783 : vector<8x128xf32>
    %815 = arith.mulf %799, %807 : vector<8x128xf32>
    %816 = arith.addf %814, %815 : vector<8x128xf32>
    %817 = math.tanh %816 : vector<8x128xf32>
    %818 = arith.mulf %813, %817 : vector<8x128xf32>
    %c48_313 = arith.constant 48 : index
    %c0_314 = arith.constant 0 : index
    %819 = vector.load %arg1[%c48_313, %c0_314] : memref<64x128xf32, #tpu.memory_space<vmem>>, vector<8x128xf32>
    %c8_315 = arith.constant 8 : index
    %c0_316 = arith.constant 0 : index
    %820 = vector.load %arg2[%c8_315, %c0_316] : memref<64x128xf32, #tpu.memory_space<vmem>>, vector<8x128xf32>
    %821 = arith.addf %819, %820 : vector<8x128xf32>
    %cst_317 = arith.constant 5.000000e-01 : f32
    %822 = vector.broadcast %cst_317 : f32 to vector<8x128xf32>
    %823 = arith.cmpf ogt, %821, %822 : vector<8x128xf32>
    %824 = arith.select %823, %818, %782 : vector<8x128xi1>, vector<8x128xf32>
    %825 = arith.select %823, %816, %783 : vector<8x128xi1>, vector<8x128xf32>
    %c56_318 = arith.constant 56 : index
    %c0_319 = arith.constant 0 : index
    %826 = vector.load %arg16[%c56_318, %c0_319] : memref<64x512xf32, #tpu.memory_space<vmem>>, vector<8x512xf32>
    %c0_320 = arith.constant 0 : index
    %c0_321 = arith.constant 0 : index
    %827 = vector.load %arg16[%c0_320, %c0_321] : memref<64x512xf32, #tpu.memory_space<vmem>>, vector<8x512xf32>
    %cst_322 = arith.constant 5.000000e-01 : f32
    %828 = vector.broadcast %cst_322 : f32 to vector<1x512xf32>
    %829 = arith.cmpf ogt, %26, %828 : vector<1x512xf32>
    %830 = vector.shape_cast %829 : vector<1x512xi1> to vector<1x512xi1>
    %831 = vector.broadcast %830 : vector<1x512xi1> to vector<8x512xi1>
    %832 = arith.select %831, %826, %827 : vector<8x512xi1>, vector<8x512xf32>
    %c0_323 = arith.constant 0 : index
    %c0_324 = arith.constant 0 : index
    %833 = vector.load %arg9[%c0_323, %c0_324] : memref<128x512xf32, #tpu.memory_space<vmem>>, vector<128x512xf32>
    %cst_325 = arith.constant dense<0.000000e+00> : vector<8x512xf32>
    %834 = tpu.matmul %824, %833, %cst_325 {dimension_numbers = #tpu.dot_dimension_numbers<[1], [0], [0], [1], [0, 0, 1, 1], [], []>} : vector<8x128xf32>, vector<128x512xf32>, vector<8x512xf32> -> vector<8x512xf32>
    %835 = arith.addf %832, %834 : vector<8x512xf32>
    %836 = vector.extract_strided_slice %835 {offsets = [0, 0], sizes = [8, 128], strides = [1, 1]} : vector<8x512xf32> to vector<8x128xf32>
    %837 = arith.negf %836 : vector<8x128xf32>
    %838 = math.exp %837 : vector<8x128xf32>
    %cst_326 = arith.constant 1.000000e+00 : f32
    %839 = vector.broadcast %cst_326 : f32 to vector<8x128xf32>
    %840 = arith.addf %839, %838 : vector<8x128xf32>
    %841 = arith.divf %839, %840 : vector<8x128xf32>
    %842 = vector.extract_strided_slice %835 {offsets = [0, 128], sizes = [8, 128], strides = [1, 1]} : vector<8x512xf32> to vector<8x128xf32>
    %843 = arith.negf %842 : vector<8x128xf32>
    %844 = math.exp %843 : vector<8x128xf32>
    %cst_327 = arith.constant 1.000000e+00 : f32
    %845 = vector.broadcast %cst_327 : f32 to vector<8x128xf32>
    %846 = arith.addf %845, %844 : vector<8x128xf32>
    %847 = arith.divf %845, %846 : vector<8x128xf32>
    %848 = vector.extract_strided_slice %835 {offsets = [0, 256], sizes = [8, 128], strides = [1, 1]} : vector<8x512xf32> to vector<8x128xf32>
    %849 = math.tanh %848 : vector<8x128xf32>
    %850 = vector.extract_strided_slice %835 {offsets = [0, 384], sizes = [8, 128], strides = [1, 1]} : vector<8x512xf32> to vector<8x128xf32>
    %851 = arith.negf %850 : vector<8x128xf32>
    %852 = math.exp %851 : vector<8x128xf32>
    %cst_328 = arith.constant 1.000000e+00 : f32
    %853 = vector.broadcast %cst_328 : f32 to vector<8x128xf32>
    %854 = arith.addf %853, %852 : vector<8x128xf32>
    %855 = arith.divf %853, %854 : vector<8x128xf32>
    %856 = arith.mulf %847, %825 : vector<8x128xf32>
    %857 = arith.mulf %841, %849 : vector<8x128xf32>
    %858 = arith.addf %856, %857 : vector<8x128xf32>
    %859 = math.tanh %858 : vector<8x128xf32>
    %860 = arith.mulf %855, %859 : vector<8x128xf32>
    %c56_329 = arith.constant 56 : index
    %c0_330 = arith.constant 0 : index
    %861 = vector.load %arg1[%c56_329, %c0_330] : memref<64x128xf32, #tpu.memory_space<vmem>>, vector<8x128xf32>
    %c0_331 = arith.constant 0 : index
    %c0_332 = arith.constant 0 : index
    %862 = vector.load %arg2[%c0_331, %c0_332] : memref<64x128xf32, #tpu.memory_space<vmem>>, vector<8x128xf32>
    %863 = arith.addf %861, %862 : vector<8x128xf32>
    %cst_333 = arith.constant 5.000000e-01 : f32
    %864 = vector.broadcast %cst_333 : f32 to vector<8x128xf32>
    %865 = arith.cmpf ogt, %863, %864 : vector<8x128xf32>
    %866 = arith.select %865, %860, %824 : vector<8x128xi1>, vector<8x128xf32>
    %867 = tpu.concatenate %398, %866 in 1 : vector<8x128xf32>, vector<8x128xf32> -> vector<8x256xf32>
    %c0_334 = arith.constant 0 : index
    %c0_335 = arith.constant 0 : index
    %868 = vector.load %arg11[%c0_334, %c0_335] : memref<256x128xf32, #tpu.memory_space<vmem>>, vector<256x128xf32>
    %cst_336 = arith.constant dense<0.000000e+00> : vector<8x128xf32>
    %869 = tpu.matmul %867, %868, %cst_336 {dimension_numbers = #tpu.dot_dimension_numbers<[1], [0], [0], [1], [0, 0, 1, 1], [], []>} : vector<8x256xf32>, vector<256x128xf32>, vector<8x128xf32> -> vector<8x128xf32>
    %c0_337 = arith.constant 0 : index
    %c0_338 = arith.constant 0 : index
    %870 = vector.load %arg12[%c0_337, %c0_338] : memref<1x128xf32, #tpu.memory_space<vmem>>, vector<1x128xf32>
    %871 = vector.broadcast %870 : vector<1x128xf32> to vector<8x128xf32>
    %872 = arith.addf %869, %871 : vector<8x128xf32>
    %cst_339 = arith.constant 0.000000e+00 : f32
    %873 = vector.broadcast %cst_339 : f32 to vector<8x128xf32>
    %874 = arith.maximumf %872, %873 : vector<8x128xf32>
    %c0_340 = arith.constant 0 : index
    %c0_341 = arith.constant 0 : index
    %875 = vector.load %arg13[%c0_340, %c0_341] : memref<128x128xf32, #tpu.memory_space<vmem>>, vector<128x128xf32>
    %cst_342 = arith.constant dense<0.000000e+00> : vector<8x128xf32>
    %876 = tpu.matmul %874, %875, %cst_342 {dimension_numbers = #tpu.dot_dimension_numbers<[1], [0], [0], [1], [0, 0, 1, 1], [], []>} : vector<8x128xf32>, vector<128x128xf32>, vector<8x128xf32> -> vector<8x128xf32>
    %c0_343 = arith.constant 0 : index
    %c0_344 = arith.constant 0 : index
    %877 = vector.load %arg14[%c0_343, %c0_344] : memref<1x128xf32, #tpu.memory_space<vmem>>, vector<1x128xf32>
    %878 = vector.broadcast %877 : vector<1x128xf32> to vector<8x128xf32>
    %879 = arith.addf %876, %878 : vector<8x128xf32>
    %c0_345 = arith.constant 0 : index
    %c0_346 = arith.constant 0 : index
    %880 = vector.load %arg15[%c0_345, %c0_346] : memref<8x128xf32, #tpu.memory_space<vmem>>, vector<8x128xf32>
    tpu.vector_store %arg15[%c0_345, %c0_346], %879 {strides = array<i32>} : memref<8x128xf32, #tpu.memory_space<vmem>>, vector<8x128xf32>,
    return
  }
}

</mosaic_0001>

<llo_original>
// kernel: lflstm_forward.1
$region0: #{lflstm_forward.1}
  #allocation0 [shape = 'u32[]', space=smem, size = 0x4, offset = 0x4, fixed_abs, tag = 'smem constant byte address 0x4 - core index']
  #allocation1 [shape = 'u32[72,128]{1,0:T(1,128)}', space=vmem, size = 0x9000, scoped, tag = 'internal scratch']
  #allocation2 [shape = 'f32[64,512]{1,0:T(8,128)}', space=vmem, size = 0x20000, scoped, tag = 'scratch operand']
  #allocation3 [shape = 'f32[64,128]{1,0:T(8,128)}', space=vmem, size = 0x8000, scoped, tag = 'scratch operand']
  #allocation4 [shape = 'f32[64,128]{1,0:T(8,128)}', space=vmem, size = 0x8000, scoped, tag = 'scratch operand']
  %s0 = inlined_call_operand.vmem [shape: f32[64,128], index: 0, kind: input, shape index: {}]
  %s1 = inlined_call_operand.vmem [shape: f32[64,128], index: 1, kind: input, shape index: {}]
  %s2 = inlined_call_operand.vmem [shape: f32[64,128], index: 2, kind: input, shape index: {}]
  %s3 = inlined_call_operand.hbm [shape: f32[128,512], index: 3, kind: input, shape index: {}]
  %s4 = inlined_call_operand.hbm [shape: f32[128,512], index: 4, kind: input, shape index: {}]
  %s5 = inlined_call_operand.vmem [shape: f32[1,512], index: 5, kind: input, shape index: {}]
  %s6 = inlined_call_operand.vmem [shape: f32[1,128], index: 6, kind: input, shape index: {}]
  %s7 = inlined_call_operand.vmem [shape: f32[1,128], index: 7, kind: input, shape index: {}]
  %s8 = inlined_call_operand.hbm [shape: f32[128,512], index: 8, kind: input, shape index: {}]
  %s9 = inlined_call_operand.hbm [shape: f32[128,512], index: 9, kind: input, shape index: {}]
  %s10 = inlined_call_operand.vmem [shape: f32[1,512], index: 10, kind: input, shape index: {}]
  %s11 = inlined_call_operand.vmem [shape: f32[256,128], index: 11, kind: input, shape index: {}]
  %s12 = inlined_call_operand.vmem [shape: f32[1,128], index: 12, kind: input, shape index: {}]
  %s13 = inlined_call_operand.vmem [shape: f32[128,128], index: 13, kind: input, shape index: {}]
  %s14 = inlined_call_operand.vmem [shape: f32[1,128], index: 14, kind: input, shape index: {}]
  %s15 = inlined_call_operand.vmem [shape: f32[8,128], index: 15, kind: output, shape index: {}]
  %s16 = sld [smem:[#allocation0]]
  $region86: #{lflstm_forward.1} parent=0
    _
  %s18 = ssub.s32 1, %s16
  %s19 = scalar_select 0, %s18, %s16
  $region1: #{lflstm_forward.1} parent=0
    #allocation5 [shape = 'u8[262144]{0}', space=vmem, size = 0x40000, scoped, tag = 'input window, operand 3, single buffered']
    #allocation6 [shape = 's32[1]{0}', space=sflag, size = 0x4, scoped, tag = 'scoped memory for lflstm_forward.1']
    #allocation7 [shape = 'u8[262144]{0}', space=vmem, size = 0x40000, scoped, tag = 'input window, operand 4, single buffered']
    #allocation8 [shape = 's32[1]{0}', space=sflag, size = 0x4, scoped, tag = 'scoped memory for lflstm_forward.1']
    #allocation9 [shape = 'u8[262144]{0}', space=vmem, size = 0x40000, scoped, tag = 'input window, operand 8, single buffered']
    #allocation10 [shape = 'u8[262144]{0}', space=vmem, size = 0x40000, scoped, tag = 'input window, operand 9, single buffered']
    #allocation11 [shape = 's32[1]{0}', space=sflag, size = 0x4, scoped, tag = 'scoped memory for lflstm_forward.1']
    %20 = vsyncpa [#allocation6], 0
    %21 = vsyncpa [#allocation8], 0
    %22 = vsyncpa [#allocation11], 0
    // Predicated region
    $region2: #{lflstm_forward.1} parent=1 // pred_check
      _
    $region3: #{lflstm_forward.1} parent=1 // pred_check_branch
      %24 = sbr.rel (0) target = $region5
    $region4: #{lflstm_forward.1} parent=1 // pred_region
      _
    $region5: #{lflstm_forward.1} parent=1 // pred_fallthru
      _
    // Predicated region
    $region6: #{lflstm_forward.1} parent=1 // pred_check
      _
    $region7: #{lflstm_forward.1} parent=1 // pred_check_branch
      %26 = sbr.rel (0) target = $region9
    $region8: #{lflstm_forward.1} parent=1 // pred_region
      _
    $region9: #{lflstm_forward.1} parent=1 // pred_fallthru
      _
    // Predicated region
    $region10: #{lflstm_forward.1} parent=1 // pred_check
      _
    $region11: #{lflstm_forward.1} parent=1 // pred_check_branch
      %28 = sbr.rel (0) target = $region13
    $region12: #{lflstm_forward.1} parent=1 // pred_region
      _
    $region13: #{lflstm_forward.1} parent=1 // pred_fallthru
      _
    // Predicated region
    $region14: #{lflstm_forward.1} parent=1 // pred_check
      _
    $region15: #{lflstm_forward.1} parent=1 // pred_check_branch
      %30 = sbr.rel (0) target = $region17
    $region16: #{lflstm_forward.1} parent=1 // pred_region
      %32 = vsyncadd [#allocation6], 0
      %s33 = sshll.u32 %s3, 4
      %s34 = int_to_ptr.hbm [resolvable:$true] %s33
      %s35 = sshll.u32 [#allocation5], 4
      %s36 = int_to_ptr.vmem [resolvable:$true] %s35
      %41 = dma.hbm_to_vmem [thread:$0]  %s34, 8192, %s36, [#allocation6], 512, 512, 32
    $region17: #{lflstm_forward.1} parent=1 // pred_fallthru
      _
    // Predicated region
    $region18: #{lflstm_forward.1} parent=1 // pred_check
      _
    $region19: #{lflstm_forward.1} parent=1 // pred_check_branch
      %43 = sbr.rel (0) target = $region21
    $region20: #{lflstm_forward.1} parent=1 // pred_region
      %45 = vsyncadd [#allocation8], 0
      %s46 = sshll.u32 %s4, 4
      %s47 = int_to_ptr.hbm [resolvable:$true] %s46
      %s48 = sshll.u32 [#allocation7], 4
      %s49 = int_to_ptr.vmem [resolvable:$true] %s48
      %54 = dma.hbm_to_vmem [thread:$0]  %s47, 8192, %s49, [#allocation8], 512, 512, 32
    $region21: #{lflstm_forward.1} parent=1 // pred_fallthru
      _
    // Predicated region
    $region22: #{lflstm_forward.1} parent=1 // pred_check
      _
    $region23: #{lflstm_forward.1} parent=1 // pred_check_branch
      %56 = sbr.rel (0) target = $region25
    $region24: #{lflstm_forward.1} parent=1 // pred_region
      _
    $region25: #{lflstm_forward.1} parent=1 // pred_fallthru
      _
    // Predicated region
    $region26: #{lflstm_forward.1} parent=1 // pred_check
      _
    $region27: #{lflstm_forward.1} parent=1 // pred_check_branch
      %58 = sbr.rel (0) target = $region29
    $region28: #{lflstm_forward.1} parent=1 // pred_region
      _
    $region29: #{lflstm_forward.1} parent=1 // pred_fallthru
      _
    // Predicated region
    $region30: #{lflstm_forward.1} parent=1 // pred_check
      _
    $region31: #{lflstm_forward.1} parent=1 // pred_check_branch
      %60 = sbr.rel (0) target = $region33
    $region32: #{lflstm_forward.1} parent=1 // pred_region
      _
    $region33: #{lflstm_forward.1} parent=1 // pred_fallthru
      _
    // Predicated region
    $region34: #{lflstm_forward.1} parent=1 // pred_check
      _
    $region35: #{lflstm_forward.1} parent=1 // pred_check_branch
      %62 = sbr.rel (0) target = $region37
    $region36: #{lflstm_forward.1} parent=1 // pred_region
      %64 = vsyncadd [#allocation8], 0
      %s65 = sshll.u32 %s8, 4
      %s66 = int_to_ptr.hbm [resolvable:$true] %s65
      %s67 = sshll.u32 [#allocation9], 4
      %s68 = int_to_ptr.vmem [resolvable:$true] %s67
      %73 = dma.hbm_to_vmem [thread:$0]  %s66, 8192, %s68, [#allocation8], 512, 512, 32
    $region37: #{lflstm_forward.1} parent=1 // pred_fallthru
      _
    // Predicated region
    $region38: #{lflstm_forward.1} parent=1 // pred_check
      _
    $region39: #{lflstm_forward.1} parent=1 // pred_check_branch
      %75 = sbr.rel (0) target = $region41
    $region40: #{lflstm_forward.1} parent=1 // pred_region
      %77 = vsyncadd [#allocation11], 0
      %s78 = sshll.u32 %s9, 4
      %s79 = int_to_ptr.hbm [resolvable:$true] %s78
      %s80 = sshll.u32 [#allocation10], 4
      %s81 = int_to_ptr.vmem [resolvable:$true] %s80
      %86 = dma.hbm_to_vmem [thread:$0]  %s79, 8192, %s81, [#allocation11], 512, 512, 32
    $region41: #{lflstm_forward.1} parent=1 // pred_fallthru
      _
    // Predicated region
    $region42: #{lflstm_forward.1} parent=1 // pred_check
      _
    $region43: #{lflstm_forward.1} parent=1 // pred_check_branch
      %88 = sbr.rel (0) target = $region45
    $region44: #{lflstm_forward.1} parent=1 // pred_region
      _
    $region45: #{lflstm_forward.1} parent=1 // pred_fallthru
      _
    // Predicated region
    $region46: #{lflstm_forward.1} parent=1 // pred_check
      _
    $region47: #{lflstm_forward.1} parent=1 // pred_check_branch
      %90 = sbr.rel (0) target = $region49
    $region48: #{lflstm_forward.1} parent=1 // pred_region
      _
    $region49: #{lflstm_forward.1} parent=1 // pred_fallthru
      _
    // Predicated region
    $region50: #{lflstm_forward.1} parent=1 // pred_check
      _
    $region51: #{lflstm_forward.1} parent=1 // pred_check_branch
      %92 = sbr.rel (0) target = $region53
    $region52: #{lflstm_forward.1} parent=1 // pred_region
      _
    $region53: #{lflstm_forward.1} parent=1 // pred_fallthru
      _
    // Predicated region
    $region54: #{lflstm_forward.1} parent=1 // pred_check
      _
    $region55: #{lflstm_forward.1} parent=1 // pred_check_branch
      %94 = sbr.rel (0) target = $region57
    $region56: #{lflstm_forward.1} parent=1 // pred_region
      _
    $region57: #{lflstm_forward.1} parent=1 // pred_fallthru
      _
    // Predicated region
    $region58: #{lflstm_forward.1} parent=1 // pred_check
      _
    $region59: #{lflstm_forward.1} parent=1 // pred_check_branch
      %96 = sbr.rel (0) target = $region61
    $region60: #{lflstm_forward.1} parent=1 // pred_region
      _
    $region61: #{lflstm_forward.1} parent=1 // pred_fallthru
      _
    // Predicated region
    $region62: #{lflstm_forward.1} parent=1 // pred_check
      _
    $region63: #{lflstm_forward.1} parent=1 // pred_check_branch
      %98 = sbr.rel (0) target = $region65
    $region64: #{lflstm_forward.1} parent=1 // pred_region
      %100 = dma.done [#allocation6], 8192
    $region65: #{lflstm_forward.1} parent=1 // pred_fallthru
      _
    // Predicated region
    $region66: #{lflstm_forward.1} parent=1 // pred_check
      _
    $region67: #{lflstm_forward.1} parent=1 // pred_check_branch
      %102 = sbr.rel (0) target = $region69
    $region68: #{lflstm_forward.1} parent=1 // pred_region
      %104 = dma.done [#allocation8], 8192
    $region69: #{lflstm_forward.1} parent=1 // pred_fallthru
      _
    // Predicated region
    $region70: #{lflstm_forward.1} parent=1 // pred_check
      _
    $region71: #{lflstm_forward.1} parent=1 // pred_check_branch
      %106 = sbr.rel (0) target = $region73
    $region72: #{lflstm_forward.1} parent=1 // pred_region
      %108 = dma.done [#allocation8], 8192
    $region73: #{lflstm_forward.1} parent=1 // pred_fallthru
      _
    // Predicated region
    $region74: #{lflstm_forward.1} parent=1 // pred_check
      _
    $region75: #{lflstm_forward.1} parent=1 // pred_check_branch
      %110 = sbr.rel (0) target = $region77
    $region76: #{lflstm_forward.1} parent=1 // pred_region
      %112 = dma.done [#allocation11], 8192
    $region77: #{lflstm_forward.1} parent=1 // pred_fallthru
      _
    %v113 = vlaneseq
    %v114 = vand.u32 %v113, 127
    %vm115 = vcmp.ge.s32.totalorder %v114, 0
    %vm116 = vcmp.lt.s32.totalorder %v114, 24
    %vm117 = vmand %vm115, %vm116
    %v118 = vsel %vm117, 1, 0
    %v119 = vcvt.s32.f32 %v118
    %v120 = vadd.f32 %v119, 0.0
    %vm121 = vcmp.ge.s32.totalorder %v114, 48
    %vm122 = vcmp.lt.s32.totalorder %v114, 60
    %vm123 = vmand %vm121, %vm122
    %v124 = vsel %vm123, 1, 0
    %v125 = vcvt.s32.f32 %v124
    %v126 = vadd.f32 %v120, %v125
    %vm127 = vcmp.ge.s32.totalorder %v114, 72
    %vm128 = vcmp.lt.s32.totalorder %v114, 90
    %vm129 = vmand %vm127, %vm128
    %v130 = vsel %vm129, 1, 0
    %v131 = vcvt.s32.f32 %v130
    %v132 = vadd.f32 %v126, %v131
    %v133 = vld [vmem:[%s0] sm:$0xff]
    %v134 = vld [vmem:[%s0 + $0x8] sm:$0xff]
    %v135 = vld [vmem:[%s0 + $0x10] sm:$0xff]
    %v136 = vld [vmem:[%s0 + $0x18] sm:$0xff]
    %v137 = vld [vmem:[%s0 + $0x20] sm:$0xff]
    %v138 = vld [vmem:[%s0 + $0x28] sm:$0xff]
    %v139 = vld [vmem:[%s0 + $0x30] sm:$0xff]
    %v140 = vld [vmem:[%s0 + $0x38] sm:$0xff]
    %v141 = vld [vmem:[#allocation5] sm:$0xff]
    %v142 = vld [vmem:[#allocation5 + $0x8] sm:$0xff]
    %v143 = vld [vmem:[#allocation5 + $0x10] sm:$0xff]
    %v144 = vld [vmem:[#allocation5 + $0x18] sm:$0xff]
    %v145 = vld [vmem:[#allocation5 + $0x20] sm:$0xff]
    %v146 = vld [vmem:[#allocation5 + $0x28] sm:$0xff]
    %v147 = vld [vmem:[#allocation5 + $0x30] sm:$0xff]
    %v148 = vld [vmem:[#allocation5 + $0x38] sm:$0xff]
    %v149 = vld [vmem:[#allocation5 + $0x40] sm:$0xff]
    %v150 = vld [vmem:[#allocation5 + $0x48] sm:$0xff]
    %v151 = vld [vmem:[#allocation5 + $0x50] sm:$0xff]
    %v152 = vld [vmem:[#allocation5 + $0x58] sm:$0xff]
    %v153 = vld [vmem:[#allocation5 + $0x60] sm:$0xff]
    %v154 = vld [vmem:[#allocation5 + $0x68] sm:$0xff]
    %v155 = vld [vmem:[#allocation5 + $0x70] sm:$0xff]
    %v156 = vld [vmem:[#allocation5 + $0x78] sm:$0xff]
    %v157 = vld [vmem:[#allocation5 + $0x80] sm:$0xff]
    %v158 = vld [vmem:[#allocation5 + $0x88] sm:$0xff]
    %v159 = vld [vmem:[#allocation5 + $0x90] sm:$0xff]
    %v160 = vld [vmem:[#allocation5 + $0x98] sm:$0xff]
    %v161 = vld [vmem:[#allocation5 + $0xa0] sm:$0xff]
    %v162 = vld [vmem:[#allocation5 + $0xa8] sm:$0xff]
    %v163 = vld [vmem:[#allocation5 + $0xb0] sm:$0xff]
    %v164 = vld [vmem:[#allocation5 + $0xb8] sm:$0xff]
    %v165 = vld [vmem:[#allocation5 + $0xc0] sm:$0xff]
    %v166 = vld [vmem:[#allocation5 + $0xc8] sm:$0xff]
    %v167 = vld [vmem:[#allocation5 + $0xd0] sm:$0xff]
    %v168 = vld [vmem:[#allocation5 + $0xd8] sm:$0xff]
    %v169 = vld [vmem:[#allocation5 + $0xe0] sm:$0xff]
    %v170 = vld [vmem:[#allocation5 + $0xe8] sm:$0xff]
    %v171 = vld [vmem:[#allocation5 + $0xf0] sm:$0xff]
    %v172 = vld [vmem:[#allocation5 + $0xf8] sm:$0xff]
    %v173 = vld [vmem:[#allocation5 + $0x100] sm:$0xff]
    %v174 = vld [vmem:[#allocation5 + $0x108] sm:$0xff]
    %v175 = vld [vmem:[#allocation5 + $0x110] sm:$0xff]
    %v176 = vld [vmem:[#allocation5 + $0x118] sm:$0xff]
    %v177 = vld [vmem:[#allocation5 + $0x120] sm:$0xff]
    %v178 = vld [vmem:[#allocation5 + $0x128] sm:$0xff]
    %v179 = vld [vmem:[#allocation5 + $0x130] sm:$0xff]
    %v180 = vld [vmem:[#allocation5 + $0x138] sm:$0xff]
    %v181 = vld [vmem:[#allocation5 + $0x140] sm:$0xff]
    %v182 = vld [vmem:[#allocation5 + $0x148] sm:$0xff]
    %v183 = vld [vmem:[#allocation5 + $0x150] sm:$0xff]
    %v184 = vld [vmem:[#allocation5 + $0x158] sm:$0xff]
    %v185 = vld [vmem:[#allocation5 + $0x160] sm:$0xff]
    %v186 = vld [vmem:[#allocation5 + $0x168] sm:$0xff]
    %v187 = vld [vmem:[#allocation5 + $0x170] sm:$0xff]
    %v188 = vld [vmem:[#allocation5 + $0x178] sm:$0xff]
    %v189 = vld [vmem:[#allocation5 + $0x180] sm:$0xff]
    %v190 = vld [vmem:[#allocation5 + $0x188] sm:$0xff]
    %v191 = vld [vmem:[#allocation5 + $0x190] sm:$0xff]
    %v192 = vld [vmem:[#allocation5 + $0x198] sm:$0xff]
    %v193 = vld [vmem:[#allocation5 + $0x1a0] sm:$0xff]
    %v194 = vld [vmem:[#allocation5 + $0x1a8] sm:$0xff]
    %v195 = vld [vmem:[#allocation5 + $0x1b0] sm:$0xff]
    %v196 = vld [vmem:[#allocation5 + $0x1b8] sm:$0xff]
    %v197 = vld [vmem:[#allocation5 + $0x1c0] sm:$0xff]
    %v198 = vld [vmem:[#allocation5 + $0x1c8] sm:$0xff]
    %v199 = vld [vmem:[#allocation5 + $0x1d0] sm:$0xff]
    %v200 = vld [vmem:[#allocation5 + $0x1d8] sm:$0xff]
    %v201 = vld [vmem:[#allocation5 + $0x1e0] sm:$0xff]
    %v202 = vld [vmem:[#allocation5 + $0x1e8] sm:$0xff]
    %v203 = vld [vmem:[#allocation5 + $0x1f0] sm:$0xff]
    %v204 = vld [vmem:[#allocation5 + $0x1f8] sm:$0xff]
    %v205 = vld [vmem:[%s5] sm:$0xf]
    %v207 = vperm.slane %v205, 0
    %v208 = vperm.slane %v205, 1
    %v209 = vperm.slane %v205, 2
    %v210 = vperm.slane %v205, 3
    %215 = vmatpush.msra.mxu0 %v201
    %216 = vmatpush.msra.mxu0 %v197
    %217 = vmatpush.msra.mxu0 %v193
    %218 = vmatpush.msra.mxu0 %v189
    %219 = vmatpush.msra.mxu0 %v185
    %220 = vmatpush.msra.mxu0 %v181
    %221 = vmatpush.msra.mxu0 %v177
    %222 = vmatpush.msra.mxu0 %v173
    %223 = vmatpush.msra.mxu0 %v169
    %224 = vmatpush.msra.mxu0 %v165
    %225 = vmatpush.msra.mxu0 %v161
    %226 = vmatpush.msra.mxu0 %v157
    %227 = vmatpush.msra.mxu0 %v153
    %228 = vmatpush.msra.mxu0 %v149
    %229 = vmatpush.msra.mxu0 %v145
    %230 = vmatpush.msra.mxu0 %v141
    %231 = vmatmul.f32.gmra.mxu0 %v133
    %v232 = vpop.f32.mrf.mxu0
    %v233 = vadd.f32 %v207, %v232
    %234 = vmatmul.f32.gmra.mxu0 %v134
    %v235 = vpop.f32.mrf.mxu0
    %v236 = vadd.f32 %v207, %v235
    %237 = vmatmul.f32.gmra.mxu0 %v135
    %v238 = vpop.f32.mrf.mxu0
    %v239 = vadd.f32 %v207, %v238
    %240 = vmatmul.f32.gmra.mxu0 %v136
    %v241 = vpop.f32.mrf.mxu0
    %v242 = vadd.f32 %v207, %v241
    %243 = vmatmul.f32.gmra.mxu0 %v137
    %v244 = vpop.f32.mrf.mxu0
    %v245 = vadd.f32 %v207, %v244
    %246 = vmatmul.f32.gmra.mxu0 %v138
    %v247 = vpop.f32.mrf.mxu0
    %v248 = vadd.f32 %v207, %v247
    %249 = vmatmul.f32.gmra.mxu0 %v139
    %v250 = vpop.f32.mrf.mxu0
    %v251 = vadd.f32 %v207, %v250
    %252 = vmatmul.f32.gmra.mxu0 %v140
    %v253 = vpop.f32.mrf.mxu0
    %v254 = vadd.f32 %v207, %v253
    %255 = vdwg.mxu0
    %256 = vmatpush.msra.mxu0 %v202
    %257 = vmatpush.msra.mxu0 %v198
    %258 = vmatpush.msra.mxu0 %v194
    %259 = vmatpush.msra.mxu0 %v190
    %260 = vmatpush.msra.mxu0 %v186
    %261 = vmatpush.msra.mxu0 %v182
    %262 = vmatpush.msra.mxu0 %v178
    %263 = vmatpush.msra.mxu0 %v174
    %264 = vmatpush.msra.mxu0 %v170
    %265 = vmatpush.msra.mxu0 %v166
    %266 = vmatpush.msra.mxu0 %v162
    %267 = vmatpush.msra.mxu0 %v158
    %268 = vmatpush.msra.mxu0 %v154
    %269 = vmatpush.msra.mxu0 %v150
    %270 = vmatpush.msra.mxu0 %v146
    %271 = vmatpush.msra.mxu0 %v142
    %272 = vmatmul.f32.gmra.mxu0 %v133
    %v273 = vpop.f32.mrf.mxu0
    %v274 = vadd.f32 %v208, %v273
    %275 = vmatmul.f32.gmra.mxu0 %v134
    %v276 = vpop.f32.mrf.mxu0
    %v277 = vadd.f32 %v208, %v276
    %278 = vmatmul.f32.gmra.mxu0 %v135
    %v279 = vpop.f32.mrf.mxu0
    %v280 = vadd.f32 %v208, %v279
    %281 = vmatmul.f32.gmra.mxu0 %v136
    %v282 = vpop.f32.mrf.mxu0
    %v283 = vadd.f32 %v208, %v282
    %284 = vmatmul.f32.gmra.mxu0 %v137
    %v285 = vpop.f32.mrf.mxu0
    %v286 = vadd.f32 %v208, %v285
    %287 = vmatmul.f32.gmra.mxu0 %v138
    %v288 = vpop.f32.mrf.mxu0
    %v289 = vadd.f32 %v208, %v288
    %290 = vmatmul.f32.gmra.mxu0 %v139
    %v291 = vpop.f32.mrf.mxu0
    %v292 = vadd.f32 %v208, %v291
    %293 = vmatmul.f32.gmra.mxu0 %v140
    %v294 = vpop.f32.mrf.mxu0
    %v295 = vadd.f32 %v208, %v294
    %296 = vdwg.mxu0
    %297 = vmatpush.msra.mxu0 %v203
    %298 = vmatpush.msra.mxu0 %v199
    %299 = vmatpush.msra.mxu0 %v195
    %300 = vmatpush.msra.mxu0 %v191
    %301 = vmatpush.msra.mxu0 %v187
    %302 = vmatpush.msra.mxu0 %v183
    %303 = vmatpush.msra.mxu0 %v179
    %304 = vmatpush.msra.mxu0 %v175
    %305 = vmatpush.msra.mxu0 %v171
    %306 = vmatpush.msra.mxu0 %v167
    %307 = vmatpush.msra.mxu0 %v163
    %308 = vmatpush.msra.mxu0 %v159
    %309 = vmatpush.msra.mxu0 %v155
    %310 = vmatpush.msra.mxu0 %v151
    %311 = vmatpush.msra.mxu0 %v147
    %312 = vmatpush.msra.mxu0 %v143
    %313 = vmatmul.f32.gmra.mxu0 %v133
    %v314 = vpop.f32.mrf.mxu0
    %v315 = vadd.f32 %v209, %v314
    %316 = vmatmul.f32.gmra.mxu0 %v134
    %v317 = vpop.f32.mrf.mxu0
    %v318 = vadd.f32 %v209, %v317
    %319 = vmatmul.f32.gmra.mxu0 %v135
    %v320 = vpop.f32.mrf.mxu0
    %v321 = vadd.f32 %v209, %v320
    %322 = vmatmul.f32.gmra.mxu0 %v136
    %v323 = vpop.f32.mrf.mxu0
    %v324 = vadd.f32 %v209, %v323
    %325 = vmatmul.f32.gmra.mxu0 %v137
    %v326 = vpop.f32.mrf.mxu0
    %v327 = vadd.f32 %v209, %v326
    %328 = vmatmul.f32.gmra.mxu0 %v138
    %v329 = vpop.f32.mrf.mxu0
    %v330 = vadd.f32 %v209, %v329
    %331 = vmatmul.f32.gmra.mxu0 %v139
    %v332 = vpop.f32.mrf.mxu0
    %v333 = vadd.f32 %v209, %v332
    %334 = vmatmul.f32.gmra.mxu0 %v140
    %v335 = vpop.f32.mrf.mxu0
    %v336 = vadd.f32 %v209, %v335
    %337 = vdwg.mxu0
    %338 = vmatpush.msra.mxu0 %v204
    %339 = vmatpush.msra.mxu0 %v200
    %340 = vmatpush.msra.mxu0 %v196
    %341 = vmatpush.msra.mxu0 %v192
    %342 = vmatpush.msra.mxu0 %v188
    %343 = vmatpush.msra.mxu0 %v184
    %344 = vmatpush.msra.mxu0 %v180
    %345 = vmatpush.msra.mxu0 %v176
    %346 = vmatpush.msra.mxu0 %v172
    %347 = vmatpush.msra.mxu0 %v168
    %348 = vmatpush.msra.mxu0 %v164
    %349 = vmatpush.msra.mxu0 %v160
    %350 = vmatpush.msra.mxu0 %v156
    %351 = vmatpush.msra.mxu0 %v152
    %352 = vmatpush.msra.mxu0 %v148
    %353 = vmatpush.msra.mxu0 %v144
    %354 = vmatmul.f32.gmra.mxu0 %v133
    %v355 = vpop.f32.mrf.mxu0
    %v356 = vadd.f32 %v210, %v355
    %357 = vmatmul.f32.gmra.mxu0 %v134
    %v358 = vpop.f32.mrf.mxu0
    %v359 = vadd.f32 %v210, %v358
    %360 = vmatmul.f32.gmra.mxu0 %v135
    %v361 = vpop.f32.mrf.mxu0
    %v362 = vadd.f32 %v210, %v361
    %363 = vmatmul.f32.gmra.mxu0 %v136
    %v364 = vpop.f32.mrf.mxu0
    %v365 = vadd.f32 %v210, %v364
    %366 = vmatmul.f32.gmra.mxu0 %v137
    %v367 = vpop.f32.mrf.mxu0
    %v368 = vadd.f32 %v210, %v367
    %369 = vmatmul.f32.gmra.mxu0 %v138
    %v370 = vpop.f32.mrf.mxu0
    %v371 = vadd.f32 %v210, %v370
    %372 = vmatmul.f32.gmra.mxu0 %v139
    %v373 = vpop.f32.mrf.mxu0
    %v374 = vadd.f32 %v210, %v373
    %375 = vmatmul.f32.gmra.mxu0 %v140
    %v376 = vpop.f32.mrf.mxu0
    %v377 = vadd.f32 %v210, %v376
    %378 = vdwg.mxu0
    %379 = vst [vmem:[#allocation2] sm:$0xff] %v233
    %380 = vst [vmem:[#allocation2 + $0x8] sm:$0xff] %v274
    %381 = vst [vmem:[#allocation2 + $0x10] sm:$0xff] %v315
    %382 = vst [vmem:[#allocation2 + $0x18] sm:$0xff] %v356
    %383 = vst [vmem:[#allocation2 + $0x20] sm:$0xff] %v236
    %384 = vst [vmem:[#allocation2 + $0x28] sm:$0xff] %v277
    %385 = vst [vmem:[#allocation2 + $0x30] sm:$0xff] %v318
    %386 = vst [vmem:[#allocation2 + $0x38] sm:$0xff] %v359
    %387 = vst [vmem:[#allocation2 + $0x40] sm:$0xff] %v239
    %388 = vst [vmem:[#allocation2 + $0x48] sm:$0xff] %v280
    %389 = vst [vmem:[#allocation2 + $0x50] sm:$0xff] %v321
    %390 = vst [vmem:[#allocation2 + $0x58] sm:$0xff] %v362
    %391 = vst [vmem:[#allocation2 + $0x60] sm:$0xff] %v242
    %392 = vst [vmem:[#allocation2 + $0x68] sm:$0xff] %v283
    %393 = vst [vmem:[#allocation2 + $0x70] sm:$0xff] %v324
    %394 = vst [vmem:[#allocation2 + $0x78] sm:$0xff] %v365
    %395 = vst [vmem:[#allocation2 + $0x80] sm:$0xff] %v245
    %396 = vst [vmem:[#allocation2 + $0x88] sm:$0xff] %v286
    %397 = vst [vmem:[#allocation2 + $0x90] sm:$0xff] %v327
    %398 = vst [vmem:[#allocation2 + $0x98] sm:$0xff] %v368
    %399 = vst [vmem:[#allocation2 + $0xa0] sm:$0xff] %v248
    %400 = vst [vmem:[#allocation2 + $0xa8] sm:$0xff] %v289
    %401 = vst [vmem:[#allocation2 + $0xb0] sm:$0xff] %v330
    %402 = vst [vmem:[#allocation2 + $0xb8] sm:$0xff] %v371
    %403 = vst [vmem:[#allocation2 + $0xc0] sm:$0xff] %v251
    %404 = vst [vmem:[#allocation2 + $0xc8] sm:$0xff] %v292
    %405 = vst [vmem:[#allocation2 + $0xd0] sm:$0xff] %v333
    %406 = vst [vmem:[#allocation2 + $0xd8] sm:$0xff] %v374
    %407 = vst [vmem:[#allocation2 + $0xe0] sm:$0xff] %v254
    %408 = vst [vmem:[#allocation2 + $0xe8] sm:$0xff] %v295
    %409 = vst [vmem:[#allocation2 + $0xf0] sm:$0xff] %v336
    %410 = vst [vmem:[#allocation2 + $0xf8] sm:$0xff] %v377
    %v411 = vld [vmem:[#allocation2] sm:$0xff]
    %v412 = vld [vmem:[#allocation2 + $0x8] sm:$0xff]
    %v413 = vld [vmem:[#allocation2 + $0x10] sm:$0xff]
    %v414 = vld [vmem:[#allocation2 + $0x18] sm:$0xff]
    %v415 = vld [vmem:[#allocation2 + $0xe0] sm:$0xff]
    %v416 = vld [vmem:[#allocation2 + $0xe8] sm:$0xff]
    %v417 = vld [vmem:[#allocation2 + $0xf0] sm:$0xff]
    %v418 = vld [vmem:[#allocation2 + $0xf8] sm:$0xff]
    %vm419 = vcmp.gt.f32.partialorder %v132, 0.5
    %v420 = vsel %vm419, 1, 0
    %v421 = vperm.slane %v420, 0
    %vm422 = vcmp.eq.s32.totalorder %v421, 1
    %v423 = vsel %vm422, %v411, %v415
    %v424 = vsel %vm422, %v412, %v416
    %v425 = vsel %vm422, %v413, %v417
    %v426 = vsel %vm422, %v414, %v418
    %v427 = vld [vmem:[#allocation7] sm:$0xff]
    %v428 = vld [vmem:[#allocation7 + $0x8] sm:$0xff]
    %v429 = vld [vmem:[#allocation7 + $0x10] sm:$0xff]
    %v430 = vld [vmem:[#allocation7 + $0x18] sm:$0xff]
    %v431 = vld [vmem:[#allocation7 + $0x20] sm:$0xff]
    %v432 = vld [vmem:[#allocation7 + $0x28] sm:$0xff]
    %v433 = vld [vmem:[#allocation7 + $0x30] sm:$0xff]
    %v434 = vld [vmem:[#allocation7 + $0x38] sm:$0xff]
    %v435 = vld [vmem:[#allocation7 + $0x40] sm:$0xff]
    %v436 = vld [vmem:[#allocation7 + $0x48] sm:$0xff]
    %v437 = vld [vmem:[#allocation7 + $0x50] sm:$0xff]
    %v438 = vld [vmem:[#allocation7 + $0x58] sm:$0xff]
    %v439 = vld [vmem:[#allocation7 + $0x60] sm:$0xff]
    %v440 = vld [vmem:[#allocation7 + $0x68] sm:$0xff]
    %v441 = vld [vmem:[#allocation7 + $0x70] sm:$0xff]
    %v442 = vld [vmem:[#allocation7 + $0x78] sm:$0xff]
    %v443 = vld [vmem:[#allocation7 + $0x80] sm:$0xff]
    %v444 = vld [vmem:[#allocation7 + $0x88] sm:$0xff]
    %v445 = vld [vmem:[#allocation7 + $0x90] sm:$0xff]
    %v446 = vld [vmem:[#allocation7 + $0x98] sm:$0xff]
    %v447 = vld [vmem:[#allocation7 + $0xa0] sm:$0xff]
    %v448 = vld [vmem:[#allocation7 + $0xa8] sm:$0xff]
    %v449 = vld [vmem:[#allocation7 + $0xb0] sm:$0xff]
    %v450 = vld [vmem:[#allocation7 + $0xb8] sm:$0xff]
    %v451 = vld [vmem:[#allocation7 + $0xc0] sm:$0xff]
    %v452 = vld [vmem:[#allocation7 + $0xc8] sm:$0xff]
    %v453 = vld [vmem:[#allocation7 + $0xd0] sm:$0xff]
    %v454 = vld [vmem:[#allocation7 + $0xd8] sm:$0xff]
    %v455 = vld [vmem:[#allocation7 + $0xe0] sm:$0xff]
    %v456 = vld [vmem:[#allocation7 + $0xe8] sm:$0xff]
    %v457 = vld [vmem:[#allocation7 + $0xf0] sm:$0xff]
    %v458 = vld [vmem:[#allocation7 + $0xf8] sm:$0xff]
    %v459 = vld [vmem:[#allocation7 + $0x100] sm:$0xff]
    %v460 = vld [vmem:[#allocation7 + $0x108] sm:$0xff]
    %v461 = vld [vmem:[#allocation7 + $0x110] sm:$0xff]
    %v462 = vld [vmem:[#allocation7 + $0x118] sm:$0xff]
    %v463 = vld [vmem:[#allocation7 + $0x120] sm:$0xff]
    %v464 = vld [vmem:[#allocation7 + $0x128] sm:$0xff]
    %v465 = vld [vmem:[#allocation7 + $0x130] sm:$0xff]
    %v466 = vld [vmem:[#allocation7 + $0x138] sm:$0xff]
    %v467 = vld [vmem:[#allocation7 + $0x140] sm:$0xff]
    %v468 = vld [vmem:[#allocation7 + $0x148] sm:$0xff]
    %v469 = vld [vmem:[#allocation7 + $0x150] sm:$0xff]
    %v470 = vld [vmem:[#allocation7 + $0x158] sm:$0xff]
    %v471 = vld [vmem:[#allocation7 + $0x160] sm:$0xff]
    %v472 = vld [vmem:[#allocation7 + $0x168] sm:$0xff]
    %v473 = vld [vmem:[#allocation7 + $0x170] sm:$0xff]
    %v474 = vld [vmem:[#allocation7 + $0x178] sm:$0xff]
    %v475 = vld [vmem:[#allocation7 + $0x180] sm:$0xff]
    %v476 = vld [vmem:[#allocation7 + $0x188] sm:$0xff]
    %v477 = vld [vmem:[#allocation7 + $0x190] sm:$0xff]
    %v478 = vld [vmem:[#allocation7 + $0x198] sm:$0xff]
    %v479 = vld [vmem:[#allocation7 + $0x1a0] sm:$0xff]
    %v480 = vld [vmem:[#allocation7 + $0x1a8] sm:$0xff]
    %v481 = vld [vmem:[#allocation7 + $0x1b0] sm:$0xff]
    %v482 = vld [vmem:[#allocation7 + $0x1b8] sm:$0xff]
    %v483 = vld [vmem:[#allocation7 + $0x1c0] sm:$0xff]
    %v484 = vld [vmem:[#allocation7 + $0x1c8] sm:$0xff]
    %v485 = vld [vmem:[#allocation7 + $0x1d0] sm:$0xff]
    %v486 = vld [vmem:[#allocation7 + $0x1d8] sm:$0xff]
    %v487 = vld [vmem:[#allocation7 + $0x1e0] sm:$0xff]
    %v488 = vld [vmem:[#allocation7 + $0x1e8] sm:$0xff]
    %v489 = vld [vmem:[#allocation7 + $0x1f0] sm:$0xff]
    %v490 = vld [vmem:[#allocation7 + $0x1f8] sm:$0xff]
    %491 = vmatpush.msra.mxu0 %v487
    %492 = vmatpush.msra.mxu0 %v483
    %493 = vmatpush.msra.mxu0 %v479
    %494 = vmatpush.msra.mxu0 %v475
    %495 = vmatpush.msra.mxu0 %v471
    %496 = vmatpush.msra.mxu0 %v467
    %497 = vmatpush.msra.mxu0 %v463
    %498 = vmatpush.msra.mxu0 %v459
    %499 = vmatpush.msra.mxu0 %v455
    %500 = vmatpush.msra.mxu0 %v451
    %501 = vmatpush.msra.mxu0 %v447
    %502 = vmatpush.msra.mxu0 %v443
    %503 = vmatpush.msra.mxu0 %v439
    %504 = vmatpush.msra.mxu0 %v435
    %505 = vmatpush.msra.mxu0 %v431
    %506 = vmatpush.msra.mxu0 %v427
    %507 = vmatmul.f32.gmra.mxu0 0.0
    %v508 = vpop.f32.mrf.mxu0
    %v509 = vadd.f32 0.0, %v508
    %510 = vdwg.mxu0
    %511 = vmatpush.msra.mxu0 %v488
    %512 = vmatpush.msra.mxu0 %v484
    %513 = vmatpush.msra.mxu0 %v480
    %514 = vmatpush.msra.mxu0 %v476
    %515 = vmatpush.msra.mxu0 %v472
    %516 = vmatpush.msra.mxu0 %v468
    %517 = vmatpush.msra.mxu0 %v464
    %518 = vmatpush.msra.mxu0 %v460
    %519 = vmatpush.msra.mxu0 %v456
    %520 = vmatpush.msra.mxu0 %v452
    %521 = vmatpush.msra.mxu0 %v448
    %522 = vmatpush.msra.mxu0 %v444
    %523 = vmatpush.msra.mxu0 %v440
    %524 = vmatpush.msra.mxu0 %v436
    %525 = vmatpush.msra.mxu0 %v432
    %526 = vmatpush.msra.mxu0 %v428
    %527 = vmatmul.f32.gmra.mxu0 0.0
    %v528 = vpop.f32.mrf.mxu0
    %v529 = vadd.f32 0.0, %v528
    %530 = vdwg.mxu0
    %531 = vmatpush.msra.mxu0 %v489
    %532 = vmatpush.msra.mxu0 %v485
    %533 = vmatpush.msra.mxu0 %v481
    %534 = vmatpush.msra.mxu0 %v477
    %535 = vmatpush.msra.mxu0 %v473
    %536 = vmatpush.msra.mxu0 %v469
    %537 = vmatpush.msra.mxu0 %v465
    %538 = vmatpush.msra.mxu0 %v461
    %539 = vmatpush.msra.mxu0 %v457
    %540 = vmatpush.msra.mxu0 %v453
    %541 = vmatpush.msra.mxu0 %v449
    %542 = vmatpush.msra.mxu0 %v445
    %543 = vmatpush.msra.mxu0 %v441
    %544 = vmatpush.msra.mxu0 %v437
    %545 = vmatpush.msra.mxu0 %v433
    %546 = vmatpush.msra.mxu0 %v429
    %547 = vmatmul.f32.gmra.mxu0 0.0
    %v548 = vpop.f32.mrf.mxu0
    %v549 = vadd.f32 0.0, %v548
    %550 = vdwg.mxu0
    %551 = vmatpush.msra.mxu0 %v490
    %552 = vmatpush.msra.mxu0 %v486
    %553 = vmatpush.msra.mxu0 %v482
    %554 = vmatpush.msra.mxu0 %v478
    %555 = vmatpush.msra.mxu0 %v474
    %556 = vmatpush.msra.mxu0 %v470
    %557 = vmatpush.msra.mxu0 %v466
    %558 = vmatpush.msra.mxu0 %v462
    %559 = vmatpush.msra.mxu0 %v458
    %560 = vmatpush.msra.mxu0 %v454
    %561 = vmatpush.msra.mxu0 %v450
    %562 = vmatpush.msra.mxu0 %v446
    %563 = vmatpush.msra.mxu0 %v442
    %564 = vmatpush.msra.mxu0 %v438
    %565 = vmatpush.msra.mxu0 %v434
    %566 = vmatpush.msra.mxu0 %v430
    %567 = vmatmul.f32.gmra.mxu0 0.0
    %v568 = vpop.f32.mrf.mxu0
    %v569 = vadd.f32 0.0, %v568
    %570 = vdwg.mxu0
    %v571 = vadd.f32 %v423, %v509
    %v572 = vadd.f32 %v424, %v529
    %v573 = vadd.f32 %v425, %v549
    %v574 = vadd.f32 %v426, %v569
    %v575 = vxor.u32 %v571, 2147483648
    %v576 = vmul.f32 %v575, 1.442695
    %v577 = vpow.pop %v576
    %v578 = vadd.f32 %v577, 1.0
    %v579 = vrcp.pop %v578
    %v580 = vmul.f32 %v578, %v579
    %v581 = vsub.f32 1.0, %v580
    %v582 = vmul.f32 %v579, %v581
    %v583 = vadd.f32 %v579, %v582
    %vm584 = vweird.f32 %v578
    %vm585 = vweird.f32 %v579
    %vm586 = vmor %vm584, %vm585
    %v587 = vsel %vm586, %v579, %v583
    %v588 = vand.u32 2147483647, %v578
    %vm589 = vcmp.eq.f32.partialorder %v588, 8.507059e+37
    %v590 = vand.u32 %v578, 2147483648
    %v591 = vor.u32 1.1754944e-38, %v590
    %v592 = vsel %vm589, %v591, %v587
    %v593 = vmul.f32 1.0, %v592
    %v594 = vxor.u32 %v572, 2147483648
    %v595 = vmul.f32 %v594, 1.442695
    %v596 = vpow.pop %v595
    %v597 = vadd.f32 %v596, 1.0
    %v598 = vrcp.pop %v597
    %v599 = vmul.f32 %v597, %v598
    %v600 = vsub.f32 1.0, %v599
    %v601 = vmul.f32 %v598, %v600
    %v602 = vadd.f32 %v598, %v601
    %vm603 = vweird.f32 %v597
    %vm604 = vweird.f32 %v598
    %vm605 = vmor %vm603, %vm604
    %v606 = vsel %vm605, %v598, %v602
    %v607 = vand.u32 2147483647, %v597
    %vm608 = vcmp.eq.f32.partialorder %v607, 8.507059e+37
    %v609 = vand.u32 %v597, 2147483648
    %v610 = vor.u32 1.1754944e-38, %v609
    %v611 = vsel %vm608, %v610, %v606
    %v612 = vmul.f32 1.0, %v611
    %v613 = vtanh.pop %v573
    %v614 = vxor.u32 %v574, 2147483648
    %v615 = vmul.f32 %v614, 1.442695
    %v616 = vpow.pop %v615
    %v617 = vadd.f32 %v616, 1.0
    %v618 = vrcp.pop %v617
    %v619 = vmul.f32 %v617, %v618
    %v620 = vsub.f32 1.0, %v619
    %v621 = vmul.f32 %v618, %v620
    %v622 = vadd.f32 %v618, %v621
    %vm623 = vweird.f32 %v617
    %vm624 = vweird.f32 %v618
    %vm625 = vmor %vm623, %vm624
    %v626 = vsel %vm625, %v618, %v622
    %v627 = vand.u32 2147483647, %v617
    %vm628 = vcmp.eq.f32.partialorder %v627, 8.507059e+37
    %v629 = vand.u32 %v617, 2147483648
    %v630 = vor.u32 1.1754944e-38, %v629
    %v631 = vsel %vm628, %v630, %v626
    %v632 = vmul.f32 1.0, %v631
    %v633 = vmul.f32 %v612, 0.0
    %v634 = vmul.f32 %v593, %v613
    %v635 = vadd.f32 %v633, %v634
    %v636 = vtanh.pop %v635
    %v637 = vmul.f32 %v632, %v636
    %v638 = vld [vmem:[%s1] sm:$0xff]
    %v639 = vld [vmem:[%s2 + $0x38] sm:$0xff]
    %v640 = vadd.f32 %v638, %v639
    %vm641 = vcmp.gt.f32.partialorder %v640, 0.5
    %v642 = vsel %vm641, %v637, 0.0
    %v643 = vsel %vm641, %v635, 0.0
    %v644 = vmul.f32 %v638, %v637
    %645 = vst [vmem:[#allocation3] sm:$0xff] %v644
    %v646 = vmul.f32 %v639, %v637
    %647 = vst [vmem:[#allocation4 + $0x38] sm:$0xff] %v646
    %v648 = vld [vmem:[#allocation2 + $0x20] sm:$0xff]
    %v649 = vld [vmem:[#allocation2 + $0x28] sm:$0xff]
    %v650 = vld [vmem:[#allocation2 + $0x30] sm:$0xff]
    %v651 = vld [vmem:[#allocation2 + $0x38] sm:$0xff]
    %v652 = vld [vmem:[#allocation2 + $0xc0] sm:$0xff]
    %v653 = vld [vmem:[#allocation2 + $0xc8] sm:$0xff]
    %v654 = vld [vmem:[#allocation2 + $0xd0] sm:$0xff]
    %v655 = vld [vmem:[#allocation2 + $0xd8] sm:$0xff]
    %v656 = vsel %vm422, %v648, %v652
    %v657 = vsel %vm422, %v649, %v653
    %v658 = vsel %vm422, %v650, %v654
    %v659 = vsel %vm422, %v651, %v655
    %v660 = vld [vmem:[#allocation7] sm:$0xff]
    %v661 = vld [vmem:[#allocation7 + $0x8] sm:$0xff]
    %v662 = vld [vmem:[#allocation7 + $0x10] sm:$0xff]
    %v663 = vld [vmem:[#allocation7 + $0x18] sm:$0xff]
    %v664 = vld [vmem:[#allocation7 + $0x20] sm:$0xff]
    %v665 = vld [vmem:[#allocation7 + $0x28] sm:$0xff]
    %v666 = vld [vmem:[#allocation7 + $0x30] sm:$0xff]
    %v667 = vld [vmem:[#allocation7 + $0x38] sm:$0xff]
    %v668 = vld [vmem:[#allocation7 + $0x40] sm:$0xff]
    %v669 = vld [vmem:[#allocation7 + $0x48] sm:$0xff]
    %v670 = vld [vmem:[#allocation7 + $0x50] sm:$0xff]
    %v671 = vld [vmem:[#allocation7 + $0x58] sm:$0xff]
    %v672 = vld [vmem:[#allocation7 + $0x60] sm:$0xff]
    %v673 = vld [vmem:[#allocation7 + $0x68] sm:$0xff]
    %v674 = vld [vmem:[#allocation7 + $0x70] sm:$0xff]
    %v675 = vld [vmem:[#allocation7 + $0x78] sm:$0xff]
    %v676 = vld [vmem:[#allocation7 + $0x80] sm:$0xff]
    %v677 = vld [vmem:[#allocation7 + $0x88] sm:$0xff]
    %v678 = vld [vmem:[#allocation7 + $0x90] sm:$0xff]
    %v679 = vld [vmem:[#allocation7 + $0x98] sm:$0xff]
    %v680 = vld [vmem:[#allocation7 + $0xa0] sm:$0xff]
    %v681 = vld [vmem:[#allocation7 + $0xa8] sm:$0xff]
    %v682 = vld [vmem:[#allocation7 + $0xb0] sm:$0xff]
    %v683 = vld [vmem:[#allocation7 + $0xb8] sm:$0xff]
    %v684 = vld [vmem:[#allocation7 + $0xc0] sm:$0xff]
    %v685 = vld [vmem:[#allocation7 + $0xc8] sm:$0xff]
    %v686 = vld [vmem:[#allocation7 + $0xd0] sm:$0xff]
    %v687 = vld [vmem:[#allocation7 + $0xd8] sm:$0xff]
    %v688 = vld [vmem:[#allocation7 + $0xe0] sm:$0xff]
    %v689 = vld [vmem:[#allocation7 + $0xe8] sm:$0xff]
    %v690 = vld [vmem:[#allocation7 + $0xf0] sm:$0xff]
    %v691 = vld [vmem:[#allocation7 + $0xf8] sm:$0xff]
    %v692 = vld [vmem:[#allocation7 + $0x100] sm:$0xff]
    %v693 = vld [vmem:[#allocation7 + $0x108] sm:$0xff]
    %v694 = vld [vmem:[#allocation7 + $0x110] sm:$0xff]
    %v695 = vld [vmem:[#allocation7 + $0x118] sm:$0xff]
    %v696 = vld [vmem:[#allocation7 + $0x120] sm:$0xff]
    %v697 = vld [vmem:[#allocation7 + $0x128] sm:$0xff]
    %v698 = vld [vmem:[#allocation7 + $0x130] sm:$0xff]
    %v699 = vld [vmem:[#allocation7 + $0x138] sm:$0xff]
    %v700 = vld [vmem:[#allocation7 + $0x140] sm:$0xff]
    %v701 = vld [vmem:[#allocation7 + $0x148] sm:$0xff]
    %v702 = vld [vmem:[#allocation7 + $0x150] sm:$0xff]
    %v703 = vld [vmem:[#allocation7 + $0x158] sm:$0xff]
    %v704 = vld [vmem:[#allocation7 + $0x160] sm:$0xff]
    %v705 = vld [vmem:[#allocation7 + $0x168] sm:$0xff]
    %v706 = vld [vmem:[#allocation7 + $0x170] sm:$0xff]
    %v707 = vld [vmem:[#allocation7 + $0x178] sm:$0xff]
    %v708 = vld [vmem:[#allocation7 + $0x180] sm:$0xff]
    %v709 = vld [vmem:[#allocation7 + $0x188] sm:$0xff]
    %v710 = vld [vmem:[#allocation7 + $0x190] sm:$0xff]
    %v711 = vld [vmem:[#allocation7 + $0x198] sm:$0xff]
    %v712 = vld [vmem:[#allocation7 + $0x1a0] sm:$0xff]
    %v713 = vld [vmem:[#allocation7 + $0x1a8] sm:$0xff]
    %v714 = vld [vmem:[#allocation7 + $0x1b0] sm:$0xff]
    %v715 = vld [vmem:[#allocation7 + $0x1b8] sm:$0xff]
    %v716 = vld [vmem:[#allocation7 + $0x1c0] sm:$0xff]
    %v717 = vld [vmem:[#allocation7 + $0x1c8] sm:$0xff]
    %v718 = vld [vmem:[#allocation7 + $0x1d0] sm:$0xff]
    %v719 = vld [vmem:[#allocation7 + $0x1d8] sm:$0xff]
    %v720 = vld [vmem:[#allocation7 + $0x1e0] sm:$0xff]
    %v721 = vld [vmem:[#allocation7 + $0x1e8] sm:$0xff]
    %v722 = vld [vmem:[#allocation7 + $0x1f0] sm:$0xff]
    %v723 = vld [vmem:[#allocation7 + $0x1f8] sm:$0xff]
    %724 = vmatpush.msra.mxu0 %v720
    %725 = vmatpush.msra.mxu0 %v716
    %726 = vmatpush.msra.mxu0 %v712
    %727 = vmatpush.msra.mxu0 %v708
    %728 = vmatpush.msra.mxu0 %v704
    %729 = vmatpush.msra.mxu0 %v700
    %730 = vmatpush.msra.mxu0 %v696
    %731 = vmatpush.msra.mxu0 %v692
    %732 = vmatpush.msra.mxu0 %v688
    %733 = vmatpush.msra.mxu0 %v684
    %734 = vmatpush.msra.mxu0 %v680
    %735 = vmatpush.msra.mxu0 %v676
    %736 = vmatpush.msra.mxu0 %v672
    %737 = vmatpush.msra.mxu0 %v668
    %738 = vmatpush.msra.mxu0 %v664
    %739 = vmatpush.msra.mxu0 %v660
    %740 = vmatmul.f32.gmra.mxu0 %v642
    %v741 = vpop.f32.mrf.mxu0
    %v742 = vadd.f32 0.0, %v741
    %743 = vdwg.mxu0
    %744 = vmatpush.msra.mxu0 %v721
    %745 = vmatpush.msra.mxu0 %v717
    %746 = vmatpush.msra.mxu0 %v713
    %747 = vmatpush.msra.mxu0 %v709
    %748 = vmatpush.msra.mxu0 %v705
    %749 = vmatpush.msra.mxu0 %v701
    %750 = vmatpush.msra.mxu0 %v697
    %751 = vmatpush.msra.mxu0 %v693
    %752 = vmatpush.msra.mxu0 %v689
    %753 = vmatpush.msra.mxu0 %v685
    %754 = vmatpush.msra.mxu0 %v681
    %755 = vmatpush.msra.mxu0 %v677
    %756 = vmatpush.msra.mxu0 %v673
    %757 = vmatpush.msra.mxu0 %v669
    %758 = vmatpush.msra.mxu0 %v665
    %759 = vmatpush.msra.mxu0 %v661
    %760 = vmatmul.f32.gmra.mxu0 %v642
    %v761 = vpop.f32.mrf.mxu0
    %v762 = vadd.f32 0.0, %v761
    %763 = vdwg.mxu0
    %764 = vmatpush.msra.mxu0 %v722
    %765 = vmatpush.msra.mxu0 %v718
    %766 = vmatpush.msra.mxu0 %v714
    %767 = vmatpush.msra.mxu0 %v710
    %768 = vmatpush.msra.mxu0 %v706
    %769 = vmatpush.msra.mxu0 %v702
    %770 = vmatpush.msra.mxu0 %v698
    %771 = vmatpush.msra.mxu0 %v694
    %772 = vmatpush.msra.mxu0 %v690
    %773 = vmatpush.msra.mxu0 %v686
    %774 = vmatpush.msra.mxu0 %v682
    %775 = vmatpush.msra.mxu0 %v678
    %776 = vmatpush.msra.mxu0 %v674
    %777 = vmatpush.msra.mxu0 %v670
    %778 = vmatpush.msra.mxu0 %v666
    %779 = vmatpush.msra.mxu0 %v662
    %780 = vmatmul.f32.gmra.mxu0 %v642
    %v781 = vpop.f32.mrf.mxu0
    %v782 = vadd.f32 0.0, %v781
    %783 = vdwg.mxu0
    %784 = vmatpush.msra.mxu0 %v723
    %785 = vmatpush.msra.mxu0 %v719
    %786 = vmatpush.msra.mxu0 %v715
    %787 = vmatpush.msra.mxu0 %v711
    %788 = vmatpush.msra.mxu0 %v707
    %789 = vmatpush.msra.mxu0 %v703
    %790 = vmatpush.msra.mxu0 %v699
    %791 = vmatpush.msra.mxu0 %v695
    %792 = vmatpush.msra.mxu0 %v691
    %793 = vmatpush.msra.mxu0 %v687
    %794 = vmatpush.msra.mxu0 %v683
    %795 = vmatpush.msra.mxu0 %v679
    %796 = vmatpush.msra.mxu0 %v675
    %797 = vmatpush.msra.mxu0 %v671
    %798 = vmatpush.msra.mxu0 %v667
    %799 = vmatpush.msra.mxu0 %v663
    %800 = vmatmul.f32.gmra.mxu0 %v642
    %v801 = vpop.f32.mrf.mxu0
    %v802 = vadd.f32 0.0, %v801
    %803 = vdwg.mxu0
    %v804 = vadd.f32 %v656, %v742
    %v805 = vadd.f32 %v657, %v762
    %v806 = vadd.f32 %v658, %v782
    %v807 = vadd.f32 %v659, %v802
    %v808 = vxor.u32 %v804, 2147483648
    %v809 = vmul.f32 %v808, 1.442695
    %v810 = vpow.pop %v809
    %v811 = vadd.f32 %v810, 1.0
    %v812 = vrcp.pop %v811
    %v813 = vmul.f32 %v811, %v812
    %v814 = vsub.f32 1.0, %v813
    %v815 = vmul.f32 %v812, %v814
    %v816 = vadd.f32 %v812, %v815
    %vm817 = vweird.f32 %v811
    %vm818 = vweird.f32 %v812
    %vm819 = vmor %vm817, %vm818
    %v820 = vsel %vm819, %v812, %v816
    %v821 = vand.u32 2147483647, %v811
    %vm822 = vcmp.eq.f32.partialorder %v821, 8.507059e+37
    %v823 = vand.u32 %v811, 2147483648
    %v824 = vor.u32 1.1754944e-38, %v823
    %v825 = vsel %vm822, %v824, %v820
    %v826 = vmul.f32 1.0, %v825
    %v827 = vxor.u32 %v805, 2147483648
    %v828 = vmul.f32 %v827, 1.442695
    %v829 = vpow.pop %v828
    %v830 = vadd.f32 %v829, 1.0
    %v831 = vrcp.pop %v830
    %v832 = vmul.f32 %v830, %v831
    %v833 = vsub.f32 1.0, %v832
    %v834 = vmul.f32 %v831, %v833
    %v835 = vadd.f32 %v831, %v834
    %vm836 = vweird.f32 %v830
    %vm837 = vweird.f32 %v831
    %vm838 = vmor %vm836, %vm837
    %v839 = vsel %vm838, %v831, %v835
    %v840 = vand.u32 2147483647, %v830
    %vm841 = vcmp.eq.f32.partialorder %v840, 8.507059e+37
    %v842 = vand.u32 %v830, 2147483648
    %v843 = vor.u32 1.1754944e-38, %v842
    %v844 = vsel %vm841, %v843, %v839
    %v845 = vmul.f32 1.0, %v844
    %v846 = vtanh.pop %v806
    %v847 = vxor.u32 %v807, 2147483648
    %v848 = vmul.f32 %v847, 1.442695
    %v849 = vpow.pop %v848
    %v850 = vadd.f32 %v849, 1.0
    %v851 = vrcp.pop %v850
    %v852 = vmul.f32 %v850, %v851
    %v853 = vsub.f32 1.0, %v852
    %v854 = vmul.f32 %v851, %v853
    %v855 = vadd.f32 %v851, %v854
    %vm856 = vweird.f32 %v850
    %vm857 = vweird.f32 %v851
    %vm858 = vmor %vm856, %vm857
    %v859 = vsel %vm858, %v851, %v855
    %v860 = vand.u32 2147483647, %v850
    %vm861 = vcmp.eq.f32.partialorder %v860, 8.507059e+37
    %v862 = vand.u32 %v850, 2147483648
    %v863 = vor.u32 1.1754944e-38, %v862
    %v864 = vsel %vm861, %v863, %v859
    %v865 = vmul.f32 1.0, %v864
    %v866 = vmul.f32 %v845, %v643
    %v867 = vmul.f32 %v826, %v846
    %v868 = vadd.f32 %v866, %v867
    %v869 = vtanh.pop %v868
    %v870 = vmul.f32 %v865, %v869
    %v871 = vld [vmem:[%s1 + $0x8] sm:$0xff]
    %v872 = vld [vmem:[%s2 + $0x30] sm:$0xff]
    %v873 = vadd.f32 %v871, %v872
    %vm874 = vcmp.gt.f32.partialorder %v873, 0.5
    %v875 = vsel %vm874, %v870, %v642
    %v876 = vsel %vm874, %v868, %v643
    %v877 = vmul.f32 %v871, %v870
    %878 = vst [vmem:[#allocation3 + $0x8] sm:$0xff] %v877
    %v879 = vmul.f32 %v872, %v870
    %880 = vst [vmem:[#allocation4 + $0x30] sm:$0xff] %v879
    %v881 = vld [vmem:[#allocation2 + $0x40] sm:$0xff]
    %v882 = vld [vmem:[#allocation2 + $0x48] sm:$0xff]
    %v883 = vld [vmem:[#allocation2 + $0x50] sm:$0xff]
    %v884 = vld [vmem:[#allocation2 + $0x58] sm:$0xff]
    %v885 = vld [vmem:[#allocation2 + $0xa0] sm:$0xff]
    %v886 = vld [vmem:[#allocation2 + $0xa8] sm:$0xff]
    %v887 = vld [vmem:[#allocation2 + $0xb0] sm:$0xff]
    %v888 = vld [vmem:[#allocation2 + $0xb8] sm:$0xff]
    %v889 = vsel %vm422, %v881, %v885
    %v890 = vsel %vm422, %v882, %v886
    %v891 = vsel %vm422, %v883, %v887
    %v892 = vsel %vm422, %v884, %v888
    %v893 = vld [vmem:[#allocation7] sm:$0xff]
    %v894 = vld [vmem:[#allocation7 + $0x8] sm:$0xff]
    %v895 = vld [vmem:[#allocation7 + $0x10] sm:$0xff]
    %v896 = vld [vmem:[#allocation7 + $0x18] sm:$0xff]
    %v897 = vld [vmem:[#allocation7 + $0x20] sm:$0xff]
    %v898 = vld [vmem:[#allocation7 + $0x28] sm:$0xff]
    %v899 = vld [vmem:[#allocation7 + $0x30] sm:$0xff]
    %v900 = vld [vmem:[#allocation7 + $0x38] sm:$0xff]
    %v901 = vld [vmem:[#allocation7 + $0x40] sm:$0xff]
    %v902 = vld [vmem:[#allocation7 + $0x48] sm:$0xff]
    %v903 = vld [vmem:[#allocation7 + $0x50] sm:$0xff]
    %v904 = vld [vmem:[#allocation7 + $0x58] sm:$0xff]
    %v905 = vld [vmem:[#allocation7 + $0x60] sm:$0xff]
    %v906 = vld [vmem:[#allocation7 + $0x68] sm:$0xff]
    %v907 = vld [vmem:[#allocation7 + $0x70] sm:$0xff]
    %v908 = vld [vmem:[#allocation7 + $0x78] sm:$0xff]
    %v909 = vld [vmem:[#allocation7 + $0x80] sm:$0xff]
    %v910 = vld [vmem:[#allocation7 + $0x88] sm:$0xff]
    %v911 = vld [vmem:[#allocation7 + $0x90] sm:$0xff]
    %v912 = vld [vmem:[#allocation7 + $0x98] sm:$0xff]
    %v913 = vld [vmem:[#allocation7 + $0xa0] sm:$0xff]
    %v914 = vld [vmem:[#allocation7 + $0xa8] sm:$0xff]
    %v915 = vld [vmem:[#allocation7 + $0xb0] sm:$0xff]
    %v916 = vld [vmem:[#allocation7 + $0xb8] sm:$0xff]
    %v917 = vld [vmem:[#allocation7 + $0xc0] sm:$0xff]
    %v918 = vld [vmem:[#allocation7 + $0xc8] sm:$0xff]
    %v919 = vld [vmem:[#allocation7 + $0xd0] sm:$0xff]
    %v920 = vld [vmem:[#allocation7 + $0xd8] sm:$0xff]
    %v921 = vld [vmem:[#allocation7 + $0xe0] sm:$0xff]
    %v922 = vld [vmem:[#allocation7 + $0xe8] sm:$0xff]
    %v923 = vld [vmem:[#allocation7 + $0xf0] sm:$0xff]
    %v924 = vld [vmem:[#allocation7 + $0xf8] sm:$0xff]
    %v925 = vld [vmem:[#allocation7 + $0x100] sm:$0xff]
    %v926 = vld [vmem:[#allocation7 + $0x108] sm:$0xff]
    %v927 = vld [vmem:[#allocation7 + $0x110] sm:$0xff]
    %v928 = vld [vmem:[#allocation7 + $0x118] sm:$0xff]
    %v929 = vld [vmem:[#allocation7 + $0x120] sm:$0xff]
    %v930 = vld [vmem:[#allocation7 + $0x128] sm:$0xff]
    %v931 = vld [vmem:[#allocation7 + $0x130] sm:$0xff]
    %v932 = vld [vmem:[#allocation7 + $0x138] sm:$0xff]
    %v933 = vld [vmem:[#allocation7 + $0x140] sm:$0xff]
    %v934 = vld [vmem:[#allocation7 + $0x148] sm:$0xff]
    %v935 = vld [vmem:[#allocation7 + $0x150] sm:$0xff]
    %v936 = vld [vmem:[#allocation7 + $0x158] sm:$0xff]
    %v937 = vld [vmem:[#allocation7 + $0x160] sm:$0xff]
    %v938 = vld [vmem:[#allocation7 + $0x168] sm:$0xff]
    %v939 = vld [vmem:[#allocation7 + $0x170] sm:$0xff]
    %v940 = vld [vmem:[#allocation7 + $0x178] sm:$0xff]
    %v941 = vld [vmem:[#allocation7 + $0x180] sm:$0xff]
    %v942 = vld [vmem:[#allocation7 + $0x188] sm:$0xff]
    %v943 = vld [vmem:[#allocation7 + $0x190] sm:$0xff]
    %v944 = vld [vmem:[#allocation7 + $0x198] sm:$0xff]
    %v945 = vld [vmem:[#allocation7 + $0x1a0] sm:$0xff]
    %v946 = vld [vmem:[#allocation7 + $0x1a8] sm:$0xff]
    %v947 = vld [vmem:[#allocation7 + $0x1b0] sm:$0xff]
    %v948 = vld [vmem:[#allocation7 + $0x1b8] sm:$0xff]
    %v949 = vld [vmem:[#allocation7 + $0x1c0] sm:$0xff]
    %v950 = vld [vmem:[#allocation7 + $0x1c8] sm:$0xff]
    %v951 = vld [vmem:[#allocation7 + $0x1d0] sm:$0xff]
    %v952 = vld [vmem:[#allocation7 + $0x1d8] sm:$0xff]
    %v953 = vld [vmem:[#allocation7 + $0x1e0] sm:$0xff]
    %v954 = vld [vmem:[#allocation7 + $0x1e8] sm:$0xff]
    %v955 = vld [vmem:[#allocation7 + $0x1f0] sm:$0xff]
    %v956 = vld [vmem:[#allocation7 + $0x1f8] sm:$0xff]
    %957 = vmatpush.msra.mxu0 %v953
    %958 = vmatpush.msra.mxu0 %v949
    %959 = vmatpush.msra.mxu0 %v945
    %960 = vmatpush.msra.mxu0 %v941
    %961 = vmatpush.msra.mxu0 %v937
    %962 = vmatpush.msra.mxu0 %v933
    %963 = vmatpush.msra.mxu0 %v929
    %964 = vmatpush.msra.mxu0 %v925
    %965 = vmatpush.msra.mxu0 %v921
    %966 = vmatpush.msra.mxu0 %v917
    %967 = vmatpush.msra.mxu0 %v913
    %968 = vmatpush.msra.mxu0 %v909
    %969 = vmatpush.msra.mxu0 %v905
    %970 = vmatpush.msra.mxu0 %v901
    %971 = vmatpush.msra.mxu0 %v897
    %972 = vmatpush.msra.mxu0 %v893
    %973 = vmatmul.f32.gmra.mxu0 %v875
    %v974 = vpop.f32.mrf.mxu0
    %v975 = vadd.f32 0.0, %v974
    %976 = vdwg.mxu0
    %977 = vmatpush.msra.mxu0 %v954
    %978 = vmatpush.msra.mxu0 %v950
    %979 = vmatpush.msra.mxu0 %v946
    %980 = vmatpush.msra.mxu0 %v942
    %981 = vmatpush.msra.mxu0 %v938
    %982 = vmatpush.msra.mxu0 %v934
    %983 = vmatpush.msra.mxu0 %v930
    %984 = vmatpush.msra.mxu0 %v926
    %985 = vmatpush.msra.mxu0 %v922
    %986 = vmatpush.msra.mxu0 %v918
    %987 = vmatpush.msra.mxu0 %v914
    %988 = vmatpush.msra.mxu0 %v910
    %989 = vmatpush.msra.mxu0 %v906
    %990 = vmatpush.msra.mxu0 %v902
    %991 = vmatpush.msra.mxu0 %v898
    %992 = vmatpush.msra.mxu0 %v894
    %993 = vmatmul.f32.gmra.mxu0 %v875
    %v994 = vpop.f32.mrf.mxu0
    %v995 = vadd.f32 0.0, %v994
    %996 = vdwg.mxu0
    %997 = vmatpush.msra.mxu0 %v955
    %998 = vmatpush.msra.mxu0 %v951
    %999 = vmatpush.msra.mxu0 %v947
    %1000 = vmatpush.msra.mxu0 %v943
    %1001 = vmatpush.msra.mxu0 %v939
    %1002 = vmatpush.msra.mxu0 %v935
    %1003 = vmatpush.msra.mxu0 %v931
    %1004 = vmatpush.msra.mxu0 %v927
    %1005 = vmatpush.msra.mxu0 %v923
    %1006 = vmatpush.msra.mxu0 %v919
    %1007 = vmatpush.msra.mxu0 %v915
    %1008 = vmatpush.msra.mxu0 %v911
    %1009 = vmatpush.msra.mxu0 %v907
    %1010 = vmatpush.msra.mxu0 %v903
    %1011 = vmatpush.msra.mxu0 %v899
    %1012 = vmatpush.msra.mxu0 %v895
    %1013 = vmatmul.f32.gmra.mxu0 %v875
    %v1014 = vpop.f32.mrf.mxu0
    %v1015 = vadd.f32 0.0, %v1014
    %1016 = vdwg.mxu0
    %1017 = vmatpush.msra.mxu0 %v956
    %1018 = vmatpush.msra.mxu0 %v952
    %1019 = vmatpush.msra.mxu0 %v948
    %1020 = vmatpush.msra.mxu0 %v944
    %1021 = vmatpush.msra.mxu0 %v940
    %1022 = vmatpush.msra.mxu0 %v936
    %1023 = vmatpush.msra.mxu0 %v932
    %1024 = vmatpush.msra.mxu0 %v928
    %1025 = vmatpush.msra.mxu0 %v924
    %1026 = vmatpush.msra.mxu0 %v920
    %1027 = vmatpush.msra.mxu0 %v916
    %1028 = vmatpush.msra.mxu0 %v912
    %1029 = vmatpush.msra.mxu0 %v908
    %1030 = vmatpush.msra.mxu0 %v904
    %1031 = vmatpush.msra.mxu0 %v900
    %1032 = vmatpush.msra.mxu0 %v896
    %1033 = vmatmul.f32.gmra.mxu0 %v875
    %v1034 = vpop.f32.mrf.mxu0
    %v1035 = vadd.f32 0.0, %v1034
    %1036 = vdwg.mxu0
    %v1037 = vadd.f32 %v889, %v975
    %v1038 = vadd.f32 %v890, %v995
    %v1039 = vadd.f32 %v891, %v1015
    %v1040 = vadd.f32 %v892, %v1035
    %v1041 = vxor.u32 %v1037, 2147483648
    %v1042 = vmul.f32 %v1041, 1.442695
    %v1043 = vpow.pop %v1042
    %v1044 = vadd.f32 %v1043, 1.0
    %v1045 = vrcp.pop %v1044
    %v1046 = vmul.f32 %v1044, %v1045
    %v1047 = vsub.f32 1.0, %v1046
    %v1048 = vmul.f32 %v1045, %v1047
    %v1049 = vadd.f32 %v1045, %v1048
    %vm1050 = vweird.f32 %v1044
    %vm1051 = vweird.f32 %v1045
    %vm1052 = vmor %vm1050, %vm1051
    %v1053 = vsel %vm1052, %v1045, %v1049
    %v1054 = vand.u32 2147483647, %v1044
    %vm1055 = vcmp.eq.f32.partialorder %v1054, 8.507059e+37
    %v1056 = vand.u32 %v1044, 2147483648
    %v1057 = vor.u32 1.1754944e-38, %v1056
    %v1058 = vsel %vm1055, %v1057, %v1053
    %v1059 = vmul.f32 1.0, %v1058
    %v1060 = vxor.u32 %v1038, 2147483648
    %v1061 = vmul.f32 %v1060, 1.442695
    %v1062 = vpow.pop %v1061
    %v1063 = vadd.f32 %v1062, 1.0
    %v1064 = vrcp.pop %v1063
    %v1065 = vmul.f32 %v1063, %v1064
    %v1066 = vsub.f32 1.0, %v1065
    %v1067 = vmul.f32 %v1064, %v1066
    %v1068 = vadd.f32 %v1064, %v1067
    %vm1069 = vweird.f32 %v1063
    %vm1070 = vweird.f32 %v1064
    %vm1071 = vmor %vm1069, %vm1070
    %v1072 = vsel %vm1071, %v1064, %v1068
    %v1073 = vand.u32 2147483647, %v1063
    %vm1074 = vcmp.eq.f32.partialorder %v1073, 8.507059e+37
    %v1075 = vand.u32 %v1063, 2147483648
    %v1076 = vor.u32 1.1754944e-38, %v1075
    %v1077 = vsel %vm1074, %v1076, %v1072
    %v1078 = vmul.f32 1.0, %v1077
    %v1079 = vtanh.pop %v1039
    %v1080 = vxor.u32 %v1040, 2147483648
    %v1081 = vmul.f32 %v1080, 1.442695
    %v1082 = vpow.pop %v1081
    %v1083 = vadd.f32 %v1082, 1.0
    %v1084 = vrcp.pop %v1083
    %v1085 = vmul.f32 %v1083, %v1084
    %v1086 = vsub.f32 1.0, %v1085
    %v1087 = vmul.f32 %v1084, %v1086
    %v1088 = vadd.f32 %v1084, %v1087
    %vm1089 = vweird.f32 %v1083
    %vm1090 = vweird.f32 %v1084
    %vm1091 = vmor %vm1089, %vm1090
    %v1092 = vsel %vm1091, %v1084, %v1088
    %v1093 = vand.u32 2147483647, %v1083
    %vm1094 = vcmp.eq.f32.partialorder %v1093, 8.507059e+37
    %v1095 = vand.u32 %v1083, 2147483648
    %v1096 = vor.u32 1.1754944e-38, %v1095
    %v1097 = vsel %vm1094, %v1096, %v1092
    %v1098 = vmul.f32 1.0, %v1097
    %v1099 = vmul.f32 %v1078, %v876
    %v1100 = vmul.f32 %v1059, %v1079
    %v1101 = vadd.f32 %v1099, %v1100
    %v1102 = vtanh.pop %v1101
    %v1103 = vmul.f32 %v1098, %v1102
    %v1104 = vld [vmem:[%s1 + $0x10] sm:$0xff]
    %v1105 = vld [vmem:[%s2 + $0x28] sm:$0xff]
    %v1106 = vadd.f32 %v1104, %v1105
    %vm1107 = vcmp.gt.f32.partialorder %v1106, 0.5
    %v1108 = vsel %vm1107, %v1103, %v875
    %v1109 = vsel %vm1107, %v1101, %v876
    %v1110 = vmul.f32 %v1104, %v1103
    %1111 = vst [vmem:[#allocation3 + $0x10] sm:$0xff] %v1110
    %v1112 = vmul.f32 %v1105, %v1103
    %1113 = vst [vmem:[#allocation4 + $0x28] sm:$0xff] %v1112
    %v1114 = vld [vmem:[#allocation2 + $0x60] sm:$0xff]
    %v1115 = vld [vmem:[#allocation2 + $0x68] sm:$0xff]
    %v1116 = vld [vmem:[#allocation2 + $0x70] sm:$0xff]
    %v1117 = vld [vmem:[#allocation2 + $0x78] sm:$0xff]
    %v1118 = vld [vmem:[#allocation2 + $0x80] sm:$0xff]
    %v1119 = vld [vmem:[#allocation2 + $0x88] sm:$0xff]
    %v1120 = vld [vmem:[#allocation2 + $0x90] sm:$0xff]
    %v1121 = vld [vmem:[#allocation2 + $0x98] sm:$0xff]
    %v1122 = vsel %vm422, %v1114, %v1118
    %v1123 = vsel %vm422, %v1115, %v1119
    %v1124 = vsel %vm422, %v1116, %v1120
    %v1125 = vsel %vm422, %v1117, %v1121
    %v1126 = vld [vmem:[#allocation7] sm:$0xff]
    %v1127 = vld [vmem:[#allocation7 + $0x8] sm:$0xff]
    %v1128 = vld [vmem:[#allocation7 + $0x10] sm:$0xff]
    %v1129 = vld [vmem:[#allocation7 + $0x18] sm:$0xff]
    %v1130 = vld [vmem:[#allocation7 + $0x20] sm:$0xff]
    %v1131 = vld [vmem:[#allocation7 + $0x28] sm:$0xff]
    %v1132 = vld [vmem:[#allocation7 + $0x30] sm:$0xff]
    %v1133 = vld [vmem:[#allocation7 + $0x38] sm:$0xff]
    %v1134 = vld [vmem:[#allocation7 + $0x40] sm:$0xff]
    %v1135 = vld [vmem:[#allocation7 + $0x48] sm:$0xff]
    %v1136 = vld [vmem:[#allocation7 + $0x50] sm:$0xff]
    %v1137 = vld [vmem:[#allocation7 + $0x58] sm:$0xff]
    %v1138 = vld [vmem:[#allocation7 + $0x60] sm:$0xff]
    %v1139 = vld [vmem:[#allocation7 + $0x68] sm:$0xff]
    %v1140 = vld [vmem:[#allocation7 + $0x70] sm:$0xff]
    %v1141 = vld [vmem:[#allocation7 + $0x78] sm:$0xff]
    %v1142 = vld [vmem:[#allocation7 + $0x80] sm:$0xff]
    %v1143 = vld [vmem:[#allocation7 + $0x88] sm:$0xff]
    %v1144 = vld [vmem:[#allocation7 + $0x90] sm:$0xff]
    %v1145 = vld [vmem:[#allocation7 + $0x98] sm:$0xff]
    %v1146 = vld [vmem:[#allocation7 + $0xa0] sm:$0xff]
    %v1147 = vld [vmem:[#allocation7 + $0xa8] sm:$0xff]
    %v1148 = vld [vmem:[#allocation7 + $0xb0] sm:$0xff]
    %v1149 = vld [vmem:[#allocation7 + $0xb8] sm:$0xff]
    %v1150 = vld [vmem:[#allocation7 + $0xc0] sm:$0xff]
    %v1151 = vld [vmem:[#allocation7 + $0xc8] sm:$0xff]
    %v1152 = vld [vmem:[#allocation7 + $0xd0] sm:$0xff]
    %v1153 = vld [vmem:[#allocation7 + $0xd8] sm:$0xff]
    %v1154 = vld [vmem:[#allocation7 + $0xe0] sm:$0xff]
    %v1155 = vld [vmem:[#allocation7 + $0xe8] sm:$0xff]
    %v1156 = vld [vmem:[#allocation7 + $0xf0] sm:$0xff]
    %v1157 = vld [vmem:[#allocation7 + $0xf8] sm:$0xff]
    %v1158 = vld [vmem:[#allocation7 + $0x100] sm:$0xff]
    %v1159 = vld [vmem:[#allocation7 + $0x108] sm:$0xff]
    %v1160 = vld [vmem:[#allocation7 + $0x110] sm:$0xff]
    %v1161 = vld [vmem:[#allocation7 + $0x118] sm:$0xff]
    %v1162 = vld [vmem:[#allocation7 + $0x120] sm:$0xff]
    %v1163 = vld [vmem:[#allocation7 + $0x128] sm:$0xff]
    %v1164 = vld [vmem:[#allocation7 + $0x130] sm:$0xff]
    %v1165 = vld [vmem:[#allocation7 + $0x138] sm:$0xff]
    %v1166 = vld [vmem:[#allocation7 + $0x140] sm:$0xff]
    %v1167 = vld [vmem:[#allocation7 + $0x148] sm:$0xff]
    %v1168 = vld [vmem:[#allocation7 + $0x150] sm:$0xff]
    %v1169 = vld [vmem:[#allocation7 + $0x158] sm:$0xff]
    %v1170 = vld [vmem:[#allocation7 + $0x160] sm:$0xff]
    %v1171 = vld [vmem:[#allocation7 + $0x168] sm:$0xff]
    %v1172 = vld [vmem:[#allocation7 + $0x170] sm:$0xff]
    %v1173 = vld [vmem:[#allocation7 + $0x178] sm:$0xff]
    %v1174 = vld [vmem:[#allocation7 + $0x180] sm:$0xff]
    %v1175 = vld [vmem:[#allocation7 + $0x188] sm:$0xff]
    %v1176 = vld [vmem:[#allocation7 + $0x190] sm:$0xff]
    %v1177 = vld [vmem:[#allocation7 + $0x198] sm:$0xff]
    %v1178 = vld [vmem:[#allocation7 + $0x1a0] sm:$0xff]
    %v1179 = vld [vmem:[#allocation7 + $0x1a8] sm:$0xff]
    %v1180 = vld [vmem:[#allocation7 + $0x1b0] sm:$0xff]
    %v1181 = vld [vmem:[#allocation7 + $0x1b8] sm:$0xff]
    %v1182 = vld [vmem:[#allocation7 + $0x1c0] sm:$0xff]
    %v1183 = vld [vmem:[#allocation7 + $0x1c8] sm:$0xff]
    %v1184 = vld [vmem:[#allocation7 + $0x1d0] sm:$0xff]
    %v1185 = vld [vmem:[#allocation7 + $0x1d8] sm:$0xff]
    %v1186 = vld [vmem:[#allocation7 + $0x1e0] sm:$0xff]
    %v1187 = vld [vmem:[#allocation7 + $0x1e8] sm:$0xff]
    %v1188 = vld [vmem:[#allocation7 + $0x1f0] sm:$0xff]
    %v1189 = vld [vmem:[#allocation7 + $0x1f8] sm:$0xff]
    %1190 = vmatpush.msra.mxu0 %v1186
    %1191 = vmatpush.msra.mxu0 %v1182
    %1192 = vmatpush.msra.mxu0 %v1178
    %1193 = vmatpush.msra.mxu0 %v1174
    %1194 = vmatpush.msra.mxu0 %v1170
    %1195 = vmatpush.msra.mxu0 %v1166
    %1196 = vmatpush.msra.mxu0 %v1162
    %1197 = vmatpush.msra.mxu0 %v1158
    %1198 = vmatpush.msra.mxu0 %v1154
    %1199 = vmatpush.msra.mxu0 %v1150
    %1200 = vmatpush.msra.mxu0 %v1146
    %1201 = vmatpush.msra.mxu0 %v1142
    %1202 = vmatpush.msra.mxu0 %v1138
    %1203 = vmatpush.msra.mxu0 %v1134
    %1204 = vmatpush.msra.mxu0 %v1130
    %1205 = vmatpush.msra.mxu0 %v1126
    %1206 = vmatmul.f32.gmra.mxu0 %v1108
    %v1207 = vpop.f32.mrf.mxu0
    %v1208 = vadd.f32 0.0, %v1207
    %1209 = vdwg.mxu0
    %1210 = vmatpush.msra.mxu0 %v1187
    %1211 = vmatpush.msra.mxu0 %v1183
    %1212 = vmatpush.msra.mxu0 %v1179
    %1213 = vmatpush.msra.mxu0 %v1175
    %1214 = vmatpush.msra.mxu0 %v1171
    %1215 = vmatpush.msra.mxu0 %v1167
    %1216 = vmatpush.msra.mxu0 %v1163
    %1217 = vmatpush.msra.mxu0 %v1159
    %1218 = vmatpush.msra.mxu0 %v1155
    %1219 = vmatpush.msra.mxu0 %v1151
    %1220 = vmatpush.msra.mxu0 %v1147
    %1221 = vmatpush.msra.mxu0 %v1143
    %1222 = vmatpush.msra.mxu0 %v1139
    %1223 = vmatpush.msra.mxu0 %v1135
    %1224 = vmatpush.msra.mxu0 %v1131
    %1225 = vmatpush.msra.mxu0 %v1127
    %1226 = vmatmul.f32.gmra.mxu0 %v1108
    %v1227 = vpop.f32.mrf.mxu0
    %v1228 = vadd.f32 0.0, %v1227
    %1229 = vdwg.mxu0
    %1230 = vmatpush.msra.mxu0 %v1188
    %1231 = vmatpush.msra.mxu0 %v1184
    %1232 = vmatpush.msra.mxu0 %v1180
    %1233 = vmatpush.msra.mxu0 %v1176
    %1234 = vmatpush.msra.mxu0 %v1172
    %1235 = vmatpush.msra.mxu0 %v1168
    %1236 = vmatpush.msra.mxu0 %v1164
    %1237 = vmatpush.msra.mxu0 %v1160
    %1238 = vmatpush.msra.mxu0 %v1156
    %1239 = vmatpush.msra.mxu0 %v1152
    %1240 = vmatpush.msra.mxu0 %v1148
    %1241 = vmatpush.msra.mxu0 %v1144
    %1242 = vmatpush.msra.mxu0 %v1140
    %1243 = vmatpush.msra.mxu0 %v1136
    %1244 = vmatpush.msra.mxu0 %v1132
    %1245 = vmatpush.msra.mxu0 %v1128
    %1246 = vmatmul.f32.gmra.mxu0 %v1108
    %v1247 = vpop.f32.mrf.mxu0
    %v1248 = vadd.f32 0.0, %v1247
    %1249 = vdwg.mxu0
    %1250 = vmatpush.msra.mxu0 %v1189
    %1251 = vmatpush.msra.mxu0 %v1185
    %1252 = vmatpush.msra.mxu0 %v1181
    %1253 = vmatpush.msra.mxu0 %v1177
    %1254 = vmatpush.msra.mxu0 %v1173
    %1255 = vmatpush.msra.mxu0 %v1169
    %1256 = vmatpush.msra.mxu0 %v1165
    %1257 = vmatpush.msra.mxu0 %v1161
    %1258 = vmatpush.msra.mxu0 %v1157
    %1259 = vmatpush.msra.mxu0 %v1153
    %1260 = vmatpush.msra.mxu0 %v1149
    %1261 = vmatpush.msra.mxu0 %v1145
    %1262 = vmatpush.msra.mxu0 %v1141
    %1263 = vmatpush.msra.mxu0 %v1137
    %1264 = vmatpush.msra.mxu0 %v1133
    %1265 = vmatpush.msra.mxu0 %v1129
    %1266 = vmatmul.f32.gmra.mxu0 %v1108
    %v1267 = vpop.f32.mrf.mxu0
    %v1268 = vadd.f32 0.0, %v1267
    %1269 = vdwg.mxu0
    %v1270 = vadd.f32 %v1122, %v1208
    %v1271 = vadd.f32 %v1123, %v1228
    %v1272 = vadd.f32 %v1124, %v1248
    %v1273 = vadd.f32 %v1125, %v1268
    %v1274 = vxor.u32 %v1270, 2147483648
    %v1275 = vmul.f32 %v1274, 1.442695
    %v1276 = vpow.pop %v1275
    %v1277 = vadd.f32 %v1276, 1.0
    %v1278 = vrcp.pop %v1277
    %v1279 = vmul.f32 %v1277, %v1278
    %v1280 = vsub.f32 1.0, %v1279
    %v1281 = vmul.f32 %v1278, %v1280
    %v1282 = vadd.f32 %v1278, %v1281
    %vm1283 = vweird.f32 %v1277
    %vm1284 = vweird.f32 %v1278
    %vm1285 = vmor %vm1283, %vm1284
    %v1286 = vsel %vm1285, %v1278, %v1282
    %v1287 = vand.u32 2147483647, %v1277
    %vm1288 = vcmp.eq.f32.partialorder %v1287, 8.507059e+37
    %v1289 = vand.u32 %v1277, 2147483648
    %v1290 = vor.u32 1.1754944e-38, %v1289
    %v1291 = vsel %vm1288, %v1290, %v1286
    %v1292 = vmul.f32 1.0, %v1291
    %v1293 = vxor.u32 %v1271, 2147483648
    %v1294 = vmul.f32 %v1293, 1.442695
    %v1295 = vpow.pop %v1294
    %v1296 = vadd.f32 %v1295, 1.0
    %v1297 = vrcp.pop %v1296
    %v1298 = vmul.f32 %v1296, %v1297
    %v1299 = vsub.f32 1.0, %v1298
    %v1300 = vmul.f32 %v1297, %v1299
    %v1301 = vadd.f32 %v1297, %v1300
    %vm1302 = vweird.f32 %v1296
    %vm1303 = vweird.f32 %v1297
    %vm1304 = vmor %vm1302, %vm1303
    %v1305 = vsel %vm1304, %v1297, %v1301
    %v1306 = vand.u32 2147483647, %v1296
    %vm1307 = vcmp.eq.f32.partialorder %v1306, 8.507059e+37
    %v1308 = vand.u32 %v1296, 2147483648
    %v1309 = vor.u32 1.1754944e-38, %v1308
    %v1310 = vsel %vm1307, %v1309, %v1305
    %v1311 = vmul.f32 1.0, %v1310
    %v1312 = vtanh.pop %v1272
    %v1313 = vxor.u32 %v1273, 2147483648
    %v1314 = vmul.f32 %v1313, 1.442695
    %v1315 = vpow.pop %v1314
    %v1316 = vadd.f32 %v1315, 1.0
    %v1317 = vrcp.pop %v1316
    %v1318 = vmul.f32 %v1316, %v1317
    %v1319 = vsub.f32 1.0, %v1318
    %v1320 = vmul.f32 %v1317, %v1319
    %v1321 = vadd.f32 %v1317, %v1320
    %vm1322 = vweird.f32 %v1316
    %vm1323 = vweird.f32 %v1317
    %vm1324 = vmor %vm1322, %vm1323
    %v1325 = vsel %vm1324, %v1317, %v1321
    %v1326 = vand.u32 2147483647, %v1316
    %vm1327 = vcmp.eq.f32.partialorder %v1326, 8.507059e+37
    %v1328 = vand.u32 %v1316, 2147483648
    %v1329 = vor.u32 1.1754944e-38, %v1328
    %v1330 = vsel %vm1327, %v1329, %v1325
    %v1331 = vmul.f32 1.0, %v1330
    %v1332 = vmul.f32 %v1311, %v1109
    %v1333 = vmul.f32 %v1292, %v1312
    %v1334 = vadd.f32 %v1332, %v1333
    %v1335 = vtanh.pop %v1334
    %v1336 = vmul.f32 %v1331, %v1335
    %v1337 = vld [vmem:[%s1 + $0x18] sm:$0xff]
    %v1338 = vld [vmem:[%s2 + $0x20] sm:$0xff]
    %v1339 = vadd.f32 %v1337, %v1338
    %vm1340 = vcmp.gt.f32.partialorder %v1339, 0.5
    %v1341 = vsel %vm1340, %v1336, %v1108
    %v1342 = vsel %vm1340, %v1334, %v1109
    %v1343 = vmul.f32 %v1337, %v1336
    %1344 = vst [vmem:[#allocation3 + $0x18] sm:$0xff] %v1343
    %v1345 = vmul.f32 %v1338, %v1336
    %1346 = vst [vmem:[#allocation4 + $0x20] sm:$0xff] %v1345
    %v1347 = vld [vmem:[#allocation2 + $0x80] sm:$0xff]
    %v1348 = vld [vmem:[#allocation2 + $0x88] sm:$0xff]
    %v1349 = vld [vmem:[#allocation2 + $0x90] sm:$0xff]
    %v1350 = vld [vmem:[#allocation2 + $0x98] sm:$0xff]
    %v1351 = vld [vmem:[#allocation2 + $0x60] sm:$0xff]
    %v1352 = vld [vmem:[#allocation2 + $0x68] sm:$0xff]
    %v1353 = vld [vmem:[#allocation2 + $0x70] sm:$0xff]
    %v1354 = vld [vmem:[#allocation2 + $0x78] sm:$0xff]
    %v1355 = vsel %vm422, %v1347, %v1351
    %v1356 = vsel %vm422, %v1348, %v1352
    %v1357 = vsel %vm422, %v1349, %v1353
    %v1358 = vsel %vm422, %v1350, %v1354
    %v1359 = vld [vmem:[#allocation7] sm:$0xff]
    %v1360 = vld [vmem:[#allocation7 + $0x8] sm:$0xff]
    %v1361 = vld [vmem:[#allocation7 + $0x10] sm:$0xff]
    %v1362 = vld [vmem:[#allocation7 + $0x18] sm:$0xff]
    %v1363 = vld [vmem:[#allocation7 + $0x20] sm:$0xff]
    %v1364 = vld [vmem:[#allocation7 + $0x28] sm:$0xff]
    %v1365 = vld [vmem:[#allocation7 + $0x30] sm:$0xff]
    %v1366 = vld [vmem:[#allocation7 + $0x38] sm:$0xff]
    %v1367 = vld [vmem:[#allocation7 + $0x40] sm:$0xff]
    %v1368 = vld [vmem:[#allocation7 + $0x48] sm:$0xff]
    %v1369 = vld [vmem:[#allocation7 + $0x50] sm:$0xff]
    %v1370 = vld [vmem:[#allocation7 + $0x58] sm:$0xff]
    %v1371 = vld [vmem:[#allocation7 + $0x60] sm:$0xff]
    %v1372 = vld [vmem:[#allocation7 + $0x68] sm:$0xff]
    %v1373 = vld [vmem:[#allocation7 + $0x70] sm:$0xff]
    %v1374 = vld [vmem:[#allocation7 + $0x78] sm:$0xff]
    %v1375 = vld [vmem:[#allocation7 + $0x80] sm:$0xff]
    %v1376 = vld [vmem:[#allocation7 + $0x88] sm:$0xff]
    %v1377 = vld [vmem:[#allocation7 + $0x90] sm:$0xff]
    %v1378 = vld [vmem:[#allocation7 + $0x98] sm:$0xff]
    %v1379 = vld [vmem:[#allocation7 + $0xa0] sm:$0xff]
    %v1380 = vld [vmem:[#allocation7 + $0xa8] sm:$0xff]
    %v1381 = vld [vmem:[#allocation7 + $0xb0] sm:$0xff]
    %v1382 = vld [vmem:[#allocation7 + $0xb8] sm:$0xff]
    %v1383 = vld [vmem:[#allocation7 + $0xc0] sm:$0xff]
    %v1384 = vld [vmem:[#allocation7 + $0xc8] sm:$0xff]
    %v1385 = vld [vmem:[#allocation7 + $0xd0] sm:$0xff]
    %v1386 = vld [vmem:[#allocation7 + $0xd8] sm:$0xff]
    %v1387 = vld [vmem:[#allocation7 + $0xe0] sm:$0xff]
    %v1388 = vld [vmem:[#allocation7 + $0xe8] sm:$0xff]
    %v1389 = vld [vmem:[#allocation7 + $0xf0] sm:$0xff]
    %v1390 = vld [vmem:[#allocation7 + $0xf8] sm:$0xff]
    %v1391 = vld [vmem:[#allocation7 + $0x100] sm:$0xff]
    %v1392 = vld [vmem:[#allocation7 + $0x108] sm:$0xff]
    %v1393 = vld [vmem:[#allocation7 + $0x110] sm:$0xff]
    %v1394 = vld [vmem:[#allocation7 + $0x118] sm:$0xff]
    %v1395 = vld [vmem:[#allocation7 + $0x120] sm:$0xff]
    %v1396 = vld [vmem:[#allocation7 + $0x128] sm:$0xff]
    %v1397 = vld [vmem:[#allocation7 + $0x130] sm:$0xff]
    %v1398 = vld [vmem:[#allocation7 + $0x138] sm:$0xff]
    %v1399 = vld [vmem:[#allocation7 + $0x140] sm:$0xff]
    %v1400 = vld [vmem:[#allocation7 + $0x148] sm:$0xff]
    %v1401 = vld [vmem:[#allocation7 + $0x150] sm:$0xff]
    %v1402 = vld [vmem:[#allocation7 + $0x158] sm:$0xff]
    %v1403 = vld [vmem:[#allocation7 + $0x160] sm:$0xff]
    %v1404 = vld [vmem:[#allocation7 + $0x168] sm:$0xff]
    %v1405 = vld [vmem:[#allocation7 + $0x170] sm:$0xff]
    %v1406 = vld [vmem:[#allocation7 + $0x178] sm:$0xff]
    %v1407 = vld [vmem:[#allocation7 + $0x180] sm:$0xff]
    %v1408 = vld [vmem:[#allocation7 + $0x188] sm:$0xff]
    %v1409 = vld [vmem:[#allocation7 + $0x190] sm:$0xff]
    %v1410 = vld [vmem:[#allocation7 + $0x198] sm:$0xff]
    %v1411 = vld [vmem:[#allocation7 + $0x1a0] sm:$0xff]
    %v1412 = vld [vmem:[#allocation7 + $0x1a8] sm:$0xff]
    %v1413 = vld [vmem:[#allocation7 + $0x1b0] sm:$0xff]
    %v1414 = vld [vmem:[#allocation7 + $0x1b8] sm:$0xff]
    %v1415 = vld [vmem:[#allocation7 + $0x1c0] sm:$0xff]
    %v1416 = vld [vmem:[#allocation7 + $0x1c8] sm:$0xff]
    %v1417 = vld [vmem:[#allocation7 + $0x1d0] sm:$0xff]
    %v1418 = vld [vmem:[#allocation7 + $0x1d8] sm:$0xff]
    %v1419 = vld [vmem:[#allocation7 + $0x1e0] sm:$0xff]
    %v1420 = vld [vmem:[#allocation7 + $0x1e8] sm:$0xff]
    %v1421 = vld [vmem:[#allocation7 + $0x1f0] sm:$0xff]
    %v1422 = vld [vmem:[#allocation7 + $0x1f8] sm:$0xff]
    %1423 = vmatpush.msra.mxu0 %v1419
    %1424 = vmatpush.msra.mxu0 %v1415
    %1425 = vmatpush.msra.mxu0 %v1411
    %1426 = vmatpush.msra.mxu0 %v1407
    %1427 = vmatpush.msra.mxu0 %v1403
    %1428 = vmatpush.msra.mxu0 %v1399
    %1429 = vmatpush.msra.mxu0 %v1395
    %1430 = vmatpush.msra.mxu0 %v1391
    %1431 = vmatpush.msra.mxu0 %v1387
    %1432 = vmatpush.msra.mxu0 %v1383
    %1433 = vmatpush.msra.mxu0 %v1379
    %1434 = vmatpush.msra.mxu0 %v1375
    %1435 = vmatpush.msra.mxu0 %v1371
    %1436 = vmatpush.msra.mxu0 %v1367
    %1437 = vmatpush.msra.mxu0 %v1363
    %1438 = vmatpush.msra.mxu0 %v1359
    %1439 = vmatmul.f32.gmra.mxu0 %v1341
    %v1440 = vpop.f32.mrf.mxu0
    %v1441 = vadd.f32 0.0, %v1440
    %1442 = vdwg.mxu0
    %1443 = vmatpush.msra.mxu0 %v1420
    %1444 = vmatpush.msra.mxu0 %v1416
    %1445 = vmatpush.msra.mxu0 %v1412
    %1446 = vmatpush.msra.mxu0 %v1408
    %1447 = vmatpush.msra.mxu0 %v1404
    %1448 = vmatpush.msra.mxu0 %v1400
    %1449 = vmatpush.msra.mxu0 %v1396
    %1450 = vmatpush.msra.mxu0 %v1392
    %1451 = vmatpush.msra.mxu0 %v1388
    %1452 = vmatpush.msra.mxu0 %v1384
    %1453 = vmatpush.msra.mxu0 %v1380
    %1454 = vmatpush.msra.mxu0 %v1376
    %1455 = vmatpush.msra.mxu0 %v1372
    %1456 = vmatpush.msra.mxu0 %v1368
    %1457 = vmatpush.msra.mxu0 %v1364
    %1458 = vmatpush.msra.mxu0 %v1360
    %1459 = vmatmul.f32.gmra.mxu0 %v1341
    %v1460 = vpop.f32.mrf.mxu0
    %v1461 = vadd.f32 0.0, %v1460
    %1462 = vdwg.mxu0
    %1463 = vmatpush.msra.mxu0 %v1421
    %1464 = vmatpush.msra.mxu0 %v1417
    %1465 = vmatpush.msra.mxu0 %v1413
    %1466 = vmatpush.msra.mxu0 %v1409
    %1467 = vmatpush.msra.mxu0 %v1405
    %1468 = vmatpush.msra.mxu0 %v1401
    %1469 = vmatpush.msra.mxu0 %v1397
    %1470 = vmatpush.msra.mxu0 %v1393
    %1471 = vmatpush.msra.mxu0 %v1389
    %1472 = vmatpush.msra.mxu0 %v1385
    %1473 = vmatpush.msra.mxu0 %v1381
    %1474 = vmatpush.msra.mxu0 %v1377
    %1475 = vmatpush.msra.mxu0 %v1373
    %1476 = vmatpush.msra.mxu0 %v1369
    %1477 = vmatpush.msra.mxu0 %v1365
    %1478 = vmatpush.msra.mxu0 %v1361
    %1479 = vmatmul.f32.gmra.mxu0 %v1341
    %v1480 = vpop.f32.mrf.mxu0
    %v1481 = vadd.f32 0.0, %v1480
    %1482 = vdwg.mxu0
    %1483 = vmatpush.msra.mxu0 %v1422
    %1484 = vmatpush.msra.mxu0 %v1418
    %1485 = vmatpush.msra.mxu0 %v1414
    %1486 = vmatpush.msra.mxu0 %v1410
    %1487 = vmatpush.msra.mxu0 %v1406
    %1488 = vmatpush.msra.mxu0 %v1402
    %1489 = vmatpush.msra.mxu0 %v1398
    %1490 = vmatpush.msra.mxu0 %v1394
    %1491 = vmatpush.msra.mxu0 %v1390
    %1492 = vmatpush.msra.mxu0 %v1386
    %1493 = vmatpush.msra.mxu0 %v1382
    %1494 = vmatpush.msra.mxu0 %v1378
    %1495 = vmatpush.msra.mxu0 %v1374
    %1496 = vmatpush.msra.mxu0 %v1370
    %1497 = vmatpush.msra.mxu0 %v1366
    %1498 = vmatpush.msra.mxu0 %v1362
    %1499 = vmatmul.f32.gmra.mxu0 %v1341
    %v1500 = vpop.f32.mrf.mxu0
    %v1501 = vadd.f32 0.0, %v1500
    %1502 = vdwg.mxu0
    %v1503 = vadd.f32 %v1355, %v1441
    %v1504 = vadd.f32 %v1356, %v1461
    %v1505 = vadd.f32 %v1357, %v1481
    %v1506 = vadd.f32 %v1358, %v1501
    %v1507 = vxor.u32 %v1503, 2147483648
    %v1508 = vmul.f32 %v1507, 1.442695
    %v1509 = vpow.pop %v1508
    %v1510 = vadd.f32 %v1509, 1.0
    %v1511 = vrcp.pop %v1510
    %v1512 = vmul.f32 %v1510, %v1511
    %v1513 = vsub.f32 1.0, %v1512
    %v1514 = vmul.f32 %v1511, %v1513
    %v1515 = vadd.f32 %v1511, %v1514
    %vm1516 = vweird.f32 %v1510
    %vm1517 = vweird.f32 %v1511
    %vm1518 = vmor %vm1516, %vm1517
    %v1519 = vsel %vm1518, %v1511, %v1515
    %v1520 = vand.u32 2147483647, %v1510
    %vm1521 = vcmp.eq.f32.partialorder %v1520, 8.507059e+37
    %v1522 = vand.u32 %v1510, 2147483648
    %v1523 = vor.u32 1.1754944e-38, %v1522
    %v1524 = vsel %vm1521, %v1523, %v1519
    %v1525 = vmul.f32 1.0, %v1524
    %v1526 = vxor.u32 %v1504, 2147483648
    %v1527 = vmul.f32 %v1526, 1.442695
    %v1528 = vpow.pop %v1527
    %v1529 = vadd.f32 %v1528, 1.0
    %v1530 = vrcp.pop %v1529
    %v1531 = vmul.f32 %v1529, %v1530
    %v1532 = vsub.f32 1.0, %v1531
    %v1533 = vmul.f32 %v1530, %v1532
    %v1534 = vadd.f32 %v1530, %v1533
    %vm1535 = vweird.f32 %v1529
    %vm1536 = vweird.f32 %v1530
    %vm1537 = vmor %vm1535, %vm1536
    %v1538 = vsel %vm1537, %v1530, %v1534
    %v1539 = vand.u32 2147483647, %v1529
    %vm1540 = vcmp.eq.f32.partialorder %v1539, 8.507059e+37
    %v1541 = vand.u32 %v1529, 2147483648
    %v1542 = vor.u32 1.1754944e-38, %v1541
    %v1543 = vsel %vm1540, %v1542, %v1538
    %v1544 = vmul.f32 1.0, %v1543
    %v1545 = vtanh.pop %v1505
    %v1546 = vxor.u32 %v1506, 2147483648
    %v1547 = vmul.f32 %v1546, 1.442695
    %v1548 = vpow.pop %v1547
    %v1549 = vadd.f32 %v1548, 1.0
    %v1550 = vrcp.pop %v1549
    %v1551 = vmul.f32 %v1549, %v1550
    %v1552 = vsub.f32 1.0, %v1551
    %v1553 = vmul.f32 %v1550, %v1552
    %v1554 = vadd.f32 %v1550, %v1553
    %vm1555 = vweird.f32 %v1549
    %vm1556 = vweird.f32 %v1550
    %vm1557 = vmor %vm1555, %vm1556
    %v1558 = vsel %vm1557, %v1550, %v1554
    %v1559 = vand.u32 2147483647, %v1549
    %vm1560 = vcmp.eq.f32.partialorder %v1559, 8.507059e+37
    %v1561 = vand.u32 %v1549, 2147483648
    %v1562 = vor.u32 1.1754944e-38, %v1561
    %v1563 = vsel %vm1560, %v1562, %v1558
    %v1564 = vmul.f32 1.0, %v1563
    %v1565 = vmul.f32 %v1544, %v1342
    %v1566 = vmul.f32 %v1525, %v1545
    %v1567 = vadd.f32 %v1565, %v1566
    %v1568 = vtanh.pop %v1567
    %v1569 = vmul.f32 %v1564, %v1568
    %v1570 = vld [vmem:[%s1 + $0x20] sm:$0xff]
    %v1571 = vld [vmem:[%s2 + $0x18] sm:$0xff]
    %v1572 = vadd.f32 %v1570, %v1571
    %vm1573 = vcmp.gt.f32.partialorder %v1572, 0.5
    %v1574 = vsel %vm1573, %v1569, %v1341
    %v1575 = vsel %vm1573, %v1567, %v1342
    %v1576 = vmul.f32 %v1570, %v1569
    %1577 = vst [vmem:[#allocation3 + $0x20] sm:$0xff] %v1576
    %v1578 = vmul.f32 %v1571, %v1569
    %1579 = vst [vmem:[#allocation4 + $0x18] sm:$0xff] %v1578
    %v1580 = vld [vmem:[#allocation2 + $0xa0] sm:$0xff]
    %v1581 = vld [vmem:[#allocation2 + $0xa8] sm:$0xff]
    %v1582 = vld [vmem:[#allocation2 + $0xb0] sm:$0xff]
    %v1583 = vld [vmem:[#allocation2 + $0xb8] sm:$0xff]
    %v1584 = vld [vmem:[#allocation2 + $0x40] sm:$0xff]
    %v1585 = vld [vmem:[#allocation2 + $0x48] sm:$0xff]
    %v1586 = vld [vmem:[#allocation2 + $0x50] sm:$0xff]
    %v1587 = vld [vmem:[#allocation2 + $0x58] sm:$0xff]
    %v1588 = vsel %vm422, %v1580, %v1584
    %v1589 = vsel %vm422, %v1581, %v1585
    %v1590 = vsel %vm422, %v1582, %v1586
    %v1591 = vsel %vm422, %v1583, %v1587
    %v1592 = vld [vmem:[#allocation7] sm:$0xff]
    %v1593 = vld [vmem:[#allocation7 + $0x8] sm:$0xff]
    %v1594 = vld [vmem:[#allocation7 + $0x10] sm:$0xff]
    %v1595 = vld [vmem:[#allocation7 + $0x18] sm:$0xff]
    %v1596 = vld [vmem:[#allocation7 + $0x20] sm:$0xff]
    %v1597 = vld [vmem:[#allocation7 + $0x28] sm:$0xff]
    %v1598 = vld [vmem:[#allocation7 + $0x30] sm:$0xff]
    %v1599 = vld [vmem:[#allocation7 + $0x38] sm:$0xff]
    %v1600 = vld [vmem:[#allocation7 + $0x40] sm:$0xff]
    %v1601 = vld [vmem:[#allocation7 + $0x48] sm:$0xff]
    %v1602 = vld [vmem:[#allocation7 + $0x50] sm:$0xff]
    %v1603 = vld [vmem:[#allocation7 + $0x58] sm:$0xff]
    %v1604 = vld [vmem:[#allocation7 + $0x60] sm:$0xff]
    %v1605 = vld [vmem:[#allocation7 + $0x68] sm:$0xff]
    %v1606 = vld [vmem:[#allocation7 + $0x70] sm:$0xff]
    %v1607 = vld [vmem:[#allocation7 + $0x78] sm:$0xff]
    %v1608 = vld [vmem:[#allocation7 + $0x80] sm:$0xff]
    %v1609 = vld [vmem:[#allocation7 + $0x88] sm:$0xff]
    %v1610 = vld [vmem:[#allocation7 + $0x90] sm:$0xff]
    %v1611 = vld [vmem:[#allocation7 + $0x98] sm:$0xff]
    %v1612 = vld [vmem:[#allocation7 + $0xa0] sm:$0xff]
    %v1613 = vld [vmem:[#allocation7 + $0xa8] sm:$0xff]
    %v1614 = vld [vmem:[#allocation7 + $0xb0] sm:$0xff]
    %v1615 = vld [vmem:[#allocation7 + $0xb8] sm:$0xff]
    %v1616 = vld [vmem:[#allocation7 + $0xc0] sm:$0xff]
    %v1617 = vld [vmem:[#allocation7 + $0xc8] sm:$0xff]
    %v1618 = vld [vmem:[#allocation7 + $0xd0] sm:$0xff]
    %v1619 = vld [vmem:[#allocation7 + $0xd8] sm:$0xff]
    %v1620 = vld [vmem:[#allocation7 + $0xe0] sm:$0xff]
    %v1621 = vld [vmem:[#allocation7 + $0xe8] sm:$0xff]
    %v1622 = vld [vmem:[#allocation7 + $0xf0] sm:$0xff]
    %v1623 = vld [vmem:[#allocation7 + $0xf8] sm:$0xff]
    %v1624 = vld [vmem:[#allocation7 + $0x100] sm:$0xff]
    %v1625 = vld [vmem:[#allocation7 + $0x108] sm:$0xff]
    %v1626 = vld [vmem:[#allocation7 + $0x110] sm:$0xff]
    %v1627 = vld [vmem:[#allocation7 + $0x118] sm:$0xff]
    %v1628 = vld [vmem:[#allocation7 + $0x120] sm:$0xff]
    %v1629 = vld [vmem:[#allocation7 + $0x128] sm:$0xff]
    %v1630 = vld [vmem:[#allocation7 + $0x130] sm:$0xff]
    %v1631 = vld [vmem:[#allocation7 + $0x138] sm:$0xff]
    %v1632 = vld [vmem:[#allocation7 + $0x140] sm:$0xff]
    %v1633 = vld [vmem:[#allocation7 + $0x148] sm:$0xff]
    %v1634 = vld [vmem:[#allocation7 + $0x150] sm:$0xff]
    %v1635 = vld [vmem:[#allocation7 + $0x158] sm:$0xff]
    %v1636 = vld [vmem:[#allocation7 + $0x160] sm:$0xff]
    %v1637 = vld [vmem:[#allocation7 + $0x168] sm:$0xff]
    %v1638 = vld [vmem:[#allocation7 + $0x170] sm:$0xff]
    %v1639 = vld [vmem:[#allocation7 + $0x178] sm:$0xff]
    %v1640 = vld [vmem:[#allocation7 + $0x180] sm:$0xff]
    %v1641 = vld [vmem:[#allocation7 + $0x188] sm:$0xff]
    %v1642 = vld [vmem:[#allocation7 + $0x190] sm:$0xff]
    %v1643 = vld [vmem:[#allocation7 + $0x198] sm:$0xff]
    %v1644 = vld [vmem:[#allocation7 + $0x1a0] sm:$0xff]
    %v1645 = vld [vmem:[#allocation7 + $0x1a8] sm:$0xff]
    %v1646 = vld [vmem:[#allocation7 + $0x1b0] sm:$0xff]
    %v1647 = vld [vmem:[#allocation7 + $0x1b8] sm:$0xff]
    %v1648 = vld [vmem:[#allocation7 + $0x1c0] sm:$0xff]
    %v1649 = vld [vmem:[#allocation7 + $0x1c8] sm:$0xff]
    %v1650 = vld [vmem:[#allocation7 + $0x1d0] sm:$0xff]
    %v1651 = vld [vmem:[#allocation7 + $0x1d8] sm:$0xff]
    %v1652 = vld [vmem:[#allocation7 + $0x1e0] sm:$0xff]
    %v1653 = vld [vmem:[#allocation7 + $0x1e8] sm:$0xff]
    %v1654 = vld [vmem:[#allocation7 + $0x1f0] sm:$0xff]
    %v1655 = vld [vmem:[#allocation7 + $0x1f8] sm:$0xff]
    %1656 = vmatpush.msra.mxu0 %v1652
    %1657 = vmatpush.msra.mxu0 %v1648
    %1658 = vmatpush.msra.mxu0 %v1644
    %1659 = vmatpush.msra.mxu0 %v1640
    %1660 = vmatpush.msra.mxu0 %v1636
    %1661 = vmatpush.msra.mxu0 %v1632
    %1662 = vmatpush.msra.mxu0 %v1628
    %1663 = vmatpush.msra.mxu0 %v1624
    %1664 = vmatpush.msra.mxu0 %v1620
    %1665 = vmatpush.msra.mxu0 %v1616
    %1666 = vmatpush.msra.mxu0 %v1612
    %1667 = vmatpush.msra.mxu0 %v1608
    %1668 = vmatpush.msra.mxu0 %v1604
    %1669 = vmatpush.msra.mxu0 %v1600
    %1670 = vmatpush.msra.mxu0 %v1596
    %1671 = vmatpush.msra.mxu0 %v1592
    %1672 = vmatmul.f32.gmra.mxu0 %v1574
    %v1673 = vpop.f32.mrf.mxu0
    %v1674 = vadd.f32 0.0, %v1673
    %1675 = vdwg.mxu0
    %1676 = vmatpush.msra.mxu0 %v1653
    %1677 = vmatpush.msra.mxu0 %v1649
    %1678 = vmatpush.msra.mxu0 %v1645
    %1679 = vmatpush.msra.mxu0 %v1641
    %1680 = vmatpush.msra.mxu0 %v1637
    %1681 = vmatpush.msra.mxu0 %v1633
    %1682 = vmatpush.msra.mxu0 %v1629
    %1683 = vmatpush.msra.mxu0 %v1625
    %1684 = vmatpush.msra.mxu0 %v1621
    %1685 = vmatpush.msra.mxu0 %v1617
    %1686 = vmatpush.msra.mxu0 %v1613
    %1687 = vmatpush.msra.mxu0 %v1609
    %1688 = vmatpush.msra.mxu0 %v1605
    %1689 = vmatpush.msra.mxu0 %v1601
    %1690 = vmatpush.msra.mxu0 %v1597
    %1691 = vmatpush.msra.mxu0 %v1593
    %1692 = vmatmul.f32.gmra.mxu0 %v1574
    %v1693 = vpop.f32.mrf.mxu0
    %v1694 = vadd.f32 0.0, %v1693
    %1695 = vdwg.mxu0
    %1696 = vmatpush.msra.mxu0 %v1654
    %1697 = vmatpush.msra.mxu0 %v1650
    %1698 = vmatpush.msra.mxu0 %v1646
    %1699 = vmatpush.msra.mxu0 %v1642
    %1700 = vmatpush.msra.mxu0 %v1638
    %1701 = vmatpush.msra.mxu0 %v1634
    %1702 = vmatpush.msra.mxu0 %v1630
    %1703 = vmatpush.msra.mxu0 %v1626
    %1704 = vmatpush.msra.mxu0 %v1622
    %1705 = vmatpush.msra.mxu0 %v1618
    %1706 = vmatpush.msra.mxu0 %v1614
    %1707 = vmatpush.msra.mxu0 %v1610
    %1708 = vmatpush.msra.mxu0 %v1606
    %1709 = vmatpush.msra.mxu0 %v1602
    %1710 = vmatpush.msra.mxu0 %v1598
    %1711 = vmatpush.msra.mxu0 %v1594
    %1712 = vmatmul.f32.gmra.mxu0 %v1574
    %v1713 = vpop.f32.mrf.mxu0
    %v1714 = vadd.f32 0.0, %v1713
    %1715 = vdwg.mxu0
    %1716 = vmatpush.msra.mxu0 %v1655
    %1717 = vmatpush.msra.mxu0 %v1651
    %1718 = vmatpush.msra.mxu0 %v1647
    %1719 = vmatpush.msra.mxu0 %v1643
    %1720 = vmatpush.msra.mxu0 %v1639
    %1721 = vmatpush.msra.mxu0 %v1635
    %1722 = vmatpush.msra.mxu0 %v1631
    %1723 = vmatpush.msra.mxu0 %v1627
    %1724 = vmatpush.msra.mxu0 %v1623
    %1725 = vmatpush.msra.mxu0 %v1619
    %1726 = vmatpush.msra.mxu0 %v1615
    %1727 = vmatpush.msra.mxu0 %v1611
    %1728 = vmatpush.msra.mxu0 %v1607
    %1729 = vmatpush.msra.mxu0 %v1603
    %1730 = vmatpush.msra.mxu0 %v1599
    %1731 = vmatpush.msra.mxu0 %v1595
    %1732 = vmatmul.f32.gmra.mxu0 %v1574
    %v1733 = vpop.f32.mrf.mxu0
    %v1734 = vadd.f32 0.0, %v1733
    %1735 = vdwg.mxu0
    %v1736 = vadd.f32 %v1588, %v1674
    %v1737 = vadd.f32 %v1589, %v1694
    %v1738 = vadd.f32 %v1590, %v1714
    %v1739 = vadd.f32 %v1591, %v1734
    %v1740 = vxor.u32 %v1736, 2147483648
    %v1741 = vmul.f32 %v1740, 1.442695
    %v1742 = vpow.pop %v1741
    %v1743 = vadd.f32 %v1742, 1.0
    %v1744 = vrcp.pop %v1743
    %v1745 = vmul.f32 %v1743, %v1744
    %v1746 = vsub.f32 1.0, %v1745
    %v1747 = vmul.f32 %v1744, %v1746
    %v1748 = vadd.f32 %v1744, %v1747
    %vm1749 = vweird.f32 %v1743
    %vm1750 = vweird.f32 %v1744
    %vm1751 = vmor %vm1749, %vm1750
    %v1752 = vsel %vm1751, %v1744, %v1748
    %v1753 = vand.u32 2147483647, %v1743
    %vm1754 = vcmp.eq.f32.partialorder %v1753, 8.507059e+37
    %v1755 = vand.u32 %v1743, 2147483648
    %v1756 = vor.u32 1.1754944e-38, %v1755
    %v1757 = vsel %vm1754, %v1756, %v1752
    %v1758 = vmul.f32 1.0, %v1757
    %v1759 = vxor.u32 %v1737, 2147483648
    %v1760 = vmul.f32 %v1759, 1.442695
    %v1761 = vpow.pop %v1760
    %v1762 = vadd.f32 %v1761, 1.0
    %v1763 = vrcp.pop %v1762
    %v1764 = vmul.f32 %v1762, %v1763
    %v1765 = vsub.f32 1.0, %v1764
    %v1766 = vmul.f32 %v1763, %v1765
    %v1767 = vadd.f32 %v1763, %v1766
    %vm1768 = vweird.f32 %v1762
    %vm1769 = vweird.f32 %v1763
    %vm1770 = vmor %vm1768, %vm1769
    %v1771 = vsel %vm1770, %v1763, %v1767
    %v1772 = vand.u32 2147483647, %v1762
    %vm1773 = vcmp.eq.f32.partialorder %v1772, 8.507059e+37
    %v1774 = vand.u32 %v1762, 2147483648
    %v1775 = vor.u32 1.1754944e-38, %v1774
    %v1776 = vsel %vm1773, %v1775, %v1771
    %v1777 = vmul.f32 1.0, %v1776
    %v1778 = vtanh.pop %v1738
    %v1779 = vxor.u32 %v1739, 2147483648
    %v1780 = vmul.f32 %v1779, 1.442695
    %v1781 = vpow.pop %v1780
    %v1782 = vadd.f32 %v1781, 1.0
    %v1783 = vrcp.pop %v1782
    %v1784 = vmul.f32 %v1782, %v1783
    %v1785 = vsub.f32 1.0, %v1784
    %v1786 = vmul.f32 %v1783, %v1785
    %v1787 = vadd.f32 %v1783, %v1786
    %vm1788 = vweird.f32 %v1782
    %vm1789 = vweird.f32 %v1783
    %vm1790 = vmor %vm1788, %vm1789
    %v1791 = vsel %vm1790, %v1783, %v1787
    %v1792 = vand.u32 2147483647, %v1782
    %vm1793 = vcmp.eq.f32.partialorder %v1792, 8.507059e+37
    %v1794 = vand.u32 %v1782, 2147483648
    %v1795 = vor.u32 1.1754944e-38, %v1794
    %v1796 = vsel %vm1793, %v1795, %v1791
    %v1797 = vmul.f32 1.0, %v1796
    %v1798 = vmul.f32 %v1777, %v1575
    %v1799 = vmul.f32 %v1758, %v1778
    %v1800 = vadd.f32 %v1798, %v1799
    %v1801 = vtanh.pop %v1800
    %v1802 = vmul.f32 %v1797, %v1801
    %v1803 = vld [vmem:[%s1 + $0x28] sm:$0xff]
    %v1804 = vld [vmem:[%s2 + $0x10] sm:$0xff]
    %v1805 = vadd.f32 %v1803, %v1804
    %vm1806 = vcmp.gt.f32.partialorder %v1805, 0.5
    %v1807 = vsel %vm1806, %v1802, %v1574
    %v1808 = vsel %vm1806, %v1800, %v1575
    %v1809 = vmul.f32 %v1803, %v1802
    %1810 = vst [vmem:[#allocation3 + $0x28] sm:$0xff] %v1809
    %v1811 = vmul.f32 %v1804, %v1802
    %1812 = vst [vmem:[#allocation4 + $0x10] sm:$0xff] %v1811
    %v1813 = vld [vmem:[#allocation2 + $0xc0] sm:$0xff]
    %v1814 = vld [vmem:[#allocation2 + $0xc8] sm:$0xff]
    %v1815 = vld [vmem:[#allocation2 + $0xd0] sm:$0xff]
    %v1816 = vld [vmem:[#allocation2 + $0xd8] sm:$0xff]
    %v1817 = vld [vmem:[#allocation2 + $0x20] sm:$0xff]
    %v1818 = vld [vmem:[#allocation2 + $0x28] sm:$0xff]
    %v1819 = vld [vmem:[#allocation2 + $0x30] sm:$0xff]
    %v1820 = vld [vmem:[#allocation2 + $0x38] sm:$0xff]
    %v1821 = vsel %vm422, %v1813, %v1817
    %v1822 = vsel %vm422, %v1814, %v1818
    %v1823 = vsel %vm422, %v1815, %v1819
    %v1824 = vsel %vm422, %v1816, %v1820
    %v1825 = vld [vmem:[#allocation7] sm:$0xff]
    %v1826 = vld [vmem:[#allocation7 + $0x8] sm:$0xff]
    %v1827 = vld [vmem:[#allocation7 + $0x10] sm:$0xff]
    %v1828 = vld [vmem:[#allocation7 + $0x18] sm:$0xff]
    %v1829 = vld [vmem:[#allocation7 + $0x20] sm:$0xff]
    %v1830 = vld [vmem:[#allocation7 + $0x28] sm:$0xff]
    %v1831 = vld [vmem:[#allocation7 + $0x30] sm:$0xff]
    %v1832 = vld [vmem:[#allocation7 + $0x38] sm:$0xff]
    %v1833 = vld [vmem:[#allocation7 + $0x40] sm:$0xff]
    %v1834 = vld [vmem:[#allocation7 + $0x48] sm:$0xff]
    %v1835 = vld [vmem:[#allocation7 + $0x50] sm:$0xff]
    %v1836 = vld [vmem:[#allocation7 + $0x58] sm:$0xff]
    %v1837 = vld [vmem:[#allocation7 + $0x60] sm:$0xff]
    %v1838 = vld [vmem:[#allocation7 + $0x68] sm:$0xff]
    %v1839 = vld [vmem:[#allocation7 + $0x70] sm:$0xff]
    %v1840 = vld [vmem:[#allocation7 + $0x78] sm:$0xff]
    %v1841 = vld [vmem:[#allocation7 + $0x80] sm:$0xff]
    %v1842 = vld [vmem:[#allocation7 + $0x88] sm:$0xff]
    %v1843 = vld [vmem:[#allocation7 + $0x90] sm:$0xff]
    %v1844 = vld [vmem:[#allocation7 + $0x98] sm:$0xff]
    %v1845 = vld [vmem:[#allocation7 + $0xa0] sm:$0xff]
    %v1846 = vld [vmem:[#allocation7 + $0xa8] sm:$0xff]
    %v1847 = vld [vmem:[#allocation7 + $0xb0] sm:$0xff]
    %v1848 = vld [vmem:[#allocation7 + $0xb8] sm:$0xff]
    %v1849 = vld [vmem:[#allocation7 + $0xc0] sm:$0xff]
    %v1850 = vld [vmem:[#allocation7 + $0xc8] sm:$0xff]
    %v1851 = vld [vmem:[#allocation7 + $0xd0] sm:$0xff]
    %v1852 = vld [vmem:[#allocation7 + $0xd8] sm:$0xff]
    %v1853 = vld [vmem:[#allocation7 + $0xe0] sm:$0xff]
    %v1854 = vld [vmem:[#allocation7 + $0xe8] sm:$0xff]
    %v1855 = vld [vmem:[#allocation7 + $0xf0] sm:$0xff]
    %v1856 = vld [vmem:[#allocation7 + $0xf8] sm:$0xff]
    %v1857 = vld [vmem:[#allocation7 + $0x100] sm:$0xff]
    %v1858 = vld [vmem:[#allocation7 + $0x108] sm:$0xff]
    %v1859 = vld [vmem:[#allocation7 + $0x110] sm:$0xff]
    %v1860 = vld [vmem:[#allocation7 + $0x118] sm:$0xff]
    %v1861 = vld [vmem:[#allocation7 + $0x120] sm:$0xff]
    %v1862 = vld [vmem:[#allocation7 + $0x128] sm:$0xff]
    %v1863 = vld [vmem:[#allocation7 + $0x130] sm:$0xff]
    %v1864 = vld [vmem:[#allocation7 + $0x138] sm:$0xff]
    %v1865 = vld [vmem:[#allocation7 + $0x140] sm:$0xff]
    %v1866 = vld [vmem:[#allocation7 + $0x148] sm:$0xff]
    %v1867 = vld [vmem:[#allocation7 + $0x150] sm:$0xff]
    %v1868 = vld [vmem:[#allocation7 + $0x158] sm:$0xff]
    %v1869 = vld [vmem:[#allocation7 + $0x160] sm:$0xff]
    %v1870 = vld [vmem:[#allocation7 + $0x168] sm:$0xff]
    %v1871 = vld [vmem:[#allocation7 + $0x170] sm:$0xff]
    %v1872 = vld [vmem:[#allocation7 + $0x178] sm:$0xff]
    %v1873 = vld [vmem:[#allocation7 + $0x180] sm:$0xff]
    %v1874 = vld [vmem:[#allocation7 + $0x188] sm:$0xff]
    %v1875 = vld [vmem:[#allocation7 + $0x190] sm:$0xff]
    %v1876 = vld [vmem:[#allocation7 + $0x198] sm:$0xff]
    %v1877 = vld [vmem:[#allocation7 + $0x1a0] sm:$0xff]
    %v1878 = vld [vmem:[#allocation7 + $0x1a8] sm:$0xff]
    %v1879 = vld [vmem:[#allocation7 + $0x1b0] sm:$0xff]
    %v1880 = vld [vmem:[#allocation7 + $0x1b8] sm:$0xff]
    %v1881 = vld [vmem:[#allocation7 + $0x1c0] sm:$0xff]
    %v1882 = vld [vmem:[#allocation7 + $0x1c8] sm:$0xff]
    %v1883 = vld [vmem:[#allocation7 + $0x1d0] sm:$0xff]
    %v1884 = vld [vmem:[#allocation7 + $0x1d8] sm:$0xff]
    %v1885 = vld [vmem:[#allocation7 + $0x1e0] sm:$0xff]
    %v1886 = vld [vmem:[#allocation7 + $0x1e8] sm:$0xff]
    %v1887 = vld [vmem:[#allocation7 + $0x1f0] sm:$0xff]
    %v1888 = vld [vmem:[#allocation7 + $0x1f8] sm:$0xff]
    %1889 = vmatpush.msra.mxu0 %v1885
    %1890 = vmatpush.msra.mxu0 %v1881
    %1891 = vmatpush.msra.mxu0 %v1877
    %1892 = vmatpush.msra.mxu0 %v1873
    %1893 = vmatpush.msra.mxu0 %v1869
    %1894 = vmatpush.msra.mxu0 %v1865
    %1895 = vmatpush.msra.mxu0 %v1861
    %1896 = vmatpush.msra.mxu0 %v1857
    %1897 = vmatpush.msra.mxu0 %v1853
    %1898 = vmatpush.msra.mxu0 %v1849
    %1899 = vmatpush.msra.mxu0 %v1845
    %1900 = vmatpush.msra.mxu0 %v1841
    %1901 = vmatpush.msra.mxu0 %v1837
    %1902 = vmatpush.msra.mxu0 %v1833
    %1903 = vmatpush.msra.mxu0 %v1829
    %1904 = vmatpush.msra.mxu0 %v1825
    %1905 = vmatmul.f32.gmra.mxu0 %v1807
    %v1906 = vpop.f32.mrf.mxu0
    %v1907 = vadd.f32 0.0, %v1906
    %1908 = vdwg.mxu0
    %1909 = vmatpush.msra.mxu0 %v1886
    %1910 = vmatpush.msra.mxu0 %v1882
    %1911 = vmatpush.msra.mxu0 %v1878
    %1912 = vmatpush.msra.mxu0 %v1874
    %1913 = vmatpush.msra.mxu0 %v1870
    %1914 = vmatpush.msra.mxu0 %v1866
    %1915 = vmatpush.msra.mxu0 %v1862
    %1916 = vmatpush.msra.mxu0 %v1858
    %1917 = vmatpush.msra.mxu0 %v1854
    %1918 = vmatpush.msra.mxu0 %v1850
    %1919 = vmatpush.msra.mxu0 %v1846
    %1920 = vmatpush.msra.mxu0 %v1842
    %1921 = vmatpush.msra.mxu0 %v1838
    %1922 = vmatpush.msra.mxu0 %v1834
    %1923 = vmatpush.msra.mxu0 %v1830
    %1924 = vmatpush.msra.mxu0 %v1826
    %1925 = vmatmul.f32.gmra.mxu0 %v1807
    %v1926 = vpop.f32.mrf.mxu0
    %v1927 = vadd.f32 0.0, %v1926
    %1928 = vdwg.mxu0
    %1929 = vmatpush.msra.mxu0 %v1887
    %1930 = vmatpush.msra.mxu0 %v1883
    %1931 = vmatpush.msra.mxu0 %v1879
    %1932 = vmatpush.msra.mxu0 %v1875
    %1933 = vmatpush.msra.mxu0 %v1871
    %1934 = vmatpush.msra.mxu0 %v1867
    %1935 = vmatpush.msra.mxu0 %v1863
    %1936 = vmatpush.msra.mxu0 %v1859
    %1937 = vmatpush.msra.mxu0 %v1855
    %1938 = vmatpush.msra.mxu0 %v1851
    %1939 = vmatpush.msra.mxu0 %v1847
    %1940 = vmatpush.msra.mxu0 %v1843
    %1941 = vmatpush.msra.mxu0 %v1839
    %1942 = vmatpush.msra.mxu0 %v1835
    %1943 = vmatpush.msra.mxu0 %v1831
    %1944 = vmatpush.msra.mxu0 %v1827
    %1945 = vmatmul.f32.gmra.mxu0 %v1807
    %v1946 = vpop.f32.mrf.mxu0
    %v1947 = vadd.f32 0.0, %v1946
    %1948 = vdwg.mxu0
    %1949 = vmatpush.msra.mxu0 %v1888
    %1950 = vmatpush.msra.mxu0 %v1884
    %1951 = vmatpush.msra.mxu0 %v1880
    %1952 = vmatpush.msra.mxu0 %v1876
    %1953 = vmatpush.msra.mxu0 %v1872
    %1954 = vmatpush.msra.mxu0 %v1868
    %1955 = vmatpush.msra.mxu0 %v1864
    %1956 = vmatpush.msra.mxu0 %v1860
    %1957 = vmatpush.msra.mxu0 %v1856
    %1958 = vmatpush.msra.mxu0 %v1852
    %1959 = vmatpush.msra.mxu0 %v1848
    %1960 = vmatpush.msra.mxu0 %v1844
    %1961 = vmatpush.msra.mxu0 %v1840
    %1962 = vmatpush.msra.mxu0 %v1836
    %1963 = vmatpush.msra.mxu0 %v1832
    %1964 = vmatpush.msra.mxu0 %v1828
    %1965 = vmatmul.f32.gmra.mxu0 %v1807
    %v1966 = vpop.f32.mrf.mxu0
    %v1967 = vadd.f32 0.0, %v1966
    %1968 = vdwg.mxu0
    %v1969 = vadd.f32 %v1821, %v1907
    %v1970 = vadd.f32 %v1822, %v1927
    %v1971 = vadd.f32 %v1823, %v1947
    %v1972 = vadd.f32 %v1824, %v1967
    %v1973 = vxor.u32 %v1969, 2147483648
    %v1974 = vmul.f32 %v1973, 1.442695
    %v1975 = vpow.pop %v1974
    %v1976 = vadd.f32 %v1975, 1.0
    %v1977 = vrcp.pop %v1976
    %v1978 = vmul.f32 %v1976, %v1977
    %v1979 = vsub.f32 1.0, %v1978
    %v1980 = vmul.f32 %v1977, %v1979
    %v1981 = vadd.f32 %v1977, %v1980
    %vm1982 = vweird.f32 %v1976
    %vm1983 = vweird.f32 %v1977
    %vm1984 = vmor %vm1982, %vm1983
    %v1985 = vsel %vm1984, %v1977, %v1981
    %v1986 = vand.u32 2147483647, %v1976
    %vm1987 = vcmp.eq.f32.partialorder %v1986, 8.507059e+37
    %v1988 = vand.u32 %v1976, 2147483648
    %v1989 = vor.u32 1.1754944e-38, %v1988
    %v1990 = vsel %vm1987, %v1989, %v1985
    %v1991 = vmul.f32 1.0, %v1990
    %v1992 = vxor.u32 %v1970, 2147483648
    %v1993 = vmul.f32 %v1992, 1.442695
    %v1994 = vpow.pop %v1993
    %v1995 = vadd.f32 %v1994, 1.0
    %v1996 = vrcp.pop %v1995
    %v1997 = vmul.f32 %v1995, %v1996
    %v1998 = vsub.f32 1.0, %v1997
    %v1999 = vmul.f32 %v1996, %v1998
    %v2000 = vadd.f32 %v1996, %v1999
    %vm2001 = vweird.f32 %v1995
    %vm2002 = vweird.f32 %v1996
    %vm2003 = vmor %vm2001, %vm2002
    %v2004 = vsel %vm2003, %v1996, %v2000
    %v2005 = vand.u32 2147483647, %v1995
    %vm2006 = vcmp.eq.f32.partialorder %v2005, 8.507059e+37
    %v2007 = vand.u32 %v1995, 2147483648
    %v2008 = vor.u32 1.1754944e-38, %v2007
    %v2009 = vsel %vm2006, %v2008, %v2004
    %v2010 = vmul.f32 1.0, %v2009
    %v2011 = vtanh.pop %v1971
    %v2012 = vxor.u32 %v1972, 2147483648
    %v2013 = vmul.f32 %v2012, 1.442695
    %v2014 = vpow.pop %v2013
    %v2015 = vadd.f32 %v2014, 1.0
    %v2016 = vrcp.pop %v2015
    %v2017 = vmul.f32 %v2015, %v2016
    %v2018 = vsub.f32 1.0, %v2017
    %v2019 = vmul.f32 %v2016, %v2018
    %v2020 = vadd.f32 %v2016, %v2019
    %vm2021 = vweird.f32 %v2015
    %vm2022 = vweird.f32 %v2016
    %vm2023 = vmor %vm2021, %vm2022
    %v2024 = vsel %vm2023, %v2016, %v2020
    %v2025 = vand.u32 2147483647, %v2015
    %vm2026 = vcmp.eq.f32.partialorder %v2025, 8.507059e+37
    %v2027 = vand.u32 %v2015, 2147483648
    %v2028 = vor.u32 1.1754944e-38, %v2027
    %v2029 = vsel %vm2026, %v2028, %v2024
    %v2030 = vmul.f32 1.0, %v2029
    %v2031 = vmul.f32 %v2010, %v1808
    %v2032 = vmul.f32 %v1991, %v2011
    %v2033 = vadd.f32 %v2031, %v2032
    %v2034 = vtanh.pop %v2033
    %v2035 = vmul.f32 %v2030, %v2034
    %v2036 = vld [vmem:[%s1 + $0x30] sm:$0xff]
    %v2037 = vld [vmem:[%s2 + $0x8] sm:$0xff]
    %v2038 = vadd.f32 %v2036, %v2037
    %vm2039 = vcmp.gt.f32.partialorder %v2038, 0.5
    %v2040 = vsel %vm2039, %v2035, %v1807
    %v2041 = vsel %vm2039, %v2033, %v1808
    %v2042 = vmul.f32 %v2036, %v2035
    %2043 = vst [vmem:[#allocation3 + $0x30] sm:$0xff] %v2042
    %v2044 = vmul.f32 %v2037, %v2035
    %2045 = vst [vmem:[#allocation4 + $0x8] sm:$0xff] %v2044
    %v2046 = vld [vmem:[#allocation2 + $0xe0] sm:$0xff]
    %v2047 = vld [vmem:[#allocation2 + $0xe8] sm:$0xff]
    %v2048 = vld [vmem:[#allocation2 + $0xf0] sm:$0xff]
    %v2049 = vld [vmem:[#allocation2 + $0xf8] sm:$0xff]
    %v2050 = vld [vmem:[#allocation2] sm:$0xff]
    %v2051 = vld [vmem:[#allocation2 + $0x8] sm:$0xff]
    %v2052 = vld [vmem:[#allocation2 + $0x10] sm:$0xff]
    %v2053 = vld [vmem:[#allocation2 + $0x18] sm:$0xff]
    %v2054 = vsel %vm422, %v2046, %v2050
    %v2055 = vsel %vm422, %v2047, %v2051
    %v2056 = vsel %vm422, %v2048, %v2052
    %v2057 = vsel %vm422, %v2049, %v2053
    %v2058 = vld [vmem:[#allocation7] sm:$0xff]
    %v2059 = vld [vmem:[#allocation7 + $0x8] sm:$0xff]
    %v2060 = vld [vmem:[#allocation7 + $0x10] sm:$0xff]
    %v2061 = vld [vmem:[#allocation7 + $0x18] sm:$0xff]
    %v2062 = vld [vmem:[#allocation7 + $0x20] sm:$0xff]
    %v2063 = vld [vmem:[#allocation7 + $0x28] sm:$0xff]
    %v2064 = vld [vmem:[#allocation7 + $0x30] sm:$0xff]
    %v2065 = vld [vmem:[#allocation7 + $0x38] sm:$0xff]
    %v2066 = vld [vmem:[#allocation7 + $0x40] sm:$0xff]
    %v2067 = vld [vmem:[#allocation7 + $0x48] sm:$0xff]
    %v2068 = vld [vmem:[#allocation7 + $0x50] sm:$0xff]
    %v2069 = vld [vmem:[#allocation7 + $0x58] sm:$0xff]
    %v2070 = vld [vmem:[#allocation7 + $0x60] sm:$0xff]
    %v2071 = vld [vmem:[#allocation7 + $0x68] sm:$0xff]
    %v2072 = vld [vmem:[#allocation7 + $0x70] sm:$0xff]
    %v2073 = vld [vmem:[#allocation7 + $0x78] sm:$0xff]
    %v2074 = vld [vmem:[#allocation7 + $0x80] sm:$0xff]
    %v2075 = vld [vmem:[#allocation7 + $0x88] sm:$0xff]
    %v2076 = vld [vmem:[#allocation7 + $0x90] sm:$0xff]
    %v2077 = vld [vmem:[#allocation7 + $0x98] sm:$0xff]
    %v2078 = vld [vmem:[#allocation7 + $0xa0] sm:$0xff]
    %v2079 = vld [vmem:[#allocation7 + $0xa8] sm:$0xff]
    %v2080 = vld [vmem:[#allocation7 + $0xb0] sm:$0xff]
    %v2081 = vld [vmem:[#allocation7 + $0xb8] sm:$0xff]
    %v2082 = vld [vmem:[#allocation7 + $0xc0] sm:$0xff]
    %v2083 = vld [vmem:[#allocation7 + $0xc8] sm:$0xff]
    %v2084 = vld [vmem:[#allocation7 + $0xd0] sm:$0xff]
    %v2085 = vld [vmem:[#allocation7 + $0xd8] sm:$0xff]
    %v2086 = vld [vmem:[#allocation7 + $0xe0] sm:$0xff]
    %v2087 = vld [vmem:[#allocation7 + $0xe8] sm:$0xff]
    %v2088 = vld [vmem:[#allocation7 + $0xf0] sm:$0xff]
    %v2089 = vld [vmem:[#allocation7 + $0xf8] sm:$0xff]
    %v2090 = vld [vmem:[#allocation7 + $0x100] sm:$0xff]
    %v2091 = vld [vmem:[#allocation7 + $0x108] sm:$0xff]
    %v2092 = vld [vmem:[#allocation7 + $0x110] sm:$0xff]
    %v2093 = vld [vmem:[#allocation7 + $0x118] sm:$0xff]
    %v2094 = vld [vmem:[#allocation7 + $0x120] sm:$0xff]
    %v2095 = vld [vmem:[#allocation7 + $0x128] sm:$0xff]
    %v2096 = vld [vmem:[#allocation7 + $0x130] sm:$0xff]
    %v2097 = vld [vmem:[#allocation7 + $0x138] sm:$0xff]
    %v2098 = vld [vmem:[#allocation7 + $0x140] sm:$0xff]
    %v2099 = vld [vmem:[#allocation7 + $0x148] sm:$0xff]
    %v2100 = vld [vmem:[#allocation7 + $0x150] sm:$0xff]
    %v2101 = vld [vmem:[#allocation7 + $0x158] sm:$0xff]
    %v2102 = vld [vmem:[#allocation7 + $0x160] sm:$0xff]
    %v2103 = vld [vmem:[#allocation7 + $0x168] sm:$0xff]
    %v2104 = vld [vmem:[#allocation7 + $0x170] sm:$0xff]
    %v2105 = vld [vmem:[#allocation7 + $0x178] sm:$0xff]
    %v2106 = vld [vmem:[#allocation7 + $0x180] sm:$0xff]
    %v2107 = vld [vmem:[#allocation7 + $0x188] sm:$0xff]
    %v2108 = vld [vmem:[#allocation7 + $0x190] sm:$0xff]
    %v2109 = vld [vmem:[#allocation7 + $0x198] sm:$0xff]
    %v2110 = vld [vmem:[#allocation7 + $0x1a0] sm:$0xff]
    %v2111 = vld [vmem:[#allocation7 + $0x1a8] sm:$0xff]
    %v2112 = vld [vmem:[#allocation7 + $0x1b0] sm:$0xff]
    %v2113 = vld [vmem:[#allocation7 + $0x1b8] sm:$0xff]
    %v2114 = vld [vmem:[#allocation7 + $0x1c0] sm:$0xff]
    %v2115 = vld [vmem:[#allocation7 + $0x1c8] sm:$0xff]
    %v2116 = vld [vmem:[#allocation7 + $0x1d0] sm:$0xff]
    %v2117 = vld [vmem:[#allocation7 + $0x1d8] sm:$0xff]
    %v2118 = vld [vmem:[#allocation7 + $0x1e0] sm:$0xff]
    %v2119 = vld [vmem:[#allocation7 + $0x1e8] sm:$0xff]
    %v2120 = vld [vmem:[#allocation7 + $0x1f0] sm:$0xff]
    %v2121 = vld [vmem:[#allocation7 + $0x1f8] sm:$0xff]
    %2122 = vmatpush.msra.mxu0 %v2118
    %2123 = vmatpush.msra.mxu0 %v2114
    %2124 = vmatpush.msra.mxu0 %v2110
    %2125 = vmatpush.msra.mxu0 %v2106
    %2126 = vmatpush.msra.mxu0 %v2102
    %2127 = vmatpush.msra.mxu0 %v2098
    %2128 = vmatpush.msra.mxu0 %v2094
    %2129 = vmatpush.msra.mxu0 %v2090
    %2130 = vmatpush.msra.mxu0 %v2086
    %2131 = vmatpush.msra.mxu0 %v2082
    %2132 = vmatpush.msra.mxu0 %v2078
    %2133 = vmatpush.msra.mxu0 %v2074
    %2134 = vmatpush.msra.mxu0 %v2070
    %2135 = vmatpush.msra.mxu0 %v2066
    %2136 = vmatpush.msra.mxu0 %v2062
    %2137 = vmatpush.msra.mxu0 %v2058
    %2138 = vmatmul.f32.gmra.mxu0 %v2040
    %v2139 = vpop.f32.mrf.mxu0
    %v2140 = vadd.f32 0.0, %v2139
    %2141 = vdwg.mxu0
    %2142 = vmatpush.msra.mxu0 %v2119
    %2143 = vmatpush.msra.mxu0 %v2115
    %2144 = vmatpush.msra.mxu0 %v2111
    %2145 = vmatpush.msra.mxu0 %v2107
    %2146 = vmatpush.msra.mxu0 %v2103
    %2147 = vmatpush.msra.mxu0 %v2099
    %2148 = vmatpush.msra.mxu0 %v2095
    %2149 = vmatpush.msra.mxu0 %v2091
    %2150 = vmatpush.msra.mxu0 %v2087
    %2151 = vmatpush.msra.mxu0 %v2083
    %2152 = vmatpush.msra.mxu0 %v2079
    %2153 = vmatpush.msra.mxu0 %v2075
    %2154 = vmatpush.msra.mxu0 %v2071
    %2155 = vmatpush.msra.mxu0 %v2067
    %2156 = vmatpush.msra.mxu0 %v2063
    %2157 = vmatpush.msra.mxu0 %v2059
    %2158 = vmatmul.f32.gmra.mxu0 %v2040
    %v2159 = vpop.f32.mrf.mxu0
    %v2160 = vadd.f32 0.0, %v2159
    %2161 = vdwg.mxu0
    %2162 = vmatpush.msra.mxu0 %v2120
    %2163 = vmatpush.msra.mxu0 %v2116
    %2164 = vmatpush.msra.mxu0 %v2112
    %2165 = vmatpush.msra.mxu0 %v2108
    %2166 = vmatpush.msra.mxu0 %v2104
    %2167 = vmatpush.msra.mxu0 %v2100
    %2168 = vmatpush.msra.mxu0 %v2096
    %2169 = vmatpush.msra.mxu0 %v2092
    %2170 = vmatpush.msra.mxu0 %v2088
    %2171 = vmatpush.msra.mxu0 %v2084
    %2172 = vmatpush.msra.mxu0 %v2080
    %2173 = vmatpush.msra.mxu0 %v2076
    %2174 = vmatpush.msra.mxu0 %v2072
    %2175 = vmatpush.msra.mxu0 %v2068
    %2176 = vmatpush.msra.mxu0 %v2064
    %2177 = vmatpush.msra.mxu0 %v2060
    %2178 = vmatmul.f32.gmra.mxu0 %v2040
    %v2179 = vpop.f32.mrf.mxu0
    %v2180 = vadd.f32 0.0, %v2179
    %2181 = vdwg.mxu0
    %2182 = vmatpush.msra.mxu0 %v2121
    %2183 = vmatpush.msra.mxu0 %v2117
    %2184 = vmatpush.msra.mxu0 %v2113
    %2185 = vmatpush.msra.mxu0 %v2109
    %2186 = vmatpush.msra.mxu0 %v2105
    %2187 = vmatpush.msra.mxu0 %v2101
    %2188 = vmatpush.msra.mxu0 %v2097
    %2189 = vmatpush.msra.mxu0 %v2093
    %2190 = vmatpush.msra.mxu0 %v2089
    %2191 = vmatpush.msra.mxu0 %v2085
    %2192 = vmatpush.msra.mxu0 %v2081
    %2193 = vmatpush.msra.mxu0 %v2077
    %2194 = vmatpush.msra.mxu0 %v2073
    %2195 = vmatpush.msra.mxu0 %v2069
    %2196 = vmatpush.msra.mxu0 %v2065
    %2197 = vmatpush.msra.mxu0 %v2061
    %2198 = vmatmul.f32.gmra.mxu0 %v2040
    %v2199 = vpop.f32.mrf.mxu0
    %v2200 = vadd.f32 0.0, %v2199
    %2201 = vdwg.mxu0
    %v2202 = vadd.f32 %v2054, %v2140
    %v2203 = vadd.f32 %v2055, %v2160
    %v2204 = vadd.f32 %v2056, %v2180
    %v2205 = vadd.f32 %v2057, %v2200
    %v2206 = vxor.u32 %v2202, 2147483648
    %v2207 = vmul.f32 %v2206, 1.442695
    %v2208 = vpow.pop %v2207
    %v2209 = vadd.f32 %v2208, 1.0
    %v2210 = vrcp.pop %v2209
    %v2211 = vmul.f32 %v2209, %v2210
    %v2212 = vsub.f32 1.0, %v2211
    %v2213 = vmul.f32 %v2210, %v2212
    %v2214 = vadd.f32 %v2210, %v2213
    %vm2215 = vweird.f32 %v2209
    %vm2216 = vweird.f32 %v2210
    %vm2217 = vmor %vm2215, %vm2216
    %v2218 = vsel %vm2217, %v2210, %v2214
    %v2219 = vand.u32 2147483647, %v2209
    %vm2220 = vcmp.eq.f32.partialorder %v2219, 8.507059e+37
    %v2221 = vand.u32 %v2209, 2147483648
    %v2222 = vor.u32 1.1754944e-38, %v2221
    %v2223 = vsel %vm2220, %v2222, %v2218
    %v2224 = vmul.f32 1.0, %v2223
    %v2225 = vxor.u32 %v2203, 2147483648
    %v2226 = vmul.f32 %v2225, 1.442695
    %v2227 = vpow.pop %v2226
    %v2228 = vadd.f32 %v2227, 1.0
    %v2229 = vrcp.pop %v2228
    %v2230 = vmul.f32 %v2228, %v2229
    %v2231 = vsub.f32 1.0, %v2230
    %v2232 = vmul.f32 %v2229, %v2231
    %v2233 = vadd.f32 %v2229, %v2232
    %vm2234 = vweird.f32 %v2228
    %vm2235 = vweird.f32 %v2229
    %vm2236 = vmor %vm2234, %vm2235
    %v2237 = vsel %vm2236, %v2229, %v2233
    %v2238 = vand.u32 2147483647, %v2228
    %vm2239 = vcmp.eq.f32.partialorder %v2238, 8.507059e+37
    %v2240 = vand.u32 %v2228, 2147483648
    %v2241 = vor.u32 1.1754944e-38, %v2240
    %v2242 = vsel %vm2239, %v2241, %v2237
    %v2243 = vmul.f32 1.0, %v2242
    %v2244 = vtanh.pop %v2204
    %v2245 = vxor.u32 %v2205, 2147483648
    %v2246 = vmul.f32 %v2245, 1.442695
    %v2247 = vpow.pop %v2246
    %v2248 = vadd.f32 %v2247, 1.0
    %v2249 = vrcp.pop %v2248
    %v2250 = vmul.f32 %v2248, %v2249
    %v2251 = vsub.f32 1.0, %v2250
    %v2252 = vmul.f32 %v2249, %v2251
    %v2253 = vadd.f32 %v2249, %v2252
    %vm2254 = vweird.f32 %v2248
    %vm2255 = vweird.f32 %v2249
    %vm2256 = vmor %vm2254, %vm2255
    %v2257 = vsel %vm2256, %v2249, %v2253
    %v2258 = vand.u32 2147483647, %v2248
    %vm2259 = vcmp.eq.f32.partialorder %v2258, 8.507059e+37
    %v2260 = vand.u32 %v2248, 2147483648
    %v2261 = vor.u32 1.1754944e-38, %v2260
    %v2262 = vsel %vm2259, %v2261, %v2257
    %v2263 = vmul.f32 1.0, %v2262
    %v2264 = vmul.f32 %v2243, %v2041
    %v2265 = vmul.f32 %v2224, %v2244
    %v2266 = vadd.f32 %v2264, %v2265
    %v2267 = vtanh.pop %v2266
    %v2268 = vmul.f32 %v2263, %v2267
    %v2269 = vld [vmem:[%s1 + $0x38] sm:$0xff]
    %v2270 = vld [vmem:[%s2] sm:$0xff]
    %v2271 = vadd.f32 %v2269, %v2270
    %vm2272 = vcmp.gt.f32.partialorder %v2271, 0.5
    %v2273 = vsel %vm2272, %v2268, %v2040
    %v2274 = vmul.f32 %v2269, %v2268
    %2275 = vst [vmem:[#allocation3 + $0x38] sm:$0xff] %v2274
    %v2276 = vmul.f32 %v2270, %v2268
    %2277 = vst [vmem:[#allocation4] sm:$0xff] %v2276
    %v2278 = vld [vmem:[#allocation3] sm:$0xff]
    %v2279 = vld [vmem:[#allocation3 + $0x8] sm:$0xff]
    %v2280 = vld [vmem:[#allocation3 + $0x10] sm:$0xff]
    %v2281 = vld [vmem:[#allocation3 + $0x18] sm:$0xff]
    %v2282 = vld [vmem:[#allocation3 + $0x20] sm:$0xff]
    %v2283 = vld [vmem:[#allocation3 + $0x28] sm:$0xff]
    %v2284 = vld [vmem:[#allocation3 + $0x30] sm:$0xff]
    %v2285 = vld [vmem:[#allocation3 + $0x38] sm:$0xff]
    %v2286 = vld [vmem:[#allocation4] sm:$0xff]
    %v2287 = vld [vmem:[#allocation4 + $0x8] sm:$0xff]
    %v2288 = vld [vmem:[#allocation4 + $0x10] sm:$0xff]
    %v2289 = vld [vmem:[#allocation4 + $0x18] sm:$0xff]
    %v2290 = vld [vmem:[#allocation4 + $0x20] sm:$0xff]
    %v2291 = vld [vmem:[#allocation4 + $0x28] sm:$0xff]
    %v2292 = vld [vmem:[#allocation4 + $0x30] sm:$0xff]
    %v2293 = vld [vmem:[#allocation4 + $0x38] sm:$0xff]
    %v2294 = vadd.f32 %v2278, %v2286
    %v2295 = vadd.f32 %v2279, %v2287
    %v2296 = vadd.f32 %v2280, %v2288
    %v2297 = vadd.f32 %v2281, %v2289
    %v2298 = vadd.f32 %v2282, %v2290
    %v2299 = vadd.f32 %v2283, %v2291
    %v2300 = vadd.f32 %v2284, %v2292
    %v2301 = vadd.f32 %v2285, %v2293
    %vm2302 = vcmp.lt.s32.totalorder %v114, 48
    %vm2303 = vmand %vm115, %vm2302
    %v2304 = vsel %vm2303, 1, 0
    %v2305 = vcvt.s32.f32 %v2304
    %v2306 = vmul.f32 %v2294, %v2305
    %v2307 = vmul.f32 %v2295, %v2305
    %v2308 = vmul.f32 %v2296, %v2305
    %v2309 = vmul.f32 %v2297, %v2305
    %v2310 = vmul.f32 %v2298, %v2305
    %v2311 = vmul.f32 %v2299, %v2305
    %v2312 = vmul.f32 %v2300, %v2305
    %v2313 = vmul.f32 %v2301, %v2305
    %2314 = vadd.xlane.f32.xlu0 %v2306
    %v2315 = vpop.xlane.xlu0 %2314
    %2316 = vadd.xlane.f32.xlu0 %v2307
    %v2317 = vpop.xlane.xlu0 %2316
    %2318 = vadd.xlane.f32.xlu0 %v2308
    %v2319 = vpop.xlane.xlu0 %2318
    %2320 = vadd.xlane.f32.xlu0 %v2309
    %v2321 = vpop.xlane.xlu0 %2320
    %2322 = vadd.xlane.f32.xlu0 %v2310
    %v2323 = vpop.xlane.xlu0 %2322
    %2324 = vadd.xlane.f32.xlu0 %v2311
    %v2325 = vpop.xlane.xlu0 %2324
    %2326 = vadd.xlane.f32.xlu0 %v2312
    %v2327 = vpop.xlane.xlu0 %2326
    %2328 = vadd.xlane.f32.xlu0 %v2313
    %v2329 = vpop.xlane.xlu0 %2328
    %v2330 = vmul.f32 %v2315, 0.020833334
    %v2331 = vmul.f32 %v2317, 0.020833334
    %v2332 = vmul.f32 %v2319, 0.020833334
    %v2333 = vmul.f32 %v2321, 0.020833334
    %v2334 = vmul.f32 %v2323, 0.020833334
    %v2335 = vmul.f32 %v2325, 0.020833334
    %v2336 = vmul.f32 %v2327, 0.020833334
    %v2337 = vmul.f32 %v2329, 0.020833334
    %v2338 = vmul.f32 %v2305, %v2330
    %v2339 = vmul.f32 %v2305, %v2331
    %v2340 = vmul.f32 %v2305, %v2332
    %v2341 = vmul.f32 %v2305, %v2333
    %v2342 = vmul.f32 %v2305, %v2334
    %v2343 = vmul.f32 %v2305, %v2335
    %v2344 = vmul.f32 %v2305, %v2336
    %v2345 = vmul.f32 %v2305, %v2337
    %v2346 = vadd.f32 %v2338, 0.0
    %v2347 = vadd.f32 %v2339, 0.0
    %v2348 = vadd.f32 %v2340, 0.0
    %v2349 = vadd.f32 %v2341, 0.0
    %v2350 = vadd.f32 %v2342, 0.0
    %v2351 = vadd.f32 %v2343, 0.0
    %v2352 = vadd.f32 %v2344, 0.0
    %v2353 = vadd.f32 %v2345, 0.0
    %vm2354 = vcmp.lt.s32.totalorder %v114, 72
    %vm2355 = vmand %vm121, %vm2354
    %v2356 = vsel %vm2355, 1, 0
    %v2357 = vcvt.s32.f32 %v2356
    %v2358 = vmul.f32 %v2294, %v2357
    %v2359 = vmul.f32 %v2295, %v2357
    %v2360 = vmul.f32 %v2296, %v2357
    %v2361 = vmul.f32 %v2297, %v2357
    %v2362 = vmul.f32 %v2298, %v2357
    %v2363 = vmul.f32 %v2299, %v2357
    %v2364 = vmul.f32 %v2300, %v2357
    %v2365 = vmul.f32 %v2301, %v2357
    %2366 = vadd.xlane.f32.xlu0 %v2358
    %v2367 = vpop.xlane.xlu0 %2366
    %2368 = vadd.xlane.f32.xlu0 %v2359
    %v2369 = vpop.xlane.xlu0 %2368
    %2370 = vadd.xlane.f32.xlu0 %v2360
    %v2371 = vpop.xlane.xlu0 %2370
    %2372 = vadd.xlane.f32.xlu0 %v2361
    %v2373 = vpop.xlane.xlu0 %2372
    %2374 = vadd.xlane.f32.xlu0 %v2362
    %v2375 = vpop.xlane.xlu0 %2374
    %2376 = vadd.xlane.f32.xlu0 %v2363
    %v2377 = vpop.xlane.xlu0 %2376
    %2378 = vadd.xlane.f32.xlu0 %v2364
    %v2379 = vpop.xlane.xlu0 %2378
    %2380 = vadd.xlane.f32.xlu0 %v2365
    %v2381 = vpop.xlane.xlu0 %2380
    %v2382 = vmul.f32 %v2367, 0.041666668
    %v2383 = vmul.f32 %v2369, 0.041666668
    %v2384 = vmul.f32 %v2371, 0.041666668
    %v2385 = vmul.f32 %v2373, 0.041666668
    %v2386 = vmul.f32 %v2375, 0.041666668
    %v2387 = vmul.f32 %v2377, 0.041666668
    %v2388 = vmul.f32 %v2379, 0.041666668
    %v2389 = vmul.f32 %v2381, 0.041666668
    %v2390 = vmul.f32 %v2357, %v2382
    %v2391 = vmul.f32 %v2357, %v2383
    %v2392 = vmul.f32 %v2357, %v2384
    %v2393 = vmul.f32 %v2357, %v2385
    %v2394 = vmul.f32 %v2357, %v2386
    %v2395 = vmul.f32 %v2357, %v2387
    %v2396 = vmul.f32 %v2357, %v2388
    %v2397 = vmul.f32 %v2357, %v2389
    %v2398 = vadd.f32 %v2346, %v2390
    %v2399 = vadd.f32 %v2347, %v2391
    %v2400 = vadd.f32 %v2348, %v2392
    %v2401 = vadd.f32 %v2349, %v2393
    %v2402 = vadd.f32 %v2350, %v2394
    %v2403 = vadd.f32 %v2351, %v2395
    %v2404 = vadd.f32 %v2352, %v2396
    %v2405 = vadd.f32 %v2353, %v2397
    %vm2406 = vcmp.lt.s32.totalorder %v114, 108
    %vm2407 = vmand %vm127, %vm2406
    %v2408 = vsel %vm2407, 1, 0
    %v2409 = vcvt.s32.f32 %v2408
    %v2410 = vmul.f32 %v2294, %v2409
    %v2411 = vmul.f32 %v2295, %v2409
    %v2412 = vmul.f32 %v2296, %v2409
    %v2413 = vmul.f32 %v2297, %v2409
    %v2414 = vmul.f32 %v2298, %v2409
    %v2415 = vmul.f32 %v2299, %v2409
    %v2416 = vmul.f32 %v2300, %v2409
    %v2417 = vmul.f32 %v2301, %v2409
    %2418 = vadd.xlane.f32.xlu0 %v2410
    %v2419 = vpop.xlane.xlu0 %2418
    %2420 = vadd.xlane.f32.xlu0 %v2411
    %v2421 = vpop.xlane.xlu0 %2420
    %2422 = vadd.xlane.f32.xlu0 %v2412
    %v2423 = vpop.xlane.xlu0 %2422
    %2424 = vadd.xlane.f32.xlu0 %v2413
    %v2425 = vpop.xlane.xlu0 %2424
    %2426 = vadd.xlane.f32.xlu0 %v2414
    %v2427 = vpop.xlane.xlu0 %2426
    %2428 = vadd.xlane.f32.xlu0 %v2415
    %v2429 = vpop.xlane.xlu0 %2428
    %2430 = vadd.xlane.f32.xlu0 %v2416
    %v2431 = vpop.xlane.xlu0 %2430
    %2432 = vadd.xlane.f32.xlu0 %v2417
    %v2433 = vpop.xlane.xlu0 %2432
    %v2434 = vmul.f32 %v2419, 0.027777778
    %v2435 = vmul.f32 %v2421, 0.027777778
    %v2436 = vmul.f32 %v2423, 0.027777778
    %v2437 = vmul.f32 %v2425, 0.027777778
    %v2438 = vmul.f32 %v2427, 0.027777778
    %v2439 = vmul.f32 %v2429, 0.027777778
    %v2440 = vmul.f32 %v2431, 0.027777778
    %v2441 = vmul.f32 %v2433, 0.027777778
    %v2442 = vmul.f32 %v2409, %v2434
    %v2443 = vmul.f32 %v2409, %v2435
    %v2444 = vmul.f32 %v2409, %v2436
    %v2445 = vmul.f32 %v2409, %v2437
    %v2446 = vmul.f32 %v2409, %v2438
    %v2447 = vmul.f32 %v2409, %v2439
    %v2448 = vmul.f32 %v2409, %v2440
    %v2449 = vmul.f32 %v2409, %v2441
    %v2450 = vadd.f32 %v2398, %v2442
    %v2451 = vadd.f32 %v2399, %v2443
    %v2452 = vadd.f32 %v2400, %v2444
    %v2453 = vadd.f32 %v2401, %v2445
    %v2454 = vadd.f32 %v2402, %v2446
    %v2455 = vadd.f32 %v2403, %v2447
    %v2456 = vadd.f32 %v2404, %v2448
    %v2457 = vadd.f32 %v2405, %v2449
    %v2458 = vsub.f32 %v2294, %v2450
    %v2459 = vsub.f32 %v2295, %v2451
    %v2460 = vsub.f32 %v2296, %v2452
    %v2461 = vsub.f32 %v2297, %v2453
    %v2462 = vsub.f32 %v2298, %v2454
    %v2463 = vsub.f32 %v2299, %v2455
    %v2464 = vsub.f32 %v2300, %v2456
    %v2465 = vsub.f32 %v2301, %v2457
    %v2466 = vmul.f32 %v2458, %v2458
    %v2467 = vmul.f32 %v2459, %v2459
    %v2468 = vmul.f32 %v2460, %v2460
    %v2469 = vmul.f32 %v2461, %v2461
    %v2470 = vmul.f32 %v2462, %v2462
    %v2471 = vmul.f32 %v2463, %v2463
    %v2472 = vmul.f32 %v2464, %v2464
    %v2473 = vmul.f32 %v2465, %v2465
    %v2474 = vmul.f32 %v2466, %v2305
    %v2475 = vmul.f32 %v2467, %v2305
    %v2476 = vmul.f32 %v2468, %v2305
    %v2477 = vmul.f32 %v2469, %v2305
    %v2478 = vmul.f32 %v2470, %v2305
    %v2479 = vmul.f32 %v2471, %v2305
    %v2480 = vmul.f32 %v2472, %v2305
    %v2481 = vmul.f32 %v2473, %v2305
    %2482 = vadd.xlane.f32.xlu0 %v2474
    %v2483 = vpop.xlane.xlu0 %2482
    %2484 = vadd.xlane.f32.xlu0 %v2475
    %v2485 = vpop.xlane.xlu0 %2484
    %2486 = vadd.xlane.f32.xlu0 %v2476
    %v2487 = vpop.xlane.xlu0 %2486
    %2488 = vadd.xlane.f32.xlu0 %v2477
    %v2489 = vpop.xlane.xlu0 %2488
    %2490 = vadd.xlane.f32.xlu0 %v2478
    %v2491 = vpop.xlane.xlu0 %2490
    %2492 = vadd.xlane.f32.xlu0 %v2479
    %v2493 = vpop.xlane.xlu0 %2492
    %2494 = vadd.xlane.f32.xlu0 %v2480
    %v2495 = vpop.xlane.xlu0 %2494
    %2496 = vadd.xlane.f32.xlu0 %v2481
    %v2497 = vpop.xlane.xlu0 %2496
    %v2498 = vmul.f32 %v2483, 0.020833334
    %v2499 = vmul.f32 %v2485, 0.020833334
    %v2500 = vmul.f32 %v2487, 0.020833334
    %v2501 = vmul.f32 %v2489, 0.020833334
    %v2502 = vmul.f32 %v2491, 0.020833334
    %v2503 = vmul.f32 %v2493, 0.020833334
    %v2504 = vmul.f32 %v2495, 0.020833334
    %v2505 = vmul.f32 %v2497, 0.020833334
    %v2506 = vmul.f32 %v2305, %v2498
    %v2507 = vmul.f32 %v2305, %v2499
    %v2508 = vmul.f32 %v2305, %v2500
    %v2509 = vmul.f32 %v2305, %v2501
    %v2510 = vmul.f32 %v2305, %v2502
    %v2511 = vmul.f32 %v2305, %v2503
    %v2512 = vmul.f32 %v2305, %v2504
    %v2513 = vmul.f32 %v2305, %v2505
    %v2514 = vadd.f32 %v2506, 0.0
    %v2515 = vadd.f32 %v2507, 0.0
    %v2516 = vadd.f32 %v2508, 0.0
    %v2517 = vadd.f32 %v2509, 0.0
    %v2518 = vadd.f32 %v2510, 0.0
    %v2519 = vadd.f32 %v2511, 0.0
    %v2520 = vadd.f32 %v2512, 0.0
    %v2521 = vadd.f32 %v2513, 0.0
    %v2522 = vmul.f32 %v2466, %v2357
    %v2523 = vmul.f32 %v2467, %v2357
    %v2524 = vmul.f32 %v2468, %v2357
    %v2525 = vmul.f32 %v2469, %v2357
    %v2526 = vmul.f32 %v2470, %v2357
    %v2527 = vmul.f32 %v2471, %v2357
    %v2528 = vmul.f32 %v2472, %v2357
    %v2529 = vmul.f32 %v2473, %v2357
    %2530 = vadd.xlane.f32.xlu0 %v2522
    %v2531 = vpop.xlane.xlu0 %2530
    %2532 = vadd.xlane.f32.xlu0 %v2523
    %v2533 = vpop.xlane.xlu0 %2532
    %2534 = vadd.xlane.f32.xlu0 %v2524
    %v2535 = vpop.xlane.xlu0 %2534
    %2536 = vadd.xlane.f32.xlu0 %v2525
    %v2537 = vpop.xlane.xlu0 %2536
    %2538 = vadd.xlane.f32.xlu0 %v2526
    %v2539 = vpop.xlane.xlu0 %2538
    %2540 = vadd.xlane.f32.xlu0 %v2527
    %v2541 = vpop.xlane.xlu0 %2540
    %2542 = vadd.xlane.f32.xlu0 %v2528
    %v2543 = vpop.xlane.xlu0 %2542
    %2544 = vadd.xlane.f32.xlu0 %v2529
    %v2545 = vpop.xlane.xlu0 %2544
    %v2546 = vmul.f32 %v2531, 0.041666668
    %v2547 = vmul.f32 %v2533, 0.041666668
    %v2548 = vmul.f32 %v2535, 0.041666668
    %v2549 = vmul.f32 %v2537, 0.041666668
    %v2550 = vmul.f32 %v2539, 0.041666668
    %v2551 = vmul.f32 %v2541, 0.041666668
    %v2552 = vmul.f32 %v2543, 0.041666668
    %v2553 = vmul.f32 %v2545, 0.041666668
    %v2554 = vmul.f32 %v2357, %v2546
    %v2555 = vmul.f32 %v2357, %v2547
    %v2556 = vmul.f32 %v2357, %v2548
    %v2557 = vmul.f32 %v2357, %v2549
    %v2558 = vmul.f32 %v2357, %v2550
    %v2559 = vmul.f32 %v2357, %v2551
    %v2560 = vmul.f32 %v2357, %v2552
    %v2561 = vmul.f32 %v2357, %v2553
    %v2562 = vadd.f32 %v2514, %v2554
    %v2563 = vadd.f32 %v2515, %v2555
    %v2564 = vadd.f32 %v2516, %v2556
    %v2565 = vadd.f32 %v2517, %v2557
    %v2566 = vadd.f32 %v2518, %v2558
    %v2567 = vadd.f32 %v2519, %v2559
    %v2568 = vadd.f32 %v2520, %v2560
    %v2569 = vadd.f32 %v2521, %v2561
    %v2570 = vmul.f32 %v2466, %v2409
    %v2571 = vmul.f32 %v2467, %v2409
    %v2572 = vmul.f32 %v2468, %v2409
    %v2573 = vmul.f32 %v2469, %v2409
    %v2574 = vmul.f32 %v2470, %v2409
    %v2575 = vmul.f32 %v2471, %v2409
    %v2576 = vmul.f32 %v2472, %v2409
    %v2577 = vmul.f32 %v2473, %v2409
    %2578 = vadd.xlane.f32.xlu0 %v2570
    %v2579 = vpop.xlane.xlu0 %2578
    %2580 = vadd.xlane.f32.xlu0 %v2571
    %v2581 = vpop.xlane.xlu0 %2580
    %2582 = vadd.xlane.f32.xlu0 %v2572
    %v2583 = vpop.xlane.xlu0 %2582
    %2584 = vadd.xlane.f32.xlu0 %v2573
    %v2585 = vpop.xlane.xlu0 %2584
    %2586 = vadd.xlane.f32.xlu0 %v2574
    %v2587 = vpop.xlane.xlu0 %2586
    %2588 = vadd.xlane.f32.xlu0 %v2575
    %v2589 = vpop.xlane.xlu0 %2588
    %2590 = vadd.xlane.f32.xlu0 %v2576
    %v2591 = vpop.xlane.xlu0 %2590
    %2592 = vadd.xlane.f32.xlu0 %v2577
    %v2593 = vpop.xlane.xlu0 %2592
    %v2594 = vmul.f32 %v2579, 0.027777778
    %v2595 = vmul.f32 %v2581, 0.027777778
    %v2596 = vmul.f32 %v2583, 0.027777778
    %v2597 = vmul.f32 %v2585, 0.027777778
    %v2598 = vmul.f32 %v2587, 0.027777778
    %v2599 = vmul.f32 %v2589, 0.027777778
    %v2600 = vmul.f32 %v2591, 0.027777778
    %v2601 = vmul.f32 %v2593, 0.027777778
    %v2602 = vmul.f32 %v2409, %v2594
    %v2603 = vmul.f32 %v2409, %v2595
    %v2604 = vmul.f32 %v2409, %v2596
    %v2605 = vmul.f32 %v2409, %v2597
    %v2606 = vmul.f32 %v2409, %v2598
    %v2607 = vmul.f32 %v2409, %v2599
    %v2608 = vmul.f32 %v2409, %v2600
    %v2609 = vmul.f32 %v2409, %v2601
    %v2610 = vadd.f32 %v2562, %v2602
    %v2611 = vadd.f32 %v2563, %v2603
    %v2612 = vadd.f32 %v2564, %v2604
    %v2613 = vadd.f32 %v2565, %v2605
    %v2614 = vadd.f32 %v2566, %v2606
    %v2615 = vadd.f32 %v2567, %v2607
    %v2616 = vadd.f32 %v2568, %v2608
    %v2617 = vadd.f32 %v2569, %v2609
    %v2618 = vadd.f32 %v2610, 1e-05
    %v2619 = vadd.f32 %v2611, 1e-05
    %v2620 = vadd.f32 %v2612, 1e-05
    %v2621 = vadd.f32 %v2613, 1e-05
    %v2622 = vadd.f32 %v2614, 1e-05
    %v2623 = vadd.f32 %v2615, 1e-05
    %v2624 = vadd.f32 %v2616, 1e-05
    %v2625 = vadd.f32 %v2617, 1e-05
    %v2626 = vrsqrt.pop %v2618
    %v2627 = vmul.f32 %v2626, %v2618
    %v2628 = vmul.f32 %v2627, %v2626
    %v2629 = vmul.f32 0.5, %v2628
    %v2630 = vsub.f32 1.5, %v2629
    %v2631 = vmul.f32 %v2626, %v2630
    %vm2632 = vweird.f32 %v2618
    %vm2633 = vweird.f32 %v2626
    %vm2634 = vmor %vm2632, %vm2633
    %v2635 = vsel %vm2634, %v2626, %v2631
    %v2636 = vrsqrt.pop %v2619
    %v2637 = vmul.f32 %v2636, %v2619
    %v2638 = vmul.f32 %v2637, %v2636
    %v2639 = vmul.f32 0.5, %v2638
    %v2640 = vsub.f32 1.5, %v2639
    %v2641 = vmul.f32 %v2636, %v2640
    %vm2642 = vweird.f32 %v2619
    %vm2643 = vweird.f32 %v2636
    %vm2644 = vmor %vm2642, %vm2643
    %v2645 = vsel %vm2644, %v2636, %v2641
    %v2646 = vrsqrt.pop %v2620
    %v2647 = vmul.f32 %v2646, %v2620
    %v2648 = vmul.f32 %v2647, %v2646
    %v2649 = vmul.f32 0.5, %v2648
    %v2650 = vsub.f32 1.5, %v2649
    %v2651 = vmul.f32 %v2646, %v2650
    %vm2652 = vweird.f32 %v2620
    %vm2653 = vweird.f32 %v2646
    %vm2654 = vmor %vm2652, %vm2653
    %v2655 = vsel %vm2654, %v2646, %v2651
    %v2656 = vrsqrt.pop %v2621
    %v2657 = vmul.f32 %v2656, %v2621
    %v2658 = vmul.f32 %v2657, %v2656
    %v2659 = vmul.f32 0.5, %v2658
    %v2660 = vsub.f32 1.5, %v2659
    %v2661 = vmul.f32 %v2656, %v2660
    %vm2662 = vweird.f32 %v2621
    %vm2663 = vweird.f32 %v2656
    %vm2664 = vmor %vm2662, %vm2663
    %v2665 = vsel %vm2664, %v2656, %v2661
    %v2666 = vrsqrt.pop %v2622
    %v2667 = vmul.f32 %v2666, %v2622
    %v2668 = vmul.f32 %v2667, %v2666
    %v2669 = vmul.f32 0.5, %v2668
    %v2670 = vsub.f32 1.5, %v2669
    %v2671 = vmul.f32 %v2666, %v2670
    %vm2672 = vweird.f32 %v2622
    %vm2673 = vweird.f32 %v2666
    %vm2674 = vmor %vm2672, %vm2673
    %v2675 = vsel %vm2674, %v2666, %v2671
    %v2676 = vrsqrt.pop %v2623
    %v2677 = vmul.f32 %v2676, %v2623
    %v2678 = vmul.f32 %v2677, %v2676
    %v2679 = vmul.f32 0.5, %v2678
    %v2680 = vsub.f32 1.5, %v2679
    %v2681 = vmul.f32 %v2676, %v2680
    %vm2682 = vweird.f32 %v2623
    %vm2683 = vweird.f32 %v2676
    %vm2684 = vmor %vm2682, %vm2683
    %v2685 = vsel %vm2684, %v2676, %v2681
    %v2686 = vrsqrt.pop %v2624
    %v2687 = vmul.f32 %v2686, %v2624
    %v2688 = vmul.f32 %v2687, %v2686
    %v2689 = vmul.f32 0.5, %v2688
    %v2690 = vsub.f32 1.5, %v2689
    %v2691 = vmul.f32 %v2686, %v2690
    %vm2692 = vweird.f32 %v2624
    %vm2693 = vweird.f32 %v2686
    %vm2694 = vmor %vm2692, %vm2693
    %v2695 = vsel %vm2694, %v2686, %v2691
    %v2696 = vrsqrt.pop %v2625
    %v2697 = vmul.f32 %v2696, %v2625
    %v2698 = vmul.f32 %v2697, %v2696
    %v2699 = vmul.f32 0.5, %v2698
    %v2700 = vsub.f32 1.5, %v2699
    %v2701 = vmul.f32 %v2696, %v2700
    %vm2702 = vweird.f32 %v2625
    %vm2703 = vweird.f32 %v2696
    %vm2704 = vmor %vm2702, %vm2703
    %v2705 = vsel %vm2704, %v2696, %v2701
    %v2706 = vmul.f32 %v2458, %v2635
    %v2707 = vmul.f32 %v2459, %v2645
    %v2708 = vmul.f32 %v2460, %v2655
    %v2709 = vmul.f32 %v2461, %v2665
    %v2710 = vmul.f32 %v2462, %v2675
    %v2711 = vmul.f32 %v2463, %v2685
    %v2712 = vmul.f32 %v2464, %v2695
    %v2713 = vmul.f32 %v2465, %v2705
    %v2714 = vld [vmem:[%s6] sm:$0x1]
    %v2716 = vperm.slane %v2714, 0
    %v2718 = vmul.f32 %v2706, %v2716
    %v2719 = vmul.f32 %v2707, %v2716
    %v2720 = vmul.f32 %v2708, %v2716
    %v2721 = vmul.f32 %v2709, %v2716
    %v2722 = vmul.f32 %v2710, %v2716
    %v2723 = vmul.f32 %v2711, %v2716
    %v2724 = vmul.f32 %v2712, %v2716
    %v2725 = vmul.f32 %v2713, %v2716
    %v2726 = vld [vmem:[%s7] sm:$0x1]
    %v2728 = vperm.slane %v2726, 0
    %v2730 = vadd.f32 %v2718, %v2728
    %v2731 = vadd.f32 %v2719, %v2728
    %v2732 = vadd.f32 %v2720, %v2728
    %v2733 = vadd.f32 %v2721, %v2728
    %v2734 = vadd.f32 %v2722, %v2728
    %v2735 = vadd.f32 %v2723, %v2728
    %v2736 = vadd.f32 %v2724, %v2728
    %v2737 = vadd.f32 %v2725, %v2728
    %v2738 = vld [vmem:[#allocation9] sm:$0xff]
    %v2739 = vld [vmem:[#allocation9 + $0x8] sm:$0xff]
    %v2740 = vld [vmem:[#allocation9 + $0x10] sm:$0xff]
    %v2741 = vld [vmem:[#allocation9 + $0x18] sm:$0xff]
    %v2742 = vld [vmem:[#allocation9 + $0x20] sm:$0xff]
    %v2743 = vld [vmem:[#allocation9 + $0x28] sm:$0xff]
    %v2744 = vld [vmem:[#allocation9 + $0x30] sm:$0xff]
    %v2745 = vld [vmem:[#allocation9 + $0x38] sm:$0xff]
    %v2746 = vld [vmem:[#allocation9 + $0x40] sm:$0xff]
    %v2747 = vld [vmem:[#allocation9 + $0x48] sm:$0xff]
    %v2748 = vld [vmem:[#allocation9 + $0x50] sm:$0xff]
    %v2749 = vld [vmem:[#allocation9 + $0x58] sm:$0xff]
    %v2750 = vld [vmem:[#allocation9 + $0x60] sm:$0xff]
    %v2751 = vld [vmem:[#allocation9 + $0x68] sm:$0xff]
    %v2752 = vld [vmem:[#allocation9 + $0x70] sm:$0xff]
    %v2753 = vld [vmem:[#allocation9 + $0x78] sm:$0xff]
    %v2754 = vld [vmem:[#allocation9 + $0x80] sm:$0xff]
    %v2755 = vld [vmem:[#allocation9 + $0x88] sm:$0xff]
    %v2756 = vld [vmem:[#allocation9 + $0x90] sm:$0xff]
    %v2757 = vld [vmem:[#allocation9 + $0x98] sm:$0xff]
    %v2758 = vld [vmem:[#allocation9 + $0xa0] sm:$0xff]
    %v2759 = vld [vmem:[#allocation9 + $0xa8] sm:$0xff]
    %v2760 = vld [vmem:[#allocation9 + $0xb0] sm:$0xff]
    %v2761 = vld [vmem:[#allocation9 + $0xb8] sm:$0xff]
    %v2762 = vld [vmem:[#allocation9 + $0xc0] sm:$0xff]
    %v2763 = vld [vmem:[#allocation9 + $0xc8] sm:$0xff]
    %v2764 = vld [vmem:[#allocation9 + $0xd0] sm:$0xff]
    %v2765 = vld [vmem:[#allocation9 + $0xd8] sm:$0xff]
    %v2766 = vld [vmem:[#allocation9 + $0xe0] sm:$0xff]
    %v2767 = vld [vmem:[#allocation9 + $0xe8] sm:$0xff]
    %v2768 = vld [vmem:[#allocation9 + $0xf0] sm:$0xff]
    %v2769 = vld [vmem:[#allocation9 + $0xf8] sm:$0xff]
    %v2770 = vld [vmem:[#allocation9 + $0x100] sm:$0xff]
    %v2771 = vld [vmem:[#allocation9 + $0x108] sm:$0xff]
    %v2772 = vld [vmem:[#allocation9 + $0x110] sm:$0xff]
    %v2773 = vld [vmem:[#allocation9 + $0x118] sm:$0xff]
    %v2774 = vld [vmem:[#allocation9 + $0x120] sm:$0xff]
    %v2775 = vld [vmem:[#allocation9 + $0x128] sm:$0xff]
    %v2776 = vld [vmem:[#allocation9 + $0x130] sm:$0xff]
    %v2777 = vld [vmem:[#allocation9 + $0x138] sm:$0xff]
    %v2778 = vld [vmem:[#allocation9 + $0x140] sm:$0xff]
    %v2779 = vld [vmem:[#allocation9 + $0x148] sm:$0xff]
    %v2780 = vld [vmem:[#allocation9 + $0x150] sm:$0xff]
    %v2781 = vld [vmem:[#allocation9 + $0x158] sm:$0xff]
    %v2782 = vld [vmem:[#allocation9 + $0x160] sm:$0xff]
    %v2783 = vld [vmem:[#allocation9 + $0x168] sm:$0xff]
    %v2784 = vld [vmem:[#allocation9 + $0x170] sm:$0xff]
    %v2785 = vld [vmem:[#allocation9 + $0x178] sm:$0xff]
    %v2786 = vld [vmem:[#allocation9 + $0x180] sm:$0xff]
    %v2787 = vld [vmem:[#allocation9 + $0x188] sm:$0xff]
    %v2788 = vld [vmem:[#allocation9 + $0x190] sm:$0xff]
    %v2789 = vld [vmem:[#allocation9 + $0x198] sm:$0xff]
    %v2790 = vld [vmem:[#allocation9 + $0x1a0] sm:$0xff]
    %v2791 = vld [vmem:[#allocation9 + $0x1a8] sm:$0xff]
    %v2792 = vld [vmem:[#allocation9 + $0x1b0] sm:$0xff]
    %v2793 = vld [vmem:[#allocation9 + $0x1b8] sm:$0xff]
    %v2794 = vld [vmem:[#allocation9 + $0x1c0] sm:$0xff]
    %v2795 = vld [vmem:[#allocation9 + $0x1c8] sm:$0xff]
    %v2796 = vld [vmem:[#allocation9 + $0x1d0] sm:$0xff]
    %v2797 = vld [vmem:[#allocation9 + $0x1d8] sm:$0xff]
    %v2798 = vld [vmem:[#allocation9 + $0x1e0] sm:$0xff]
    %v2799 = vld [vmem:[#allocation9 + $0x1e8] sm:$0xff]
    %v2800 = vld [vmem:[#allocation9 + $0x1f0] sm:$0xff]
    %v2801 = vld [vmem:[#allocation9 + $0x1f8] sm:$0xff]
    %v2802 = vld [vmem:[%s10] sm:$0xf]
    %v2804 = vperm.slane %v2802, 0
    %v2805 = vperm.slane %v2802, 1
    %v2806 = vperm.slane %v2802, 2
    %v2807 = vperm.slane %v2802, 3
    %2812 = vmatpush.msra.mxu0 %v2798
    %2813 = vmatpush.msra.mxu0 %v2794
    %2814 = vmatpush.msra.mxu0 %v2790
    %2815 = vmatpush.msra.mxu0 %v2786
    %2816 = vmatpush.msra.mxu0 %v2782
    %2817 = vmatpush.msra.mxu0 %v2778
    %2818 = vmatpush.msra.mxu0 %v2774
    %2819 = vmatpush.msra.mxu0 %v2770
    %2820 = vmatpush.msra.mxu0 %v2766
    %2821 = vmatpush.msra.mxu0 %v2762
    %2822 = vmatpush.msra.mxu0 %v2758
    %2823 = vmatpush.msra.mxu0 %v2754
    %2824 = vmatpush.msra.mxu0 %v2750
    %2825 = vmatpush.msra.mxu0 %v2746
    %2826 = vmatpush.msra.mxu0 %v2742
    %2827 = vmatpush.msra.mxu0 %v2738
    %2828 = vmatmul.f32.gmra.mxu0 %v2730
    %v2829 = vpop.f32.mrf.mxu0
    %v2830 = vadd.f32 %v2804, %v2829
    %2831 = vmatmul.f32.gmra.mxu0 %v2731
    %v2832 = vpop.f32.mrf.mxu0
    %v2833 = vadd.f32 %v2804, %v2832
    %2834 = vmatmul.f32.gmra.mxu0 %v2732
    %v2835 = vpop.f32.mrf.mxu0
    %v2836 = vadd.f32 %v2804, %v2835
    %2837 = vmatmul.f32.gmra.mxu0 %v2733
    %v2838 = vpop.f32.mrf.mxu0
    %v2839 = vadd.f32 %v2804, %v2838
    %2840 = vmatmul.f32.gmra.mxu0 %v2734
    %v2841 = vpop.f32.mrf.mxu0
    %v2842 = vadd.f32 %v2804, %v2841
    %2843 = vmatmul.f32.gmra.mxu0 %v2735
    %v2844 = vpop.f32.mrf.mxu0
    %v2845 = vadd.f32 %v2804, %v2844
    %2846 = vmatmul.f32.gmra.mxu0 %v2736
    %v2847 = vpop.f32.mrf.mxu0
    %v2848 = vadd.f32 %v2804, %v2847
    %2849 = vmatmul.f32.gmra.mxu0 %v2737
    %v2850 = vpop.f32.mrf.mxu0
    %v2851 = vadd.f32 %v2804, %v2850
    %2852 = vdwg.mxu0
    %2853 = vmatpush.msra.mxu0 %v2799
    %2854 = vmatpush.msra.mxu0 %v2795
    %2855 = vmatpush.msra.mxu0 %v2791
    %2856 = vmatpush.msra.mxu0 %v2787
    %2857 = vmatpush.msra.mxu0 %v2783
    %2858 = vmatpush.msra.mxu0 %v2779
    %2859 = vmatpush.msra.mxu0 %v2775
    %2860 = vmatpush.msra.mxu0 %v2771
    %2861 = vmatpush.msra.mxu0 %v2767
    %2862 = vmatpush.msra.mxu0 %v2763
    %2863 = vmatpush.msra.mxu0 %v2759
    %2864 = vmatpush.msra.mxu0 %v2755
    %2865 = vmatpush.msra.mxu0 %v2751
    %2866 = vmatpush.msra.mxu0 %v2747
    %2867 = vmatpush.msra.mxu0 %v2743
    %2868 = vmatpush.msra.mxu0 %v2739
    %2869 = vmatmul.f32.gmra.mxu0 %v2730
    %v2870 = vpop.f32.mrf.mxu0
    %v2871 = vadd.f32 %v2805, %v2870
    %2872 = vmatmul.f32.gmra.mxu0 %v2731
    %v2873 = vpop.f32.mrf.mxu0
    %v2874 = vadd.f32 %v2805, %v2873
    %2875 = vmatmul.f32.gmra.mxu0 %v2732
    %v2876 = vpop.f32.mrf.mxu0
    %v2877 = vadd.f32 %v2805, %v2876
    %2878 = vmatmul.f32.gmra.mxu0 %v2733
    %v2879 = vpop.f32.mrf.mxu0
    %v2880 = vadd.f32 %v2805, %v2879
    %2881 = vmatmul.f32.gmra.mxu0 %v2734
    %v2882 = vpop.f32.mrf.mxu0
    %v2883 = vadd.f32 %v2805, %v2882
    %2884 = vmatmul.f32.gmra.mxu0 %v2735
    %v2885 = vpop.f32.mrf.mxu0
    %v2886 = vadd.f32 %v2805, %v2885
    %2887 = vmatmul.f32.gmra.mxu0 %v2736
    %v2888 = vpop.f32.mrf.mxu0
    %v2889 = vadd.f32 %v2805, %v2888
    %2890 = vmatmul.f32.gmra.mxu0 %v2737
    %v2891 = vpop.f32.mrf.mxu0
    %v2892 = vadd.f32 %v2805, %v2891
    %2893 = vdwg.mxu0
    %2894 = vmatpush.msra.mxu0 %v2800
    %2895 = vmatpush.msra.mxu0 %v2796
    %2896 = vmatpush.msra.mxu0 %v2792
    %2897 = vmatpush.msra.mxu0 %v2788
    %2898 = vmatpush.msra.mxu0 %v2784
    %2899 = vmatpush.msra.mxu0 %v2780
    %2900 = vmatpush.msra.mxu0 %v2776
    %2901 = vmatpush.msra.mxu0 %v2772
    %2902 = vmatpush.msra.mxu0 %v2768
    %2903 = vmatpush.msra.mxu0 %v2764
    %2904 = vmatpush.msra.mxu0 %v2760
    %2905 = vmatpush.msra.mxu0 %v2756
    %2906 = vmatpush.msra.mxu0 %v2752
    %2907 = vmatpush.msra.mxu0 %v2748
    %2908 = vmatpush.msra.mxu0 %v2744
    %2909 = vmatpush.msra.mxu0 %v2740
    %2910 = vmatmul.f32.gmra.mxu0 %v2730
    %v2911 = vpop.f32.mrf.mxu0
    %v2912 = vadd.f32 %v2806, %v2911
    %2913 = vmatmul.f32.gmra.mxu0 %v2731
    %v2914 = vpop.f32.mrf.mxu0
    %v2915 = vadd.f32 %v2806, %v2914
    %2916 = vmatmul.f32.gmra.mxu0 %v2732
    %v2917 = vpop.f32.mrf.mxu0
    %v2918 = vadd.f32 %v2806, %v2917
    %2919 = vmatmul.f32.gmra.mxu0 %v2733
    %v2920 = vpop.f32.mrf.mxu0
    %v2921 = vadd.f32 %v2806, %v2920
    %2922 = vmatmul.f32.gmra.mxu0 %v2734
    %v2923 = vpop.f32.mrf.mxu0
    %v2924 = vadd.f32 %v2806, %v2923
    %2925 = vmatmul.f32.gmra.mxu0 %v2735
    %v2926 = vpop.f32.mrf.mxu0
    %v2927 = vadd.f32 %v2806, %v2926
    %2928 = vmatmul.f32.gmra.mxu0 %v2736
    %v2929 = vpop.f32.mrf.mxu0
    %v2930 = vadd.f32 %v2806, %v2929
    %2931 = vmatmul.f32.gmra.mxu0 %v2737
    %v2932 = vpop.f32.mrf.mxu0
    %v2933 = vadd.f32 %v2806, %v2932
    %2934 = vdwg.mxu0
    %2935 = vmatpush.msra.mxu0 %v2801
    %2936 = vmatpush.msra.mxu0 %v2797
    %2937 = vmatpush.msra.mxu0 %v2793
    %2938 = vmatpush.msra.mxu0 %v2789
    %2939 = vmatpush.msra.mxu0 %v2785
    %2940 = vmatpush.msra.mxu0 %v2781
    %2941 = vmatpush.msra.mxu0 %v2777
    %2942 = vmatpush.msra.mxu0 %v2773
    %2943 = vmatpush.msra.mxu0 %v2769
    %2944 = vmatpush.msra.mxu0 %v2765
    %2945 = vmatpush.msra.mxu0 %v2761
    %2946 = vmatpush.msra.mxu0 %v2757
    %2947 = vmatpush.msra.mxu0 %v2753
    %2948 = vmatpush.msra.mxu0 %v2749
    %2949 = vmatpush.msra.mxu0 %v2745
    %2950 = vmatpush.msra.mxu0 %v2741
    %2951 = vmatmul.f32.gmra.mxu0 %v2730
    %v2952 = vpop.f32.mrf.mxu0
    %v2953 = vadd.f32 %v2807, %v2952
    %2954 = vmatmul.f32.gmra.mxu0 %v2731
    %v2955 = vpop.f32.mrf.mxu0
    %v2956 = vadd.f32 %v2807, %v2955
    %2957 = vmatmul.f32.gmra.mxu0 %v2732
    %v2958 = vpop.f32.mrf.mxu0
    %v2959 = vadd.f32 %v2807, %v2958
    %2960 = vmatmul.f32.gmra.mxu0 %v2733
    %v2961 = vpop.f32.mrf.mxu0
    %v2962 = vadd.f32 %v2807, %v2961
    %2963 = vmatmul.f32.gmra.mxu0 %v2734
    %v2964 = vpop.f32.mrf.mxu0
    %v2965 = vadd.f32 %v2807, %v2964
    %2966 = vmatmul.f32.gmra.mxu0 %v2735
    %v2967 = vpop.f32.mrf.mxu0
    %v2968 = vadd.f32 %v2807, %v2967
    %2969 = vmatmul.f32.gmra.mxu0 %v2736
    %v2970 = vpop.f32.mrf.mxu0
    %v2971 = vadd.f32 %v2807, %v2970
    %2972 = vmatmul.f32.gmra.mxu0 %v2737
    %v2973 = vpop.f32.mrf.mxu0
    %v2974 = vadd.f32 %v2807, %v2973
    %2975 = vdwg.mxu0
    %2976 = vst [vmem:[#allocation2] sm:$0xff] %v2830
    %2977 = vst [vmem:[#allocation2 + $0x8] sm:$0xff] %v2871
    %2978 = vst [vmem:[#allocation2 + $0x10] sm:$0xff] %v2912
    %2979 = vst [vmem:[#allocation2 + $0x18] sm:$0xff] %v2953
    %2980 = vst [vmem:[#allocation2 + $0x20] sm:$0xff] %v2833
    %2981 = vst [vmem:[#allocation2 + $0x28] sm:$0xff] %v2874
    %2982 = vst [vmem:[#allocation2 + $0x30] sm:$0xff] %v2915
    %2983 = vst [vmem:[#allocation2 + $0x38] sm:$0xff] %v2956
    %2984 = vst [vmem:[#allocation2 + $0x40] sm:$0xff] %v2836
    %2985 = vst [vmem:[#allocation2 + $0x48] sm:$0xff] %v2877
    %2986 = vst [vmem:[#allocation2 + $0x50] sm:$0xff] %v2918
    %2987 = vst [vmem:[#allocation2 + $0x58] sm:$0xff] %v2959
    %2988 = vst [vmem:[#allocation2 + $0x60] sm:$0xff] %v2839
    %2989 = vst [vmem:[#allocation2 + $0x68] sm:$0xff] %v2880
    %2990 = vst [vmem:[#allocation2 + $0x70] sm:$0xff] %v2921
    %2991 = vst [vmem:[#allocation2 + $0x78] sm:$0xff] %v2962
    %2992 = vst [vmem:[#allocation2 + $0x80] sm:$0xff] %v2842
    %2993 = vst [vmem:[#allocation2 + $0x88] sm:$0xff] %v2883
    %2994 = vst [vmem:[#allocation2 + $0x90] sm:$0xff] %v2924
    %2995 = vst [vmem:[#allocation2 + $0x98] sm:$0xff] %v2965
    %2996 = vst [vmem:[#allocation2 + $0xa0] sm:$0xff] %v2845
    %2997 = vst [vmem:[#allocation2 + $0xa8] sm:$0xff] %v2886
    %2998 = vst [vmem:[#allocation2 + $0xb0] sm:$0xff] %v2927
    %2999 = vst [vmem:[#allocation2 + $0xb8] sm:$0xff] %v2968
    %3000 = vst [vmem:[#allocation2 + $0xc0] sm:$0xff] %v2848
    %3001 = vst [vmem:[#allocation2 + $0xc8] sm:$0xff] %v2889
    %3002 = vst [vmem:[#allocation2 + $0xd0] sm:$0xff] %v2930
    %3003 = vst [vmem:[#allocation2 + $0xd8] sm:$0xff] %v2971
    %3004 = vst [vmem:[#allocation2 + $0xe0] sm:$0xff] %v2851
    %3005 = vst [vmem:[#allocation2 + $0xe8] sm:$0xff] %v2892
    %3006 = vst [vmem:[#allocation2 + $0xf0] sm:$0xff] %v2933
    %3007 = vst [vmem:[#allocation2 + $0xf8] sm:$0xff] %v2974
    %v3008 = vld [vmem:[#allocation2] sm:$0xff]
    %v3009 = vld [vmem:[#allocation2 + $0x8] sm:$0xff]
    %v3010 = vld [vmem:[#allocation2 + $0x10] sm:$0xff]
    %v3011 = vld [vmem:[#allocation2 + $0x18] sm:$0xff]
    %v3012 = vld [vmem:[#allocation2 + $0xe0] sm:$0xff]
    %v3013 = vld [vmem:[#allocation2 + $0xe8] sm:$0xff]
    %v3014 = vld [vmem:[#allocation2 + $0xf0] sm:$0xff]
    %v3015 = vld [vmem:[#allocation2 + $0xf8] sm:$0xff]
    %v3016 = vsel %vm422, %v3008, %v3012
    %v3017 = vsel %vm422, %v3009, %v3013
    %v3018 = vsel %vm422, %v3010, %v3014
    %v3019 = vsel %vm422, %v3011, %v3015
    %v3020 = vld [vmem:[#allocation10] sm:$0xff]
    %v3021 = vld [vmem:[#allocation10 + $0x8] sm:$0xff]
    %v3022 = vld [vmem:[#allocation10 + $0x10] sm:$0xff]
    %v3023 = vld [vmem:[#allocation10 + $0x18] sm:$0xff]
    %v3024 = vld [vmem:[#allocation10 + $0x20] sm:$0xff]
    %v3025 = vld [vmem:[#allocation10 + $0x28] sm:$0xff]
    %v3026 = vld [vmem:[#allocation10 + $0x30] sm:$0xff]
    %v3027 = vld [vmem:[#allocation10 + $0x38] sm:$0xff]
    %v3028 = vld [vmem:[#allocation10 + $0x40] sm:$0xff]
    %v3029 = vld [vmem:[#allocation10 + $0x48] sm:$0xff]
    %v3030 = vld [vmem:[#allocation10 + $0x50] sm:$0xff]
    %v3031 = vld [vmem:[#allocation10 + $0x58] sm:$0xff]
    %v3032 = vld [vmem:[#allocation10 + $0x60] sm:$0xff]
    %v3033 = vld [vmem:[#allocation10 + $0x68] sm:$0xff]
    %v3034 = vld [vmem:[#allocation10 + $0x70] sm:$0xff]
    %v3035 = vld [vmem:[#allocation10 + $0x78] sm:$0xff]
    %v3036 = vld [vmem:[#allocation10 + $0x80] sm:$0xff]
    %v3037 = vld [vmem:[#allocation10 + $0x88] sm:$0xff]
    %v3038 = vld [vmem:[#allocation10 + $0x90] sm:$0xff]
    %v3039 = vld [vmem:[#allocation10 + $0x98] sm:$0xff]
    %v3040 = vld [vmem:[#allocation10 + $0xa0] sm:$0xff]
    %v3041 = vld [vmem:[#allocation10 + $0xa8] sm:$0xff]
    %v3042 = vld [vmem:[#allocation10 + $0xb0] sm:$0xff]
    %v3043 = vld [vmem:[#allocation10 + $0xb8] sm:$0xff]
    %v3044 = vld [vmem:[#allocation10 + $0xc0] sm:$0xff]
    %v3045 = vld [vmem:[#allocation10 + $0xc8] sm:$0xff]
    %v3046 = vld [vmem:[#allocation10 + $0xd0] sm:$0xff]
    %v3047 = vld [vmem:[#allocation10 + $0xd8] sm:$0xff]
    %v3048 = vld [vmem:[#allocation10 + $0xe0] sm:$0xff]
    %v3049 = vld [vmem:[#allocation10 + $0xe8] sm:$0xff]
    %v3050 = vld [vmem:[#allocation10 + $0xf0] sm:$0xff]
    %v3051 = vld [vmem:[#allocation10 + $0xf8] sm:$0xff]
    %v3052 = vld [vmem:[#allocation10 + $0x100] sm:$0xff]
    %v3053 = vld [vmem:[#allocation10 + $0x108] sm:$0xff]
    %v3054 = vld [vmem:[#allocation10 + $0x110] sm:$0xff]
    %v3055 = vld [vmem:[#allocation10 + $0x118] sm:$0xff]
    %v3056 = vld [vmem:[#allocation10 + $0x120] sm:$0xff]
    %v3057 = vld [vmem:[#allocation10 + $0x128] sm:$0xff]
    %v3058 = vld [vmem:[#allocation10 + $0x130] sm:$0xff]
    %v3059 = vld [vmem:[#allocation10 + $0x138] sm:$0xff]
    %v3060 = vld [vmem:[#allocation10 + $0x140] sm:$0xff]
    %v3061 = vld [vmem:[#allocation10 + $0x148] sm:$0xff]
    %v3062 = vld [vmem:[#allocation10 + $0x150] sm:$0xff]
    %v3063 = vld [vmem:[#allocation10 + $0x158] sm:$0xff]
    %v3064 = vld [vmem:[#allocation10 + $0x160] sm:$0xff]
    %v3065 = vld [vmem:[#allocation10 + $0x168] sm:$0xff]
    %v3066 = vld [vmem:[#allocation10 + $0x170] sm:$0xff]
    %v3067 = vld [vmem:[#allocation10 + $0x178] sm:$0xff]
    %v3068 = vld [vmem:[#allocation10 + $0x180] sm:$0xff]
    %v3069 = vld [vmem:[#allocation10 + $0x188] sm:$0xff]
    %v3070 = vld [vmem:[#allocation10 + $0x190] sm:$0xff]
    %v3071 = vld [vmem:[#allocation10 + $0x198] sm:$0xff]
    %v3072 = vld [vmem:[#allocation10 + $0x1a0] sm:$0xff]
    %v3073 = vld [vmem:[#allocation10 + $0x1a8] sm:$0xff]
    %v3074 = vld [vmem:[#allocation10 + $0x1b0] sm:$0xff]
    %v3075 = vld [vmem:[#allocation10 + $0x1b8] sm:$0xff]
    %v3076 = vld [vmem:[#allocation10 + $0x1c0] sm:$0xff]
    %v3077 = vld [vmem:[#allocation10 + $0x1c8] sm:$0xff]
    %v3078 = vld [vmem:[#allocation10 + $0x1d0] sm:$0xff]
    %v3079 = vld [vmem:[#allocation10 + $0x1d8] sm:$0xff]
    %v3080 = vld [vmem:[#allocation10 + $0x1e0] sm:$0xff]
    %v3081 = vld [vmem:[#allocation10 + $0x1e8] sm:$0xff]
    %v3082 = vld [vmem:[#allocation10 + $0x1f0] sm:$0xff]
    %v3083 = vld [vmem:[#allocation10 + $0x1f8] sm:$0xff]
    %3084 = vmatpush.msra.mxu0 %v3080
    %3085 = vmatpush.msra.mxu0 %v3076
    %3086 = vmatpush.msra.mxu0 %v3072
    %3087 = vmatpush.msra.mxu0 %v3068
    %3088 = vmatpush.msra.mxu0 %v3064
    %3089 = vmatpush.msra.mxu0 %v3060
    %3090 = vmatpush.msra.mxu0 %v3056
    %3091 = vmatpush.msra.mxu0 %v3052
    %3092 = vmatpush.msra.mxu0 %v3048
    %3093 = vmatpush.msra.mxu0 %v3044
    %3094 = vmatpush.msra.mxu0 %v3040
    %3095 = vmatpush.msra.mxu0 %v3036
    %3096 = vmatpush.msra.mxu0 %v3032
    %3097 = vmatpush.msra.mxu0 %v3028
    %3098 = vmatpush.msra.mxu0 %v3024
    %3099 = vmatpush.msra.mxu0 %v3020
    %3100 = vmatmul.f32.gmra.mxu0 0.0
    %v3101 = vpop.f32.mrf.mxu0
    %v3102 = vadd.f32 0.0, %v3101
    %3103 = vdwg.mxu0
    %3104 = vmatpush.msra.mxu0 %v3081
    %3105 = vmatpush.msra.mxu0 %v3077
    %3106 = vmatpush.msra.mxu0 %v3073
    %3107 = vmatpush.msra.mxu0 %v3069
    %3108 = vmatpush.msra.mxu0 %v3065
    %3109 = vmatpush.msra.mxu0 %v3061
    %3110 = vmatpush.msra.mxu0 %v3057
    %3111 = vmatpush.msra.mxu0 %v3053
    %3112 = vmatpush.msra.mxu0 %v3049
    %3113 = vmatpush.msra.mxu0 %v3045
    %3114 = vmatpush.msra.mxu0 %v3041
    %3115 = vmatpush.msra.mxu0 %v3037
    %3116 = vmatpush.msra.mxu0 %v3033
    %3117 = vmatpush.msra.mxu0 %v3029
    %3118 = vmatpush.msra.mxu0 %v3025
    %3119 = vmatpush.msra.mxu0 %v3021
    %3120 = vmatmul.f32.gmra.mxu0 0.0
    %v3121 = vpop.f32.mrf.mxu0
    %v3122 = vadd.f32 0.0, %v3121
    %3123 = vdwg.mxu0
    %3124 = vmatpush.msra.mxu0 %v3082
    %3125 = vmatpush.msra.mxu0 %v3078
    %3126 = vmatpush.msra.mxu0 %v3074
    %3127 = vmatpush.msra.mxu0 %v3070
    %3128 = vmatpush.msra.mxu0 %v3066
    %3129 = vmatpush.msra.mxu0 %v3062
    %3130 = vmatpush.msra.mxu0 %v3058
    %3131 = vmatpush.msra.mxu0 %v3054
    %3132 = vmatpush.msra.mxu0 %v3050
    %3133 = vmatpush.msra.mxu0 %v3046
    %3134 = vmatpush.msra.mxu0 %v3042
    %3135 = vmatpush.msra.mxu0 %v3038
    %3136 = vmatpush.msra.mxu0 %v3034
    %3137 = vmatpush.msra.mxu0 %v3030
    %3138 = vmatpush.msra.mxu0 %v3026
    %3139 = vmatpush.msra.mxu0 %v3022
    %3140 = vmatmul.f32.gmra.mxu0 0.0
    %v3141 = vpop.f32.mrf.mxu0
    %v3142 = vadd.f32 0.0, %v3141
    %3143 = vdwg.mxu0
    %3144 = vmatpush.msra.mxu0 %v3083
    %3145 = vmatpush.msra.mxu0 %v3079
    %3146 = vmatpush.msra.mxu0 %v3075
    %3147 = vmatpush.msra.mxu0 %v3071
    %3148 = vmatpush.msra.mxu0 %v3067
    %3149 = vmatpush.msra.mxu0 %v3063
    %3150 = vmatpush.msra.mxu0 %v3059
    %3151 = vmatpush.msra.mxu0 %v3055
    %3152 = vmatpush.msra.mxu0 %v3051
    %3153 = vmatpush.msra.mxu0 %v3047
    %3154 = vmatpush.msra.mxu0 %v3043
    %3155 = vmatpush.msra.mxu0 %v3039
    %3156 = vmatpush.msra.mxu0 %v3035
    %3157 = vmatpush.msra.mxu0 %v3031
    %3158 = vmatpush.msra.mxu0 %v3027
    %3159 = vmatpush.msra.mxu0 %v3023
    %3160 = vmatmul.f32.gmra.mxu0 0.0
    %v3161 = vpop.f32.mrf.mxu0
    %v3162 = vadd.f32 0.0, %v3161
    %3163 = vdwg.mxu0
    %v3164 = vadd.f32 %v3016, %v3102
    %v3165 = vadd.f32 %v3017, %v3122
    %v3166 = vadd.f32 %v3018, %v3142
    %v3167 = vadd.f32 %v3019, %v3162
    %v3168 = vxor.u32 %v3164, 2147483648
    %v3169 = vmul.f32 %v3168, 1.442695
    %v3170 = vpow.pop %v3169
    %v3171 = vadd.f32 %v3170, 1.0
    %v3172 = vrcp.pop %v3171
    %v3173 = vmul.f32 %v3171, %v3172
    %v3174 = vsub.f32 1.0, %v3173
    %v3175 = vmul.f32 %v3172, %v3174
    %v3176 = vadd.f32 %v3172, %v3175
    %vm3177 = vweird.f32 %v3171
    %vm3178 = vweird.f32 %v3172
    %vm3179 = vmor %vm3177, %vm3178
    %v3180 = vsel %vm3179, %v3172, %v3176
    %v3181 = vand.u32 2147483647, %v3171
    %vm3182 = vcmp.eq.f32.partialorder %v3181, 8.507059e+37
    %v3183 = vand.u32 %v3171, 2147483648
    %v3184 = vor.u32 1.1754944e-38, %v3183
    %v3185 = vsel %vm3182, %v3184, %v3180
    %v3186 = vmul.f32 1.0, %v3185
    %v3187 = vxor.u32 %v3165, 2147483648
    %v3188 = vmul.f32 %v3187, 1.442695
    %v3189 = vpow.pop %v3188
    %v3190 = vadd.f32 %v3189, 1.0
    %v3191 = vrcp.pop %v3190
    %v3192 = vmul.f32 %v3190, %v3191
    %v3193 = vsub.f32 1.0, %v3192
    %v3194 = vmul.f32 %v3191, %v3193
    %v3195 = vadd.f32 %v3191, %v3194
    %vm3196 = vweird.f32 %v3190
    %vm3197 = vweird.f32 %v3191
    %vm3198 = vmor %vm3196, %vm3197
    %v3199 = vsel %vm3198, %v3191, %v3195
    %v3200 = vand.u32 2147483647, %v3190
    %vm3201 = vcmp.eq.f32.partialorder %v3200, 8.507059e+37
    %v3202 = vand.u32 %v3190, 2147483648
    %v3203 = vor.u32 1.1754944e-38, %v3202
    %v3204 = vsel %vm3201, %v3203, %v3199
    %v3205 = vmul.f32 1.0, %v3204
    %v3206 = vtanh.pop %v3166
    %v3207 = vxor.u32 %v3167, 2147483648
    %v3208 = vmul.f32 %v3207, 1.442695
    %v3209 = vpow.pop %v3208
    %v3210 = vadd.f32 %v3209, 1.0
    %v3211 = vrcp.pop %v3210
    %v3212 = vmul.f32 %v3210, %v3211
    %v3213 = vsub.f32 1.0, %v3212
    %v3214 = vmul.f32 %v3211, %v3213
    %v3215 = vadd.f32 %v3211, %v3214
    %vm3216 = vweird.f32 %v3210
    %vm3217 = vweird.f32 %v3211
    %vm3218 = vmor %vm3216, %vm3217
    %v3219 = vsel %vm3218, %v3211, %v3215
    %v3220 = vand.u32 2147483647, %v3210
    %vm3221 = vcmp.eq.f32.partialorder %v3220, 8.507059e+37
    %v3222 = vand.u32 %v3210, 2147483648
    %v3223 = vor.u32 1.1754944e-38, %v3222
    %v3224 = vsel %vm3221, %v3223, %v3219
    %v3225 = vmul.f32 1.0, %v3224
    %v3226 = vmul.f32 %v3205, 0.0
    %v3227 = vmul.f32 %v3186, %v3206
    %v3228 = vadd.f32 %v3226, %v3227
    %v3229 = vtanh.pop %v3228
    %v3230 = vmul.f32 %v3225, %v3229
    %v3231 = vld [vmem:[%s1] sm:$0xff]
    %v3232 = vld [vmem:[%s2 + $0x38] sm:$0xff]
    %v3233 = vadd.f32 %v3231, %v3232
    %vm3234 = vcmp.gt.f32.partialorder %v3233, 0.5
    %v3235 = vsel %vm3234, %v3230, 0.0
    %v3236 = vsel %vm3234, %v3228, 0.0
    %v3237 = vld [vmem:[#allocation2 + $0x20] sm:$0xff]
    %v3238 = vld [vmem:[#allocation2 + $0x28] sm:$0xff]
    %v3239 = vld [vmem:[#allocation2 + $0x30] sm:$0xff]
    %v3240 = vld [vmem:[#allocation2 + $0x38] sm:$0xff]
    %v3241 = vld [vmem:[#allocation2 + $0xc0] sm:$0xff]
    %v3242 = vld [vmem:[#allocation2 + $0xc8] sm:$0xff]
    %v3243 = vld [vmem:[#allocation2 + $0xd0] sm:$0xff]
    %v3244 = vld [vmem:[#allocation2 + $0xd8] sm:$0xff]
    %v3245 = vsel %vm422, %v3237, %v3241
    %v3246 = vsel %vm422, %v3238, %v3242
    %v3247 = vsel %vm422, %v3239, %v3243
    %v3248 = vsel %vm422, %v3240, %v3244
    %3249 = vmatpush.msra.mxu0 %v3080
    %3250 = vmatpush.msra.mxu0 %v3076
    %3251 = vmatpush.msra.mxu0 %v3072
    %3252 = vmatpush.msra.mxu0 %v3068
    %3253 = vmatpush.msra.mxu0 %v3064
    %3254 = vmatpush.msra.mxu0 %v3060
    %3255 = vmatpush.msra.mxu0 %v3056
    %3256 = vmatpush.msra.mxu0 %v3052
    %3257 = vmatpush.msra.mxu0 %v3048
    %3258 = vmatpush.msra.mxu0 %v3044
    %3259 = vmatpush.msra.mxu0 %v3040
    %3260 = vmatpush.msra.mxu0 %v3036
    %3261 = vmatpush.msra.mxu0 %v3032
    %3262 = vmatpush.msra.mxu0 %v3028
    %3263 = vmatpush.msra.mxu0 %v3024
    %3264 = vmatpush.msra.mxu0 %v3020
    %3265 = vmatmul.f32.gmra.mxu0 %v3235
    %v3266 = vpop.f32.mrf.mxu0
    %v3267 = vadd.f32 0.0, %v3266
    %3268 = vdwg.mxu0
    %3269 = vmatpush.msra.mxu0 %v3081
    %3270 = vmatpush.msra.mxu0 %v3077
    %3271 = vmatpush.msra.mxu0 %v3073
    %3272 = vmatpush.msra.mxu0 %v3069
    %3273 = vmatpush.msra.mxu0 %v3065
    %3274 = vmatpush.msra.mxu0 %v3061
    %3275 = vmatpush.msra.mxu0 %v3057
    %3276 = vmatpush.msra.mxu0 %v3053
    %3277 = vmatpush.msra.mxu0 %v3049
    %3278 = vmatpush.msra.mxu0 %v3045
    %3279 = vmatpush.msra.mxu0 %v3041
    %3280 = vmatpush.msra.mxu0 %v3037
    %3281 = vmatpush.msra.mxu0 %v3033
    %3282 = vmatpush.msra.mxu0 %v3029
    %3283 = vmatpush.msra.mxu0 %v3025
    %3284 = vmatpush.msra.mxu0 %v3021
    %3285 = vmatmul.f32.gmra.mxu0 %v3235
    %v3286 = vpop.f32.mrf.mxu0
    %v3287 = vadd.f32 0.0, %v3286
    %3288 = vdwg.mxu0
    %3289 = vmatpush.msra.mxu0 %v3082
    %3290 = vmatpush.msra.mxu0 %v3078
    %3291 = vmatpush.msra.mxu0 %v3074
    %3292 = vmatpush.msra.mxu0 %v3070
    %3293 = vmatpush.msra.mxu0 %v3066
    %3294 = vmatpush.msra.mxu0 %v3062
    %3295 = vmatpush.msra.mxu0 %v3058
    %3296 = vmatpush.msra.mxu0 %v3054
    %3297 = vmatpush.msra.mxu0 %v3050
    %3298 = vmatpush.msra.mxu0 %v3046
    %3299 = vmatpush.msra.mxu0 %v3042
    %3300 = vmatpush.msra.mxu0 %v3038
    %3301 = vmatpush.msra.mxu0 %v3034
    %3302 = vmatpush.msra.mxu0 %v3030
    %3303 = vmatpush.msra.mxu0 %v3026
    %3304 = vmatpush.msra.mxu0 %v3022
    %3305 = vmatmul.f32.gmra.mxu0 %v3235
    %v3306 = vpop.f32.mrf.mxu0
    %v3307 = vadd.f32 0.0, %v3306
    %3308 = vdwg.mxu0
    %3309 = vmatpush.msra.mxu0 %v3083
    %3310 = vmatpush.msra.mxu0 %v3079
    %3311 = vmatpush.msra.mxu0 %v3075
    %3312 = vmatpush.msra.mxu0 %v3071
    %3313 = vmatpush.msra.mxu0 %v3067
    %3314 = vmatpush.msra.mxu0 %v3063
    %3315 = vmatpush.msra.mxu0 %v3059
    %3316 = vmatpush.msra.mxu0 %v3055
    %3317 = vmatpush.msra.mxu0 %v3051
    %3318 = vmatpush.msra.mxu0 %v3047
    %3319 = vmatpush.msra.mxu0 %v3043
    %3320 = vmatpush.msra.mxu0 %v3039
    %3321 = vmatpush.msra.mxu0 %v3035
    %3322 = vmatpush.msra.mxu0 %v3031
    %3323 = vmatpush.msra.mxu0 %v3027
    %3324 = vmatpush.msra.mxu0 %v3023
    %3325 = vmatmul.f32.gmra.mxu0 %v3235
    %v3326 = vpop.f32.mrf.mxu0
    %v3327 = vadd.f32 0.0, %v3326
    %3328 = vdwg.mxu0
    %v3329 = vadd.f32 %v3245, %v3267
    %v3330 = vadd.f32 %v3246, %v3287
    %v3331 = vadd.f32 %v3247, %v3307
    %v3332 = vadd.f32 %v3248, %v3327
    %v3333 = vxor.u32 %v3329, 2147483648
    %v3334 = vmul.f32 %v3333, 1.442695
    %v3335 = vpow.pop %v3334
    %v3336 = vadd.f32 %v3335, 1.0
    %v3337 = vrcp.pop %v3336
    %v3338 = vmul.f32 %v3336, %v3337
    %v3339 = vsub.f32 1.0, %v3338
    %v3340 = vmul.f32 %v3337, %v3339
    %v3341 = vadd.f32 %v3337, %v3340
    %vm3342 = vweird.f32 %v3336
    %vm3343 = vweird.f32 %v3337
    %vm3344 = vmor %vm3342, %vm3343
    %v3345 = vsel %vm3344, %v3337, %v3341
    %v3346 = vand.u32 2147483647, %v3336
    %vm3347 = vcmp.eq.f32.partialorder %v3346, 8.507059e+37
    %v3348 = vand.u32 %v3336, 2147483648
    %v3349 = vor.u32 1.1754944e-38, %v3348
    %v3350 = vsel %vm3347, %v3349, %v3345
    %v3351 = vmul.f32 1.0, %v3350
    %v3352 = vxor.u32 %v3330, 2147483648
    %v3353 = vmul.f32 %v3352, 1.442695
    %v3354 = vpow.pop %v3353
    %v3355 = vadd.f32 %v3354, 1.0
    %v3356 = vrcp.pop %v3355
    %v3357 = vmul.f32 %v3355, %v3356
    %v3358 = vsub.f32 1.0, %v3357
    %v3359 = vmul.f32 %v3356, %v3358
    %v3360 = vadd.f32 %v3356, %v3359
    %vm3361 = vweird.f32 %v3355
    %vm3362 = vweird.f32 %v3356
    %vm3363 = vmor %vm3361, %vm3362
    %v3364 = vsel %vm3363, %v3356, %v3360
    %v3365 = vand.u32 2147483647, %v3355
    %vm3366 = vcmp.eq.f32.partialorder %v3365, 8.507059e+37
    %v3367 = vand.u32 %v3355, 2147483648
    %v3368 = vor.u32 1.1754944e-38, %v3367
    %v3369 = vsel %vm3366, %v3368, %v3364
    %v3370 = vmul.f32 1.0, %v3369
    %v3371 = vtanh.pop %v3331
    %v3372 = vxor.u32 %v3332, 2147483648
    %v3373 = vmul.f32 %v3372, 1.442695
    %v3374 = vpow.pop %v3373
    %v3375 = vadd.f32 %v3374, 1.0
    %v3376 = vrcp.pop %v3375
    %v3377 = vmul.f32 %v3375, %v3376
    %v3378 = vsub.f32 1.0, %v3377
    %v3379 = vmul.f32 %v3376, %v3378
    %v3380 = vadd.f32 %v3376, %v3379
    %vm3381 = vweird.f32 %v3375
    %vm3382 = vweird.f32 %v3376
    %vm3383 = vmor %vm3381, %vm3382
    %v3384 = vsel %vm3383, %v3376, %v3380
    %v3385 = vand.u32 2147483647, %v3375
    %vm3386 = vcmp.eq.f32.partialorder %v3385, 8.507059e+37
    %v3387 = vand.u32 %v3375, 2147483648
    %v3388 = vor.u32 1.1754944e-38, %v3387
    %v3389 = vsel %vm3386, %v3388, %v3384
    %v3390 = vmul.f32 1.0, %v3389
    %v3391 = vmul.f32 %v3370, %v3236
    %v3392 = vmul.f32 %v3351, %v3371
    %v3393 = vadd.f32 %v3391, %v3392
    %v3394 = vtanh.pop %v3393
    %v3395 = vmul.f32 %v3390, %v3394
    %v3396 = vld [vmem:[%s1 + $0x8] sm:$0xff]
    %v3397 = vld [vmem:[%s2 + $0x30] sm:$0xff]
    %v3398 = vadd.f32 %v3396, %v3397
    %vm3399 = vcmp.gt.f32.partialorder %v3398, 0.5
    %v3400 = vsel %vm3399, %v3395, %v3235
    %v3401 = vsel %vm3399, %v3393, %v3236
    %v3402 = vld [vmem:[#allocation2 + $0x40] sm:$0xff]
    %v3403 = vld [vmem:[#allocation2 + $0x48] sm:$0xff]
    %v3404 = vld [vmem:[#allocation2 + $0x50] sm:$0xff]
    %v3405 = vld [vmem:[#allocation2 + $0x58] sm:$0xff]
    %v3406 = vld [vmem:[#allocation2 + $0xa0] sm:$0xff]
    %v3407 = vld [vmem:[#allocation2 + $0xa8] sm:$0xff]
    %v3408 = vld [vmem:[#allocation2 + $0xb0] sm:$0xff]
    %v3409 = vld [vmem:[#allocation2 + $0xb8] sm:$0xff]
    %v3410 = vsel %vm422, %v3402, %v3406
    %v3411 = vsel %vm422, %v3403, %v3407
    %v3412 = vsel %vm422, %v3404, %v3408
    %v3413 = vsel %vm422, %v3405, %v3409
    %3414 = vmatpush.msra.mxu0 %v3080
    %3415 = vmatpush.msra.mxu0 %v3076
    %3416 = vmatpush.msra.mxu0 %v3072
    %3417 = vmatpush.msra.mxu0 %v3068
    %3418 = vmatpush.msra.mxu0 %v3064
    %3419 = vmatpush.msra.mxu0 %v3060
    %3420 = vmatpush.msra.mxu0 %v3056
    %3421 = vmatpush.msra.mxu0 %v3052
    %3422 = vmatpush.msra.mxu0 %v3048
    %3423 = vmatpush.msra.mxu0 %v3044
    %3424 = vmatpush.msra.mxu0 %v3040
    %3425 = vmatpush.msra.mxu0 %v3036
    %3426 = vmatpush.msra.mxu0 %v3032
    %3427 = vmatpush.msra.mxu0 %v3028
    %3428 = vmatpush.msra.mxu0 %v3024
    %3429 = vmatpush.msra.mxu0 %v3020
    %3430 = vmatmul.f32.gmra.mxu0 %v3400
    %v3431 = vpop.f32.mrf.mxu0
    %v3432 = vadd.f32 0.0, %v3431
    %3433 = vdwg.mxu0
    %3434 = vmatpush.msra.mxu0 %v3081
    %3435 = vmatpush.msra.mxu0 %v3077
    %3436 = vmatpush.msra.mxu0 %v3073
    %3437 = vmatpush.msra.mxu0 %v3069
    %3438 = vmatpush.msra.mxu0 %v3065
    %3439 = vmatpush.msra.mxu0 %v3061
    %3440 = vmatpush.msra.mxu0 %v3057
    %3441 = vmatpush.msra.mxu0 %v3053
    %3442 = vmatpush.msra.mxu0 %v3049
    %3443 = vmatpush.msra.mxu0 %v3045
    %3444 = vmatpush.msra.mxu0 %v3041
    %3445 = vmatpush.msra.mxu0 %v3037
    %3446 = vmatpush.msra.mxu0 %v3033
    %3447 = vmatpush.msra.mxu0 %v3029
    %3448 = vmatpush.msra.mxu0 %v3025
    %3449 = vmatpush.msra.mxu0 %v3021
    %3450 = vmatmul.f32.gmra.mxu0 %v3400
    %v3451 = vpop.f32.mrf.mxu0
    %v3452 = vadd.f32 0.0, %v3451
    %3453 = vdwg.mxu0
    %3454 = vmatpush.msra.mxu0 %v3082
    %3455 = vmatpush.msra.mxu0 %v3078
    %3456 = vmatpush.msra.mxu0 %v3074
    %3457 = vmatpush.msra.mxu0 %v3070
    %3458 = vmatpush.msra.mxu0 %v3066
    %3459 = vmatpush.msra.mxu0 %v3062
    %3460 = vmatpush.msra.mxu0 %v3058
    %3461 = vmatpush.msra.mxu0 %v3054
    %3462 = vmatpush.msra.mxu0 %v3050
    %3463 = vmatpush.msra.mxu0 %v3046
    %3464 = vmatpush.msra.mxu0 %v3042
    %3465 = vmatpush.msra.mxu0 %v3038
    %3466 = vmatpush.msra.mxu0 %v3034
    %3467 = vmatpush.msra.mxu0 %v3030
    %3468 = vmatpush.msra.mxu0 %v3026
    %3469 = vmatpush.msra.mxu0 %v3022
    %3470 = vmatmul.f32.gmra.mxu0 %v3400
    %v3471 = vpop.f32.mrf.mxu0
    %v3472 = vadd.f32 0.0, %v3471
    %3473 = vdwg.mxu0
    %3474 = vmatpush.msra.mxu0 %v3083
    %3475 = vmatpush.msra.mxu0 %v3079
    %3476 = vmatpush.msra.mxu0 %v3075
    %3477 = vmatpush.msra.mxu0 %v3071
    %3478 = vmatpush.msra.mxu0 %v3067
    %3479 = vmatpush.msra.mxu0 %v3063
    %3480 = vmatpush.msra.mxu0 %v3059
    %3481 = vmatpush.msra.mxu0 %v3055
    %3482 = vmatpush.msra.mxu0 %v3051
    %3483 = vmatpush.msra.mxu0 %v3047
    %3484 = vmatpush.msra.mxu0 %v3043
    %3485 = vmatpush.msra.mxu0 %v3039
    %3486 = vmatpush.msra.mxu0 %v3035
    %3487 = vmatpush.msra.mxu0 %v3031
    %3488 = vmatpush.msra.mxu0 %v3027
    %3489 = vmatpush.msra.mxu0 %v3023
    %3490 = vmatmul.f32.gmra.mxu0 %v3400
    %v3491 = vpop.f32.mrf.mxu0
    %v3492 = vadd.f32 0.0, %v3491
    %3493 = vdwg.mxu0
    %v3494 = vadd.f32 %v3410, %v3432
    %v3495 = vadd.f32 %v3411, %v3452
    %v3496 = vadd.f32 %v3412, %v3472
    %v3497 = vadd.f32 %v3413, %v3492
    %v3498 = vxor.u32 %v3494, 2147483648
    %v3499 = vmul.f32 %v3498, 1.442695
    %v3500 = vpow.pop %v3499
    %v3501 = vadd.f32 %v3500, 1.0
    %v3502 = vrcp.pop %v3501
    %v3503 = vmul.f32 %v3501, %v3502
    %v3504 = vsub.f32 1.0, %v3503
    %v3505 = vmul.f32 %v3502, %v3504
    %v3506 = vadd.f32 %v3502, %v3505
    %vm3507 = vweird.f32 %v3501
    %vm3508 = vweird.f32 %v3502
    %vm3509 = vmor %vm3507, %vm3508
    %v3510 = vsel %vm3509, %v3502, %v3506
    %v3511 = vand.u32 2147483647, %v3501
    %vm3512 = vcmp.eq.f32.partialorder %v3511, 8.507059e+37
    %v3513 = vand.u32 %v3501, 2147483648
    %v3514 = vor.u32 1.1754944e-38, %v3513
    %v3515 = vsel %vm3512, %v3514, %v3510
    %v3516 = vmul.f32 1.0, %v3515
    %v3517 = vxor.u32 %v3495, 2147483648
    %v3518 = vmul.f32 %v3517, 1.442695
    %v3519 = vpow.pop %v3518
    %v3520 = vadd.f32 %v3519, 1.0
    %v3521 = vrcp.pop %v3520
    %v3522 = vmul.f32 %v3520, %v3521
    %v3523 = vsub.f32 1.0, %v3522
    %v3524 = vmul.f32 %v3521, %v3523
    %v3525 = vadd.f32 %v3521, %v3524
    %vm3526 = vweird.f32 %v3520
    %vm3527 = vweird.f32 %v3521
    %vm3528 = vmor %vm3526, %vm3527
    %v3529 = vsel %vm3528, %v3521, %v3525
    %v3530 = vand.u32 2147483647, %v3520
    %vm3531 = vcmp.eq.f32.partialorder %v3530, 8.507059e+37
    %v3532 = vand.u32 %v3520, 2147483648
    %v3533 = vor.u32 1.1754944e-38, %v3532
    %v3534 = vsel %vm3531, %v3533, %v3529
    %v3535 = vmul.f32 1.0, %v3534
    %v3536 = vtanh.pop %v3496
    %v3537 = vxor.u32 %v3497, 2147483648
    %v3538 = vmul.f32 %v3537, 1.442695
    %v3539 = vpow.pop %v3538
    %v3540 = vadd.f32 %v3539, 1.0
    %v3541 = vrcp.pop %v3540
    %v3542 = vmul.f32 %v3540, %v3541
    %v3543 = vsub.f32 1.0, %v3542
    %v3544 = vmul.f32 %v3541, %v3543
    %v3545 = vadd.f32 %v3541, %v3544
    %vm3546 = vweird.f32 %v3540
    %vm3547 = vweird.f32 %v3541
    %vm3548 = vmor %vm3546, %vm3547
    %v3549 = vsel %vm3548, %v3541, %v3545
    %v3550 = vand.u32 2147483647, %v3540
    %vm3551 = vcmp.eq.f32.partialorder %v3550, 8.507059e+37
    %v3552 = vand.u32 %v3540, 2147483648
    %v3553 = vor.u32 1.1754944e-38, %v3552
    %v3554 = vsel %vm3551, %v3553, %v3549
    %v3555 = vmul.f32 1.0, %v3554
    %v3556 = vmul.f32 %v3535, %v3401
    %v3557 = vmul.f32 %v3516, %v3536
    %v3558 = vadd.f32 %v3556, %v3557
    %v3559 = vtanh.pop %v3558
    %v3560 = vmul.f32 %v3555, %v3559
    %v3561 = vld [vmem:[%s1 + $0x10] sm:$0xff]
    %v3562 = vld [vmem:[%s2 + $0x28] sm:$0xff]
    %v3563 = vadd.f32 %v3561, %v3562
    %vm3564 = vcmp.gt.f32.partialorder %v3563, 0.5
    %v3565 = vsel %vm3564, %v3560, %v3400
    %v3566 = vsel %vm3564, %v3558, %v3401
    %v3567 = vld [vmem:[#allocation2 + $0x60] sm:$0xff]
    %v3568 = vld [vmem:[#allocation2 + $0x68] sm:$0xff]
    %v3569 = vld [vmem:[#allocation2 + $0x70] sm:$0xff]
    %v3570 = vld [vmem:[#allocation2 + $0x78] sm:$0xff]
    %v3571 = vld [vmem:[#allocation2 + $0x80] sm:$0xff]
    %v3572 = vld [vmem:[#allocation2 + $0x88] sm:$0xff]
    %v3573 = vld [vmem:[#allocation2 + $0x90] sm:$0xff]
    %v3574 = vld [vmem:[#allocation2 + $0x98] sm:$0xff]
    %v3575 = vsel %vm422, %v3567, %v3571
    %v3576 = vsel %vm422, %v3568, %v3572
    %v3577 = vsel %vm422, %v3569, %v3573
    %v3578 = vsel %vm422, %v3570, %v3574
    %3579 = vmatpush.msra.mxu0 %v3080
    %3580 = vmatpush.msra.mxu0 %v3076
    %3581 = vmatpush.msra.mxu0 %v3072
    %3582 = vmatpush.msra.mxu0 %v3068
    %3583 = vmatpush.msra.mxu0 %v3064
    %3584 = vmatpush.msra.mxu0 %v3060
    %3585 = vmatpush.msra.mxu0 %v3056
    %3586 = vmatpush.msra.mxu0 %v3052
    %3587 = vmatpush.msra.mxu0 %v3048
    %3588 = vmatpush.msra.mxu0 %v3044
    %3589 = vmatpush.msra.mxu0 %v3040
    %3590 = vmatpush.msra.mxu0 %v3036
    %3591 = vmatpush.msra.mxu0 %v3032
    %3592 = vmatpush.msra.mxu0 %v3028
    %3593 = vmatpush.msra.mxu0 %v3024
    %3594 = vmatpush.msra.mxu0 %v3020
    %3595 = vmatmul.f32.gmra.mxu0 %v3565
    %v3596 = vpop.f32.mrf.mxu0
    %v3597 = vadd.f32 0.0, %v3596
    %3598 = vdwg.mxu0
    %3599 = vmatpush.msra.mxu0 %v3081
    %3600 = vmatpush.msra.mxu0 %v3077
    %3601 = vmatpush.msra.mxu0 %v3073
    %3602 = vmatpush.msra.mxu0 %v3069
    %3603 = vmatpush.msra.mxu0 %v3065
    %3604 = vmatpush.msra.mxu0 %v3061
    %3605 = vmatpush.msra.mxu0 %v3057
    %3606 = vmatpush.msra.mxu0 %v3053
    %3607 = vmatpush.msra.mxu0 %v3049
    %3608 = vmatpush.msra.mxu0 %v3045
    %3609 = vmatpush.msra.mxu0 %v3041
    %3610 = vmatpush.msra.mxu0 %v3037
    %3611 = vmatpush.msra.mxu0 %v3033
    %3612 = vmatpush.msra.mxu0 %v3029
    %3613 = vmatpush.msra.mxu0 %v3025
    %3614 = vmatpush.msra.mxu0 %v3021
    %3615 = vmatmul.f32.gmra.mxu0 %v3565
    %v3616 = vpop.f32.mrf.mxu0
    %v3617 = vadd.f32 0.0, %v3616
    %3618 = vdwg.mxu0
    %3619 = vmatpush.msra.mxu0 %v3082
    %3620 = vmatpush.msra.mxu0 %v3078
    %3621 = vmatpush.msra.mxu0 %v3074
    %3622 = vmatpush.msra.mxu0 %v3070
    %3623 = vmatpush.msra.mxu0 %v3066
    %3624 = vmatpush.msra.mxu0 %v3062
    %3625 = vmatpush.msra.mxu0 %v3058
    %3626 = vmatpush.msra.mxu0 %v3054
    %3627 = vmatpush.msra.mxu0 %v3050
    %3628 = vmatpush.msra.mxu0 %v3046
    %3629 = vmatpush.msra.mxu0 %v3042
    %3630 = vmatpush.msra.mxu0 %v3038
    %3631 = vmatpush.msra.mxu0 %v3034
    %3632 = vmatpush.msra.mxu0 %v3030
    %3633 = vmatpush.msra.mxu0 %v3026
    %3634 = vmatpush.msra.mxu0 %v3022
    %3635 = vmatmul.f32.gmra.mxu0 %v3565
    %v3636 = vpop.f32.mrf.mxu0
    %v3637 = vadd.f32 0.0, %v3636
    %3638 = vdwg.mxu0
    %3639 = vmatpush.msra.mxu0 %v3083
    %3640 = vmatpush.msra.mxu0 %v3079
    %3641 = vmatpush.msra.mxu0 %v3075
    %3642 = vmatpush.msra.mxu0 %v3071
    %3643 = vmatpush.msra.mxu0 %v3067
    %3644 = vmatpush.msra.mxu0 %v3063
    %3645 = vmatpush.msra.mxu0 %v3059
    %3646 = vmatpush.msra.mxu0 %v3055
    %3647 = vmatpush.msra.mxu0 %v3051
    %3648 = vmatpush.msra.mxu0 %v3047
    %3649 = vmatpush.msra.mxu0 %v3043
    %3650 = vmatpush.msra.mxu0 %v3039
    %3651 = vmatpush.msra.mxu0 %v3035
    %3652 = vmatpush.msra.mxu0 %v3031
    %3653 = vmatpush.msra.mxu0 %v3027
    %3654 = vmatpush.msra.mxu0 %v3023
    %3655 = vmatmul.f32.gmra.mxu0 %v3565
    %v3656 = vpop.f32.mrf.mxu0
    %v3657 = vadd.f32 0.0, %v3656
    %3658 = vdwg.mxu0
    %v3659 = vadd.f32 %v3575, %v3597
    %v3660 = vadd.f32 %v3576, %v3617
    %v3661 = vadd.f32 %v3577, %v3637
    %v3662 = vadd.f32 %v3578, %v3657
    %v3663 = vxor.u32 %v3659, 2147483648
    %v3664 = vmul.f32 %v3663, 1.442695
    %v3665 = vpow.pop %v3664
    %v3666 = vadd.f32 %v3665, 1.0
    %v3667 = vrcp.pop %v3666
    %v3668 = vmul.f32 %v3666, %v3667
    %v3669 = vsub.f32 1.0, %v3668
    %v3670 = vmul.f32 %v3667, %v3669
    %v3671 = vadd.f32 %v3667, %v3670
    %vm3672 = vweird.f32 %v3666
    %vm3673 = vweird.f32 %v3667
    %vm3674 = vmor %vm3672, %vm3673
    %v3675 = vsel %vm3674, %v3667, %v3671
    %v3676 = vand.u32 2147483647, %v3666
    %vm3677 = vcmp.eq.f32.partialorder %v3676, 8.507059e+37
    %v3678 = vand.u32 %v3666, 2147483648
    %v3679 = vor.u32 1.1754944e-38, %v3678
    %v3680 = vsel %vm3677, %v3679, %v3675
    %v3681 = vmul.f32 1.0, %v3680
    %v3682 = vxor.u32 %v3660, 2147483648
    %v3683 = vmul.f32 %v3682, 1.442695
    %v3684 = vpow.pop %v3683
    %v3685 = vadd.f32 %v3684, 1.0
    %v3686 = vrcp.pop %v3685
    %v3687 = vmul.f32 %v3685, %v3686
    %v3688 = vsub.f32 1.0, %v3687
    %v3689 = vmul.f32 %v3686, %v3688
    %v3690 = vadd.f32 %v3686, %v3689
    %vm3691 = vweird.f32 %v3685
    %vm3692 = vweird.f32 %v3686
    %vm3693 = vmor %vm3691, %vm3692
    %v3694 = vsel %vm3693, %v3686, %v3690
    %v3695 = vand.u32 2147483647, %v3685
    %vm3696 = vcmp.eq.f32.partialorder %v3695, 8.507059e+37
    %v3697 = vand.u32 %v3685, 2147483648
    %v3698 = vor.u32 1.1754944e-38, %v3697
    %v3699 = vsel %vm3696, %v3698, %v3694
    %v3700 = vmul.f32 1.0, %v3699
    %v3701 = vtanh.pop %v3661
    %v3702 = vxor.u32 %v3662, 2147483648
    %v3703 = vmul.f32 %v3702, 1.442695
    %v3704 = vpow.pop %v3703
    %v3705 = vadd.f32 %v3704, 1.0
    %v3706 = vrcp.pop %v3705
    %v3707 = vmul.f32 %v3705, %v3706
    %v3708 = vsub.f32 1.0, %v3707
    %v3709 = vmul.f32 %v3706, %v3708
    %v3710 = vadd.f32 %v3706, %v3709
    %vm3711 = vweird.f32 %v3705
    %vm3712 = vweird.f32 %v3706
    %vm3713 = vmor %vm3711, %vm3712
    %v3714 = vsel %vm3713, %v3706, %v3710
    %v3715 = vand.u32 2147483647, %v3705
    %vm3716 = vcmp.eq.f32.partialorder %v3715, 8.507059e+37
    %v3717 = vand.u32 %v3705, 2147483648
    %v3718 = vor.u32 1.1754944e-38, %v3717
    %v3719 = vsel %vm3716, %v3718, %v3714
    %v3720 = vmul.f32 1.0, %v3719
    %v3721 = vmul.f32 %v3700, %v3566
    %v3722 = vmul.f32 %v3681, %v3701
    %v3723 = vadd.f32 %v3721, %v3722
    %v3724 = vtanh.pop %v3723
    %v3725 = vmul.f32 %v3720, %v3724
    %v3726 = vld [vmem:[%s1 + $0x18] sm:$0xff]
    %v3727 = vld [vmem:[%s2 + $0x20] sm:$0xff]
    %v3728 = vadd.f32 %v3726, %v3727
    %vm3729 = vcmp.gt.f32.partialorder %v3728, 0.5
    %v3730 = vsel %vm3729, %v3725, %v3565
    %v3731 = vsel %vm3729, %v3723, %v3566
    %v3732 = vsel %vm422, %v3571, %v3567
    %v3733 = vsel %vm422, %v3572, %v3568
    %v3734 = vsel %vm422, %v3573, %v3569
    %v3735 = vsel %vm422, %v3574, %v3570
    %3736 = vmatpush.msra.mxu0 %v3080
    %3737 = vmatpush.msra.mxu0 %v3076
    %3738 = vmatpush.msra.mxu0 %v3072
    %3739 = vmatpush.msra.mxu0 %v3068
    %3740 = vmatpush.msra.mxu0 %v3064
    %3741 = vmatpush.msra.mxu0 %v3060
    %3742 = vmatpush.msra.mxu0 %v3056
    %3743 = vmatpush.msra.mxu0 %v3052
    %3744 = vmatpush.msra.mxu0 %v3048
    %3745 = vmatpush.msra.mxu0 %v3044
    %3746 = vmatpush.msra.mxu0 %v3040
    %3747 = vmatpush.msra.mxu0 %v3036
    %3748 = vmatpush.msra.mxu0 %v3032
    %3749 = vmatpush.msra.mxu0 %v3028
    %3750 = vmatpush.msra.mxu0 %v3024
    %3751 = vmatpush.msra.mxu0 %v3020
    %3752 = vmatmul.f32.gmra.mxu0 %v3730
    %v3753 = vpop.f32.mrf.mxu0
    %v3754 = vadd.f32 0.0, %v3753
    %3755 = vdwg.mxu0
    %3756 = vmatpush.msra.mxu0 %v3081
    %3757 = vmatpush.msra.mxu0 %v3077
    %3758 = vmatpush.msra.mxu0 %v3073
    %3759 = vmatpush.msra.mxu0 %v3069
    %3760 = vmatpush.msra.mxu0 %v3065
    %3761 = vmatpush.msra.mxu0 %v3061
    %3762 = vmatpush.msra.mxu0 %v3057
    %3763 = vmatpush.msra.mxu0 %v3053
    %3764 = vmatpush.msra.mxu0 %v3049
    %3765 = vmatpush.msra.mxu0 %v3045
    %3766 = vmatpush.msra.mxu0 %v3041
    %3767 = vmatpush.msra.mxu0 %v3037
    %3768 = vmatpush.msra.mxu0 %v3033
    %3769 = vmatpush.msra.mxu0 %v3029
    %3770 = vmatpush.msra.mxu0 %v3025
    %3771 = vmatpush.msra.mxu0 %v3021
    %3772 = vmatmul.f32.gmra.mxu0 %v3730
    %v3773 = vpop.f32.mrf.mxu0
    %v3774 = vadd.f32 0.0, %v3773
    %3775 = vdwg.mxu0
    %3776 = vmatpush.msra.mxu0 %v3082
    %3777 = vmatpush.msra.mxu0 %v3078
    %3778 = vmatpush.msra.mxu0 %v3074
    %3779 = vmatpush.msra.mxu0 %v3070
    %3780 = vmatpush.msra.mxu0 %v3066
    %3781 = vmatpush.msra.mxu0 %v3062
    %3782 = vmatpush.msra.mxu0 %v3058
    %3783 = vmatpush.msra.mxu0 %v3054
    %3784 = vmatpush.msra.mxu0 %v3050
    %3785 = vmatpush.msra.mxu0 %v3046
    %3786 = vmatpush.msra.mxu0 %v3042
    %3787 = vmatpush.msra.mxu0 %v3038
    %3788 = vmatpush.msra.mxu0 %v3034
    %3789 = vmatpush.msra.mxu0 %v3030
    %3790 = vmatpush.msra.mxu0 %v3026
    %3791 = vmatpush.msra.mxu0 %v3022
    %3792 = vmatmul.f32.gmra.mxu0 %v3730
    %v3793 = vpop.f32.mrf.mxu0
    %v3794 = vadd.f32 0.0, %v3793
    %3795 = vdwg.mxu0
    %3796 = vmatpush.msra.mxu0 %v3083
    %3797 = vmatpush.msra.mxu0 %v3079
    %3798 = vmatpush.msra.mxu0 %v3075
    %3799 = vmatpush.msra.mxu0 %v3071
    %3800 = vmatpush.msra.mxu0 %v3067
    %3801 = vmatpush.msra.mxu0 %v3063
    %3802 = vmatpush.msra.mxu0 %v3059
    %3803 = vmatpush.msra.mxu0 %v3055
    %3804 = vmatpush.msra.mxu0 %v3051
    %3805 = vmatpush.msra.mxu0 %v3047
    %3806 = vmatpush.msra.mxu0 %v3043
    %3807 = vmatpush.msra.mxu0 %v3039
    %3808 = vmatpush.msra.mxu0 %v3035
    %3809 = vmatpush.msra.mxu0 %v3031
    %3810 = vmatpush.msra.mxu0 %v3027
    %3811 = vmatpush.msra.mxu0 %v3023
    %3812 = vmatmul.f32.gmra.mxu0 %v3730
    %v3813 = vpop.f32.mrf.mxu0
    %v3814 = vadd.f32 0.0, %v3813
    %3815 = vdwg.mxu0
    %v3816 = vadd.f32 %v3732, %v3754
    %v3817 = vadd.f32 %v3733, %v3774
    %v3818 = vadd.f32 %v3734, %v3794
    %v3819 = vadd.f32 %v3735, %v3814
    %v3820 = vxor.u32 %v3816, 2147483648
    %v3821 = vmul.f32 %v3820, 1.442695
    %v3822 = vpow.pop %v3821
    %v3823 = vadd.f32 %v3822, 1.0
    %v3824 = vrcp.pop %v3823
    %v3825 = vmul.f32 %v3823, %v3824
    %v3826 = vsub.f32 1.0, %v3825
    %v3827 = vmul.f32 %v3824, %v3826
    %v3828 = vadd.f32 %v3824, %v3827
    %vm3829 = vweird.f32 %v3823
    %vm3830 = vweird.f32 %v3824
    %vm3831 = vmor %vm3829, %vm3830
    %v3832 = vsel %vm3831, %v3824, %v3828
    %v3833 = vand.u32 2147483647, %v3823
    %vm3834 = vcmp.eq.f32.partialorder %v3833, 8.507059e+37
    %v3835 = vand.u32 %v3823, 2147483648
    %v3836 = vor.u32 1.1754944e-38, %v3835
    %v3837 = vsel %vm3834, %v3836, %v3832
    %v3838 = vmul.f32 1.0, %v3837
    %v3839 = vxor.u32 %v3817, 2147483648
    %v3840 = vmul.f32 %v3839, 1.442695
    %v3841 = vpow.pop %v3840
    %v3842 = vadd.f32 %v3841, 1.0
    %v3843 = vrcp.pop %v3842
    %v3844 = vmul.f32 %v3842, %v3843
    %v3845 = vsub.f32 1.0, %v3844
    %v3846 = vmul.f32 %v3843, %v3845
    %v3847 = vadd.f32 %v3843, %v3846
    %vm3848 = vweird.f32 %v3842
    %vm3849 = vweird.f32 %v3843
    %vm3850 = vmor %vm3848, %vm3849
    %v3851 = vsel %vm3850, %v3843, %v3847
    %v3852 = vand.u32 2147483647, %v3842
    %vm3853 = vcmp.eq.f32.partialorder %v3852, 8.507059e+37
    %v3854 = vand.u32 %v3842, 2147483648
    %v3855 = vor.u32 1.1754944e-38, %v3854
    %v3856 = vsel %vm3853, %v3855, %v3851
    %v3857 = vmul.f32 1.0, %v3856
    %v3858 = vtanh.pop %v3818
    %v3859 = vxor.u32 %v3819, 2147483648
    %v3860 = vmul.f32 %v3859, 1.442695
    %v3861 = vpow.pop %v3860
    %v3862 = vadd.f32 %v3861, 1.0
    %v3863 = vrcp.pop %v3862
    %v3864 = vmul.f32 %v3862, %v3863
    %v3865 = vsub.f32 1.0, %v3864
    %v3866 = vmul.f32 %v3863, %v3865
    %v3867 = vadd.f32 %v3863, %v3866
    %vm3868 = vweird.f32 %v3862
    %vm3869 = vweird.f32 %v3863
    %vm3870 = vmor %vm3868, %vm3869
    %v3871 = vsel %vm3870, %v3863, %v3867
    %v3872 = vand.u32 2147483647, %v3862
    %vm3873 = vcmp.eq.f32.partialorder %v3872, 8.507059e+37
    %v3874 = vand.u32 %v3862, 2147483648
    %v3875 = vor.u32 1.1754944e-38, %v3874
    %v3876 = vsel %vm3873, %v3875, %v3871
    %v3877 = vmul.f32 1.0, %v3876
    %v3878 = vmul.f32 %v3857, %v3731
    %v3879 = vmul.f32 %v3838, %v3858
    %v3880 = vadd.f32 %v3878, %v3879
    %v3881 = vtanh.pop %v3880
    %v3882 = vmul.f32 %v3877, %v3881
    %v3883 = vld [vmem:[%s1 + $0x20] sm:$0xff]
    %v3884 = vld [vmem:[%s2 + $0x18] sm:$0xff]
    %v3885 = vadd.f32 %v3883, %v3884
    %vm3886 = vcmp.gt.f32.partialorder %v3885, 0.5
    %v3887 = vsel %vm3886, %v3882, %v3730
    %v3888 = vsel %vm3886, %v3880, %v3731
    %v3889 = vsel %vm422, %v3406, %v3402
    %v3890 = vsel %vm422, %v3407, %v3403
    %v3891 = vsel %vm422, %v3408, %v3404
    %v3892 = vsel %vm422, %v3409, %v3405
    %3893 = vmatpush.msra.mxu0 %v3080
    %3894 = vmatpush.msra.mxu0 %v3076
    %3895 = vmatpush.msra.mxu0 %v3072
    %3896 = vmatpush.msra.mxu0 %v3068
    %3897 = vmatpush.msra.mxu0 %v3064
    %3898 = vmatpush.msra.mxu0 %v3060
    %3899 = vmatpush.msra.mxu0 %v3056
    %3900 = vmatpush.msra.mxu0 %v3052
    %3901 = vmatpush.msra.mxu0 %v3048
    %3902 = vmatpush.msra.mxu0 %v3044
    %3903 = vmatpush.msra.mxu0 %v3040
    %3904 = vmatpush.msra.mxu0 %v3036
    %3905 = vmatpush.msra.mxu0 %v3032
    %3906 = vmatpush.msra.mxu0 %v3028
    %3907 = vmatpush.msra.mxu0 %v3024
    %3908 = vmatpush.msra.mxu0 %v3020
    %3909 = vmatmul.f32.gmra.mxu0 %v3887
    %v3910 = vpop.f32.mrf.mxu0
    %v3911 = vadd.f32 0.0, %v3910
    %3912 = vdwg.mxu0
    %3913 = vmatpush.msra.mxu0 %v3081
    %3914 = vmatpush.msra.mxu0 %v3077
    %3915 = vmatpush.msra.mxu0 %v3073
    %3916 = vmatpush.msra.mxu0 %v3069
    %3917 = vmatpush.msra.mxu0 %v3065
    %3918 = vmatpush.msra.mxu0 %v3061
    %3919 = vmatpush.msra.mxu0 %v3057
    %3920 = vmatpush.msra.mxu0 %v3053
    %3921 = vmatpush.msra.mxu0 %v3049
    %3922 = vmatpush.msra.mxu0 %v3045
    %3923 = vmatpush.msra.mxu0 %v3041
    %3924 = vmatpush.msra.mxu0 %v3037
    %3925 = vmatpush.msra.mxu0 %v3033
    %3926 = vmatpush.msra.mxu0 %v3029
    %3927 = vmatpush.msra.mxu0 %v3025
    %3928 = vmatpush.msra.mxu0 %v3021
    %3929 = vmatmul.f32.gmra.mxu0 %v3887
    %v3930 = vpop.f32.mrf.mxu0
    %v3931 = vadd.f32 0.0, %v3930
    %3932 = vdwg.mxu0
    %3933 = vmatpush.msra.mxu0 %v3082
    %3934 = vmatpush.msra.mxu0 %v3078
    %3935 = vmatpush.msra.mxu0 %v3074
    %3936 = vmatpush.msra.mxu0 %v3070
    %3937 = vmatpush.msra.mxu0 %v3066
    %3938 = vmatpush.msra.mxu0 %v3062
    %3939 = vmatpush.msra.mxu0 %v3058
    %3940 = vmatpush.msra.mxu0 %v3054
    %3941 = vmatpush.msra.mxu0 %v3050
    %3942 = vmatpush.msra.mxu0 %v3046
    %3943 = vmatpush.msra.mxu0 %v3042
    %3944 = vmatpush.msra.mxu0 %v3038
    %3945 = vmatpush.msra.mxu0 %v3034
    %3946 = vmatpush.msra.mxu0 %v3030
    %3947 = vmatpush.msra.mxu0 %v3026
    %3948 = vmatpush.msra.mxu0 %v3022
    %3949 = vmatmul.f32.gmra.mxu0 %v3887
    %v3950 = vpop.f32.mrf.mxu0
    %v3951 = vadd.f32 0.0, %v3950
    %3952 = vdwg.mxu0
    %3953 = vmatpush.msra.mxu0 %v3083
    %3954 = vmatpush.msra.mxu0 %v3079
    %3955 = vmatpush.msra.mxu0 %v3075
    %3956 = vmatpush.msra.mxu0 %v3071
    %3957 = vmatpush.msra.mxu0 %v3067
    %3958 = vmatpush.msra.mxu0 %v3063
    %3959 = vmatpush.msra.mxu0 %v3059
    %3960 = vmatpush.msra.mxu0 %v3055
    %3961 = vmatpush.msra.mxu0 %v3051
    %3962 = vmatpush.msra.mxu0 %v3047
    %3963 = vmatpush.msra.mxu0 %v3043
    %3964 = vmatpush.msra.mxu0 %v3039
    %3965 = vmatpush.msra.mxu0 %v3035
    %3966 = vmatpush.msra.mxu0 %v3031
    %3967 = vmatpush.msra.mxu0 %v3027
    %3968 = vmatpush.msra.mxu0 %v3023
    %3969 = vmatmul.f32.gmra.mxu0 %v3887
    %v3970 = vpop.f32.mrf.mxu0
    %v3971 = vadd.f32 0.0, %v3970
    %3972 = vdwg.mxu0
    %v3973 = vadd.f32 %v3889, %v3911
    %v3974 = vadd.f32 %v3890, %v3931
    %v3975 = vadd.f32 %v3891, %v3951
    %v3976 = vadd.f32 %v3892, %v3971
    %v3977 = vxor.u32 %v3973, 2147483648
    %v3978 = vmul.f32 %v3977, 1.442695
    %v3979 = vpow.pop %v3978
    %v3980 = vadd.f32 %v3979, 1.0
    %v3981 = vrcp.pop %v3980
    %v3982 = vmul.f32 %v3980, %v3981
    %v3983 = vsub.f32 1.0, %v3982
    %v3984 = vmul.f32 %v3981, %v3983
    %v3985 = vadd.f32 %v3981, %v3984
    %vm3986 = vweird.f32 %v3980
    %vm3987 = vweird.f32 %v3981
    %vm3988 = vmor %vm3986, %vm3987
    %v3989 = vsel %vm3988, %v3981, %v3985
    %v3990 = vand.u32 2147483647, %v3980
    %vm3991 = vcmp.eq.f32.partialorder %v3990, 8.507059e+37
    %v3992 = vand.u32 %v3980, 2147483648
    %v3993 = vor.u32 1.1754944e-38, %v3992
    %v3994 = vsel %vm3991, %v3993, %v3989
    %v3995 = vmul.f32 1.0, %v3994
    %v3996 = vxor.u32 %v3974, 2147483648
    %v3997 = vmul.f32 %v3996, 1.442695
    %v3998 = vpow.pop %v3997
    %v3999 = vadd.f32 %v3998, 1.0
    %v4000 = vrcp.pop %v3999
    %v4001 = vmul.f32 %v3999, %v4000
    %v4002 = vsub.f32 1.0, %v4001
    %v4003 = vmul.f32 %v4000, %v4002
    %v4004 = vadd.f32 %v4000, %v4003
    %vm4005 = vweird.f32 %v3999
    %vm4006 = vweird.f32 %v4000
    %vm4007 = vmor %vm4005, %vm4006
    %v4008 = vsel %vm4007, %v4000, %v4004
    %v4009 = vand.u32 2147483647, %v3999
    %vm4010 = vcmp.eq.f32.partialorder %v4009, 8.507059e+37
    %v4011 = vand.u32 %v3999, 2147483648
    %v4012 = vor.u32 1.1754944e-38, %v4011
    %v4013 = vsel %vm4010, %v4012, %v4008
    %v4014 = vmul.f32 1.0, %v4013
    %v4015 = vtanh.pop %v3975
    %v4016 = vxor.u32 %v3976, 2147483648
    %v4017 = vmul.f32 %v4016, 1.442695
    %v4018 = vpow.pop %v4017
    %v4019 = vadd.f32 %v4018, 1.0
    %v4020 = vrcp.pop %v4019
    %v4021 = vmul.f32 %v4019, %v4020
    %v4022 = vsub.f32 1.0, %v4021
    %v4023 = vmul.f32 %v4020, %v4022
    %v4024 = vadd.f32 %v4020, %v4023
    %vm4025 = vweird.f32 %v4019
    %vm4026 = vweird.f32 %v4020
    %vm4027 = vmor %vm4025, %vm4026
    %v4028 = vsel %vm4027, %v4020, %v4024
    %v4029 = vand.u32 2147483647, %v4019
    %vm4030 = vcmp.eq.f32.partialorder %v4029, 8.507059e+37
    %v4031 = vand.u32 %v4019, 2147483648
    %v4032 = vor.u32 1.1754944e-38, %v4031
    %v4033 = vsel %vm4030, %v4032, %v4028
    %v4034 = vmul.f32 1.0, %v4033
    %v4035 = vmul.f32 %v4014, %v3888
    %v4036 = vmul.f32 %v3995, %v4015
    %v4037 = vadd.f32 %v4035, %v4036
    %v4038 = vtanh.pop %v4037
    %v4039 = vmul.f32 %v4034, %v4038
    %v4040 = vld [vmem:[%s1 + $0x28] sm:$0xff]
    %v4041 = vld [vmem:[%s2 + $0x10] sm:$0xff]
    %v4042 = vadd.f32 %v4040, %v4041
    %vm4043 = vcmp.gt.f32.partialorder %v4042, 0.5
    %v4044 = vsel %vm4043, %v4039, %v3887
    %v4045 = vsel %vm4043, %v4037, %v3888
    %v4046 = vsel %vm422, %v3241, %v3237
    %v4047 = vsel %vm422, %v3242, %v3238
    %v4048 = vsel %vm422, %v3243, %v3239
    %v4049 = vsel %vm422, %v3244, %v3240
    %4050 = vmatpush.msra.mxu0 %v3080
    %4051 = vmatpush.msra.mxu0 %v3076
    %4052 = vmatpush.msra.mxu0 %v3072
    %4053 = vmatpush.msra.mxu0 %v3068
    %4054 = vmatpush.msra.mxu0 %v3064
    %4055 = vmatpush.msra.mxu0 %v3060
    %4056 = vmatpush.msra.mxu0 %v3056
    %4057 = vmatpush.msra.mxu0 %v3052
    %4058 = vmatpush.msra.mxu0 %v3048
    %4059 = vmatpush.msra.mxu0 %v3044
    %4060 = vmatpush.msra.mxu0 %v3040
    %4061 = vmatpush.msra.mxu0 %v3036
    %4062 = vmatpush.msra.mxu0 %v3032
    %4063 = vmatpush.msra.mxu0 %v3028
    %4064 = vmatpush.msra.mxu0 %v3024
    %4065 = vmatpush.msra.mxu0 %v3020
    %4066 = vmatmul.f32.gmra.mxu0 %v4044
    %v4067 = vpop.f32.mrf.mxu0
    %v4068 = vadd.f32 0.0, %v4067
    %4069 = vdwg.mxu0
    %4070 = vmatpush.msra.mxu0 %v3081
    %4071 = vmatpush.msra.mxu0 %v3077
    %4072 = vmatpush.msra.mxu0 %v3073
    %4073 = vmatpush.msra.mxu0 %v3069
    %4074 = vmatpush.msra.mxu0 %v3065
    %4075 = vmatpush.msra.mxu0 %v3061
    %4076 = vmatpush.msra.mxu0 %v3057
    %4077 = vmatpush.msra.mxu0 %v3053
    %4078 = vmatpush.msra.mxu0 %v3049
    %4079 = vmatpush.msra.mxu0 %v3045
    %4080 = vmatpush.msra.mxu0 %v3041
    %4081 = vmatpush.msra.mxu0 %v3037
    %4082 = vmatpush.msra.mxu0 %v3033
    %4083 = vmatpush.msra.mxu0 %v3029
    %4084 = vmatpush.msra.mxu0 %v3025
    %4085 = vmatpush.msra.mxu0 %v3021
    %4086 = vmatmul.f32.gmra.mxu0 %v4044
    %v4087 = vpop.f32.mrf.mxu0
    %v4088 = vadd.f32 0.0, %v4087
    %4089 = vdwg.mxu0
    %4090 = vmatpush.msra.mxu0 %v3082
    %4091 = vmatpush.msra.mxu0 %v3078
    %4092 = vmatpush.msra.mxu0 %v3074
    %4093 = vmatpush.msra.mxu0 %v3070
    %4094 = vmatpush.msra.mxu0 %v3066
    %4095 = vmatpush.msra.mxu0 %v3062
    %4096 = vmatpush.msra.mxu0 %v3058
    %4097 = vmatpush.msra.mxu0 %v3054
    %4098 = vmatpush.msra.mxu0 %v3050
    %4099 = vmatpush.msra.mxu0 %v3046
    %4100 = vmatpush.msra.mxu0 %v3042
    %4101 = vmatpush.msra.mxu0 %v3038
    %4102 = vmatpush.msra.mxu0 %v3034
    %4103 = vmatpush.msra.mxu0 %v3030
    %4104 = vmatpush.msra.mxu0 %v3026
    %4105 = vmatpush.msra.mxu0 %v3022
    %4106 = vmatmul.f32.gmra.mxu0 %v4044
    %v4107 = vpop.f32.mrf.mxu0
    %v4108 = vadd.f32 0.0, %v4107
    %4109 = vdwg.mxu0
    %4110 = vmatpush.msra.mxu0 %v3083
    %4111 = vmatpush.msra.mxu0 %v3079
    %4112 = vmatpush.msra.mxu0 %v3075
    %4113 = vmatpush.msra.mxu0 %v3071
    %4114 = vmatpush.msra.mxu0 %v3067
    %4115 = vmatpush.msra.mxu0 %v3063
    %4116 = vmatpush.msra.mxu0 %v3059
    %4117 = vmatpush.msra.mxu0 %v3055
    %4118 = vmatpush.msra.mxu0 %v3051
    %4119 = vmatpush.msra.mxu0 %v3047
    %4120 = vmatpush.msra.mxu0 %v3043
    %4121 = vmatpush.msra.mxu0 %v3039
    %4122 = vmatpush.msra.mxu0 %v3035
    %4123 = vmatpush.msra.mxu0 %v3031
    %4124 = vmatpush.msra.mxu0 %v3027
    %4125 = vmatpush.msra.mxu0 %v3023
    %4126 = vmatmul.f32.gmra.mxu0 %v4044
    %v4127 = vpop.f32.mrf.mxu0
    %v4128 = vadd.f32 0.0, %v4127
    %4129 = vdwg.mxu0
    %v4130 = vadd.f32 %v4046, %v4068
    %v4131 = vadd.f32 %v4047, %v4088
    %v4132 = vadd.f32 %v4048, %v4108
    %v4133 = vadd.f32 %v4049, %v4128
    %v4134 = vxor.u32 %v4130, 2147483648
    %v4135 = vmul.f32 %v4134, 1.442695
    %v4136 = vpow.pop %v4135
    %v4137 = vadd.f32 %v4136, 1.0
    %v4138 = vrcp.pop %v4137
    %v4139 = vmul.f32 %v4137, %v4138
    %v4140 = vsub.f32 1.0, %v4139
    %v4141 = vmul.f32 %v4138, %v4140
    %v4142 = vadd.f32 %v4138, %v4141
    %vm4143 = vweird.f32 %v4137
    %vm4144 = vweird.f32 %v4138
    %vm4145 = vmor %vm4143, %vm4144
    %v4146 = vsel %vm4145, %v4138, %v4142
    %v4147 = vand.u32 2147483647, %v4137
    %vm4148 = vcmp.eq.f32.partialorder %v4147, 8.507059e+37
    %v4149 = vand.u32 %v4137, 2147483648
    %v4150 = vor.u32 1.1754944e-38, %v4149
    %v4151 = vsel %vm4148, %v4150, %v4146
    %v4152 = vmul.f32 1.0, %v4151
    %v4153 = vxor.u32 %v4131, 2147483648
    %v4154 = vmul.f32 %v4153, 1.442695
    %v4155 = vpow.pop %v4154
    %v4156 = vadd.f32 %v4155, 1.0
    %v4157 = vrcp.pop %v4156
    %v4158 = vmul.f32 %v4156, %v4157
    %v4159 = vsub.f32 1.0, %v4158
    %v4160 = vmul.f32 %v4157, %v4159
    %v4161 = vadd.f32 %v4157, %v4160
    %vm4162 = vweird.f32 %v4156
    %vm4163 = vweird.f32 %v4157
    %vm4164 = vmor %vm4162, %vm4163
    %v4165 = vsel %vm4164, %v4157, %v4161
    %v4166 = vand.u32 2147483647, %v4156
    %vm4167 = vcmp.eq.f32.partialorder %v4166, 8.507059e+37
    %v4168 = vand.u32 %v4156, 2147483648
    %v4169 = vor.u32 1.1754944e-38, %v4168
    %v4170 = vsel %vm4167, %v4169, %v4165
    %v4171 = vmul.f32 1.0, %v4170
    %v4172 = vtanh.pop %v4132
    %v4173 = vxor.u32 %v4133, 2147483648
    %v4174 = vmul.f32 %v4173, 1.442695
    %v4175 = vpow.pop %v4174
    %v4176 = vadd.f32 %v4175, 1.0
    %v4177 = vrcp.pop %v4176
    %v4178 = vmul.f32 %v4176, %v4177
    %v4179 = vsub.f32 1.0, %v4178
    %v4180 = vmul.f32 %v4177, %v4179
    %v4181 = vadd.f32 %v4177, %v4180
    %vm4182 = vweird.f32 %v4176
    %vm4183 = vweird.f32 %v4177
    %vm4184 = vmor %vm4182, %vm4183
    %v4185 = vsel %vm4184, %v4177, %v4181
    %v4186 = vand.u32 2147483647, %v4176
    %vm4187 = vcmp.eq.f32.partialorder %v4186, 8.507059e+37
    %v4188 = vand.u32 %v4176, 2147483648
    %v4189 = vor.u32 1.1754944e-38, %v4188
    %v4190 = vsel %vm4187, %v4189, %v4185
    %v4191 = vmul.f32 1.0, %v4190
    %v4192 = vmul.f32 %v4171, %v4045
    %v4193 = vmul.f32 %v4152, %v4172
    %v4194 = vadd.f32 %v4192, %v4193
    %v4195 = vtanh.pop %v4194
    %v4196 = vmul.f32 %v4191, %v4195
    %v4197 = vld [vmem:[%s1 + $0x30] sm:$0xff]
    %v4198 = vld [vmem:[%s2 + $0x8] sm:$0xff]
    %v4199 = vadd.f32 %v4197, %v4198
    %vm4200 = vcmp.gt.f32.partialorder %v4199, 0.5
    %v4201 = vsel %vm4200, %v4196, %v4044
    %v4202 = vsel %vm4200, %v4194, %v4045
    %v4203 = vsel %vm422, %v3012, %v3008
    %v4204 = vsel %vm422, %v3013, %v3009
    %v4205 = vsel %vm422, %v3014, %v3010
    %v4206 = vsel %vm422, %v3015, %v3011
    %4207 = vmatpush.msra.mxu0 %v3080
    %4208 = vmatpush.msra.mxu0 %v3076
    %4209 = vmatpush.msra.mxu0 %v3072
    %4210 = vmatpush.msra.mxu0 %v3068
    %4211 = vmatpush.msra.mxu0 %v3064
    %4212 = vmatpush.msra.mxu0 %v3060
    %4213 = vmatpush.msra.mxu0 %v3056
    %4214 = vmatpush.msra.mxu0 %v3052
    %4215 = vmatpush.msra.mxu0 %v3048
    %4216 = vmatpush.msra.mxu0 %v3044
    %4217 = vmatpush.msra.mxu0 %v3040
    %4218 = vmatpush.msra.mxu0 %v3036
    %4219 = vmatpush.msra.mxu0 %v3032
    %4220 = vmatpush.msra.mxu0 %v3028
    %4221 = vmatpush.msra.mxu0 %v3024
    %4222 = vmatpush.msra.mxu0 %v3020
    %4223 = vmatmul.f32.gmra.mxu0 %v4201
    %v4224 = vpop.f32.mrf.mxu0
    %v4225 = vadd.f32 0.0, %v4224
    %4226 = vdwg.mxu0
    %4227 = vmatpush.msra.mxu0 %v3081
    %4228 = vmatpush.msra.mxu0 %v3077
    %4229 = vmatpush.msra.mxu0 %v3073
    %4230 = vmatpush.msra.mxu0 %v3069
    %4231 = vmatpush.msra.mxu0 %v3065
    %4232 = vmatpush.msra.mxu0 %v3061
    %4233 = vmatpush.msra.mxu0 %v3057
    %4234 = vmatpush.msra.mxu0 %v3053
    %4235 = vmatpush.msra.mxu0 %v3049
    %4236 = vmatpush.msra.mxu0 %v3045
    %4237 = vmatpush.msra.mxu0 %v3041
    %4238 = vmatpush.msra.mxu0 %v3037
    %4239 = vmatpush.msra.mxu0 %v3033
    %4240 = vmatpush.msra.mxu0 %v3029
    %4241 = vmatpush.msra.mxu0 %v3025
    %4242 = vmatpush.msra.mxu0 %v3021
    %4243 = vmatmul.f32.gmra.mxu0 %v4201
    %v4244 = vpop.f32.mrf.mxu0
    %v4245 = vadd.f32 0.0, %v4244
    %4246 = vdwg.mxu0
    %4247 = vmatpush.msra.mxu0 %v3082
    %4248 = vmatpush.msra.mxu0 %v3078
    %4249 = vmatpush.msra.mxu0 %v3074
    %4250 = vmatpush.msra.mxu0 %v3070
    %4251 = vmatpush.msra.mxu0 %v3066
    %4252 = vmatpush.msra.mxu0 %v3062
    %4253 = vmatpush.msra.mxu0 %v3058
    %4254 = vmatpush.msra.mxu0 %v3054
    %4255 = vmatpush.msra.mxu0 %v3050
    %4256 = vmatpush.msra.mxu0 %v3046
    %4257 = vmatpush.msra.mxu0 %v3042
    %4258 = vmatpush.msra.mxu0 %v3038
    %4259 = vmatpush.msra.mxu0 %v3034
    %4260 = vmatpush.msra.mxu0 %v3030
    %4261 = vmatpush.msra.mxu0 %v3026
    %4262 = vmatpush.msra.mxu0 %v3022
    %4263 = vmatmul.f32.gmra.mxu0 %v4201
    %v4264 = vpop.f32.mrf.mxu0
    %v4265 = vadd.f32 0.0, %v4264
    %4266 = vdwg.mxu0
    %4267 = vmatpush.msra.mxu0 %v3083
    %4268 = vmatpush.msra.mxu0 %v3079
    %4269 = vmatpush.msra.mxu0 %v3075
    %4270 = vmatpush.msra.mxu0 %v3071
    %4271 = vmatpush.msra.mxu0 %v3067
    %4272 = vmatpush.msra.mxu0 %v3063
    %4273 = vmatpush.msra.mxu0 %v3059
    %4274 = vmatpush.msra.mxu0 %v3055
    %4275 = vmatpush.msra.mxu0 %v3051
    %4276 = vmatpush.msra.mxu0 %v3047
    %4277 = vmatpush.msra.mxu0 %v3043
    %4278 = vmatpush.msra.mxu0 %v3039
    %4279 = vmatpush.msra.mxu0 %v3035
    %4280 = vmatpush.msra.mxu0 %v3031
    %4281 = vmatpush.msra.mxu0 %v3027
    %4282 = vmatpush.msra.mxu0 %v3023
    %4283 = vmatmul.f32.gmra.mxu0 %v4201
    %v4284 = vpop.f32.mrf.mxu0
    %v4285 = vadd.f32 0.0, %v4284
    %4286 = vdwg.mxu0
    %v4287 = vadd.f32 %v4203, %v4225
    %v4288 = vadd.f32 %v4204, %v4245
    %v4289 = vadd.f32 %v4205, %v4265
    %v4290 = vadd.f32 %v4206, %v4285
    %v4291 = vxor.u32 %v4287, 2147483648
    %v4292 = vmul.f32 %v4291, 1.442695
    %v4293 = vpow.pop %v4292
    %v4294 = vadd.f32 %v4293, 1.0
    %v4295 = vrcp.pop %v4294
    %v4296 = vmul.f32 %v4294, %v4295
    %v4297 = vsub.f32 1.0, %v4296
    %v4298 = vmul.f32 %v4295, %v4297
    %v4299 = vadd.f32 %v4295, %v4298
    %vm4300 = vweird.f32 %v4294
    %vm4301 = vweird.f32 %v4295
    %vm4302 = vmor %vm4300, %vm4301
    %v4303 = vsel %vm4302, %v4295, %v4299
    %v4304 = vand.u32 2147483647, %v4294
    %vm4305 = vcmp.eq.f32.partialorder %v4304, 8.507059e+37
    %v4306 = vand.u32 %v4294, 2147483648
    %v4307 = vor.u32 1.1754944e-38, %v4306
    %v4308 = vsel %vm4305, %v4307, %v4303
    %v4309 = vmul.f32 1.0, %v4308
    %v4310 = vxor.u32 %v4288, 2147483648
    %v4311 = vmul.f32 %v4310, 1.442695
    %v4312 = vpow.pop %v4311
    %v4313 = vadd.f32 %v4312, 1.0
    %v4314 = vrcp.pop %v4313
    %v4315 = vmul.f32 %v4313, %v4314
    %v4316 = vsub.f32 1.0, %v4315
    %v4317 = vmul.f32 %v4314, %v4316
    %v4318 = vadd.f32 %v4314, %v4317
    %vm4319 = vweird.f32 %v4313
    %vm4320 = vweird.f32 %v4314
    %vm4321 = vmor %vm4319, %vm4320
    %v4322 = vsel %vm4321, %v4314, %v4318
    %v4323 = vand.u32 2147483647, %v4313
    %vm4324 = vcmp.eq.f32.partialorder %v4323, 8.507059e+37
    %v4325 = vand.u32 %v4313, 2147483648
    %v4326 = vor.u32 1.1754944e-38, %v4325
    %v4327 = vsel %vm4324, %v4326, %v4322
    %v4328 = vmul.f32 1.0, %v4327
    %v4329 = vtanh.pop %v4289
    %v4330 = vxor.u32 %v4290, 2147483648
    %v4331 = vmul.f32 %v4330, 1.442695
    %v4332 = vpow.pop %v4331
    %v4333 = vadd.f32 %v4332, 1.0
    %v4334 = vrcp.pop %v4333
    %v4335 = vmul.f32 %v4333, %v4334
    %v4336 = vsub.f32 1.0, %v4335
    %v4337 = vmul.f32 %v4334, %v4336
    %v4338 = vadd.f32 %v4334, %v4337
    %vm4339 = vweird.f32 %v4333
    %vm4340 = vweird.f32 %v4334
    %vm4341 = vmor %vm4339, %vm4340
    %v4342 = vsel %vm4341, %v4334, %v4338
    %v4343 = vand.u32 2147483647, %v4333
    %vm4344 = vcmp.eq.f32.partialorder %v4343, 8.507059e+37
    %v4345 = vand.u32 %v4333, 2147483648
    %v4346 = vor.u32 1.1754944e-38, %v4345
    %v4347 = vsel %vm4344, %v4346, %v4342
    %v4348 = vmul.f32 1.0, %v4347
    %v4349 = vmul.f32 %v4328, %v4202
    %v4350 = vmul.f32 %v4309, %v4329
    %v4351 = vadd.f32 %v4349, %v4350
    %v4352 = vtanh.pop %v4351
    %v4353 = vmul.f32 %v4348, %v4352
    %v4354 = vld [vmem:[%s1 + $0x38] sm:$0xff]
    %v4355 = vld [vmem:[%s2] sm:$0xff]
    %v4356 = vadd.f32 %v4354, %v4355
    %vm4357 = vcmp.gt.f32.partialorder %v4356, 0.5
    %v4358 = vsel %vm4357, %v4353, %v4201
    %v4359 = vld [vmem:[%s11] sm:$0xff]
    %v4360 = vld [vmem:[%s11 + $0x8] sm:$0xff]
    %v4361 = vld [vmem:[%s11 + $0x10] sm:$0xff]
    %v4362 = vld [vmem:[%s11 + $0x18] sm:$0xff]
    %v4363 = vld [vmem:[%s11 + $0x20] sm:$0xff]
    %v4364 = vld [vmem:[%s11 + $0x28] sm:$0xff]
    %v4365 = vld [vmem:[%s11 + $0x30] sm:$0xff]
    %v4366 = vld [vmem:[%s11 + $0x38] sm:$0xff]
    %v4367 = vld [vmem:[%s11 + $0x40] sm:$0xff]
    %v4368 = vld [vmem:[%s11 + $0x48] sm:$0xff]
    %v4369 = vld [vmem:[%s11 + $0x50] sm:$0xff]
    %v4370 = vld [vmem:[%s11 + $0x58] sm:$0xff]
    %v4371 = vld [vmem:[%s11 + $0x60] sm:$0xff]
    %v4372 = vld [vmem:[%s11 + $0x68] sm:$0xff]
    %v4373 = vld [vmem:[%s11 + $0x70] sm:$0xff]
    %v4374 = vld [vmem:[%s11 + $0x78] sm:$0xff]
    %v4375 = vld [vmem:[%s11 + $0x80] sm:$0xff]
    %v4376 = vld [vmem:[%s11 + $0x88] sm:$0xff]
    %v4377 = vld [vmem:[%s11 + $0x90] sm:$0xff]
    %v4378 = vld [vmem:[%s11 + $0x98] sm:$0xff]
    %v4379 = vld [vmem:[%s11 + $0xa0] sm:$0xff]
    %v4380 = vld [vmem:[%s11 + $0xa8] sm:$0xff]
    %v4381 = vld [vmem:[%s11 + $0xb0] sm:$0xff]
    %v4382 = vld [vmem:[%s11 + $0xb8] sm:$0xff]
    %v4383 = vld [vmem:[%s11 + $0xc0] sm:$0xff]
    %v4384 = vld [vmem:[%s11 + $0xc8] sm:$0xff]
    %v4385 = vld [vmem:[%s11 + $0xd0] sm:$0xff]
    %v4386 = vld [vmem:[%s11 + $0xd8] sm:$0xff]
    %v4387 = vld [vmem:[%s11 + $0xe0] sm:$0xff]
    %v4388 = vld [vmem:[%s11 + $0xe8] sm:$0xff]
    %v4389 = vld [vmem:[%s11 + $0xf0] sm:$0xff]
    %v4390 = vld [vmem:[%s11 + $0xf8] sm:$0xff]
    %v4391 = vld [vmem:[%s12] sm:$0x1]
    %v4393 = vperm.slane %v4391, 0
    %4395 = vmatpush.msra.mxu0 %v4374
    %4396 = vmatpush.msra.mxu0 %v4373
    %4397 = vmatpush.msra.mxu0 %v4372
    %4398 = vmatpush.msra.mxu0 %v4371
    %4399 = vmatpush.msra.mxu0 %v4370
    %4400 = vmatpush.msra.mxu0 %v4369
    %4401 = vmatpush.msra.mxu0 %v4368
    %4402 = vmatpush.msra.mxu0 %v4367
    %4403 = vmatpush.msra.mxu0 %v4366
    %4404 = vmatpush.msra.mxu0 %v4365
    %4405 = vmatpush.msra.mxu0 %v4364
    %4406 = vmatpush.msra.mxu0 %v4363
    %4407 = vmatpush.msra.mxu0 %v4362
    %4408 = vmatpush.msra.mxu0 %v4361
    %4409 = vmatpush.msra.mxu0 %v4360
    %4410 = vmatpush.msra.mxu0 %v4359
    %4411 = vmatmul.f32.gmra.mxu0 %v2273
    %v4412 = vpop.f32.mrf.mxu0
    %v4413 = vadd.f32 %v4393, %v4412
    %4414 = vdwg.mxu0
    %4415 = vmatpush.msra.mxu0 %v4390
    %4416 = vmatpush.msra.mxu0 %v4389
    %4417 = vmatpush.msra.mxu0 %v4388
    %4418 = vmatpush.msra.mxu0 %v4387
    %4419 = vmatpush.msra.mxu0 %v4386
    %4420 = vmatpush.msra.mxu0 %v4385
    %4421 = vmatpush.msra.mxu0 %v4384
    %4422 = vmatpush.msra.mxu0 %v4383
    %4423 = vmatpush.msra.mxu0 %v4382
    %4424 = vmatpush.msra.mxu0 %v4381
    %4425 = vmatpush.msra.mxu0 %v4380
    %4426 = vmatpush.msra.mxu0 %v4379
    %4427 = vmatpush.msra.mxu0 %v4378
    %4428 = vmatpush.msra.mxu0 %v4377
    %4429 = vmatpush.msra.mxu0 %v4376
    %4430 = vmatpush.msra.mxu0 %v4375
    %4431 = vmatmul.f32.gmra.mxu0 %v4358
    %v4432 = vpop.f32.mrf.mxu0
    %v4433 = vadd.f32 %v4413, %v4432
    %4434 = vdwg.mxu0
    %v4435 = vmax.f32 %v4433, 0.0
    %v4436 = vld [vmem:[%s13] sm:$0xff]
    %v4437 = vld [vmem:[%s13 + $0x8] sm:$0xff]
    %v4438 = vld [vmem:[%s13 + $0x10] sm:$0xff]
    %v4439 = vld [vmem:[%s13 + $0x18] sm:$0xff]
    %v4440 = vld [vmem:[%s13 + $0x20] sm:$0xff]
    %v4441 = vld [vmem:[%s13 + $0x28] sm:$0xff]
    %v4442 = vld [vmem:[%s13 + $0x30] sm:$0xff]
    %v4443 = vld [vmem:[%s13 + $0x38] sm:$0xff]
    %v4444 = vld [vmem:[%s13 + $0x40] sm:$0xff]
    %v4445 = vld [vmem:[%s13 + $0x48] sm:$0xff]
    %v4446 = vld [vmem:[%s13 + $0x50] sm:$0xff]
    %v4447 = vld [vmem:[%s13 + $0x58] sm:$0xff]
    %v4448 = vld [vmem:[%s13 + $0x60] sm:$0xff]
    %v4449 = vld [vmem:[%s13 + $0x68] sm:$0xff]
    %v4450 = vld [vmem:[%s13 + $0x70] sm:$0xff]
    %v4451 = vld [vmem:[%s13 + $0x78] sm:$0xff]
    %v4452 = vld [vmem:[%s14] sm:$0x1]
    %v4454 = vperm.slane %v4452, 0
    %4456 = vmatpush.msra.mxu0 %v4451
    %4457 = vmatpush.msra.mxu0 %v4450
    %4458 = vmatpush.msra.mxu0 %v4449
    %4459 = vmatpush.msra.mxu0 %v4448
    %4460 = vmatpush.msra.mxu0 %v4447
    %4461 = vmatpush.msra.mxu0 %v4446
    %4462 = vmatpush.msra.mxu0 %v4445
    %4463 = vmatpush.msra.mxu0 %v4444
    %4464 = vmatpush.msra.mxu0 %v4443
    %4465 = vmatpush.msra.mxu0 %v4442
    %4466 = vmatpush.msra.mxu0 %v4441
    %4467 = vmatpush.msra.mxu0 %v4440
    %4468 = vmatpush.msra.mxu0 %v4439
    %4469 = vmatpush.msra.mxu0 %v4438
    %4470 = vmatpush.msra.mxu0 %v4437
    %4471 = vmatpush.msra.mxu0 %v4436
    %4472 = vmatmul.f32.gmra.mxu0 %v4435
    %v4473 = vpop.f32.mrf.mxu0
    %v4474 = vadd.f32 %v4454, %v4473
    %4475 = vdwg.mxu0
    %4476 = vst [vmem:[%s15] sm:$0xff] %v4474
    // Predicated region
    $region78: #{lflstm_forward.1} parent=1 // pred_check
      _
    $region79: #{lflstm_forward.1} parent=1 // pred_check_branch
      %4478 = sbr.rel (0) target = $region81
    $region80: #{lflstm_forward.1} parent=1 // pred_region
      _
    $region81: #{lflstm_forward.1} parent=1 // pred_fallthru
      _
    // Predicated region
    $region82: #{lflstm_forward.1} parent=1 // pred_check
      _
    $region83: #{lflstm_forward.1} parent=1 // pred_check_branch
      %4480 = sbr.rel (0) target = $region85
    $region84: #{lflstm_forward.1} parent=1 // pred_region
      _
    $region85: #{lflstm_forward.1} parent=1 // pred_fallthru
      _
    %4481 = vsyncpa [#allocation6], 1
    %4482 = vsyncpa [#allocation8], 1
    %4483 = vsyncpa [#allocation11], 1

</llo_original>
